<compile_context>
chip_gen: v7x
topology: tpu7x:2x2x1
jax: 0.10.0
libtpu: 0.0.40
codegen_flags: <defaults>
</compile_context>

<pallas_src>
import functools

import numpy as np

import jax
import jax.numpy as jnp
from jax import lax
from jax.experimental import pallas as pl
from jax.experimental.pallas import tpu as pltpu

NUM_BANDS = 6
LEAKY_SLOPE = 0.01          # torch.nn.LeakyReLU default
MXU_DTYPE = jnp.bfloat16    # MXU operand dtype; accumulation stays f32


# ----------------------------- one-time weight folding ----------------------------
def _fold_conv3x3(w, b, w_in, *, stride=1, upsample=False):
    """Fold the 3 column taps, replication padding, column stride / nearest
    upsample and Cin of a 3x3 conv (HWIO weights) into block-Toeplitz matrices,
    one per row tap, stacked along K -> (3*W_in*Cin, Wo*Cout).  The 3 row taps
    are applied in-kernel by cheap row selection, so one dot does the layer."""
    u = 2 if upsample else 1
    wu = u * w_in
    wo = (wu - 1) // stride + 1
    cin, cout = w.shape[2], w.shape[3]
    M = np.zeros((3, wo, w_in), np.float32)          # M[dx, out_col, src_col]
    for dx in range(3):
        for x in range(wo):
            M[dx, x, min(max(stride * x + dx - 1, 0), wu - 1) // u] = 1.0
    # B[dy, c*Cin+ci, x*Cout+co] = sum_dx M[dx, x, c] * w[dy, dx, ci, co]
    B = jnp.einsum("axc,daio->dcixo", jnp.asarray(M), w)
    B = B.reshape(3 * w_in * cin, wo * cout)
    bias = jnp.tile(b, wo).astype(jnp.float32)       # (wo*cout,)
    return B, bias


def _fold_conv1x1(w, b, w_sp, cout_pad):
    """1x1 conv as a block-diagonal (W*Cin, W*Cout_pad) matrix (Cout zero-padded)."""
    cin, cout = w.shape
    w_p = jnp.pad(w, ((0, 0), (0, cout_pad - cout)))
    eye = jnp.eye(w_sp, dtype=jnp.float32)
    B = jnp.einsum("xy,io->xiyo", eye, w_p).reshape(w_sp * cin, w_sp * cout_pad)
    bias = jnp.tile(jnp.pad(b, (0, cout_pad - cout)), w_sp).astype(jnp.float32)
    return B, bias


def precompute_mats(params, h, w):
    """Build one packed bf16 weight slab + one bias slab (weight preprocessing)."""
    assert h % 8 == 0 and w % 8 == 0, "spatial dims must be divisible by 8"
    w1, c1 = params["conv1"]
    cin = w1.shape[2]
    cin_pad = ((cin + 7) // 8) * 8                    # 6 -> 8: 128-lane input block
    w8, c8 = params["conv8"]
    cout = w8.shape[1]
    cout_pad = ((cout + 7) // 8) * 8                  # 6 -> 8: 128-lane output block

    w1p = jnp.pad(w1, ((0, 0), (0, 0), (0, cin_pad - cin), (0, 0)))
    b1, s1 = _fold_conv3x3(w1p, c1, w)
    w2, c2 = params["conv2"]; b2, s2 = _fold_conv3x3(w2, c2, w, stride=2)
    w3, c3 = params["conv3"]; b3, s3 = _fold_conv3x3(w3, c3, w // 2, stride=2)
    w4, c4 = params["conv4"]; b4, s4 = _fold_conv3x3(w4, c4, w // 4, stride=2)
    w5, c5 = params["conv5"]; b5, s5 = _fold_conv3x3(w5, c5, w // 8, upsample=True)
    # Skip-cat layers: split weights over Cin halves and K-stack them -> one dot.
    w6, c6 = params["conv6"]; h6 = w6.shape[2] // 2
    b6a, s6 = _fold_conv3x3(w6[:, :, :h6, :], c6, w // 4, upsample=True)
    b6b, _ = _fold_conv3x3(w6[:, :, h6:, :], c6, w // 4, upsample=True)
    b6 = jnp.concatenate([b6a, b6b], axis=0)
    w7, c7 = params["conv7"]; h7 = w7.shape[2] // 2
    b7a, s7 = _fold_conv3x3(w7[:, :, :h7, :], c7, w // 2, upsample=True)
    b7b, _ = _fold_conv3x3(w7[:, :, h7:, :], c7, w // 2, upsample=True)
    b7 = jnp.concatenate([b7a, b7b], axis=0)
    h8 = w8.shape[0] // 2
    b8a, s8 = _fold_conv1x1(w8[:h8], c8, w, cout_pad)
    b8b, _ = _fold_conv1x1(w8[h8:], c8, w, cout_pad)
    b8 = jnp.concatenate([b8a, b8b], axis=0)

    blocks = [b1, b2, b3, b4, b5, b6, b7, b8]
    biases = [s1, s2, s3, s4, s5, s6, s7, s8]
    ncols = [int(blk.shape[1]) for blk in blocks]
    nmax = max(ncols)
    assert nmax % 128 == 0
    # One packed weight slab (column-padded to nmax) and one bias slab.
    w_all = jnp.concatenate(
        [jnp.pad(blk, ((0, 0), (0, nmax - blk.shape[1]))) for blk in blocks],
        axis=0).astype(MXU_DTYPE)
    bias_all = jnp.stack(
        [jnp.pad(sv, (0, nmax - sv.shape[0])) for sv in biases]).astype(jnp.float32)
    ksizes = [int(blk.shape[0]) for blk in blocks]
    offsets = [int(o) for o in np.cumsum([0] + ksizes[:-1])]
    meta = dict(offsets=offsets, ksizes=ksizes, ncols=ncols, nmax=int(nmax),
                cin_pad=int(cin_pad), cout=int(cout), cout_pad=int(cout_pad))
    return w_all, bias_all, meta


# ----------------------------- fused Pallas kernel --------------------------------
def _make_kernel(meta, h, w, bn):
    offs, ks = meta["offsets"], meta["ksizes"]
    ncols, nmax = meta["ncols"], meta["nmax"]

    def taps3(src, mode):
        """hstack of the 3 row-tap views [dy=0 | dy=1 | dy=2] of one activation.
        Replication pad / stride-2 / 2x nearest row upsample are folded into
        static slices + sublane split/merge reshapes + concats (no MXU)."""
        hin, c = src.shape
        if mode == "same":                       # stride-1 conv
            d0 = jnp.concatenate([src[0:1], src[:-1]], axis=0)
            d1 = src
            d2 = jnp.concatenate([src[1:], src[-1:]], axis=0)
        elif mode == "down":                     # stride-2 conv
            ho = hin // 2
            pairs = src.reshape(ho, 2, c)        # row r = [src[2r]; src[2r+1]]
            even = pairs[:, 0, :]
            odd = pairs[:, 1, :]
            d0 = jnp.concatenate([even[0:1], odd[: ho - 1]], axis=0)
            d1 = even
            d2 = odd
        else:                                    # "up": 2x nearest rows, stride-1 conv
            rep = jnp.broadcast_to(src[:, None, :], (hin, 2, c)).reshape(2 * hin, c)
            d0 = jnp.concatenate([rep[0:1], rep[:-1]], axis=0)
            d1 = rep
            d2 = jnp.concatenate([rep[1:], rep[-1:]], axis=0)
        return jnp.concatenate([d0, d1, d2], axis=1)

    def kernel(x_ref, w_ref, b_ref, o_ref):
        def conv(layer, branches_per_img, mode, act=True):
            off, k, nc = offs[layer], ks[layer], ncols[layer]
            if mode == "1x1":
                rows = [b[0] if len(b) == 1 else jnp.concatenate(b, axis=1)
                        for b in branches_per_img]
            else:
                rows = [taps3(b[0], mode) if len(b) == 1
                        else jnp.concatenate([taps3(s, mode) for s in b], axis=1)
                        for b in branches_per_img]
            m = rows[0].shape[0]
            # Stack images along M (rows) -> one MXU dot per layer per grid step.
            rows_cat = rows[0] if bn == 1 else jnp.concatenate(rows, axis=0)
            acc = jnp.dot(rows_cat, w_ref[off:off + k, :],
                          preferred_element_type=jnp.float32)
            if nc < nmax:
                acc = acc[:, :nc]
            acc = acc + b_ref[layer:layer + 1, :nc]
            if act:
                acc = jnp.where(acc >= 0.0, acc, LEAKY_SLOPE * acc)
                acc = acc.astype(MXU_DTYPE)      # bf16-resident activations
            if bn == 1:
                return [acc]
            return [acc[i * m:(i + 1) * m] for i in range(bn)]

        xs = [x_ref[i].astype(MXU_DTYPE) for i in range(bn)]   # (H, W*Cin_pad)
        l1 = conv(0, [[xi] for xi in xs], "same")              # 16x16x16
        l2 = conv(1, [[a] for a in l1], "down")                # 8x8x32
        l3 = conv(2, [[a] for a in l2], "down")                # 4x4x64
        l4 = conv(3, [[a] for a in l3], "down")                # 2x2x128
        l5 = conv(4, [[a] for a in l4], "up")                  # 4x4x64
        l6 = conv(5, [[a, b] for a, b in zip(l3, l5)], "up")   # cat + up -> 8x8x32
        l7 = conv(6, [[a, b] for a, b in zip(l2, l6)], "up")   # cat + up -> 16x16x16
        out = conv(7, [[a, b] for a, b in zip(l1, l7)], "1x1", act=False)
        for i in range(bn):
            o_ref[i] = out[i].astype(o_ref.dtype)

    return kernel


# ----------------------------- forward (single pallas_call) -----------------------
def fused_forward(x, w_all, bias_all, *, meta, block_n=1):
    n, h, w, cin = x.shape
    cin_pad = meta["cin_pad"]
    if cin_pad > cin:
        x = jnp.pad(x, ((0, 0), (0, 0), (0, 0), (0, cin_pad - cin)))
    x2 = x.reshape(n, h, w * cin_pad).astype(jnp.float32)   # (N, H, W*Cin_pad)
    nc_out = meta["ncols"][-1]                               # W * Cout_pad (128 lanes)
    assert n % block_n == 0
    kernel = _make_kernel(meta, h, w, block_n)
    out = pl.pallas_call(
        kernel,
        out_shape=jax.ShapeDtypeStruct((n, h, nc_out), jnp.float32),
        grid=(n // block_n,),
        in_specs=[
            pl.BlockSpec((block_n, h, w * cin_pad), lambda i: (i, 0, 0)),
            pl.BlockSpec(w_all.shape, lambda i: (0, 0)),      # resident packed weights
            pl.BlockSpec(bias_all.shape, lambda i: (0, 0)),   # resident packed biases
        ],
        out_specs=pl.BlockSpec((block_n, h, nc_out), lambda i: (i, 0, 0)),
        compiler_params=pltpu.CompilerParams(
            dimension_semantics=("parallel",),
            vmem_limit_bytes=32 * 1024 * 1024),
    )(x2, w_all, bias_all)
    out = out.reshape(n, h, w, meta["cout_pad"])[..., :meta["cout"]]
    return out


# ----------------------------- parameter init --------------------------------------
def init_params(key):
    chans = (16, 32, 64, 128)
    specs = [
        ("conv1", 3, NUM_BANDS, chans[0]),
        ("conv2", 3, chans[0], chans[1]),
        ("conv3", 3, chans[1], chans[2]),
        ("conv4", 3, chans[2], chans[3]),
        ("conv5", 3, chans[3], chans[2]),
        ("conv6", 3, chans[2] * 2, chans[1]),
        ("conv7", 3, chans[1] * 2, chans[0]),
        ("conv8", 1, chans[0] * 2, NUM_BANDS),
    ]
    params = {}
    for name, k, cin, cout in specs:
        key, kw, kb = jax.random.split(key, 3)
        scale = 1.0 / jnp.sqrt(jnp.float32(k * k * cin))
        if k == 3:
            wgt = jax.random.normal(kw, (3, 3, cin, cout), jnp.float32) * scale  # HWIO
        else:
            wgt = jax.random.normal(kw, (cin, cout), jnp.float32) * scale
        bb = jax.random.normal(kb, (cout,), jnp.float32) * 0.01
        params[name] = (wgt, bb)
    return params


# ----------------------------- pure-JAX reference (verification) -------------------
def _replication_pad(x):  # nn.ReplicationPad2d(1) on NHWC
    return jnp.pad(x, ((0, 0), (1, 1), (1, 1), (0, 0)), mode="edge")


def _upsample_nearest_2x(x):  # F.interpolate(scale_factor=2), mode='nearest'
    return jnp.repeat(jnp.repeat(x, 2, axis=1), 2, axis=2)


def _ref_conv3x3(x, w, b, *, stride=1, upsample=False, apply_lrelu=True):
    if upsample:
        x = _upsample_nearest_2x(x)
    xp = _replication_pad(x)
    y = lax.conv_general_dilated(
        xp, w, (stride, stride), "VALID",
        dimension_numbers=("NHWC", "HWIO", "NHWC"),
        precision=lax.Precision.HIGHEST) + b
    if apply_lrelu:
        y = jnp.where(y >= 0, y, LEAKY_SLOPE * y)
    return y


def ref_forward(params, x):
    w1, b1 = params["conv1"]; l1 = _ref_conv3x3(x, w1, b1)
    w2, b2 = params["conv2"]; l2 = _ref_conv3x3(l1, w2, b2, stride=2)
    w3, b3 = params["conv3"]; l3 = _ref_conv3x3(l2, w3, b3, stride=2)
    w4, b4 = params["conv4"]; l4 = _ref_conv3x3(l3, w4, b4, stride=2)
    w5, b5 = params["conv5"]; l5 = _ref_conv3x3(l4, w5, b5, upsample=True)
    w6, b6 = params["conv6"]; l6 = _ref_conv3x3(
        jnp.concatenate([l3, l5], axis=-1), w6, b6, upsample=True)
    w7, b7 = params["conv7"]; l7 = _ref_conv3x3(
        jnp.concatenate([l2, l6], axis=-1), w7, b7, upsample=True)
    w8, b8 = params["conv8"]
    cat = jnp.concatenate([l1, l7], axis=-1)
    out = jnp.einsum("nhwc,cd->nhwd", cat, w8,
                     precision=lax.Precision.HIGHEST) + b8
    return out


# ----------------------------- main -------------------------------------------------
if __name__ == "__main__":
    key = jax.random.PRNGKey(0)
    pkey, xkey = jax.random.split(key)
    params = init_params(pkey)

    N, H, W = 2, 16, 16
    x = jax.random.normal(xkey, (N, H, W, NUM_BANDS), jnp.float32)  # NHWC

    w_all, bias_all, meta = precompute_mats(params, H, W)   # one-time weight folding
    # block_n=1 -> grid=(2,) "parallel": one image per TensorCore on v7x.
    # On v5e/v6e with larger batches, block_n>1 stacks images into M instead.
    fwd = jax.jit(functools.partial(fused_forward, meta=meta, block_n=1))
    out = jax.block_until_ready(fwd(x, w_all, bias_all))

    assert out.shape == (N, H, W, NUM_BANDS), out.shape
    ref = ref_forward(params, x)
    max_err = float(jnp.max(jnp.abs(out - ref)))
    # bf16 MXU operands / bf16-resident activations with f32 accumulation across
    # 8 layers -> allow 5e-2.
    assert jnp.allclose(out, ref, atol=5e-2, rtol=5e-2), f"max_err={max_err}"

    print("KERNEL_OK")
</pallas_src>

<mosaic_0001>
module attributes {stable_mosaic.version = 11 : i64} {
  func.func @kernel(%arg0: i32, %arg1: memref<1x16x128xf32, #tpu.memory_space<vmem>>, %arg2: memref<7040x256xbf16, #tpu.memory_space<vmem>>, %arg3: memref<8x256xf32, #tpu.memory_space<vmem>>, %arg4: memref<1x16x128xf32, #tpu.memory_space<vmem>>) attributes {dimension_semantics = [#tpu.dimension_semantics<parallel>], iteration_bounds = array<i64: 2>, scalar_prefetch = 0 : i64, scratch_operands = 0 : i64, tpu.core_type = #tpu.core_type<tc>, window_params = [{transform_indices = @transform_0, window_bounds = array<i64: 1, 16, 128>}, {pipeline_mode = #tpu.pipeline_mode<synchronous>, transform_indices = @transform_1, window_bounds = array<i64: 7040, 256>}, {pipeline_mode = #tpu.pipeline_mode<synchronous>, transform_indices = @transform_2, window_bounds = array<i64: 8, 256>}, {transform_indices = @transform_3, window_bounds = array<i64: 1, 16, 128>}]} {
    %c0 = arith.constant 0 : index
    %c0_0 = arith.constant 0 : index
    %c0_1 = arith.constant 0 : index
    %0 = vector.load %arg1[%c0, %c0_0, %c0_1] : memref<1x16x128xf32, #tpu.memory_space<vmem>>, vector<1x16x128xf32>
    %1 = vector.shape_cast %0 : vector<1x16x128xf32> to vector<16x128xf32>
    %2 = arith.truncf %1 : vector<16x128xf32> to vector<16x128xbf16>
    %3 = vector.extract_strided_slice %2 {offsets = [0, 0], sizes = [1, 128], strides = [1, 1]} : vector<16x128xbf16> to vector<1x128xbf16>
    %4 = vector.extract_strided_slice %2 {offsets = [0, 0], sizes = [15, 128], strides = [1, 1]} : vector<16x128xbf16> to vector<15x128xbf16>
    %5 = tpu.concatenate %3, %4 in 0 : vector<1x128xbf16>, vector<15x128xbf16> -> vector<16x128xbf16>
    %6 = vector.extract_strided_slice %2 {offsets = [1, 0], sizes = [15, 128], strides = [1, 1]} : vector<16x128xbf16> to vector<15x128xbf16>
    %7 = vector.extract_strided_slice %2 {offsets = [15, 0], sizes = [1, 128], strides = [1, 1]} : vector<16x128xbf16> to vector<1x128xbf16>
    %8 = tpu.concatenate %6, %7 in 0 : vector<15x128xbf16>, vector<1x128xbf16> -> vector<16x128xbf16>
    %9 = tpu.concatenate %5, %2, %8 in 1 : vector<16x128xbf16>, vector<16x128xbf16>, vector<16x128xbf16> -> vector<16x384xbf16>
    %c0_2 = arith.constant 0 : index
    %c0_3 = arith.constant 0 : index
    %10 = vector.load %arg2[%c0_2, %c0_3] : memref<7040x256xbf16, #tpu.memory_space<vmem>>, vector<384x256xbf16>
    %cst = arith.constant dense<0.000000e+00> : vector<16x256xf32>
    %11 = tpu.matmul %9, %10, %cst {dimension_numbers = #tpu.dot_dimension_numbers<[1], [0], [0], [1], [0, 0, 1, 1], [], []>} : vector<16x384xbf16>, vector<384x256xbf16>, vector<16x256xf32> -> vector<16x256xf32>
    %c0_4 = arith.constant 0 : index
    %c0_5 = arith.constant 0 : index
    %12 = vector.load %arg3[%c0_4, %c0_5] : memref<8x256xf32, #tpu.memory_space<vmem>>, vector<1x256xf32>
    %13 = vector.broadcast %12 : vector<1x256xf32> to vector<16x256xf32>
    %14 = arith.addf %11, %13 : vector<16x256xf32>
    %cst_6 = arith.constant 0.000000e+00 : f32
    %15 = vector.broadcast %cst_6 : f32 to vector<16x256xf32>
    %16 = arith.cmpf oge, %14, %15 : vector<16x256xf32>
    %cst_7 = arith.constant 0.00999999977 : f32
    %17 = vector.broadcast %cst_7 : f32 to vector<16x256xf32>
    %18 = arith.mulf %17, %14 : vector<16x256xf32>
    %19 = arith.select %16, %14, %18 : vector<16x256xi1>, vector<16x256xf32>
    %20 = arith.truncf %19 : vector<16x256xf32> to vector<16x256xbf16>
    %21 = vector.shape_cast %20 : vector<16x256xbf16> to vector<8x2x256xbf16>
    %22 = vector.extract_strided_slice %21 {offsets = [0, 0, 0], sizes = [8, 1, 256], strides = [1, 1, 1]} : vector<8x2x256xbf16> to vector<8x1x256xbf16>
    %23 = vector.shape_cast %22 : vector<8x1x256xbf16> to vector<8x256xbf16>
    %24 = vector.extract_strided_slice %21 {offsets = [0, 1, 0], sizes = [8, 1, 256], strides = [1, 1, 1]} : vector<8x2x256xbf16> to vector<8x1x256xbf16>
    %25 = vector.shape_cast %24 : vector<8x1x256xbf16> to vector<8x256xbf16>
    %26 = vector.extract_strided_slice %23 {offsets = [0, 0], sizes = [1, 256], strides = [1, 1]} : vector<8x256xbf16> to vector<1x256xbf16>
    %27 = vector.extract_strided_slice %25 {offsets = [0, 0], sizes = [7, 256], strides = [1, 1]} : vector<8x256xbf16> to vector<7x256xbf16>
    %28 = tpu.concatenate %26, %27 in 0 : vector<1x256xbf16>, vector<7x256xbf16> -> vector<8x256xbf16>
    %29 = tpu.concatenate %28, %23, %25 in 1 : vector<8x256xbf16>, vector<8x256xbf16>, vector<8x256xbf16> -> vector<8x768xbf16>
    %c384 = arith.constant 384 : index
    %c0_8 = arith.constant 0 : index
    %30 = vector.load %arg2[%c384, %c0_8] : memref<7040x256xbf16, #tpu.memory_space<vmem>>, vector<768x256xbf16>
    %cst_9 = arith.constant dense<0.000000e+00> : vector<8x256xf32>
    %31 = tpu.matmul %29, %30, %cst_9 {dimension_numbers = #tpu.dot_dimension_numbers<[1], [0], [0], [1], [0, 0, 1, 1], [], []>} : vector<8x768xbf16>, vector<768x256xbf16>, vector<8x256xf32> -> vector<8x256xf32>
    %c1 = arith.constant 1 : index
    %c0_10 = arith.constant 0 : index
    %32 = vector.load %arg3[%c1, %c0_10] : memref<8x256xf32, #tpu.memory_space<vmem>>, vector<1x256xf32>
    %33 = vector.broadcast %32 : vector<1x256xf32> to vector<8x256xf32>
    %34 = arith.addf %31, %33 : vector<8x256xf32>
    %cst_11 = arith.constant 0.000000e+00 : f32
    %35 = vector.broadcast %cst_11 : f32 to vector<8x256xf32>
    %36 = arith.cmpf oge, %34, %35 : vector<8x256xf32>
    %cst_12 = arith.constant 0.00999999977 : f32
    %37 = vector.broadcast %cst_12 : f32 to vector<8x256xf32>
    %38 = arith.mulf %37, %34 : vector<8x256xf32>
    %39 = arith.select %36, %34, %38 : vector<8x256xi1>, vector<8x256xf32>
    %40 = arith.truncf %39 : vector<8x256xf32> to vector<8x256xbf16>
    %41 = vector.shape_cast %40 : vector<8x256xbf16> to vector<4x2x256xbf16>
    %42 = vector.extract_strided_slice %41 {offsets = [0, 0, 0], sizes = [4, 1, 256], strides = [1, 1, 1]} : vector<4x2x256xbf16> to vector<4x1x256xbf16>
    %43 = vector.shape_cast %42 : vector<4x1x256xbf16> to vector<4x256xbf16>
    %44 = vector.extract_strided_slice %41 {offsets = [0, 1, 0], sizes = [4, 1, 256], strides = [1, 1, 1]} : vector<4x2x256xbf16> to vector<4x1x256xbf16>
    %45 = vector.shape_cast %44 : vector<4x1x256xbf16> to vector<4x256xbf16>
    %46 = vector.extract_strided_slice %43 {offsets = [0, 0], sizes = [1, 256], strides = [1, 1]} : vector<4x256xbf16> to vector<1x256xbf16>
    %47 = vector.extract_strided_slice %45 {offsets = [0, 0], sizes = [3, 256], strides = [1, 1]} : vector<4x256xbf16> to vector<3x256xbf16>
    %48 = tpu.concatenate %46, %47 in 0 : vector<1x256xbf16>, vector<3x256xbf16> -> vector<4x256xbf16>
    %49 = tpu.concatenate %48, %43, %45 in 1 : vector<4x256xbf16>, vector<4x256xbf16>, vector<4x256xbf16> -> vector<4x768xbf16>
    %c1152 = arith.constant 1152 : index
    %c0_13 = arith.constant 0 : index
    %50 = vector.load %arg2[%c1152, %c0_13] : memref<7040x256xbf16, #tpu.memory_space<vmem>>, vector<768x256xbf16>
    %cst_14 = arith.constant dense<0.000000e+00> : vector<4x256xf32>
    %51 = tpu.matmul %49, %50, %cst_14 {dimension_numbers = #tpu.dot_dimension_numbers<[1], [0], [0], [1], [0, 0, 1, 1], [], []>} : vector<4x768xbf16>, vector<768x256xbf16>, vector<4x256xf32> -> vector<4x256xf32>
    %c2 = arith.constant 2 : index
    %c0_15 = arith.constant 0 : index
    %52 = vector.load %arg3[%c2, %c0_15] : memref<8x256xf32, #tpu.memory_space<vmem>>, vector<1x256xf32>
    %53 = vector.broadcast %52 : vector<1x256xf32> to vector<4x256xf32>
    %54 = arith.addf %51, %53 : vector<4x256xf32>
    %cst_16 = arith.constant 0.000000e+00 : f32
    %55 = vector.broadcast %cst_16 : f32 to vector<4x256xf32>
    %56 = arith.cmpf oge, %54, %55 : vector<4x256xf32>
    %cst_17 = arith.constant 0.00999999977 : f32
    %57 = vector.broadcast %cst_17 : f32 to vector<4x256xf32>
    %58 = arith.mulf %57, %54 : vector<4x256xf32>
    %59 = arith.select %56, %54, %58 : vector<4x256xi1>, vector<4x256xf32>
    %60 = arith.truncf %59 : vector<4x256xf32> to vector<4x256xbf16>
    %61 = vector.shape_cast %60 : vector<4x256xbf16> to vector<2x2x256xbf16>
    %62 = vector.extract_strided_slice %61 {offsets = [0, 0, 0], sizes = [2, 1, 256], strides = [1, 1, 1]} : vector<2x2x256xbf16> to vector<2x1x256xbf16>
    %63 = vector.shape_cast %62 : vector<2x1x256xbf16> to vector<2x256xbf16>
    %64 = vector.extract_strided_slice %61 {offsets = [0, 1, 0], sizes = [2, 1, 256], strides = [1, 1, 1]} : vector<2x2x256xbf16> to vector<2x1x256xbf16>
    %65 = vector.shape_cast %64 : vector<2x1x256xbf16> to vector<2x256xbf16>
    %66 = vector.extract_strided_slice %63 {offsets = [0, 0], sizes = [1, 256], strides = [1, 1]} : vector<2x256xbf16> to vector<1x256xbf16>
    %67 = vector.extract_strided_slice %65 {offsets = [0, 0], sizes = [1, 256], strides = [1, 1]} : vector<2x256xbf16> to vector<1x256xbf16>
    %68 = tpu.concatenate %66, %67 in 0 : vector<1x256xbf16>, vector<1x256xbf16> -> vector<2x256xbf16>
    %69 = tpu.concatenate %68, %63, %65 in 1 : vector<2x256xbf16>, vector<2x256xbf16>, vector<2x256xbf16> -> vector<2x768xbf16>
    %c1920 = arith.constant 1920 : index
    %c0_18 = arith.constant 0 : index
    %70 = vector.load %arg2[%c1920, %c0_18] : memref<7040x256xbf16, #tpu.memory_space<vmem>>, vector<768x256xbf16>
    %cst_19 = arith.constant dense<0.000000e+00> : vector<2x256xf32>
    %71 = tpu.matmul %69, %70, %cst_19 {dimension_numbers = #tpu.dot_dimension_numbers<[1], [0], [0], [1], [0, 0, 1, 1], [], []>} : vector<2x768xbf16>, vector<768x256xbf16>, vector<2x256xf32> -> vector<2x256xf32>
    %c3 = arith.constant 3 : index
    %c0_20 = arith.constant 0 : index
    %72 = vector.load %arg3[%c3, %c0_20] : memref<8x256xf32, #tpu.memory_space<vmem>>, vector<1x256xf32>
    %73 = vector.broadcast %72 : vector<1x256xf32> to vector<2x256xf32>
    %74 = arith.addf %71, %73 : vector<2x256xf32>
    %cst_21 = arith.constant 0.000000e+00 : f32
    %75 = vector.broadcast %cst_21 : f32 to vector<2x256xf32>
    %76 = arith.cmpf oge, %74, %75 : vector<2x256xf32>
    %cst_22 = arith.constant 0.00999999977 : f32
    %77 = vector.broadcast %cst_22 : f32 to vector<2x256xf32>
    %78 = arith.mulf %77, %74 : vector<2x256xf32>
    %79 = arith.select %76, %74, %78 : vector<2x256xi1>, vector<2x256xf32>
    %80 = arith.truncf %79 : vector<2x256xf32> to vector<2x256xbf16>
    %81 = vector.shape_cast %80 : vector<2x256xbf16> to vector<2x1x256xbf16>
    %82 = vector.shape_cast %81 : vector<2x1x256xbf16> to vector<2x1x256xbf16>
    %83 = vector.broadcast %82 : vector<2x1x256xbf16> to vector<2x2x256xbf16>
    %84 = vector.shape_cast %83 : vector<2x2x256xbf16> to vector<4x256xbf16>
    %85 = vector.extract_strided_slice %84 {offsets = [0, 0], sizes = [1, 256], strides = [1, 1]} : vector<4x256xbf16> to vector<1x256xbf16>
    %86 = vector.extract_strided_slice %84 {offsets = [0, 0], sizes = [3, 256], strides = [1, 1]} : vector<4x256xbf16> to vector<3x256xbf16>
    %87 = tpu.concatenate %85, %86 in 0 : vector<1x256xbf16>, vector<3x256xbf16> -> vector<4x256xbf16>
    %88 = vector.extract_strided_slice %84 {offsets = [1, 0], sizes = [3, 256], strides = [1, 1]} : vector<4x256xbf16> to vector<3x256xbf16>
    %89 = vector.extract_strided_slice %84 {offsets = [3, 0], sizes = [1, 256], strides = [1, 1]} : vector<4x256xbf16> to vector<1x256xbf16>
    %90 = tpu.concatenate %88, %89 in 0 : vector<3x256xbf16>, vector<1x256xbf16> -> vector<4x256xbf16>
    %91 = tpu.concatenate %87, %84, %90 in 1 : vector<4x256xbf16>, vector<4x256xbf16>, vector<4x256xbf16> -> vector<4x768xbf16>
    %c2688 = arith.constant 2688 : index
    %c0_23 = arith.constant 0 : index
    %92 = vector.load %arg2[%c2688, %c0_23] : memref<7040x256xbf16, #tpu.memory_space<vmem>>, vector<768x256xbf16>
    %cst_24 = arith.constant dense<0.000000e+00> : vector<4x256xf32>
    %93 = tpu.matmul %91, %92, %cst_24 {dimension_numbers = #tpu.dot_dimension_numbers<[1], [0], [0], [1], [0, 0, 1, 1], [], []>} : vector<4x768xbf16>, vector<768x256xbf16>, vector<4x256xf32> -> vector<4x256xf32>
    %c4 = arith.constant 4 : index
    %c0_25 = arith.constant 0 : index
    %94 = vector.load %arg3[%c4, %c0_25] : memref<8x256xf32, #tpu.memory_space<vmem>>, vector<1x256xf32>
    %95 = vector.broadcast %94 : vector<1x256xf32> to vector<4x256xf32>
    %96 = arith.addf %93, %95 : vector<4x256xf32>
    %cst_26 = arith.constant 0.000000e+00 : f32
    %97 = vector.broadcast %cst_26 : f32 to vector<4x256xf32>
    %98 = arith.cmpf oge, %96, %97 : vector<4x256xf32>
    %cst_27 = arith.constant 0.00999999977 : f32
    %99 = vector.broadcast %cst_27 : f32 to vector<4x256xf32>
    %100 = arith.mulf %99, %96 : vector<4x256xf32>
    %101 = arith.select %98, %96, %100 : vector<4x256xi1>, vector<4x256xf32>
    %102 = arith.truncf %101 : vector<4x256xf32> to vector<4x256xbf16>
    %103 = vector.shape_cast %60 : vector<4x256xbf16> to vector<4x1x256xbf16>
    %104 = vector.shape_cast %103 : vector<4x1x256xbf16> to vector<4x1x256xbf16>
    %105 = vector.broadcast %104 : vector<4x1x256xbf16> to vector<4x2x256xbf16>
    %106 = vector.shape_cast %105 : vector<4x2x256xbf16> to vector<8x256xbf16>
    %107 = vector.extract_strided_slice %106 {offsets = [0, 0], sizes = [1, 256], strides = [1, 1]} : vector<8x256xbf16> to vector<1x256xbf16>
    %108 = vector.extract_strided_slice %106 {offsets = [0, 0], sizes = [7, 256], strides = [1, 1]} : vector<8x256xbf16> to vector<7x256xbf16>
    %109 = tpu.concatenate %107, %108 in 0 : vector<1x256xbf16>, vector<7x256xbf16> -> vector<8x256xbf16>
    %110 = vector.extract_strided_slice %106 {offsets = [1, 0], sizes = [7, 256], strides = [1, 1]} : vector<8x256xbf16> to vector<7x256xbf16>
    %111 = vector.extract_strided_slice %106 {offsets = [7, 0], sizes = [1, 256], strides = [1, 1]} : vector<8x256xbf16> to vector<1x256xbf16>
    %112 = tpu.concatenate %110, %111 in 0 : vector<7x256xbf16>, vector<1x256xbf16> -> vector<8x256xbf16>
    %113 = tpu.concatenate %109, %106, %112 in 1 : vector<8x256xbf16>, vector<8x256xbf16>, vector<8x256xbf16> -> vector<8x768xbf16>
    %114 = vector.shape_cast %102 : vector<4x256xbf16> to vector<4x1x256xbf16>
    %115 = vector.shape_cast %114 : vector<4x1x256xbf16> to vector<4x1x256xbf16>
    %116 = vector.broadcast %115 : vector<4x1x256xbf16> to vector<4x2x256xbf16>
    %117 = vector.shape_cast %116 : vector<4x2x256xbf16> to vector<8x256xbf16>
    %118 = vector.extract_strided_slice %117 {offsets = [0, 0], sizes = [1, 256], strides = [1, 1]} : vector<8x256xbf16> to vector<1x256xbf16>
    %119 = vector.extract_strided_slice %117 {offsets = [0, 0], sizes = [7, 256], strides = [1, 1]} : vector<8x256xbf16> to vector<7x256xbf16>
    %120 = tpu.concatenate %118, %119 in 0 : vector<1x256xbf16>, vector<7x256xbf16> -> vector<8x256xbf16>
    %121 = vector.extract_strided_slice %117 {offsets = [1, 0], sizes = [7, 256], strides = [1, 1]} : vector<8x256xbf16> to vector<7x256xbf16>
    %122 = vector.extract_strided_slice %117 {offsets = [7, 0], sizes = [1, 256], strides = [1, 1]} : vector<8x256xbf16> to vector<1x256xbf16>
    %123 = tpu.concatenate %121, %122 in 0 : vector<7x256xbf16>, vector<1x256xbf16> -> vector<8x256xbf16>
    %124 = tpu.concatenate %120, %117, %123 in 1 : vector<8x256xbf16>, vector<8x256xbf16>, vector<8x256xbf16> -> vector<8x768xbf16>
    %125 = tpu.concatenate %113, %124 in 1 : vector<8x768xbf16>, vector<8x768xbf16> -> vector<8x1536xbf16>
    %c3456 = arith.constant 3456 : index
    %c0_28 = arith.constant 0 : index
    %126 = vector.load %arg2[%c3456, %c0_28] : memref<7040x256xbf16, #tpu.memory_space<vmem>>, vector<1536x256xbf16>
    %cst_29 = arith.constant dense<0.000000e+00> : vector<8x256xf32>
    %127 = tpu.matmul %125, %126, %cst_29 {dimension_numbers = #tpu.dot_dimension_numbers<[1], [0], [0], [1], [0, 0, 1, 1], [], []>} : vector<8x1536xbf16>, vector<1536x256xbf16>, vector<8x256xf32> -> vector<8x256xf32>
    %c5 = arith.constant 5 : index
    %c0_30 = arith.constant 0 : index
    %128 = vector.load %arg3[%c5, %c0_30] : memref<8x256xf32, #tpu.memory_space<vmem>>, vector<1x256xf32>
    %129 = vector.broadcast %128 : vector<1x256xf32> to vector<8x256xf32>
    %130 = arith.addf %127, %129 : vector<8x256xf32>
    %cst_31 = arith.constant 0.000000e+00 : f32
    %131 = vector.broadcast %cst_31 : f32 to vector<8x256xf32>
    %132 = arith.cmpf oge, %130, %131 : vector<8x256xf32>
    %cst_32 = arith.constant 0.00999999977 : f32
    %133 = vector.broadcast %cst_32 : f32 to vector<8x256xf32>
    %134 = arith.mulf %133, %130 : vector<8x256xf32>
    %135 = arith.select %132, %130, %134 : vector<8x256xi1>, vector<8x256xf32>
    %136 = arith.truncf %135 : vector<8x256xf32> to vector<8x256xbf16>
    %137 = vector.shape_cast %40 : vector<8x256xbf16> to vector<8x1x256xbf16>
    %138 = vector.shape_cast %137 : vector<8x1x256xbf16> to vector<8x1x256xbf16>
    %139 = vector.broadcast %138 : vector<8x1x256xbf16> to vector<8x2x256xbf16>
    %140 = vector.shape_cast %139 : vector<8x2x256xbf16> to vector<16x256xbf16>
    %141 = vector.extract_strided_slice %140 {offsets = [0, 0], sizes = [1, 256], strides = [1, 1]} : vector<16x256xbf16> to vector<1x256xbf16>
    %142 = vector.extract_strided_slice %140 {offsets = [0, 0], sizes = [15, 256], strides = [1, 1]} : vector<16x256xbf16> to vector<15x256xbf16>
    %143 = tpu.concatenate %141, %142 in 0 : vector<1x256xbf16>, vector<15x256xbf16> -> vector<16x256xbf16>
    %144 = vector.extract_strided_slice %140 {offsets = [1, 0], sizes = [15, 256], strides = [1, 1]} : vector<16x256xbf16> to vector<15x256xbf16>
    %145 = vector.extract_strided_slice %140 {offsets = [15, 0], sizes = [1, 256], strides = [1, 1]} : vector<16x256xbf16> to vector<1x256xbf16>
    %146 = tpu.concatenate %144, %145 in 0 : vector<15x256xbf16>, vector<1x256xbf16> -> vector<16x256xbf16>
    %147 = tpu.concatenate %143, %140, %146 in 1 : vector<16x256xbf16>, vector<16x256xbf16>, vector<16x256xbf16> -> vector<16x768xbf16>
    %148 = vector.shape_cast %136 : vector<8x256xbf16> to vector<8x1x256xbf16>
    %149 = vector.shape_cast %148 : vector<8x1x256xbf16> to vector<8x1x256xbf16>
    %150 = vector.broadcast %149 : vector<8x1x256xbf16> to vector<8x2x256xbf16>
    %151 = vector.shape_cast %150 : vector<8x2x256xbf16> to vector<16x256xbf16>
    %152 = vector.extract_strided_slice %151 {offsets = [0, 0], sizes = [1, 256], strides = [1, 1]} : vector<16x256xbf16> to vector<1x256xbf16>
    %153 = vector.extract_strided_slice %151 {offsets = [0, 0], sizes = [15, 256], strides = [1, 1]} : vector<16x256xbf16> to vector<15x256xbf16>
    %154 = tpu.concatenate %152, %153 in 0 : vector<1x256xbf16>, vector<15x256xbf16> -> vector<16x256xbf16>
    %155 = vector.extract_strided_slice %151 {offsets = [1, 0], sizes = [15, 256], strides = [1, 1]} : vector<16x256xbf16> to vector<15x256xbf16>
    %156 = vector.extract_strided_slice %151 {offsets = [15, 0], sizes = [1, 256], strides = [1, 1]} : vector<16x256xbf16> to vector<1x256xbf16>
    %157 = tpu.concatenate %155, %156 in 0 : vector<15x256xbf16>, vector<1x256xbf16> -> vector<16x256xbf16>
    %158 = tpu.concatenate %154, %151, %157 in 1 : vector<16x256xbf16>, vector<16x256xbf16>, vector<16x256xbf16> -> vector<16x768xbf16>
    %159 = tpu.concatenate %147, %158 in 1 : vector<16x768xbf16>, vector<16x768xbf16> -> vector<16x1536xbf16>
    %c4992 = arith.constant 4992 : index
    %c0_33 = arith.constant 0 : index
    %160 = vector.load %arg2[%c4992, %c0_33] : memref<7040x256xbf16, #tpu.memory_space<vmem>>, vector<1536x256xbf16>
    %cst_34 = arith.constant dense<0.000000e+00> : vector<16x256xf32>
    %161 = tpu.matmul %159, %160, %cst_34 {dimension_numbers = #tpu.dot_dimension_numbers<[1], [0], [0], [1], [0, 0, 1, 1], [], []>} : vector<16x1536xbf16>, vector<1536x256xbf16>, vector<16x256xf32> -> vector<16x256xf32>
    %c6 = arith.constant 6 : index
    %c0_35 = arith.constant 0 : index
    %162 = vector.load %arg3[%c6, %c0_35] : memref<8x256xf32, #tpu.memory_space<vmem>>, vector<1x256xf32>
    %163 = vector.broadcast %162 : vector<1x256xf32> to vector<16x256xf32>
    %164 = arith.addf %161, %163 : vector<16x256xf32>
    %cst_36 = arith.constant 0.000000e+00 : f32
    %165 = vector.broadcast %cst_36 : f32 to vector<16x256xf32>
    %166 = arith.cmpf oge, %164, %165 : vector<16x256xf32>
    %cst_37 = arith.constant 0.00999999977 : f32
    %167 = vector.broadcast %cst_37 : f32 to vector<16x256xf32>
    %168 = arith.mulf %167, %164 : vector<16x256xf32>
    %169 = arith.select %166, %164, %168 : vector<16x256xi1>, vector<16x256xf32>
    %170 = arith.truncf %169 : vector<16x256xf32> to vector<16x256xbf16>
    %171 = tpu.concatenate %20, %170 in 1 : vector<16x256xbf16>, vector<16x256xbf16> -> vector<16x512xbf16>
    %c6528 = arith.constant 6528 : index
    %c0_38 = arith.constant 0 : index
    %172 = vector.load %arg2[%c6528, %c0_38] : memref<7040x256xbf16, #tpu.memory_space<vmem>>, vector<512x256xbf16>
    %cst_39 = arith.constant dense<0.000000e+00> : vector<16x256xf32>
    %173 = tpu.matmul %171, %172, %cst_39 {dimension_numbers = #tpu.dot_dimension_numbers<[1], [0], [0], [1], [0, 0, 1, 1], [], []>} : vector<16x512xbf16>, vector<512x256xbf16>, vector<16x256xf32> -> vector<16x256xf32>
    %174 = vector.extract_strided_slice %173 {offsets = [0, 0], sizes = [16, 128], strides = [1, 1]} : vector<16x256xf32> to vector<16x128xf32>
    %c7 = arith.constant 7 : index
    %c0_40 = arith.constant 0 : index
    %175 = vector.load %arg3[%c7, %c0_40] : memref<8x256xf32, #tpu.memory_space<vmem>>, vector<1x128xf32>
    %176 = vector.broadcast %175 : vector<1x128xf32> to vector<16x128xf32>
    %177 = arith.addf %174, %176 : vector<16x128xf32>
    %c0_41 = arith.constant 0 : index
    %c0_42 = arith.constant 0 : index
    %c0_43 = arith.constant 0 : index
    %178 = vector.load %arg4[%c0_41, %c0_42, %c0_43] : memref<1x16x128xf32, #tpu.memory_space<vmem>>, vector<1x16x128xf32>
    %179 = vector.shape_cast %178 : vector<1x16x128xf32> to vector<16x128xf32>
    %180 = vector.shape_cast %177 : vector<16x128xf32> to vector<1x16x128xf32>
    tpu.vector_store %arg4[%c0_41, %c0_42, %c0_43], %180 {strides = array<i32>} : memref<1x16x128xf32, #tpu.memory_space<vmem>>, vector<1x16x128xf32>,
    return
  }
  func.func @transform_0(%arg0: i32) -> (i32, i32, i32) {
    %c0_i32 = arith.constant 0 : i32
    %c0_i32_0 = arith.constant 0 : i32
    %c0_i32_1 = arith.constant 0 : i32
    return %arg0, %c0_i32, %c0_i32_0 : i32, i32, i32
  }
  func.func @transform_1(%arg0: i32) -> (i32, i32) {
    %c0_i32 = arith.constant 0 : i32
    %c0_i32_0 = arith.constant 0 : i32
    %c0_i32_1 = arith.constant 0 : i32
    return %c0_i32, %c0_i32_0 : i32, i32
  }
  func.func @transform_2(%arg0: i32) -> (i32, i32) {
    %c0_i32 = arith.constant 0 : i32
    %c0_i32_0 = arith.constant 0 : i32
    %c0_i32_1 = arith.constant 0 : i32
    return %c0_i32, %c0_i32_0 : i32, i32
  }
  func.func @transform_3(%arg0: i32) -> (i32, i32, i32) {
    %c0_i32 = arith.constant 0 : i32
    %c0_i32_0 = arith.constant 0 : i32
    %c0_i32_1 = arith.constant 0 : i32
    return %arg0, %c0_i32, %c0_i32_0 : i32, i32, i32
  }
}

</mosaic_0001>

<llo_original>
// kernel: fused_forward.1
$region0: #{fused_forward.1}
  #allocation0 [shape = 'u32[]', space=smem, size = 0x4, offset = 0x4, fixed_abs, tag = 'smem constant byte address 0x4 - core index']
  #allocation1 [shape = 'u32[144,128]{1,0:T(1,128)}', space=vmem, size = 0x12000, scoped, tag = 'internal scratch']
  %s0 = inlined_call_operand.vmem [shape: f32[2,16,128], index: 0, kind: input, shape index: {}]
  %s1 = inlined_call_operand.hbm [shape: bf16[7040,256], index: 1, kind: input, shape index: {}]
  %s2 = inlined_call_operand.hbm [shape: f32[8,256], index: 2, kind: input, shape index: {}]
  %s3 = inlined_call_operand.vmem [shape: f32[2,16,128], index: 3, kind: output, shape index: {}]
  %s4 = sld [smem:[#allocation0]]
  $region53: #{fused_forward.1} parent=0
    _
  %s6 = ssub.s32 1, %s4
  %s7 = scalar_select 0, %s6, %s4
  $region1: #{fused_forward.1} parent=0
    #allocation2 [shape = 'u8[3604480]{0}', space=vmem, size = 0x370000, scoped, tag = 'input window, operand 1, single buffered']
    #allocation3 [shape = 's32[2]{0}', space=sflag, size = 0x8, scoped, tag = 'scoped memory for fused_forward.1']
    #allocation4 [shape = 'u8[8192]{0}', space=vmem, size = 0x2000, scoped, tag = 'input window, operand 2, single buffered']
    #allocation5 [shape = 's32[1]{0}', space=sflag, size = 0x4, scoped, tag = 'scoped memory for fused_forward.1']
    %8 = vsyncpa [#allocation3], 0
    %9 = vsyncpa [#allocation5], 0
    loop: start=0, step=1, limit=4
    $region2: #{fused_forward.1} parent=1 // loop_pre_header
      _
    $region3: #{fused_forward.1} parent=1 // loop_header
      %s11 = sphi 0, %s15
      %p12 = scmp.ge.s32.totalorder %s11, 4
      %s21 = sphi 0, %s23
      %s24 = sphi 0, %s21
      %s25 = sphi 0, %s24
      %s41 = sphi 0, %s25
      %s45 = sphi 0, %s45
      %s47 = sphi 0, %s45
      %s48 = sphi 0, %s47
      %s62 = sphi 0, %s48
      %s66 = sphi 0, %s66
      %s68 = sphi 0, %s66
      %s69 = sphi 0, %s68
      %s83 = sphi 0, %s69
      %s89 = sphi 0, %s91
      %s92 = sphi 0, %s89
      %s93 = sphi 0, %s92
      %s109 = sphi 0, %s93
    $region4: #{fused_forward.1} parent=1 // loop_header_branch
      %14 = sbr.rel (%p12) target = $region8
    $region5: #{fused_forward.1} parent=1 // loop_body
      %s16 = ssub.s32 %s11, 1
      %s17 = ssub.s32 %s11, 2
      %s18 = sadd.s32 %s11, 1
      %s19 = ssub.s32 %s11, %s18
      %p20 = scmp.eq.s32.totalorder %s19, 0
      %s22 = sadd.s32 %s21, 1
      %s23 = scalar_select %p20, %s21, %s22
      %p26 = pneg %p20
      %p27 = scmp.eq.s32.totalorder %s11, 1
      %p28 = por %p26, %p27
      %p29 = scmp.ne.s32.totalorder %s21, %s24
      %p30 = scmp.eq.s32.totalorder %s11, 0
      %p31 = por %p29, %p30
      %p32 = scmp.ne.s32.totalorder %s21, %s24
      %p33 = scmp.eq.s32.totalorder %s16, 1
      %p34 = por %p32, %p33
      %p35 = scmp.ne.s32.totalorder %s24, %s25
      %p36 = scmp.eq.s32.totalorder %s16, 0
      %p37 = por %p35, %p36
      %p38 = scmp.ne.s32.totalorder %s24, %s25
      %p39 = scmp.eq.s32.totalorder %s17, 1
      %p40 = por %p38, %p39
      %p42 = scmp.ne.s32.totalorder %s25, %s41
      %p43 = scmp.eq.s32.totalorder %s17, 0
      %p44 = por %p42, %p43
      %s46 = sadd.s32 %s45, 1
      %p49 = scmp.eq.s32.totalorder %s11, 1
      %p50 = scmp.ne.s32.totalorder %s45, %s47
      %p51 = scmp.eq.s32.totalorder %s11, 0
      %p52 = por %p50, %p51
      %p53 = scmp.ne.s32.totalorder %s45, %s47
      %p54 = scmp.eq.s32.totalorder %s16, 1
      %p55 = por %p53, %p54
      %p56 = scmp.ne.s32.totalorder %s47, %s48
      %p57 = scmp.eq.s32.totalorder %s16, 0
      %p58 = por %p56, %p57
      %p59 = scmp.ne.s32.totalorder %s47, %s48
      %p60 = scmp.eq.s32.totalorder %s17, 1
      %p61 = por %p59, %p60
      %p63 = scmp.ne.s32.totalorder %s48, %s62
      %p64 = scmp.eq.s32.totalorder %s17, 0
      %p65 = por %p63, %p64
      %s67 = sadd.s32 %s66, 1
      %p70 = scmp.eq.s32.totalorder %s11, 1
      %p71 = scmp.ne.s32.totalorder %s66, %s68
      %p72 = scmp.eq.s32.totalorder %s11, 0
      %p73 = por %p71, %p72
      %p74 = scmp.ne.s32.totalorder %s66, %s68
      %p75 = scmp.eq.s32.totalorder %s16, 1
      %p76 = por %p74, %p75
      %p77 = scmp.ne.s32.totalorder %s68, %s69
      %p78 = scmp.eq.s32.totalorder %s16, 0
      %p79 = por %p77, %p78
      %p80 = scmp.ne.s32.totalorder %s68, %s69
      %p81 = scmp.eq.s32.totalorder %s17, 1
      %p82 = por %p80, %p81
      %p84 = scmp.ne.s32.totalorder %s69, %s83
      %p85 = scmp.eq.s32.totalorder %s17, 0
      %p86 = por %p84, %p85
      %s87 = ssub.s32 %s11, %s18
      %p88 = scmp.eq.s32.totalorder %s87, 0
      %s90 = sadd.s32 %s89, 1
      %s91 = scalar_select %p88, %s89, %s90
      %p94 = pneg %p88
      %p95 = scmp.eq.s32.totalorder %s11, 1
      %p96 = por %p94, %p95
      %p97 = scmp.ne.s32.totalorder %s89, %s92
      %p98 = scmp.eq.s32.totalorder %s11, 0
      %p99 = por %p97, %p98
      %p100 = scmp.ne.s32.totalorder %s89, %s92
      %p101 = scmp.eq.s32.totalorder %s16, 1
      %p102 = por %p100, %p101
      %p103 = scmp.ne.s32.totalorder %s92, %s93
      %p104 = scmp.eq.s32.totalorder %s16, 0
      %p105 = por %p103, %p104
      %p106 = scmp.ne.s32.totalorder %s92, %s93
      %p107 = scmp.eq.s32.totalorder %s17, 1
      %p108 = por %p106, %p107
      %p110 = scmp.ne.s32.totalorder %s93, %s109
      %p111 = scmp.eq.s32.totalorder %s17, 0
      %p112 = por %p110, %p111
      %p113 = scmp.le.s32.totalorder 1, %s11
      %p114 = scmp.lt.s32.totalorder %s11, 3
      %p115 = pnand %p113, %p114
      %p116 = pneg %p115
      // Predicated region
      $region9: #{fused_forward.1} parent=5 // pred_check
        _
      $region10: #{fused_forward.1} parent=5 // pred_check_branch
        %118 = sbr.rel (%p115) target = $region12
      $region11: #{fused_forward.1} parent=5 // pred_region
        %s119 = ssub.s32 %s11, 1
        // Predicated region
        $region13: #{fused_forward.1} parent=11 // pred_check
          %p120 = pneg %p58
        $region14: #{fused_forward.1} parent=11 // pred_check_branch
          %122 = sbr.rel (%p120) target = $region16
        $region15: #{fused_forward.1} parent=11 // pred_region
          %s124 = ssub.s32 112640, 112640
          %125 = vsyncadd [#allocation3], %s124
          %s126 = sshll.u32 [#allocation2], 4
          %s127 = int_to_ptr.vmem [resolvable:$true] %s126
          %132 = dma.hbm_to_vmem [thread:$0]  %s1, 112640, %s127, [#allocation3], 128, 128, 8
        $region16: #{fused_forward.1} parent=11 // pred_fallthru
          _
        // Predicated region
        $region17: #{fused_forward.1} parent=11 // pred_check
          %p133 = pneg %p79
        $region18: #{fused_forward.1} parent=11 // pred_check_branch
          %135 = sbr.rel (%p133) target = $region20
        $region19: #{fused_forward.1} parent=11 // pred_region
          %s137 = ssub.s32 256, 256
          %138 = vsyncadd [#allocation5], %s137
          %s140 = sshll.u32 [#allocation4], 4
          %s141 = int_to_ptr.vmem [resolvable:$true] %s140
          %143 = dma.hbm_to_vmem [thread:$0]  %s2, 256, %s141, [#allocation5]
        $region20: #{fused_forward.1} parent=11 // pred_fallthru
          _
      $region12: #{fused_forward.1} parent=5 // pred_fallthru
        _
      %p144 = scmp.lt.s32.totalorder %s11, 2
      // Predicated region
      $region21: #{fused_forward.1} parent=5 // pred_check
        %p145 = pneg %p144
      $region22: #{fused_forward.1} parent=5 // pred_check_branch
        %147 = sbr.rel (%p145) target = $region24
      $region23: #{fused_forward.1} parent=5 // pred_region
        // Predicated region
        $region25: #{fused_forward.1} parent=23 // pred_check
          %p148 = pneg %p31
        $region26: #{fused_forward.1} parent=23 // pred_check_branch
          %150 = sbr.rel (%p148) target = $region28
        $region27: #{fused_forward.1} parent=23 // pred_region
          %p151 = scmp.lt.s32.totalorder %s11, 1
          %s152 = scalar_select %p151, %s11, 1
          %s153 = smul.addr %s152, 2
          %s154 = smul.addr %s153, 8
          %s155 = scalar_lea.vmem %s0, %s154
        $region28: #{fused_forward.1} parent=23 // pred_fallthru
          _
      $region24: #{fused_forward.1} parent=5 // pred_fallthru
        _
      %p156 = scmp.le.s32.totalorder 1, %s11
      %p157 = scmp.lt.s32.totalorder %s11, 3
      %p158 = pnand %p156, %p157
      %p159 = pneg %p158
      // Predicated region
      $region29: #{fused_forward.1} parent=5 // pred_check
        _
      $region30: #{fused_forward.1} parent=5 // pred_check_branch
        %161 = sbr.rel (%p158) target = $region32
      $region31: #{fused_forward.1} parent=5 // pred_region
        %s162 = ssub.s32 %s11, 1
        // Predicated region
        $region33: #{fused_forward.1} parent=31 // pred_check
          %p163 = pneg %p58
        $region34: #{fused_forward.1} parent=31 // pred_check_branch
          %165 = sbr.rel (%p163) target = $region36
        $region35: #{fused_forward.1} parent=31 // pred_region
          %166 = dma.done [#allocation3], 112640
        $region36: #{fused_forward.1} parent=31 // pred_fallthru
          _
        // Predicated region
        $region37: #{fused_forward.1} parent=31 // pred_check
          %p167 = pneg %p79
        $region38: #{fused_forward.1} parent=31 // pred_check_branch
          %169 = sbr.rel (%p167) target = $region40
        $region39: #{fused_forward.1} parent=31 // pred_region
          %170 = dma.done [#allocation5], 256
        $region40: #{fused_forward.1} parent=31 // pred_fallthru
          _
        %p171 = scmp.lt.s32.totalorder %s16, 1
        %s172 = scalar_select %p171, %s16, 1
        %s173 = smul.addr %s172, 2
        %s174 = smul.addr %s173, 8
        %s175 = scalar_lea.vmem %s0, %s174
        %p176 = pneg %p37
        %p177 = pneg %p34
        %p178 = pneg %p58
        %p179 = pneg %p55
        %p180 = pneg %p79
        %p181 = pneg %p76
        %p182 = pneg %p105
        %p183 = pneg %p102
        %p184 = scmp.lt.s32.totalorder %s16, 1
        %s185 = scalar_select %p184, %s16, 1
        %s186 = smul.addr %s185, 2
        %s187 = smul.addr %s186, 8
        %s188 = scalar_lea.vmem %s3, %s187
        %p189 = scmp.lt.s32.totalorder %s16, 1
        %s190 = scalar_select %p189, %s16, 1
        %s191 = smul.addr %s190, 2
        %s192 = smul.addr %s191, 8
        %s193 = scalar_lea.vmem %s0, %s192
        %p194 = scmp.lt.s32.totalorder %s16, 1
        %s195 = scalar_select %p194, %s16, 1
        %s196 = smul.addr %s195, 2
        %s197 = smul.addr %s196, 8
        %s198 = scalar_lea.vmem %s3, %s197
        %v200 = vld [vmem:[%s193] sm:$0xff]
        %v201 = vld [vmem:[%s193 + $0x8] sm:$0xff]
        %v202 = vpack.c.bf16 %v201, %v200
        %v204 = vshrl.u32 %v202, 16
        %v206 = vrot.slane %v204, 7
        %v207 = vshll.u32 %v202, 16
        %v209 = vor.u32 %v206, %v207
        %vm211 = vcmask 1040384
        %vm212 = vsmask.f32 256
        %vm213 = vmand %vm211, %vm212
        %v214 = vsel %vm213, %v202, %v209
        %v215 = vrot.slane %v207, 1
        %v216 = vor.u32 %v204, %v215
        %vm218 = vcmask 1047552
        %vm219 = vsmask.f32 7424
        %vm220 = vmand %vm218, %vm219
        %v221 = vsel %vm220, %v216, %v202
        %v222 = vld [vmem:[#allocation2] sm:$0xff]
        %v223 = vld [vmem:[#allocation2 + $0x8] sm:$0xff]
        %v224 = vld [vmem:[#allocation2 + $0x10] sm:$0xff]
        %v225 = vld [vmem:[#allocation2 + $0x18] sm:$0xff]
        %v226 = vld [vmem:[#allocation2 + $0x20] sm:$0xff]
        %v227 = vld [vmem:[#allocation2 + $0x28] sm:$0xff]
        %v228 = vld [vmem:[#allocation2 + $0x30] sm:$0xff]
        %v229 = vld [vmem:[#allocation2 + $0x38] sm:$0xff]
        %v230 = vld [vmem:[#allocation2 + $0x40] sm:$0xff]
        %v231 = vld [vmem:[#allocation2 + $0x48] sm:$0xff]
        %v232 = vld [vmem:[#allocation2 + $0x50] sm:$0xff]
        %v233 = vld [vmem:[#allocation2 + $0x58] sm:$0xff]
        %v234 = vld [vmem:[#allocation2 + $0x60] sm:$0xff]
        %v235 = vld [vmem:[#allocation2 + $0x68] sm:$0xff]
        %v236 = vld [vmem:[#allocation2 + $0x70] sm:$0xff]
        %v237 = vld [vmem:[#allocation2 + $0x78] sm:$0xff]
        %v238 = vld [vmem:[#allocation2 + $0x80] sm:$0xff]
        %v239 = vld [vmem:[#allocation2 + $0x88] sm:$0xff]
        %v240 = vld [vmem:[#allocation2 + $0x90] sm:$0xff]
        %v241 = vld [vmem:[#allocation2 + $0x98] sm:$0xff]
        %v242 = vld [vmem:[#allocation2 + $0xa0] sm:$0xff]
        %v243 = vld [vmem:[#allocation2 + $0xa8] sm:$0xff]
        %v244 = vld [vmem:[#allocation2 + $0xb0] sm:$0xff]
        %v245 = vld [vmem:[#allocation2 + $0xb8] sm:$0xff]
        %v246 = vld [vmem:[#allocation2 + $0xc0] sm:$0xff]
        %v247 = vld [vmem:[#allocation2 + $0xc8] sm:$0xff]
        %v248 = vld [vmem:[#allocation2 + $0xd0] sm:$0xff]
        %v249 = vld [vmem:[#allocation2 + $0xd8] sm:$0xff]
        %v250 = vld [vmem:[#allocation2 + $0xe0] sm:$0xff]
        %v251 = vld [vmem:[#allocation2 + $0xe8] sm:$0xff]
        %v252 = vld [vmem:[#allocation2 + $0xf0] sm:$0xff]
        %v253 = vld [vmem:[#allocation2 + $0xf8] sm:$0xff]
        %v254 = vld [vmem:[#allocation2 + $0x100] sm:$0xff]
        %v255 = vld [vmem:[#allocation2 + $0x108] sm:$0xff]
        %v256 = vld [vmem:[#allocation2 + $0x110] sm:$0xff]
        %v257 = vld [vmem:[#allocation2 + $0x118] sm:$0xff]
        %v258 = vld [vmem:[#allocation2 + $0x120] sm:$0xff]
        %v259 = vld [vmem:[#allocation2 + $0x128] sm:$0xff]
        %v260 = vld [vmem:[#allocation2 + $0x130] sm:$0xff]
        %v261 = vld [vmem:[#allocation2 + $0x138] sm:$0xff]
        %v262 = vld [vmem:[#allocation2 + $0x140] sm:$0xff]
        %v263 = vld [vmem:[#allocation2 + $0x148] sm:$0xff]
        %v264 = vld [vmem:[#allocation2 + $0x150] sm:$0xff]
        %v265 = vld [vmem:[#allocation2 + $0x158] sm:$0xff]
        %v266 = vld [vmem:[#allocation2 + $0x160] sm:$0xff]
        %v267 = vld [vmem:[#allocation2 + $0x168] sm:$0xff]
        %v268 = vld [vmem:[#allocation2 + $0x170] sm:$0xff]
        %v269 = vld [vmem:[#allocation2 + $0x178] sm:$0xff]
        %v270 = vld [vmem:[#allocation4] ss:$8 sm:$0x3]
        %v272 = vlaneseq
        %v273 = vshrl.u32 %v272, 7
        %v274 = vsub.s32 0, %v273
        %v275 = vrot.slane %v270, %v274
        %v276 = vlaneseq
        %v277 = vshrl.u32 %v276, 7
        %v278 = vsub.s32 1, %v277
        %v279 = vrot.slane %v270, %v278
        %v330 = vunpack.c.l.b16 %v222
        %v331 = vunpack.c.h.b16 %v222
        %v332 = vunpack.c.l.b16 %v223
        %v333 = vunpack.c.h.b16 %v223
        %v334 = vunpack.c.l.b16 %v224
        %v335 = vunpack.c.h.b16 %v224
        %v336 = vunpack.c.l.b16 %v225
        %v337 = vunpack.c.h.b16 %v225
        %v338 = vunpack.c.l.b16 %v226
        %v339 = vunpack.c.h.b16 %v226
        %v340 = vunpack.c.l.b16 %v227
        %v341 = vunpack.c.h.b16 %v227
        %v342 = vunpack.c.l.b16 %v228
        %v343 = vunpack.c.h.b16 %v228
        %v344 = vunpack.c.l.b16 %v229
        %v345 = vunpack.c.h.b16 %v229
        %v346 = vunpack.c.l.b16 %v230
        %v347 = vunpack.c.h.b16 %v230
        %v348 = vunpack.c.l.b16 %v231
        %v349 = vunpack.c.h.b16 %v231
        %v350 = vunpack.c.l.b16 %v232
        %v351 = vunpack.c.h.b16 %v232
        %v352 = vunpack.c.l.b16 %v233
        %v353 = vunpack.c.h.b16 %v233
        %v354 = vunpack.c.l.b16 %v234
        %v355 = vunpack.c.h.b16 %v234
        %v356 = vunpack.c.l.b16 %v235
        %v357 = vunpack.c.h.b16 %v235
        %v358 = vunpack.c.l.b16 %v236
        %v359 = vunpack.c.h.b16 %v236
        %v360 = vunpack.c.l.b16 %v237
        %v361 = vunpack.c.h.b16 %v237
        %v362 = vunpack.c.l.b16 %v238
        %v363 = vunpack.c.h.b16 %v238
        %v364 = vunpack.c.l.b16 %v239
        %v365 = vunpack.c.h.b16 %v239
        %v366 = vunpack.c.l.b16 %v240
        %v367 = vunpack.c.h.b16 %v240
        %v368 = vunpack.c.l.b16 %v241
        %v369 = vunpack.c.h.b16 %v241
        %v370 = vunpack.c.l.b16 %v242
        %v371 = vunpack.c.h.b16 %v242
        %v372 = vunpack.c.l.b16 %v243
        %v373 = vunpack.c.h.b16 %v243
        %v374 = vunpack.c.l.b16 %v244
        %v375 = vunpack.c.h.b16 %v244
        %v376 = vunpack.c.l.b16 %v245
        %v377 = vunpack.c.h.b16 %v245
        %v378 = vunpack.c.l.b16 %v246
        %v379 = vunpack.c.h.b16 %v246
        %v380 = vunpack.c.l.b16 %v247
        %v381 = vunpack.c.h.b16 %v247
        %v382 = vunpack.c.l.b16 %v248
        %v383 = vunpack.c.h.b16 %v248
        %v384 = vunpack.c.l.b16 %v249
        %v385 = vunpack.c.h.b16 %v249
        %v386 = vunpack.c.l.b16 %v250
        %v387 = vunpack.c.h.b16 %v250
        %v388 = vunpack.c.l.b16 %v251
        %v389 = vunpack.c.h.b16 %v251
        %v390 = vunpack.c.l.b16 %v252
        %v391 = vunpack.c.h.b16 %v252
        %v392 = vunpack.c.l.b16 %v253
        %v393 = vunpack.c.h.b16 %v253
        %v394 = vunpack.c.l.b16 %v254
        %v395 = vunpack.c.h.b16 %v254
        %v396 = vunpack.c.l.b16 %v255
        %v397 = vunpack.c.h.b16 %v255
        %v398 = vunpack.c.l.b16 %v256
        %v399 = vunpack.c.h.b16 %v256
        %v400 = vunpack.c.l.b16 %v257
        %v401 = vunpack.c.h.b16 %v257
        %v402 = vunpack.c.l.b16 %v258
        %v403 = vunpack.c.h.b16 %v258
        %v404 = vunpack.c.l.b16 %v259
        %v405 = vunpack.c.h.b16 %v259
        %v406 = vunpack.c.l.b16 %v260
        %v407 = vunpack.c.h.b16 %v260
        %v408 = vunpack.c.l.b16 %v261
        %v409 = vunpack.c.h.b16 %v261
        %v410 = vunpack.c.l.b16 %v262
        %v411 = vunpack.c.h.b16 %v262
        %v412 = vunpack.c.l.b16 %v263
        %v413 = vunpack.c.h.b16 %v263
        %v414 = vunpack.c.l.b16 %v264
        %v415 = vunpack.c.h.b16 %v264
        %v416 = vunpack.c.l.b16 %v265
        %v417 = vunpack.c.h.b16 %v265
        %v418 = vunpack.c.l.b16 %v266
        %v419 = vunpack.c.h.b16 %v266
        %v420 = vunpack.c.l.b16 %v267
        %v421 = vunpack.c.h.b16 %v267
        %v422 = vunpack.c.l.b16 %v268
        %v423 = vunpack.c.h.b16 %v268
        %v424 = vunpack.c.l.b16 %v269
        %v425 = vunpack.c.h.b16 %v269
        %v426 = vpack.c.b16 %v332, %v330
        %v427 = vpack.c.b16 %v333, %v331
        %v428 = vpack.c.b16 %v336, %v334
        %v429 = vpack.c.b16 %v337, %v335
        %v430 = vpack.c.b16 %v340, %v338
        %v431 = vpack.c.b16 %v341, %v339
        %v432 = vpack.c.b16 %v344, %v342
        %v433 = vpack.c.b16 %v345, %v343
        %v434 = vpack.c.b16 %v348, %v346
        %v435 = vpack.c.b16 %v349, %v347
        %v436 = vpack.c.b16 %v352, %v350
        %v437 = vpack.c.b16 %v353, %v351
        %v438 = vpack.c.b16 %v356, %v354
        %v439 = vpack.c.b16 %v357, %v355
        %v440 = vpack.c.b16 %v360, %v358
        %v441 = vpack.c.b16 %v361, %v359
        %v442 = vpack.c.b16 %v364, %v362
        %v443 = vpack.c.b16 %v365, %v363
        %v444 = vpack.c.b16 %v368, %v366
        %v445 = vpack.c.b16 %v369, %v367
        %v446 = vpack.c.b16 %v372, %v370
        %v447 = vpack.c.b16 %v373, %v371
        %v448 = vpack.c.b16 %v376, %v374
        %v449 = vpack.c.b16 %v377, %v375
        %v450 = vpack.c.b16 %v380, %v378
        %v451 = vpack.c.b16 %v381, %v379
        %v452 = vpack.c.b16 %v384, %v382
        %v453 = vpack.c.b16 %v385, %v383
        %v454 = vpack.c.b16 %v388, %v386
        %v455 = vpack.c.b16 %v389, %v387
        %v456 = vpack.c.b16 %v392, %v390
        %v457 = vpack.c.b16 %v393, %v391
        %v458 = vpack.c.b16 %v396, %v394
        %v459 = vpack.c.b16 %v397, %v395
        %v460 = vpack.c.b16 %v400, %v398
        %v461 = vpack.c.b16 %v401, %v399
        %v462 = vpack.c.b16 %v404, %v402
        %v463 = vpack.c.b16 %v405, %v403
        %v464 = vpack.c.b16 %v408, %v406
        %v465 = vpack.c.b16 %v409, %v407
        %v466 = vpack.c.b16 %v412, %v410
        %v467 = vpack.c.b16 %v413, %v411
        %v468 = vpack.c.b16 %v416, %v414
        %v469 = vpack.c.b16 %v417, %v415
        %v470 = vpack.c.b16 %v420, %v418
        %v471 = vpack.c.b16 %v421, %v419
        %v472 = vpack.c.b16 %v424, %v422
        %v473 = vpack.c.b16 %v425, %v423
        %522 = vmatprep.subr.bf16.mxu0 %v427
        %523 = vmatpush1.bf16.msra.mxu0 %v426
        %524 = vmatprep.subr.bf16.mxu0 %v429
        %525 = vmatpush1.bf16.msra.mxu0 %v428
        %526 = vmatprep.subr.bf16.mxu0 %v431
        %527 = vmatpush1.bf16.msra.mxu0 %v430
        %528 = vmatprep.subr.bf16.mxu0 %v433
        %529 = vmatpush1.bf16.msra.mxu0 %v432
        %530 = vmatprep.subr.bf16.mxu0 %v435
        %531 = vmatpush1.bf16.msra.mxu0 %v434
        %532 = vmatprep.subr.bf16.mxu0 %v437
        %533 = vmatpush1.bf16.msra.mxu0 %v436
        %534 = vmatprep.subr.bf16.mxu0 %v439
        %535 = vmatpush1.bf16.msra.mxu0 %v438
        %536 = vmatprep.subr.bf16.mxu0 %v441
        %537 = vmatpush1.bf16.msra.mxu0 %v440
        %538 = vmatprep.subr.bf16.mxu0 %v443
        %539 = vmatpush1.bf16.msra.mxu0 %v442
        %540 = vmatprep.subr.bf16.mxu0 %v445
        %541 = vmatpush1.bf16.msra.mxu0 %v444
        %542 = vmatprep.subr.bf16.mxu0 %v447
        %543 = vmatpush1.bf16.msra.mxu0 %v446
        %544 = vmatprep.subr.bf16.mxu0 %v449
        %545 = vmatpush1.bf16.msra.mxu0 %v448
        %546 = vmatprep.subr.bf16.mxu0 %v451
        %547 = vmatpush1.bf16.msra.mxu0 %v450
        %548 = vmatprep.subr.bf16.mxu0 %v453
        %549 = vmatpush1.bf16.msra.mxu0 %v452
        %550 = vmatprep.subr.bf16.mxu0 %v455
        %551 = vmatpush1.bf16.msra.mxu0 %v454
        %552 = vmatprep.subr.bf16.mxu0 %v457
        %553 = vmatpush1.bf16.msra.mxu0 %v456
        %554 = vmatprep.mubr.bf16.mxu0 %v202
        %555 = vmatmul.mubr.bf16.gmra.mrb[0].mxu0 %v214
        %v556 = vpop.f32.mrb[0].mxu0
        %v557 = vadd.f32 %v275, %v556
        %v558 = vpop.f32.mrb[0].mxu0
        %v559 = vadd.f32 %v279, %v558
        %v560 = vpop.f32.mrb[0].mxu0
        %v561 = vadd.f32 %v275, %v560
        %v562 = vpop.f32.mrb[0].mxu0
        %v563 = vadd.f32 %v279, %v562
        %564 = vdwg.mxu0
        %565 = vmatprep.subr.bf16.mxu0 %v459
        %566 = vmatpush1.bf16.msra.mxu0 %v458
        %567 = vmatprep.subr.bf16.mxu0 %v461
        %568 = vmatpush1.bf16.msra.mxu0 %v460
        %569 = vmatprep.subr.bf16.mxu0 %v463
        %570 = vmatpush1.bf16.msra.mxu0 %v462
        %571 = vmatprep.subr.bf16.mxu0 %v465
        %572 = vmatpush1.bf16.msra.mxu0 %v464
        %573 = vmatprep.subr.bf16.mxu0 %v467
        %574 = vmatpush1.bf16.msra.mxu0 %v466
        %575 = vmatprep.subr.bf16.mxu0 %v469
        %576 = vmatpush1.bf16.msra.mxu0 %v468
        %577 = vmatprep.subr.bf16.mxu0 %v471
        %578 = vmatpush1.bf16.msra.mxu0 %v470
        %579 = vmatprep.subr.bf16.mxu0 %v473
        %580 = vmatpush1.bf16.msra.mxu0 %v472
        %581 = vmatprep.subr.bf16.mxu0 0
        %582 = vmatpush1.bf16.msra.mxu0 0
        %583 = vmatprep.subr.bf16.mxu0 0
        %584 = vmatpush1.bf16.msra.mxu0 0
        %585 = vmatprep.subr.bf16.mxu0 0
        %586 = vmatpush1.bf16.msra.mxu0 0
        %587 = vmatprep.subr.bf16.mxu0 0
        %588 = vmatpush1.bf16.msra.mxu0 0
        %589 = vmatprep.subr.bf16.mxu0 0
        %590 = vmatpush1.bf16.msra.mxu0 0
        %591 = vmatprep.subr.bf16.mxu0 0
        %592 = vmatpush1.bf16.msra.mxu0 0
        %593 = vmatprep.subr.bf16.mxu0 0
        %594 = vmatpush1.bf16.msra.mxu0 0
        %595 = vmatprep.subr.bf16.mxu0 0
        %596 = vmatpush1.bf16.msra.mxu0 0
        %597 = vmatprep.mubr.bf16.mxu0 0
        %598 = vmatmul.mubr.bf16.gmra.mrb[0].mxu0 %v221
        %v599 = vpop.f32.mrb[0].mxu0
        %v600 = vadd.f32 %v557, %v599
        %v601 = vpop.f32.mrb[0].mxu0
        %v602 = vadd.f32 %v559, %v601
        %v603 = vpop.f32.mrb[0].mxu0
        %v604 = vadd.f32 %v561, %v603
        %v605 = vpop.f32.mrb[0].mxu0
        %v606 = vadd.f32 %v563, %v605
        %607 = vdwg.mxu0
        %vm608 = vcmp.ge.f32.partialorder %v600, 0.0
        %vm609 = vcmp.ge.f32.partialorder %v602, 0.0
        %vm610 = vcmp.ge.f32.partialorder %v604, 0.0
        %vm611 = vcmp.ge.f32.partialorder %v606, 0.0
        %v612 = vmul.f32 %v600, 0.01
        %v613 = vmul.f32 %v602, 0.01
        %v614 = vmul.f32 %v604, 0.01
        %v615 = vmul.f32 %v606, 0.01
        %v616 = vsel %vm608, %v600, %v612
        %v617 = vsel %vm609, %v602, %v613
        %v618 = vsel %vm610, %v604, %v614
        %v619 = vsel %vm611, %v606, %v615
        %v620 = vpack.c.bf16 %v618, %v616
        %v621 = vpack.c.bf16 %v619, %v617
        %v624 = vcombine.low %v620, %v621
        %v625 = vcombine.high %v620, %v621
        %v627 = vunpack.c.l.s4 1966171168
        %v628 = vunpack.c.0.s8 %v627
        %v629 = vlaneseq
        %v630 = vshrl.u32 %v629, 7
        %v631 = vsub.s32 %v628, %v630
        %v632 = vrot.slane %v624, %v631
        %v634 = vunpack.c.l.s4 1966171168
        %v635 = vunpack.c.0.s8 %v634
        %v636 = vlaneseq
        %v637 = vshrl.u32 %v636, 7
        %v638 = vsub.s32 %v635, %v637
        %v639 = vrot.slane %v625, %v638
        %v640 = vcombine.high %v632, %v632
        %v641 = vcombine.high %v639, %v639
        %v643 = vunpack.c.l.s4 1966171168
        %v644 = vunpack.c.0.s8 %v643
        %v645 = vlaneseq
        %v646 = vshrl.u32 %v645, 7
        %v647 = vsub.s32 %v644, %v646
        %v648 = vrot.slane %v632, %v647
        %v650 = vunpack.c.l.s4 1966171168
        %v651 = vunpack.c.0.s8 %v650
        %v652 = vlaneseq
        %v653 = vshrl.u32 %v652, 7
        %v654 = vsub.s32 %v651, %v653
        %v655 = vrot.slane %v639, %v654
        %v657 = vunpack.c.l.s4 1966171168
        %v658 = vunpack.c.0.s8 %v657
        %v659 = vlaneseq
        %v660 = vshrl.u32 %v659, 7
        %v661 = vsub.s32 %v658, %v660
        %v662 = vrot.slane %v640, %v661
        %v664 = vunpack.c.l.s4 1966171168
        %v665 = vunpack.c.0.s8 %v664
        %v666 = vlaneseq
        %v667 = vshrl.u32 %v666, 7
        %v668 = vsub.s32 %v665, %v667
        %v669 = vrot.slane %v641, %v668
        %v670 = vcombine.high %v648, %v648
        %v671 = vcombine.high %v655, %v655
        %v672 = vcombine.high %v662, %v662
        %v673 = vcombine.high %v669, %v669
        %v675 = vunpack.c.l.s4 1966171168
        %v676 = vunpack.c.0.s8 %v675
        %v677 = vlaneseq
        %v678 = vshrl.u32 %v677, 7
        %v679 = vsub.s32 %v676, %v678
        %v680 = vrot.slane %v648, %v679
        %v681 = vcombine.high %v680, %v680
        %v683 = vunpack.c.l.s4 1966171168
        %v684 = vunpack.c.0.s8 %v683
        %v685 = vlaneseq
        %v686 = vshrl.u32 %v685, 7
        %v687 = vsub.s32 %v684, %v686
        %v688 = vrot.slane %v680, %v687
        %v690 = vunpack.c.l.s4 1966171168
        %v691 = vunpack.c.0.s8 %v690
        %v692 = vlaneseq
        %v693 = vshrl.u32 %v692, 7
        %v694 = vsub.s32 %v691, %v693
        %v695 = vrot.slane %v681, %v694
        %v697 = vunpack.c.l.s4 1966171168
        %v698 = vunpack.c.0.s8 %v697
        %v699 = vlaneseq
        %v700 = vshrl.u32 %v699, 7
        %v701 = vsub.s32 %v698, %v700
        %v702 = vrot.slane %v662, %v701
        %v703 = vcombine.high %v702, %v702
        %v705 = vunpack.c.l.s4 1966171168
        %v706 = vunpack.c.0.s8 %v705
        %v707 = vlaneseq
        %v708 = vshrl.u32 %v707, 7
        %v709 = vsub.s32 %v706, %v708
        %v710 = vrot.slane %v702, %v709
        %v712 = vunpack.c.l.s4 1966171168
        %v713 = vunpack.c.0.s8 %v712
        %v714 = vlaneseq
        %v715 = vshrl.u32 %v714, 7
        %v716 = vsub.s32 %v713, %v715
        %v717 = vrot.slane %v703, %v716
        %v719 = vunpack.c.l.s4 1966171168
        %v720 = vunpack.c.0.s8 %v719
        %v721 = vlaneseq
        %v722 = vshrl.u32 %v721, 7
        %v723 = vsub.s32 %v720, %v722
        %v724 = vrot.slane %v670, %v723
        %v725 = vcombine.high %v724, %v724
        %v727 = vunpack.c.l.s4 1966171168
        %v728 = vunpack.c.0.s8 %v727
        %v729 = vlaneseq
        %v730 = vshrl.u32 %v729, 7
        %v731 = vsub.s32 %v728, %v730
        %v732 = vrot.slane %v724, %v731
        %v734 = vunpack.c.l.s4 1966171168
        %v735 = vunpack.c.0.s8 %v734
        %v736 = vlaneseq
        %v737 = vshrl.u32 %v736, 7
        %v738 = vsub.s32 %v735, %v737
        %v739 = vrot.slane %v725, %v738
        %v741 = vunpack.c.l.s4 1966171168
        %v742 = vunpack.c.0.s8 %v741
        %v743 = vlaneseq
        %v744 = vshrl.u32 %v743, 7
        %v745 = vsub.s32 %v742, %v744
        %v746 = vrot.slane %v672, %v745
        %v747 = vcombine.high %v746, %v746
        %v749 = vunpack.c.l.s4 1966171168
        %v750 = vunpack.c.0.s8 %v749
        %v751 = vlaneseq
        %v752 = vshrl.u32 %v751, 7
        %v753 = vsub.s32 %v750, %v752
        %v754 = vrot.slane %v746, %v753
        %v756 = vunpack.c.l.s4 1966171168
        %v757 = vunpack.c.0.s8 %v756
        %v758 = vlaneseq
        %v759 = vshrl.u32 %v758, 7
        %v760 = vsub.s32 %v757, %v759
        %v761 = vrot.slane %v747, %v760
        %v763 = vunpack.c.l.s4 1966171168
        %v764 = vunpack.c.0.s8 %v763
        %v765 = vlaneseq
        %v766 = vshrl.u32 %v765, 7
        %v767 = vsub.s32 %v764, %v766
        %v768 = vrot.slane %v655, %v767
        %v769 = vcombine.high %v768, %v768
        %v771 = vunpack.c.l.s4 1966171168
        %v772 = vunpack.c.0.s8 %v771
        %v773 = vlaneseq
        %v774 = vshrl.u32 %v773, 7
        %v775 = vsub.s32 %v772, %v774
        %v776 = vrot.slane %v768, %v775
        %v778 = vunpack.c.l.s4 1966171168
        %v779 = vunpack.c.0.s8 %v778
        %v780 = vlaneseq
        %v781 = vshrl.u32 %v780, 7
        %v782 = vsub.s32 %v779, %v781
        %v783 = vrot.slane %v769, %v782
        %v785 = vunpack.c.l.s4 1966171168
        %v786 = vunpack.c.0.s8 %v785
        %v787 = vlaneseq
        %v788 = vshrl.u32 %v787, 7
        %v789 = vsub.s32 %v786, %v788
        %v790 = vrot.slane %v669, %v789
        %v791 = vcombine.high %v790, %v790
        %v793 = vunpack.c.l.s4 1966171168
        %v794 = vunpack.c.0.s8 %v793
        %v795 = vlaneseq
        %v796 = vshrl.u32 %v795, 7
        %v797 = vsub.s32 %v794, %v796
        %v798 = vrot.slane %v790, %v797
        %v800 = vunpack.c.l.s4 1966171168
        %v801 = vunpack.c.0.s8 %v800
        %v802 = vlaneseq
        %v803 = vshrl.u32 %v802, 7
        %v804 = vsub.s32 %v801, %v803
        %v805 = vrot.slane %v791, %v804
        %v807 = vunpack.c.l.s4 1966171168
        %v808 = vunpack.c.0.s8 %v807
        %v809 = vlaneseq
        %v810 = vshrl.u32 %v809, 7
        %v811 = vsub.s32 %v808, %v810
        %v812 = vrot.slane %v671, %v811
        %v813 = vcombine.high %v812, %v812
        %v815 = vunpack.c.l.s4 1966171168
        %v816 = vunpack.c.0.s8 %v815
        %v817 = vlaneseq
        %v818 = vshrl.u32 %v817, 7
        %v819 = vsub.s32 %v816, %v818
        %v820 = vrot.slane %v812, %v819
        %v822 = vunpack.c.l.s4 1966171168
        %v823 = vunpack.c.0.s8 %v822
        %v824 = vlaneseq
        %v825 = vshrl.u32 %v824, 7
        %v826 = vsub.s32 %v823, %v825
        %v827 = vrot.slane %v813, %v826
        %v828 = vunpack.c.l.b16 %v688
        %v829 = vunpack.c.l.b16 %v695
        %v830 = vunpack.c.l.b16 %v710
        %v831 = vunpack.c.l.b16 %v717
        %v832 = vunpack.c.l.b16 %v732
        %v833 = vunpack.c.l.b16 %v739
        %v834 = vunpack.c.l.b16 %v754
        %v835 = vunpack.c.l.b16 %v761
        %v836 = vunpack.c.l.b16 %v776
        %v837 = vunpack.c.l.b16 %v783
        %v838 = vunpack.c.l.b16 %v798
        %v839 = vunpack.c.l.b16 %v805
        %v840 = vunpack.c.l.b16 %v820
        %v841 = vunpack.c.l.b16 %v827
        %v842 = vrot.slane %v830, 7
        %vm843 = vcmask 1042434
        %v844 = vsel %vm843, %v842, %v828
        %v845 = vrot.slane %v832, 6
        %vm846 = vcmask 1043459
        %v847 = vsel %vm846, %v845, %v844
        %v848 = vrot.slane %v834, 5
        %vm849 = vcmask 1044484
        %v850 = vsel %vm849, %v848, %v847
        %v851 = vrot.slane %v836, 4
        %vm852 = vcmask 1045509
        %v853 = vsel %vm852, %v851, %v850
        %v854 = vrot.slane %v838, 3
        %vm855 = vcmask 1046534
        %v856 = vsel %vm855, %v854, %v853
        %v857 = vrot.slane %v840, 2
        %vm858 = vcmask 1047559
        %v859 = vsel %vm858, %v857, %v856
        %v860 = vrot.slane %v831, 7
        %v861 = vsel %vm843, %v860, %v829
        %v862 = vrot.slane %v833, 6
        %v863 = vsel %vm846, %v862, %v861
        %v864 = vrot.slane %v835, 5
        %v865 = vsel %vm849, %v864, %v863
        %v866 = vrot.slane %v837, 4
        %v867 = vsel %vm852, %v866, %v865
        %v868 = vrot.slane %v839, 3
        %v869 = vsel %vm855, %v868, %v867
        %v870 = vrot.slane %v841, 2
        %v871 = vsel %vm858, %v870, %v869
        %v872 = vpack.c.b16 %v859, %v859
        %v873 = vpack.c.b16 %v871, %v871
        %v876 = vsel %vm213, %v620, %v872
        %v877 = vsel %vm213, %v621, %v873
        %v879 = vunpack.c.l.s4 1966171168
        %v880 = vunpack.c.0.s8 %v879
        %v881 = vlaneseq
        %v882 = vshrl.u32 %v881, 7
        %v883 = vsub.s32 %v880, %v882
        %v884 = vrot.slane %v673, %v883
        %v885 = vcombine.high %v884, %v884
        %v887 = vunpack.c.l.s4 1966171168
        %v888 = vunpack.c.0.s8 %v887
        %v889 = vlaneseq
        %v890 = vshrl.u32 %v889, 7
        %v891 = vsub.s32 %v888, %v890
        %v892 = vrot.slane %v884, %v891
        %v894 = vunpack.c.l.s4 1966171168
        %v895 = vunpack.c.0.s8 %v894
        %v896 = vlaneseq
        %v897 = vshrl.u32 %v896, 7
        %v898 = vsub.s32 %v895, %v897
        %v899 = vrot.slane %v885, %v898
        %v900 = vunpack.c.l.b16 %v892
        %v901 = vunpack.c.l.b16 %v899
        %vm902 = vcmask 1041409
        %v903 = vsel %vm902, %v842, %v828
        %v904 = vsel %vm843, %v845, %v903
        %v905 = vsel %vm846, %v848, %v904
        %v906 = vsel %vm849, %v851, %v905
        %v907 = vsel %vm852, %v854, %v906
        %v908 = vsel %vm855, %v857, %v907
        %v909 = vrot.slane %v900, 1
        %v910 = vsel %vm858, %v909, %v908
        %v911 = vsel %vm902, %v860, %v829
        %v912 = vsel %vm843, %v862, %v911
        %v913 = vsel %vm846, %v864, %v912
        %v914 = vsel %vm849, %v866, %v913
        %v915 = vsel %vm852, %v868, %v914
        %v916 = vsel %vm855, %v870, %v915
        %v917 = vrot.slane %v901, 1
        %v918 = vsel %vm858, %v917, %v916
        %v919 = vpack.c.b16 %v910, %v910
        %v920 = vpack.c.b16 %v918, %v918
        %v923 = vrot.slane %v828, 1
        %v924 = vsel %vm902, %v830, %v923
        %v925 = vrot.slane %v832, 7
        %v926 = vsel %vm843, %v925, %v924
        %v927 = vrot.slane %v834, 6
        %v928 = vsel %vm846, %v927, %v926
        %v929 = vrot.slane %v836, 5
        %v930 = vsel %vm849, %v929, %v928
        %v931 = vrot.slane %v838, 4
        %v932 = vsel %vm852, %v931, %v930
        %v933 = vrot.slane %v840, 3
        %v934 = vsel %vm855, %v933, %v932
        %v935 = vrot.slane %v900, 2
        %v936 = vsel %vm858, %v935, %v934
        %v937 = vrot.slane %v829, 1
        %v938 = vsel %vm902, %v831, %v937
        %v939 = vrot.slane %v833, 7
        %v940 = vsel %vm843, %v939, %v938
        %v941 = vrot.slane %v835, 6
        %v942 = vsel %vm846, %v941, %v940
        %v943 = vrot.slane %v837, 5
        %v944 = vsel %vm849, %v943, %v942
        %v945 = vrot.slane %v839, 4
        %v946 = vsel %vm852, %v945, %v944
        %v947 = vrot.slane %v841, 3
        %v948 = vsel %vm855, %v947, %v946
        %v949 = vrot.slane %v901, 2
        %v950 = vsel %vm858, %v949, %v948
        %v951 = vpack.c.b16 %v936, %v936
        %v952 = vpack.c.b16 %v950, %v950
        %v955 = vld [vmem:[#allocation2 + $0x180] sm:$0xff]
        %v956 = vld [vmem:[#allocation2 + $0x188] sm:$0xff]
        %v957 = vld [vmem:[#allocation2 + $0x190] sm:$0xff]
        %v958 = vld [vmem:[#allocation2 + $0x198] sm:$0xff]
        %v959 = vld [vmem:[#allocation2 + $0x1a0] sm:$0xff]
        %v960 = vld [vmem:[#allocation2 + $0x1a8] sm:$0xff]
        %v961 = vld [vmem:[#allocation2 + $0x1b0] sm:$0xff]
        %v962 = vld [vmem:[#allocation2 + $0x1b8] sm:$0xff]
        %v963 = vld [vmem:[#allocation2 + $0x1c0] sm:$0xff]
        %v964 = vld [vmem:[#allocation2 + $0x1c8] sm:$0xff]
        %v965 = vld [vmem:[#allocation2 + $0x1d0] sm:$0xff]
        %v966 = vld [vmem:[#allocation2 + $0x1d8] sm:$0xff]
        %v967 = vld [vmem:[#allocation2 + $0x1e0] sm:$0xff]
        %v968 = vld [vmem:[#allocation2 + $0x1e8] sm:$0xff]
        %v969 = vld [vmem:[#allocation2 + $0x1f0] sm:$0xff]
        %v970 = vld [vmem:[#allocation2 + $0x1f8] sm:$0xff]
        %v971 = vld [vmem:[#allocation2 + $0x200] sm:$0xff]
        %v972 = vld [vmem:[#allocation2 + $0x208] sm:$0xff]
        %v973 = vld [vmem:[#allocation2 + $0x210] sm:$0xff]
        %v974 = vld [vmem:[#allocation2 + $0x218] sm:$0xff]
        %v975 = vld [vmem:[#allocation2 + $0x220] sm:$0xff]
        %v976 = vld [vmem:[#allocation2 + $0x228] sm:$0xff]
        %v977 = vld [vmem:[#allocation2 + $0x230] sm:$0xff]
        %v978 = vld [vmem:[#allocation2 + $0x238] sm:$0xff]
        %v979 = vld [vmem:[#allocation2 + $0x240] sm:$0xff]
        %v980 = vld [vmem:[#allocation2 + $0x248] sm:$0xff]
        %v981 = vld [vmem:[#allocation2 + $0x250] sm:$0xff]
        %v982 = vld [vmem:[#allocation2 + $0x258] sm:$0xff]
        %v983 = vld [vmem:[#allocation2 + $0x260] sm:$0xff]
        %v984 = vld [vmem:[#allocation2 + $0x268] sm:$0xff]
        %v985 = vld [vmem:[#allocation2 + $0x270] sm:$0xff]
        %v986 = vld [vmem:[#allocation2 + $0x278] sm:$0xff]
        %v987 = vld [vmem:[#allocation2 + $0x280] sm:$0xff]
        %v988 = vld [vmem:[#allocation2 + $0x288] sm:$0xff]
        %v989 = vld [vmem:[#allocation2 + $0x290] sm:$0xff]
        %v990 = vld [vmem:[#allocation2 + $0x298] sm:$0xff]
        %v991 = vld [vmem:[#allocation2 + $0x2a0] sm:$0xff]
        %v992 = vld [vmem:[#allocation2 + $0x2a8] sm:$0xff]
        %v993 = vld [vmem:[#allocation2 + $0x2b0] sm:$0xff]
        %v994 = vld [vmem:[#allocation2 + $0x2b8] sm:$0xff]
        %v995 = vld [vmem:[#allocation2 + $0x2c0] sm:$0xff]
        %v996 = vld [vmem:[#allocation2 + $0x2c8] sm:$0xff]
        %v997 = vld [vmem:[#allocation2 + $0x2d0] sm:$0xff]
        %v998 = vld [vmem:[#allocation2 + $0x2d8] sm:$0xff]
        %v999 = vld [vmem:[#allocation2 + $0x2e0] sm:$0xff]
        %v1000 = vld [vmem:[#allocation2 + $0x2e8] sm:$0xff]
        %v1001 = vld [vmem:[#allocation2 + $0x2f0] sm:$0xff]
        %v1002 = vld [vmem:[#allocation2 + $0x2f8] sm:$0xff]
        %v1003 = vld [vmem:[#allocation2 + $0x300] sm:$0xff]
        %v1004 = vld [vmem:[#allocation2 + $0x308] sm:$0xff]
        %v1005 = vld [vmem:[#allocation2 + $0x310] sm:$0xff]
        %v1006 = vld [vmem:[#allocation2 + $0x318] sm:$0xff]
        %v1007 = vld [vmem:[#allocation2 + $0x320] sm:$0xff]
        %v1008 = vld [vmem:[#allocation2 + $0x328] sm:$0xff]
        %v1009 = vld [vmem:[#allocation2 + $0x330] sm:$0xff]
        %v1010 = vld [vmem:[#allocation2 + $0x338] sm:$0xff]
        %v1011 = vld [vmem:[#allocation2 + $0x340] sm:$0xff]
        %v1012 = vld [vmem:[#allocation2 + $0x348] sm:$0xff]
        %v1013 = vld [vmem:[#allocation2 + $0x350] sm:$0xff]
        %v1014 = vld [vmem:[#allocation2 + $0x358] sm:$0xff]
        %v1015 = vld [vmem:[#allocation2 + $0x360] sm:$0xff]
        %v1016 = vld [vmem:[#allocation2 + $0x368] sm:$0xff]
        %v1017 = vld [vmem:[#allocation2 + $0x370] sm:$0xff]
        %v1018 = vld [vmem:[#allocation2 + $0x378] sm:$0xff]
        %v1019 = vld [vmem:[#allocation2 + $0x380] sm:$0xff]
        %v1020 = vld [vmem:[#allocation2 + $0x388] sm:$0xff]
        %v1021 = vld [vmem:[#allocation2 + $0x390] sm:$0xff]
        %v1022 = vld [vmem:[#allocation2 + $0x398] sm:$0xff]
        %v1023 = vld [vmem:[#allocation2 + $0x3a0] sm:$0xff]
        %v1024 = vld [vmem:[#allocation2 + $0x3a8] sm:$0xff]
        %v1025 = vld [vmem:[#allocation2 + $0x3b0] sm:$0xff]
        %v1026 = vld [vmem:[#allocation2 + $0x3b8] sm:$0xff]
        %v1027 = vld [vmem:[#allocation2 + $0x3c0] sm:$0xff]
        %v1028 = vld [vmem:[#allocation2 + $0x3c8] sm:$0xff]
        %v1029 = vld [vmem:[#allocation2 + $0x3d0] sm:$0xff]
        %v1030 = vld [vmem:[#allocation2 + $0x3d8] sm:$0xff]
        %v1031 = vld [vmem:[#allocation2 + $0x3e0] sm:$0xff]
        %v1032 = vld [vmem:[#allocation2 + $0x3e8] sm:$0xff]
        %v1033 = vld [vmem:[#allocation2 + $0x3f0] sm:$0xff]
        %v1034 = vld [vmem:[#allocation2 + $0x3f8] sm:$0xff]
        %v1035 = vld [vmem:[#allocation2 + $0x400] sm:$0xff]
        %v1036 = vld [vmem:[#allocation2 + $0x408] sm:$0xff]
        %v1037 = vld [vmem:[#allocation2 + $0x410] sm:$0xff]
        %v1038 = vld [vmem:[#allocation2 + $0x418] sm:$0xff]
        %v1039 = vld [vmem:[#allocation2 + $0x420] sm:$0xff]
        %v1040 = vld [vmem:[#allocation2 + $0x428] sm:$0xff]
        %v1041 = vld [vmem:[#allocation2 + $0x430] sm:$0xff]
        %v1042 = vld [vmem:[#allocation2 + $0x438] sm:$0xff]
        %v1043 = vld [vmem:[#allocation2 + $0x440] sm:$0xff]
        %v1044 = vld [vmem:[#allocation2 + $0x448] sm:$0xff]
        %v1045 = vld [vmem:[#allocation2 + $0x450] sm:$0xff]
        %v1046 = vld [vmem:[#allocation2 + $0x458] sm:$0xff]
        %v1047 = vld [vmem:[#allocation2 + $0x460] sm:$0xff]
        %v1048 = vld [vmem:[#allocation2 + $0x468] sm:$0xff]
        %v1049 = vld [vmem:[#allocation2 + $0x470] sm:$0xff]
        %v1050 = vld [vmem:[#allocation2 + $0x478] sm:$0xff]
        %s1051 = scalar_lea.vmem [#allocation4], 1
        %v1052 = vld [vmem:[%s1051] ss:$8 sm:$0x3]
        %v1054 = vlaneseq
        %v1055 = vshrl.u32 %v1054, 7
        %v1056 = vsub.s32 0, %v1055
        %v1057 = vrot.slane %v1052, %v1056
        %v1058 = vlaneseq
        %v1059 = vshrl.u32 %v1058, 7
        %v1060 = vsub.s32 1, %v1059
        %v1061 = vrot.slane %v1052, %v1060
        %v1160 = vunpack.c.l.b16 %v955
        %v1161 = vunpack.c.h.b16 %v955
        %v1162 = vunpack.c.l.b16 %v956
        %v1163 = vunpack.c.h.b16 %v956
        %v1164 = vunpack.c.l.b16 %v957
        %v1165 = vunpack.c.h.b16 %v957
        %v1166 = vunpack.c.l.b16 %v958
        %v1167 = vunpack.c.h.b16 %v958
        %v1168 = vunpack.c.l.b16 %v959
        %v1169 = vunpack.c.h.b16 %v959
        %v1170 = vunpack.c.l.b16 %v960
        %v1171 = vunpack.c.h.b16 %v960
        %v1172 = vunpack.c.l.b16 %v961
        %v1173 = vunpack.c.h.b16 %v961
        %v1174 = vunpack.c.l.b16 %v962
        %v1175 = vunpack.c.h.b16 %v962
        %v1176 = vunpack.c.l.b16 %v963
        %v1177 = vunpack.c.h.b16 %v963
        %v1178 = vunpack.c.l.b16 %v964
        %v1179 = vunpack.c.h.b16 %v964
        %v1180 = vunpack.c.l.b16 %v965
        %v1181 = vunpack.c.h.b16 %v965
        %v1182 = vunpack.c.l.b16 %v966
        %v1183 = vunpack.c.h.b16 %v966
        %v1184 = vunpack.c.l.b16 %v967
        %v1185 = vunpack.c.h.b16 %v967
        %v1186 = vunpack.c.l.b16 %v968
        %v1187 = vunpack.c.h.b16 %v968
        %v1188 = vunpack.c.l.b16 %v969
        %v1189 = vunpack.c.h.b16 %v969
        %v1190 = vunpack.c.l.b16 %v970
        %v1191 = vunpack.c.h.b16 %v970
        %v1192 = vunpack.c.l.b16 %v971
        %v1193 = vunpack.c.h.b16 %v971
        %v1194 = vunpack.c.l.b16 %v972
        %v1195 = vunpack.c.h.b16 %v972
        %v1196 = vunpack.c.l.b16 %v973
        %v1197 = vunpack.c.h.b16 %v973
        %v1198 = vunpack.c.l.b16 %v974
        %v1199 = vunpack.c.h.b16 %v974
        %v1200 = vunpack.c.l.b16 %v975
        %v1201 = vunpack.c.h.b16 %v975
        %v1202 = vunpack.c.l.b16 %v976
        %v1203 = vunpack.c.h.b16 %v976
        %v1204 = vunpack.c.l.b16 %v977
        %v1205 = vunpack.c.h.b16 %v977
        %v1206 = vunpack.c.l.b16 %v978
        %v1207 = vunpack.c.h.b16 %v978
        %v1208 = vunpack.c.l.b16 %v979
        %v1209 = vunpack.c.h.b16 %v979
        %v1210 = vunpack.c.l.b16 %v980
        %v1211 = vunpack.c.h.b16 %v980
        %v1212 = vunpack.c.l.b16 %v981
        %v1213 = vunpack.c.h.b16 %v981
        %v1214 = vunpack.c.l.b16 %v982
        %v1215 = vunpack.c.h.b16 %v982
        %v1216 = vunpack.c.l.b16 %v983
        %v1217 = vunpack.c.h.b16 %v983
        %v1218 = vunpack.c.l.b16 %v984
        %v1219 = vunpack.c.h.b16 %v984
        %v1220 = vunpack.c.l.b16 %v985
        %v1221 = vunpack.c.h.b16 %v985
        %v1222 = vunpack.c.l.b16 %v986
        %v1223 = vunpack.c.h.b16 %v986
        %v1224 = vunpack.c.l.b16 %v987
        %v1225 = vunpack.c.h.b16 %v987
        %v1226 = vunpack.c.l.b16 %v988
        %v1227 = vunpack.c.h.b16 %v988
        %v1228 = vunpack.c.l.b16 %v989
        %v1229 = vunpack.c.h.b16 %v989
        %v1230 = vunpack.c.l.b16 %v990
        %v1231 = vunpack.c.h.b16 %v990
        %v1232 = vunpack.c.l.b16 %v991
        %v1233 = vunpack.c.h.b16 %v991
        %v1234 = vunpack.c.l.b16 %v992
        %v1235 = vunpack.c.h.b16 %v992
        %v1236 = vunpack.c.l.b16 %v993
        %v1237 = vunpack.c.h.b16 %v993
        %v1238 = vunpack.c.l.b16 %v994
        %v1239 = vunpack.c.h.b16 %v994
        %v1240 = vunpack.c.l.b16 %v995
        %v1241 = vunpack.c.h.b16 %v995
        %v1242 = vunpack.c.l.b16 %v996
        %v1243 = vunpack.c.h.b16 %v996
        %v1244 = vunpack.c.l.b16 %v997
        %v1245 = vunpack.c.h.b16 %v997
        %v1246 = vunpack.c.l.b16 %v998
        %v1247 = vunpack.c.h.b16 %v998
        %v1248 = vunpack.c.l.b16 %v999
        %v1249 = vunpack.c.h.b16 %v999
        %v1250 = vunpack.c.l.b16 %v1000
        %v1251 = vunpack.c.h.b16 %v1000
        %v1252 = vunpack.c.l.b16 %v1001
        %v1253 = vunpack.c.h.b16 %v1001
        %v1254 = vunpack.c.l.b16 %v1002
        %v1255 = vunpack.c.h.b16 %v1002
        %v1256 = vunpack.c.l.b16 %v1003
        %v1257 = vunpack.c.h.b16 %v1003
        %v1258 = vunpack.c.l.b16 %v1004
        %v1259 = vunpack.c.h.b16 %v1004
        %v1260 = vunpack.c.l.b16 %v1005
        %v1261 = vunpack.c.h.b16 %v1005
        %v1262 = vunpack.c.l.b16 %v1006
        %v1263 = vunpack.c.h.b16 %v1006
        %v1264 = vunpack.c.l.b16 %v1007
        %v1265 = vunpack.c.h.b16 %v1007
        %v1266 = vunpack.c.l.b16 %v1008
        %v1267 = vunpack.c.h.b16 %v1008
        %v1268 = vunpack.c.l.b16 %v1009
        %v1269 = vunpack.c.h.b16 %v1009
        %v1270 = vunpack.c.l.b16 %v1010
        %v1271 = vunpack.c.h.b16 %v1010
        %v1272 = vunpack.c.l.b16 %v1011
        %v1273 = vunpack.c.h.b16 %v1011
        %v1274 = vunpack.c.l.b16 %v1012
        %v1275 = vunpack.c.h.b16 %v1012
        %v1276 = vunpack.c.l.b16 %v1013
        %v1277 = vunpack.c.h.b16 %v1013
        %v1278 = vunpack.c.l.b16 %v1014
        %v1279 = vunpack.c.h.b16 %v1014
        %v1280 = vunpack.c.l.b16 %v1015
        %v1281 = vunpack.c.h.b16 %v1015
        %v1282 = vunpack.c.l.b16 %v1016
        %v1283 = vunpack.c.h.b16 %v1016
        %v1284 = vunpack.c.l.b16 %v1017
        %v1285 = vunpack.c.h.b16 %v1017
        %v1286 = vunpack.c.l.b16 %v1018
        %v1287 = vunpack.c.h.b16 %v1018
        %v1288 = vunpack.c.l.b16 %v1019
        %v1289 = vunpack.c.h.b16 %v1019
        %v1290 = vunpack.c.l.b16 %v1020
        %v1291 = vunpack.c.h.b16 %v1020
        %v1292 = vunpack.c.l.b16 %v1021
        %v1293 = vunpack.c.h.b16 %v1021
        %v1294 = vunpack.c.l.b16 %v1022
        %v1295 = vunpack.c.h.b16 %v1022
        %v1296 = vunpack.c.l.b16 %v1023
        %v1297 = vunpack.c.h.b16 %v1023
        %v1298 = vunpack.c.l.b16 %v1024
        %v1299 = vunpack.c.h.b16 %v1024
        %v1300 = vunpack.c.l.b16 %v1025
        %v1301 = vunpack.c.h.b16 %v1025
        %v1302 = vunpack.c.l.b16 %v1026
        %v1303 = vunpack.c.h.b16 %v1026
        %v1304 = vunpack.c.l.b16 %v1027
        %v1305 = vunpack.c.h.b16 %v1027
        %v1306 = vunpack.c.l.b16 %v1028
        %v1307 = vunpack.c.h.b16 %v1028
        %v1308 = vunpack.c.l.b16 %v1029
        %v1309 = vunpack.c.h.b16 %v1029
        %v1310 = vunpack.c.l.b16 %v1030
        %v1311 = vunpack.c.h.b16 %v1030
        %v1312 = vunpack.c.l.b16 %v1031
        %v1313 = vunpack.c.h.b16 %v1031
        %v1314 = vunpack.c.l.b16 %v1032
        %v1315 = vunpack.c.h.b16 %v1032
        %v1316 = vunpack.c.l.b16 %v1033
        %v1317 = vunpack.c.h.b16 %v1033
        %v1318 = vunpack.c.l.b16 %v1034
        %v1319 = vunpack.c.h.b16 %v1034
        %v1320 = vunpack.c.l.b16 %v1035
        %v1321 = vunpack.c.h.b16 %v1035
        %v1322 = vunpack.c.l.b16 %v1036
        %v1323 = vunpack.c.h.b16 %v1036
        %v1324 = vunpack.c.l.b16 %v1037
        %v1325 = vunpack.c.h.b16 %v1037
        %v1326 = vunpack.c.l.b16 %v1038
        %v1327 = vunpack.c.h.b16 %v1038
        %v1328 = vunpack.c.l.b16 %v1039
        %v1329 = vunpack.c.h.b16 %v1039
        %v1330 = vunpack.c.l.b16 %v1040
        %v1331 = vunpack.c.h.b16 %v1040
        %v1332 = vunpack.c.l.b16 %v1041
        %v1333 = vunpack.c.h.b16 %v1041
        %v1334 = vunpack.c.l.b16 %v1042
        %v1335 = vunpack.c.h.b16 %v1042
        %v1336 = vunpack.c.l.b16 %v1043
        %v1337 = vunpack.c.h.b16 %v1043
        %v1338 = vunpack.c.l.b16 %v1044
        %v1339 = vunpack.c.h.b16 %v1044
        %v1340 = vunpack.c.l.b16 %v1045
        %v1341 = vunpack.c.h.b16 %v1045
        %v1342 = vunpack.c.l.b16 %v1046
        %v1343 = vunpack.c.h.b16 %v1046
        %v1344 = vunpack.c.l.b16 %v1047
        %v1345 = vunpack.c.h.b16 %v1047
        %v1346 = vunpack.c.l.b16 %v1048
        %v1347 = vunpack.c.h.b16 %v1048
        %v1348 = vunpack.c.l.b16 %v1049
        %v1349 = vunpack.c.h.b16 %v1049
        %v1350 = vunpack.c.l.b16 %v1050
        %v1351 = vunpack.c.h.b16 %v1050
        %v1352 = vpack.c.b16 %v1162, %v1160
        %v1353 = vpack.c.b16 %v1163, %v1161
        %v1354 = vpack.c.b16 %v1166, %v1164
        %v1355 = vpack.c.b16 %v1167, %v1165
        %v1356 = vpack.c.b16 %v1170, %v1168
        %v1357 = vpack.c.b16 %v1171, %v1169
        %v1358 = vpack.c.b16 %v1174, %v1172
        %v1359 = vpack.c.b16 %v1175, %v1173
        %v1360 = vpack.c.b16 %v1178, %v1176
        %v1361 = vpack.c.b16 %v1179, %v1177
        %v1362 = vpack.c.b16 %v1182, %v1180
        %v1363 = vpack.c.b16 %v1183, %v1181
        %v1364 = vpack.c.b16 %v1186, %v1184
        %v1365 = vpack.c.b16 %v1187, %v1185
        %v1366 = vpack.c.b16 %v1190, %v1188
        %v1367 = vpack.c.b16 %v1191, %v1189
        %v1368 = vpack.c.b16 %v1194, %v1192
        %v1369 = vpack.c.b16 %v1195, %v1193
        %v1370 = vpack.c.b16 %v1198, %v1196
        %v1371 = vpack.c.b16 %v1199, %v1197
        %v1372 = vpack.c.b16 %v1202, %v1200
        %v1373 = vpack.c.b16 %v1203, %v1201
        %v1374 = vpack.c.b16 %v1206, %v1204
        %v1375 = vpack.c.b16 %v1207, %v1205
        %v1376 = vpack.c.b16 %v1210, %v1208
        %v1377 = vpack.c.b16 %v1211, %v1209
        %v1378 = vpack.c.b16 %v1214, %v1212
        %v1379 = vpack.c.b16 %v1215, %v1213
        %v1380 = vpack.c.b16 %v1218, %v1216
        %v1381 = vpack.c.b16 %v1219, %v1217
        %v1382 = vpack.c.b16 %v1222, %v1220
        %v1383 = vpack.c.b16 %v1223, %v1221
        %v1384 = vpack.c.b16 %v1226, %v1224
        %v1385 = vpack.c.b16 %v1227, %v1225
        %v1386 = vpack.c.b16 %v1230, %v1228
        %v1387 = vpack.c.b16 %v1231, %v1229
        %v1388 = vpack.c.b16 %v1234, %v1232
        %v1389 = vpack.c.b16 %v1235, %v1233
        %v1390 = vpack.c.b16 %v1238, %v1236
        %v1391 = vpack.c.b16 %v1239, %v1237
        %v1392 = vpack.c.b16 %v1242, %v1240
        %v1393 = vpack.c.b16 %v1243, %v1241
        %v1394 = vpack.c.b16 %v1246, %v1244
        %v1395 = vpack.c.b16 %v1247, %v1245
        %v1396 = vpack.c.b16 %v1250, %v1248
        %v1397 = vpack.c.b16 %v1251, %v1249
        %v1398 = vpack.c.b16 %v1254, %v1252
        %v1399 = vpack.c.b16 %v1255, %v1253
        %v1400 = vpack.c.b16 %v1258, %v1256
        %v1401 = vpack.c.b16 %v1259, %v1257
        %v1402 = vpack.c.b16 %v1262, %v1260
        %v1403 = vpack.c.b16 %v1263, %v1261
        %v1404 = vpack.c.b16 %v1266, %v1264
        %v1405 = vpack.c.b16 %v1267, %v1265
        %v1406 = vpack.c.b16 %v1270, %v1268
        %v1407 = vpack.c.b16 %v1271, %v1269
        %v1408 = vpack.c.b16 %v1274, %v1272
        %v1409 = vpack.c.b16 %v1275, %v1273
        %v1410 = vpack.c.b16 %v1278, %v1276
        %v1411 = vpack.c.b16 %v1279, %v1277
        %v1412 = vpack.c.b16 %v1282, %v1280
        %v1413 = vpack.c.b16 %v1283, %v1281
        %v1414 = vpack.c.b16 %v1286, %v1284
        %v1415 = vpack.c.b16 %v1287, %v1285
        %v1416 = vpack.c.b16 %v1290, %v1288
        %v1417 = vpack.c.b16 %v1291, %v1289
        %v1418 = vpack.c.b16 %v1294, %v1292
        %v1419 = vpack.c.b16 %v1295, %v1293
        %v1420 = vpack.c.b16 %v1298, %v1296
        %v1421 = vpack.c.b16 %v1299, %v1297
        %v1422 = vpack.c.b16 %v1302, %v1300
        %v1423 = vpack.c.b16 %v1303, %v1301
        %v1424 = vpack.c.b16 %v1306, %v1304
        %v1425 = vpack.c.b16 %v1307, %v1305
        %v1426 = vpack.c.b16 %v1310, %v1308
        %v1427 = vpack.c.b16 %v1311, %v1309
        %v1428 = vpack.c.b16 %v1314, %v1312
        %v1429 = vpack.c.b16 %v1315, %v1313
        %v1430 = vpack.c.b16 %v1318, %v1316
        %v1431 = vpack.c.b16 %v1319, %v1317
        %v1432 = vpack.c.b16 %v1322, %v1320
        %v1433 = vpack.c.b16 %v1323, %v1321
        %v1434 = vpack.c.b16 %v1326, %v1324
        %v1435 = vpack.c.b16 %v1327, %v1325
        %v1436 = vpack.c.b16 %v1330, %v1328
        %v1437 = vpack.c.b16 %v1331, %v1329
        %v1438 = vpack.c.b16 %v1334, %v1332
        %v1439 = vpack.c.b16 %v1335, %v1333
        %v1440 = vpack.c.b16 %v1338, %v1336
        %v1441 = vpack.c.b16 %v1339, %v1337
        %v1442 = vpack.c.b16 %v1342, %v1340
        %v1443 = vpack.c.b16 %v1343, %v1341
        %v1444 = vpack.c.b16 %v1346, %v1344
        %v1445 = vpack.c.b16 %v1347, %v1345
        %v1446 = vpack.c.b16 %v1350, %v1348
        %v1447 = vpack.c.b16 %v1351, %v1349
        %1544 = vmatprep.subr.bf16.mxu0 %v1353
        %1545 = vmatpush1.bf16.msra.mxu0 %v1352
        %1546 = vmatprep.subr.bf16.mxu0 %v1355
        %1547 = vmatpush1.bf16.msra.mxu0 %v1354
        %1548 = vmatprep.subr.bf16.mxu0 %v1357
        %1549 = vmatpush1.bf16.msra.mxu0 %v1356
        %1550 = vmatprep.subr.bf16.mxu0 %v1359
        %1551 = vmatpush1.bf16.msra.mxu0 %v1358
        %1552 = vmatprep.subr.bf16.mxu0 %v1361
        %1553 = vmatpush1.bf16.msra.mxu0 %v1360
        %1554 = vmatprep.subr.bf16.mxu0 %v1363
        %1555 = vmatpush1.bf16.msra.mxu0 %v1362
        %1556 = vmatprep.subr.bf16.mxu0 %v1365
        %1557 = vmatpush1.bf16.msra.mxu0 %v1364
        %1558 = vmatprep.subr.bf16.mxu0 %v1367
        %1559 = vmatpush1.bf16.msra.mxu0 %v1366
        %1560 = vmatprep.subr.bf16.mxu0 %v1369
        %1561 = vmatpush1.bf16.msra.mxu0 %v1368
        %1562 = vmatprep.subr.bf16.mxu0 %v1371
        %1563 = vmatpush1.bf16.msra.mxu0 %v1370
        %1564 = vmatprep.subr.bf16.mxu0 %v1373
        %1565 = vmatpush1.bf16.msra.mxu0 %v1372
        %1566 = vmatprep.subr.bf16.mxu0 %v1375
        %1567 = vmatpush1.bf16.msra.mxu0 %v1374
        %1568 = vmatprep.subr.bf16.mxu0 %v1377
        %1569 = vmatpush1.bf16.msra.mxu0 %v1376
        %1570 = vmatprep.subr.bf16.mxu0 %v1379
        %1571 = vmatpush1.bf16.msra.mxu0 %v1378
        %1572 = vmatprep.subr.bf16.mxu0 %v1381
        %1573 = vmatpush1.bf16.msra.mxu0 %v1380
        %1574 = vmatprep.subr.bf16.mxu0 %v1383
        %1575 = vmatpush1.bf16.msra.mxu0 %v1382
        %1576 = vmatprep.mubr.bf16.mxu0 %v877
        %1577 = vmatmul.mubr.bf16.gmra.mrb[0].mxu0 %v876
        %v1578 = vpop.f32.mrb[0].mxu0
        %v1579 = vadd.f32 %v1057, %v1578
        %v1580 = vpop.f32.mrb[0].mxu0
        %v1581 = vadd.f32 %v1061, %v1580
        %v1582 = vpop.f32.mrb[0].mxu0
        %v1583 = vpop.f32.mrb[0].mxu0
        %1584 = vdwg.mxu0
        %1585 = vmatprep.subr.bf16.mxu0 %v1385
        %1586 = vmatpush1.bf16.msra.mxu0 %v1384
        %1587 = vmatprep.subr.bf16.mxu0 %v1387
        %1588 = vmatpush1.bf16.msra.mxu0 %v1386
        %1589 = vmatprep.subr.bf16.mxu0 %v1389
        %1590 = vmatpush1.bf16.msra.mxu0 %v1388
        %1591 = vmatprep.subr.bf16.mxu0 %v1391
        %1592 = vmatpush1.bf16.msra.mxu0 %v1390
        %1593 = vmatprep.subr.bf16.mxu0 %v1393
        %1594 = vmatpush1.bf16.msra.mxu0 %v1392
        %1595 = vmatprep.subr.bf16.mxu0 %v1395
        %1596 = vmatpush1.bf16.msra.mxu0 %v1394
        %1597 = vmatprep.subr.bf16.mxu0 %v1397
        %1598 = vmatpush1.bf16.msra.mxu0 %v1396
        %1599 = vmatprep.subr.bf16.mxu0 %v1399
        %1600 = vmatpush1.bf16.msra.mxu0 %v1398
        %1601 = vmatprep.subr.bf16.mxu0 %v1401
        %1602 = vmatpush1.bf16.msra.mxu0 %v1400
        %1603 = vmatprep.subr.bf16.mxu0 %v1403
        %1604 = vmatpush1.bf16.msra.mxu0 %v1402
        %1605 = vmatprep.subr.bf16.mxu0 %v1405
        %1606 = vmatpush1.bf16.msra.mxu0 %v1404
        %1607 = vmatprep.subr.bf16.mxu0 %v1407
        %1608 = vmatpush1.bf16.msra.mxu0 %v1406
        %1609 = vmatprep.subr.bf16.mxu0 %v1409
        %1610 = vmatpush1.bf16.msra.mxu0 %v1408
        %1611 = vmatprep.subr.bf16.mxu0 %v1411
        %1612 = vmatpush1.bf16.msra.mxu0 %v1410
        %1613 = vmatprep.subr.bf16.mxu0 %v1413
        %1614 = vmatpush1.bf16.msra.mxu0 %v1412
        %1615 = vmatprep.subr.bf16.mxu0 %v1415
        %1616 = vmatpush1.bf16.msra.mxu0 %v1414
        %1617 = vmatprep.mubr.bf16.mxu0 %v920
        %1618 = vmatmul.mubr.bf16.gmra.mrb[0].mxu0 %v919
        %v1619 = vpop.f32.mrb[0].mxu0
        %v1620 = vadd.f32 %v1579, %v1619
        %v1621 = vpop.f32.mrb[0].mxu0
        %v1622 = vadd.f32 %v1581, %v1621
        %v1623 = vpop.f32.mrb[0].mxu0
        %v1624 = vpop.f32.mrb[0].mxu0
        %1625 = vdwg.mxu0
        %1626 = vmatprep.subr.bf16.mxu0 %v1417
        %1627 = vmatpush1.bf16.msra.mxu0 %v1416
        %1628 = vmatprep.subr.bf16.mxu0 %v1419
        %1629 = vmatpush1.bf16.msra.mxu0 %v1418
        %1630 = vmatprep.subr.bf16.mxu0 %v1421
        %1631 = vmatpush1.bf16.msra.mxu0 %v1420
        %1632 = vmatprep.subr.bf16.mxu0 %v1423
        %1633 = vmatpush1.bf16.msra.mxu0 %v1422
        %1634 = vmatprep.subr.bf16.mxu0 %v1425
        %1635 = vmatpush1.bf16.msra.mxu0 %v1424
        %1636 = vmatprep.subr.bf16.mxu0 %v1427
        %1637 = vmatpush1.bf16.msra.mxu0 %v1426
        %1638 = vmatprep.subr.bf16.mxu0 %v1429
        %1639 = vmatpush1.bf16.msra.mxu0 %v1428
        %1640 = vmatprep.subr.bf16.mxu0 %v1431
        %1641 = vmatpush1.bf16.msra.mxu0 %v1430
        %1642 = vmatprep.subr.bf16.mxu0 %v1433
        %1643 = vmatpush1.bf16.msra.mxu0 %v1432
        %1644 = vmatprep.subr.bf16.mxu0 %v1435
        %1645 = vmatpush1.bf16.msra.mxu0 %v1434
        %1646 = vmatprep.subr.bf16.mxu0 %v1437
        %1647 = vmatpush1.bf16.msra.mxu0 %v1436
        %1648 = vmatprep.subr.bf16.mxu0 %v1439
        %1649 = vmatpush1.bf16.msra.mxu0 %v1438
        %1650 = vmatprep.subr.bf16.mxu0 %v1441
        %1651 = vmatpush1.bf16.msra.mxu0 %v1440
        %1652 = vmatprep.subr.bf16.mxu0 %v1443
        %1653 = vmatpush1.bf16.msra.mxu0 %v1442
        %1654 = vmatprep.subr.bf16.mxu0 %v1445
        %1655 = vmatpush1.bf16.msra.mxu0 %v1444
        %1656 = vmatprep.subr.bf16.mxu0 %v1447
        %1657 = vmatpush1.bf16.msra.mxu0 %v1446
        %1658 = vmatprep.mubr.bf16.mxu0 %v952
        %1659 = vmatmul.mubr.bf16.gmra.mrb[0].mxu0 %v951
        %v1660 = vpop.f32.mrb[0].mxu0
        %v1661 = vadd.f32 %v1620, %v1660
        %v1662 = vpop.f32.mrb[0].mxu0
        %v1663 = vadd.f32 %v1622, %v1662
        %v1664 = vpop.f32.mrb[0].mxu0
        %v1665 = vpop.f32.mrb[0].mxu0
        %1666 = vdwg.mxu0
        %vm1667 = vcmp.ge.f32.partialorder %v1661, 0.0
        %vm1668 = vcmp.ge.f32.partialorder %v1663, 0.0
        %v1669 = vmul.f32 %v1661, 0.01
        %v1670 = vmul.f32 %v1663, 0.01
        %v1671 = vsel %vm1667, %v1661, %v1669
        %v1672 = vsel %vm1668, %v1663, %v1670
        %v1673 = vpack.c.bf16 %v1671, %v1671
        %v1674 = vpack.c.bf16 %v1672, %v1672
        %v1677 = vcombine.low %v1673, %v1674
        %v1679 = vunpack.c.l.s4 1966171168
        %v1680 = vunpack.c.0.s8 %v1679
        %v1681 = vlaneseq
        %v1682 = vshrl.u32 %v1681, 7
        %v1683 = vsub.s32 %v1680, %v1682
        %v1684 = vrot.slane %v1677, %v1683
        %v1685 = vcombine.high %v1684, %v1684
        %v1687 = vunpack.c.l.s4 1966171168
        %v1688 = vunpack.c.0.s8 %v1687
        %v1689 = vlaneseq
        %v1690 = vshrl.u32 %v1689, 7
        %v1691 = vsub.s32 %v1688, %v1690
        %v1692 = vrot.slane %v1684, %v1691
        %v1694 = vunpack.c.l.s4 1966171168
        %v1695 = vunpack.c.0.s8 %v1694
        %v1696 = vlaneseq
        %v1697 = vshrl.u32 %v1696, 7
        %v1698 = vsub.s32 %v1695, %v1697
        %v1699 = vrot.slane %v1685, %v1698
        %v1700 = vcombine.high %v1692, %v1692
        %v1701 = vcombine.high %v1699, %v1699
        %v1703 = vunpack.c.l.s4 1966171168
        %v1704 = vunpack.c.0.s8 %v1703
        %v1705 = vlaneseq
        %v1706 = vshrl.u32 %v1705, 7
        %v1707 = vsub.s32 %v1704, %v1706
        %v1708 = vrot.slane %v1692, %v1707
        %v1709 = vcombine.high %v1708, %v1708
        %v1711 = vunpack.c.l.s4 1966171168
        %v1712 = vunpack.c.0.s8 %v1711
        %v1713 = vlaneseq
        %v1714 = vshrl.u32 %v1713, 7
        %v1715 = vsub.s32 %v1712, %v1714
        %v1716 = vrot.slane %v1708, %v1715
        %v1718 = vunpack.c.l.s4 1966171168
        %v1719 = vunpack.c.0.s8 %v1718
        %v1720 = vlaneseq
        %v1721 = vshrl.u32 %v1720, 7
        %v1722 = vsub.s32 %v1719, %v1721
        %v1723 = vrot.slane %v1709, %v1722
        %v1725 = vunpack.c.l.s4 1966171168
        %v1726 = vunpack.c.0.s8 %v1725
        %v1727 = vlaneseq
        %v1728 = vshrl.u32 %v1727, 7
        %v1729 = vsub.s32 %v1726, %v1728
        %v1730 = vrot.slane %v1699, %v1729
        %v1731 = vcombine.high %v1730, %v1730
        %v1733 = vunpack.c.l.s4 1966171168
        %v1734 = vunpack.c.0.s8 %v1733
        %v1735 = vlaneseq
        %v1736 = vshrl.u32 %v1735, 7
        %v1737 = vsub.s32 %v1734, %v1736
        %v1738 = vrot.slane %v1730, %v1737
        %v1740 = vunpack.c.l.s4 1966171168
        %v1741 = vunpack.c.0.s8 %v1740
        %v1742 = vlaneseq
        %v1743 = vshrl.u32 %v1742, 7
        %v1744 = vsub.s32 %v1741, %v1743
        %v1745 = vrot.slane %v1731, %v1744
        %v1747 = vunpack.c.l.s4 1966171168
        %v1748 = vunpack.c.0.s8 %v1747
        %v1749 = vlaneseq
        %v1750 = vshrl.u32 %v1749, 7
        %v1751 = vsub.s32 %v1748, %v1750
        %v1752 = vrot.slane %v1700, %v1751
        %v1753 = vcombine.high %v1752, %v1752
        %v1755 = vunpack.c.l.s4 1966171168
        %v1756 = vunpack.c.0.s8 %v1755
        %v1757 = vlaneseq
        %v1758 = vshrl.u32 %v1757, 7
        %v1759 = vsub.s32 %v1756, %v1758
        %v1760 = vrot.slane %v1752, %v1759
        %v1762 = vunpack.c.l.s4 1966171168
        %v1763 = vunpack.c.0.s8 %v1762
        %v1764 = vlaneseq
        %v1765 = vshrl.u32 %v1764, 7
        %v1766 = vsub.s32 %v1763, %v1765
        %v1767 = vrot.slane %v1753, %v1766
        %v1768 = vunpack.c.l.b16 %v1716
        %v1769 = vunpack.c.l.b16 %v1723
        %v1770 = vunpack.c.l.b16 %v1738
        %v1771 = vunpack.c.l.b16 %v1745
        %v1772 = vunpack.c.l.b16 %v1760
        %v1773 = vunpack.c.l.b16 %v1767
        %v1774 = vrot.slane %v1770, 7
        %v1775 = vsel %vm843, %v1774, %v1768
        %v1776 = vrot.slane %v1772, 6
        %v1777 = vsel %vm846, %v1776, %v1775
        %v1778 = vrot.slane %v1771, 7
        %v1779 = vsel %vm843, %v1778, %v1769
        %v1780 = vrot.slane %v1773, 6
        %v1781 = vsel %vm846, %v1780, %v1779
        %v1782 = vpack.c.b16 %v1777, %v1777
        %v1783 = vpack.c.b16 %v1781, %v1781
        %v1786 = vsel %vm213, %v1673, %v1782
        %v1787 = vsel %vm213, %v1674, %v1783
        %v1789 = vunpack.c.l.s4 1966171168
        %v1790 = vunpack.c.0.s8 %v1789
        %v1791 = vlaneseq
        %v1792 = vshrl.u32 %v1791, 7
        %v1793 = vsub.s32 %v1790, %v1792
        %v1794 = vrot.slane %v1701, %v1793
        %v1795 = vcombine.high %v1794, %v1794
        %v1797 = vunpack.c.l.s4 1966171168
        %v1798 = vunpack.c.0.s8 %v1797
        %v1799 = vlaneseq
        %v1800 = vshrl.u32 %v1799, 7
        %v1801 = vsub.s32 %v1798, %v1800
        %v1802 = vrot.slane %v1794, %v1801
        %v1804 = vunpack.c.l.s4 1966171168
        %v1805 = vunpack.c.0.s8 %v1804
        %v1806 = vlaneseq
        %v1807 = vshrl.u32 %v1806, 7
        %v1808 = vsub.s32 %v1805, %v1807
        %v1809 = vrot.slane %v1795, %v1808
        %v1810 = vunpack.c.l.b16 %v1802
        %v1811 = vunpack.c.l.b16 %v1809
        %v1812 = vsel %vm902, %v1774, %v1768
        %v1813 = vsel %vm843, %v1776, %v1812
        %v1814 = vrot.slane %v1810, 5
        %v1815 = vsel %vm846, %v1814, %v1813
        %v1816 = vsel %vm902, %v1778, %v1769
        %v1817 = vsel %vm843, %v1780, %v1816
        %v1818 = vrot.slane %v1811, 5
        %v1819 = vsel %vm846, %v1818, %v1817
        %v1820 = vpack.c.b16 %v1815, %v1815
        %v1821 = vpack.c.b16 %v1819, %v1819
        %v1824 = vrot.slane %v1768, 1
        %v1825 = vsel %vm902, %v1770, %v1824
        %v1826 = vrot.slane %v1772, 7
        %v1827 = vsel %vm843, %v1826, %v1825
        %v1828 = vrot.slane %v1810, 6
        %v1829 = vsel %vm846, %v1828, %v1827
        %v1830 = vrot.slane %v1769, 1
        %v1831 = vsel %vm902, %v1771, %v1830
        %v1832 = vrot.slane %v1773, 7
        %v1833 = vsel %vm843, %v1832, %v1831
        %v1834 = vrot.slane %v1811, 6
        %v1835 = vsel %vm846, %v1834, %v1833
        %v1836 = vpack.c.b16 %v1829, %v1829
        %v1837 = vpack.c.b16 %v1835, %v1835
        %v1840 = vld [vmem:[#allocation2 + $0x480] sm:$0xff]
        %v1841 = vld [vmem:[#allocation2 + $0x488] sm:$0xff]
        %v1842 = vld [vmem:[#allocation2 + $0x490] sm:$0xff]
        %v1843 = vld [vmem:[#allocation2 + $0x498] sm:$0xff]
        %v1844 = vld [vmem:[#allocation2 + $0x4a0] sm:$0xff]
        %v1845 = vld [vmem:[#allocation2 + $0x4a8] sm:$0xff]
        %v1846 = vld [vmem:[#allocation2 + $0x4b0] sm:$0xff]
        %v1847 = vld [vmem:[#allocation2 + $0x4b8] sm:$0xff]
        %v1848 = vld [vmem:[#allocation2 + $0x4c0] sm:$0xff]
        %v1849 = vld [vmem:[#allocation2 + $0x4c8] sm:$0xff]
        %v1850 = vld [vmem:[#allocation2 + $0x4d0] sm:$0xff]
        %v1851 = vld [vmem:[#allocation2 + $0x4d8] sm:$0xff]
        %v1852 = vld [vmem:[#allocation2 + $0x4e0] sm:$0xff]
        %v1853 = vld [vmem:[#allocation2 + $0x4e8] sm:$0xff]
        %v1854 = vld [vmem:[#allocation2 + $0x4f0] sm:$0xff]
        %v1855 = vld [vmem:[#allocation2 + $0x4f8] sm:$0xff]
        %v1856 = vld [vmem:[#allocation2 + $0x500] sm:$0xff]
        %v1857 = vld [vmem:[#allocation2 + $0x508] sm:$0xff]
        %v1858 = vld [vmem:[#allocation2 + $0x510] sm:$0xff]
        %v1859 = vld [vmem:[#allocation2 + $0x518] sm:$0xff]
        %v1860 = vld [vmem:[#allocation2 + $0x520] sm:$0xff]
        %v1861 = vld [vmem:[#allocation2 + $0x528] sm:$0xff]
        %v1862 = vld [vmem:[#allocation2 + $0x530] sm:$0xff]
        %v1863 = vld [vmem:[#allocation2 + $0x538] sm:$0xff]
        %v1864 = vld [vmem:[#allocation2 + $0x540] sm:$0xff]
        %v1865 = vld [vmem:[#allocation2 + $0x548] sm:$0xff]
        %v1866 = vld [vmem:[#allocation2 + $0x550] sm:$0xff]
        %v1867 = vld [vmem:[#allocation2 + $0x558] sm:$0xff]
        %v1868 = vld [vmem:[#allocation2 + $0x560] sm:$0xff]
        %v1869 = vld [vmem:[#allocation2 + $0x568] sm:$0xff]
        %v1870 = vld [vmem:[#allocation2 + $0x570] sm:$0xff]
        %v1871 = vld [vmem:[#allocation2 + $0x578] sm:$0xff]
        %v1872 = vld [vmem:[#allocation2 + $0x580] sm:$0xff]
        %v1873 = vld [vmem:[#allocation2 + $0x588] sm:$0xff]
        %v1874 = vld [vmem:[#allocation2 + $0x590] sm:$0xff]
        %v1875 = vld [vmem:[#allocation2 + $0x598] sm:$0xff]
        %v1876 = vld [vmem:[#allocation2 + $0x5a0] sm:$0xff]
        %v1877 = vld [vmem:[#allocation2 + $0x5a8] sm:$0xff]
        %v1878 = vld [vmem:[#allocation2 + $0x5b0] sm:$0xff]
        %v1879 = vld [vmem:[#allocation2 + $0x5b8] sm:$0xff]
        %v1880 = vld [vmem:[#allocation2 + $0x5c0] sm:$0xff]
        %v1881 = vld [vmem:[#allocation2 + $0x5c8] sm:$0xff]
        %v1882 = vld [vmem:[#allocation2 + $0x5d0] sm:$0xff]
        %v1883 = vld [vmem:[#allocation2 + $0x5d8] sm:$0xff]
        %v1884 = vld [vmem:[#allocation2 + $0x5e0] sm:$0xff]
        %v1885 = vld [vmem:[#allocation2 + $0x5e8] sm:$0xff]
        %v1886 = vld [vmem:[#allocation2 + $0x5f0] sm:$0xff]
        %v1887 = vld [vmem:[#allocation2 + $0x5f8] sm:$0xff]
        %v1888 = vld [vmem:[#allocation2 + $0x600] sm:$0xff]
        %v1889 = vld [vmem:[#allocation2 + $0x608] sm:$0xff]
        %v1890 = vld [vmem:[#allocation2 + $0x610] sm:$0xff]
        %v1891 = vld [vmem:[#allocation2 + $0x618] sm:$0xff]
        %v1892 = vld [vmem:[#allocation2 + $0x620] sm:$0xff]
        %v1893 = vld [vmem:[#allocation2 + $0x628] sm:$0xff]
        %v1894 = vld [vmem:[#allocation2 + $0x630] sm:$0xff]
        %v1895 = vld [vmem:[#allocation2 + $0x638] sm:$0xff]
        %v1896 = vld [vmem:[#allocation2 + $0x640] sm:$0xff]
        %v1897 = vld [vmem:[#allocation2 + $0x648] sm:$0xff]
        %v1898 = vld [vmem:[#allocation2 + $0x650] sm:$0xff]
        %v1899 = vld [vmem:[#allocation2 + $0x658] sm:$0xff]
        %v1900 = vld [vmem:[#allocation2 + $0x660] sm:$0xff]
        %v1901 = vld [vmem:[#allocation2 + $0x668] sm:$0xff]
        %v1902 = vld [vmem:[#allocation2 + $0x670] sm:$0xff]
        %v1903 = vld [vmem:[#allocation2 + $0x678] sm:$0xff]
        %v1904 = vld [vmem:[#allocation2 + $0x680] sm:$0xff]
        %v1905 = vld [vmem:[#allocation2 + $0x688] sm:$0xff]
        %v1906 = vld [vmem:[#allocation2 + $0x690] sm:$0xff]
        %v1907 = vld [vmem:[#allocation2 + $0x698] sm:$0xff]
        %v1908 = vld [vmem:[#allocation2 + $0x6a0] sm:$0xff]
        %v1909 = vld [vmem:[#allocation2 + $0x6a8] sm:$0xff]
        %v1910 = vld [vmem:[#allocation2 + $0x6b0] sm:$0xff]
        %v1911 = vld [vmem:[#allocation2 + $0x6b8] sm:$0xff]
        %v1912 = vld [vmem:[#allocation2 + $0x6c0] sm:$0xff]
        %v1913 = vld [vmem:[#allocation2 + $0x6c8] sm:$0xff]
        %v1914 = vld [vmem:[#allocation2 + $0x6d0] sm:$0xff]
        %v1915 = vld [vmem:[#allocation2 + $0x6d8] sm:$0xff]
        %v1916 = vld [vmem:[#allocation2 + $0x6e0] sm:$0xff]
        %v1917 = vld [vmem:[#allocation2 + $0x6e8] sm:$0xff]
        %v1918 = vld [vmem:[#allocation2 + $0x6f0] sm:$0xff]
        %v1919 = vld [vmem:[#allocation2 + $0x6f8] sm:$0xff]
        %v1920 = vld [vmem:[#allocation2 + $0x700] sm:$0xff]
        %v1921 = vld [vmem:[#allocation2 + $0x708] sm:$0xff]
        %v1922 = vld [vmem:[#allocation2 + $0x710] sm:$0xff]
        %v1923 = vld [vmem:[#allocation2 + $0x718] sm:$0xff]
        %v1924 = vld [vmem:[#allocation2 + $0x720] sm:$0xff]
        %v1925 = vld [vmem:[#allocation2 + $0x728] sm:$0xff]
        %v1926 = vld [vmem:[#allocation2 + $0x730] sm:$0xff]
        %v1927 = vld [vmem:[#allocation2 + $0x738] sm:$0xff]
        %v1928 = vld [vmem:[#allocation2 + $0x740] sm:$0xff]
        %v1929 = vld [vmem:[#allocation2 + $0x748] sm:$0xff]
        %v1930 = vld [vmem:[#allocation2 + $0x750] sm:$0xff]
        %v1931 = vld [vmem:[#allocation2 + $0x758] sm:$0xff]
        %v1932 = vld [vmem:[#allocation2 + $0x760] sm:$0xff]
        %v1933 = vld [vmem:[#allocation2 + $0x768] sm:$0xff]
        %v1934 = vld [vmem:[#allocation2 + $0x770] sm:$0xff]
        %v1935 = vld [vmem:[#allocation2 + $0x778] sm:$0xff]
        %s1936 = scalar_lea.vmem [#allocation4], 2
        %v1937 = vld [vmem:[%s1936] ss:$8 sm:$0x3]
        %v1939 = vlaneseq
        %v1940 = vshrl.u32 %v1939, 7
        %v1941 = vsub.s32 0, %v1940
        %v1942 = vrot.slane %v1937, %v1941
        %v1943 = vlaneseq
        %v1944 = vshrl.u32 %v1943, 7
        %v1945 = vsub.s32 1, %v1944
        %v1946 = vrot.slane %v1937, %v1945
        %v2045 = vunpack.c.l.b16 %v1840
        %v2046 = vunpack.c.h.b16 %v1840
        %v2047 = vunpack.c.l.b16 %v1841
        %v2048 = vunpack.c.h.b16 %v1841
        %v2049 = vunpack.c.l.b16 %v1842
        %v2050 = vunpack.c.h.b16 %v1842
        %v2051 = vunpack.c.l.b16 %v1843
        %v2052 = vunpack.c.h.b16 %v1843
        %v2053 = vunpack.c.l.b16 %v1844
        %v2054 = vunpack.c.h.b16 %v1844
        %v2055 = vunpack.c.l.b16 %v1845
        %v2056 = vunpack.c.h.b16 %v1845
        %v2057 = vunpack.c.l.b16 %v1846
        %v2058 = vunpack.c.h.b16 %v1846
        %v2059 = vunpack.c.l.b16 %v1847
        %v2060 = vunpack.c.h.b16 %v1847
        %v2061 = vunpack.c.l.b16 %v1848
        %v2062 = vunpack.c.h.b16 %v1848
        %v2063 = vunpack.c.l.b16 %v1849
        %v2064 = vunpack.c.h.b16 %v1849
        %v2065 = vunpack.c.l.b16 %v1850
        %v2066 = vunpack.c.h.b16 %v1850
        %v2067 = vunpack.c.l.b16 %v1851
        %v2068 = vunpack.c.h.b16 %v1851
        %v2069 = vunpack.c.l.b16 %v1852
        %v2070 = vunpack.c.h.b16 %v1852
        %v2071 = vunpack.c.l.b16 %v1853
        %v2072 = vunpack.c.h.b16 %v1853
        %v2073 = vunpack.c.l.b16 %v1854
        %v2074 = vunpack.c.h.b16 %v1854
        %v2075 = vunpack.c.l.b16 %v1855
        %v2076 = vunpack.c.h.b16 %v1855
        %v2077 = vunpack.c.l.b16 %v1856
        %v2078 = vunpack.c.h.b16 %v1856
        %v2079 = vunpack.c.l.b16 %v1857
        %v2080 = vunpack.c.h.b16 %v1857
        %v2081 = vunpack.c.l.b16 %v1858
        %v2082 = vunpack.c.h.b16 %v1858
        %v2083 = vunpack.c.l.b16 %v1859
        %v2084 = vunpack.c.h.b16 %v1859
        %v2085 = vunpack.c.l.b16 %v1860
        %v2086 = vunpack.c.h.b16 %v1860
        %v2087 = vunpack.c.l.b16 %v1861
        %v2088 = vunpack.c.h.b16 %v1861
        %v2089 = vunpack.c.l.b16 %v1862
        %v2090 = vunpack.c.h.b16 %v1862
        %v2091 = vunpack.c.l.b16 %v1863
        %v2092 = vunpack.c.h.b16 %v1863
        %v2093 = vunpack.c.l.b16 %v1864
        %v2094 = vunpack.c.h.b16 %v1864
        %v2095 = vunpack.c.l.b16 %v1865
        %v2096 = vunpack.c.h.b16 %v1865
        %v2097 = vunpack.c.l.b16 %v1866
        %v2098 = vunpack.c.h.b16 %v1866
        %v2099 = vunpack.c.l.b16 %v1867
        %v2100 = vunpack.c.h.b16 %v1867
        %v2101 = vunpack.c.l.b16 %v1868
        %v2102 = vunpack.c.h.b16 %v1868
        %v2103 = vunpack.c.l.b16 %v1869
        %v2104 = vunpack.c.h.b16 %v1869
        %v2105 = vunpack.c.l.b16 %v1870
        %v2106 = vunpack.c.h.b16 %v1870
        %v2107 = vunpack.c.l.b16 %v1871
        %v2108 = vunpack.c.h.b16 %v1871
        %v2109 = vunpack.c.l.b16 %v1872
        %v2110 = vunpack.c.h.b16 %v1872
        %v2111 = vunpack.c.l.b16 %v1873
        %v2112 = vunpack.c.h.b16 %v1873
        %v2113 = vunpack.c.l.b16 %v1874
        %v2114 = vunpack.c.h.b16 %v1874
        %v2115 = vunpack.c.l.b16 %v1875
        %v2116 = vunpack.c.h.b16 %v1875
        %v2117 = vunpack.c.l.b16 %v1876
        %v2118 = vunpack.c.h.b16 %v1876
        %v2119 = vunpack.c.l.b16 %v1877
        %v2120 = vunpack.c.h.b16 %v1877
        %v2121 = vunpack.c.l.b16 %v1878
        %v2122 = vunpack.c.h.b16 %v1878
        %v2123 = vunpack.c.l.b16 %v1879
        %v2124 = vunpack.c.h.b16 %v1879
        %v2125 = vunpack.c.l.b16 %v1880
        %v2126 = vunpack.c.h.b16 %v1880
        %v2127 = vunpack.c.l.b16 %v1881
        %v2128 = vunpack.c.h.b16 %v1881
        %v2129 = vunpack.c.l.b16 %v1882
        %v2130 = vunpack.c.h.b16 %v1882
        %v2131 = vunpack.c.l.b16 %v1883
        %v2132 = vunpack.c.h.b16 %v1883
        %v2133 = vunpack.c.l.b16 %v1884
        %v2134 = vunpack.c.h.b16 %v1884
        %v2135 = vunpack.c.l.b16 %v1885
        %v2136 = vunpack.c.h.b16 %v1885
        %v2137 = vunpack.c.l.b16 %v1886
        %v2138 = vunpack.c.h.b16 %v1886
        %v2139 = vunpack.c.l.b16 %v1887
        %v2140 = vunpack.c.h.b16 %v1887
        %v2141 = vunpack.c.l.b16 %v1888
        %v2142 = vunpack.c.h.b16 %v1888
        %v2143 = vunpack.c.l.b16 %v1889
        %v2144 = vunpack.c.h.b16 %v1889
        %v2145 = vunpack.c.l.b16 %v1890
        %v2146 = vunpack.c.h.b16 %v1890
        %v2147 = vunpack.c.l.b16 %v1891
        %v2148 = vunpack.c.h.b16 %v1891
        %v2149 = vunpack.c.l.b16 %v1892
        %v2150 = vunpack.c.h.b16 %v1892
        %v2151 = vunpack.c.l.b16 %v1893
        %v2152 = vunpack.c.h.b16 %v1893
        %v2153 = vunpack.c.l.b16 %v1894
        %v2154 = vunpack.c.h.b16 %v1894
        %v2155 = vunpack.c.l.b16 %v1895
        %v2156 = vunpack.c.h.b16 %v1895
        %v2157 = vunpack.c.l.b16 %v1896
        %v2158 = vunpack.c.h.b16 %v1896
        %v2159 = vunpack.c.l.b16 %v1897
        %v2160 = vunpack.c.h.b16 %v1897
        %v2161 = vunpack.c.l.b16 %v1898
        %v2162 = vunpack.c.h.b16 %v1898
        %v2163 = vunpack.c.l.b16 %v1899
        %v2164 = vunpack.c.h.b16 %v1899
        %v2165 = vunpack.c.l.b16 %v1900
        %v2166 = vunpack.c.h.b16 %v1900
        %v2167 = vunpack.c.l.b16 %v1901
        %v2168 = vunpack.c.h.b16 %v1901
        %v2169 = vunpack.c.l.b16 %v1902
        %v2170 = vunpack.c.h.b16 %v1902
        %v2171 = vunpack.c.l.b16 %v1903
        %v2172 = vunpack.c.h.b16 %v1903
        %v2173 = vunpack.c.l.b16 %v1904
        %v2174 = vunpack.c.h.b16 %v1904
        %v2175 = vunpack.c.l.b16 %v1905
        %v2176 = vunpack.c.h.b16 %v1905
        %v2177 = vunpack.c.l.b16 %v1906
        %v2178 = vunpack.c.h.b16 %v1906
        %v2179 = vunpack.c.l.b16 %v1907
        %v2180 = vunpack.c.h.b16 %v1907
        %v2181 = vunpack.c.l.b16 %v1908
        %v2182 = vunpack.c.h.b16 %v1908
        %v2183 = vunpack.c.l.b16 %v1909
        %v2184 = vunpack.c.h.b16 %v1909
        %v2185 = vunpack.c.l.b16 %v1910
        %v2186 = vunpack.c.h.b16 %v1910
        %v2187 = vunpack.c.l.b16 %v1911
        %v2188 = vunpack.c.h.b16 %v1911
        %v2189 = vunpack.c.l.b16 %v1912
        %v2190 = vunpack.c.h.b16 %v1912
        %v2191 = vunpack.c.l.b16 %v1913
        %v2192 = vunpack.c.h.b16 %v1913
        %v2193 = vunpack.c.l.b16 %v1914
        %v2194 = vunpack.c.h.b16 %v1914
        %v2195 = vunpack.c.l.b16 %v1915
        %v2196 = vunpack.c.h.b16 %v1915
        %v2197 = vunpack.c.l.b16 %v1916
        %v2198 = vunpack.c.h.b16 %v1916
        %v2199 = vunpack.c.l.b16 %v1917
        %v2200 = vunpack.c.h.b16 %v1917
        %v2201 = vunpack.c.l.b16 %v1918
        %v2202 = vunpack.c.h.b16 %v1918
        %v2203 = vunpack.c.l.b16 %v1919
        %v2204 = vunpack.c.h.b16 %v1919
        %v2205 = vunpack.c.l.b16 %v1920
        %v2206 = vunpack.c.h.b16 %v1920
        %v2207 = vunpack.c.l.b16 %v1921
        %v2208 = vunpack.c.h.b16 %v1921
        %v2209 = vunpack.c.l.b16 %v1922
        %v2210 = vunpack.c.h.b16 %v1922
        %v2211 = vunpack.c.l.b16 %v1923
        %v2212 = vunpack.c.h.b16 %v1923
        %v2213 = vunpack.c.l.b16 %v1924
        %v2214 = vunpack.c.h.b16 %v1924
        %v2215 = vunpack.c.l.b16 %v1925
        %v2216 = vunpack.c.h.b16 %v1925
        %v2217 = vunpack.c.l.b16 %v1926
        %v2218 = vunpack.c.h.b16 %v1926
        %v2219 = vunpack.c.l.b16 %v1927
        %v2220 = vunpack.c.h.b16 %v1927
        %v2221 = vunpack.c.l.b16 %v1928
        %v2222 = vunpack.c.h.b16 %v1928
        %v2223 = vunpack.c.l.b16 %v1929
        %v2224 = vunpack.c.h.b16 %v1929
        %v2225 = vunpack.c.l.b16 %v1930
        %v2226 = vunpack.c.h.b16 %v1930
        %v2227 = vunpack.c.l.b16 %v1931
        %v2228 = vunpack.c.h.b16 %v1931
        %v2229 = vunpack.c.l.b16 %v1932
        %v2230 = vunpack.c.h.b16 %v1932
        %v2231 = vunpack.c.l.b16 %v1933
        %v2232 = vunpack.c.h.b16 %v1933
        %v2233 = vunpack.c.l.b16 %v1934
        %v2234 = vunpack.c.h.b16 %v1934
        %v2235 = vunpack.c.l.b16 %v1935
        %v2236 = vunpack.c.h.b16 %v1935
        %v2237 = vpack.c.b16 %v2047, %v2045
        %v2238 = vpack.c.b16 %v2048, %v2046
        %v2239 = vpack.c.b16 %v2051, %v2049
        %v2240 = vpack.c.b16 %v2052, %v2050
        %v2241 = vpack.c.b16 %v2055, %v2053
        %v2242 = vpack.c.b16 %v2056, %v2054
        %v2243 = vpack.c.b16 %v2059, %v2057
        %v2244 = vpack.c.b16 %v2060, %v2058
        %v2245 = vpack.c.b16 %v2063, %v2061
        %v2246 = vpack.c.b16 %v2064, %v2062
        %v2247 = vpack.c.b16 %v2067, %v2065
        %v2248 = vpack.c.b16 %v2068, %v2066
        %v2249 = vpack.c.b16 %v2071, %v2069
        %v2250 = vpack.c.b16 %v2072, %v2070
        %v2251 = vpack.c.b16 %v2075, %v2073
        %v2252 = vpack.c.b16 %v2076, %v2074
        %v2253 = vpack.c.b16 %v2079, %v2077
        %v2254 = vpack.c.b16 %v2080, %v2078
        %v2255 = vpack.c.b16 %v2083, %v2081
        %v2256 = vpack.c.b16 %v2084, %v2082
        %v2257 = vpack.c.b16 %v2087, %v2085
        %v2258 = vpack.c.b16 %v2088, %v2086
        %v2259 = vpack.c.b16 %v2091, %v2089
        %v2260 = vpack.c.b16 %v2092, %v2090
        %v2261 = vpack.c.b16 %v2095, %v2093
        %v2262 = vpack.c.b16 %v2096, %v2094
        %v2263 = vpack.c.b16 %v2099, %v2097
        %v2264 = vpack.c.b16 %v2100, %v2098
        %v2265 = vpack.c.b16 %v2103, %v2101
        %v2266 = vpack.c.b16 %v2104, %v2102
        %v2267 = vpack.c.b16 %v2107, %v2105
        %v2268 = vpack.c.b16 %v2108, %v2106
        %v2269 = vpack.c.b16 %v2111, %v2109
        %v2270 = vpack.c.b16 %v2112, %v2110
        %v2271 = vpack.c.b16 %v2115, %v2113
        %v2272 = vpack.c.b16 %v2116, %v2114
        %v2273 = vpack.c.b16 %v2119, %v2117
        %v2274 = vpack.c.b16 %v2120, %v2118
        %v2275 = vpack.c.b16 %v2123, %v2121
        %v2276 = vpack.c.b16 %v2124, %v2122
        %v2277 = vpack.c.b16 %v2127, %v2125
        %v2278 = vpack.c.b16 %v2128, %v2126
        %v2279 = vpack.c.b16 %v2131, %v2129
        %v2280 = vpack.c.b16 %v2132, %v2130
        %v2281 = vpack.c.b16 %v2135, %v2133
        %v2282 = vpack.c.b16 %v2136, %v2134
        %v2283 = vpack.c.b16 %v2139, %v2137
        %v2284 = vpack.c.b16 %v2140, %v2138
        %v2285 = vpack.c.b16 %v2143, %v2141
        %v2286 = vpack.c.b16 %v2144, %v2142
        %v2287 = vpack.c.b16 %v2147, %v2145
        %v2288 = vpack.c.b16 %v2148, %v2146
        %v2289 = vpack.c.b16 %v2151, %v2149
        %v2290 = vpack.c.b16 %v2152, %v2150
        %v2291 = vpack.c.b16 %v2155, %v2153
        %v2292 = vpack.c.b16 %v2156, %v2154
        %v2293 = vpack.c.b16 %v2159, %v2157
        %v2294 = vpack.c.b16 %v2160, %v2158
        %v2295 = vpack.c.b16 %v2163, %v2161
        %v2296 = vpack.c.b16 %v2164, %v2162
        %v2297 = vpack.c.b16 %v2167, %v2165
        %v2298 = vpack.c.b16 %v2168, %v2166
        %v2299 = vpack.c.b16 %v2171, %v2169
        %v2300 = vpack.c.b16 %v2172, %v2170
        %v2301 = vpack.c.b16 %v2175, %v2173
        %v2302 = vpack.c.b16 %v2176, %v2174
        %v2303 = vpack.c.b16 %v2179, %v2177
        %v2304 = vpack.c.b16 %v2180, %v2178
        %v2305 = vpack.c.b16 %v2183, %v2181
        %v2306 = vpack.c.b16 %v2184, %v2182
        %v2307 = vpack.c.b16 %v2187, %v2185
        %v2308 = vpack.c.b16 %v2188, %v2186
        %v2309 = vpack.c.b16 %v2191, %v2189
        %v2310 = vpack.c.b16 %v2192, %v2190
        %v2311 = vpack.c.b16 %v2195, %v2193
        %v2312 = vpack.c.b16 %v2196, %v2194
        %v2313 = vpack.c.b16 %v2199, %v2197
        %v2314 = vpack.c.b16 %v2200, %v2198
        %v2315 = vpack.c.b16 %v2203, %v2201
        %v2316 = vpack.c.b16 %v2204, %v2202
        %v2317 = vpack.c.b16 %v2207, %v2205
        %v2318 = vpack.c.b16 %v2208, %v2206
        %v2319 = vpack.c.b16 %v2211, %v2209
        %v2320 = vpack.c.b16 %v2212, %v2210
        %v2321 = vpack.c.b16 %v2215, %v2213
        %v2322 = vpack.c.b16 %v2216, %v2214
        %v2323 = vpack.c.b16 %v2219, %v2217
        %v2324 = vpack.c.b16 %v2220, %v2218
        %v2325 = vpack.c.b16 %v2223, %v2221
        %v2326 = vpack.c.b16 %v2224, %v2222
        %v2327 = vpack.c.b16 %v2227, %v2225
        %v2328 = vpack.c.b16 %v2228, %v2226
        %v2329 = vpack.c.b16 %v2231, %v2229
        %v2330 = vpack.c.b16 %v2232, %v2230
        %v2331 = vpack.c.b16 %v2235, %v2233
        %v2332 = vpack.c.b16 %v2236, %v2234
        %2429 = vmatprep.subr.bf16.mxu0 %v2238
        %2430 = vmatpush1.bf16.msra.mxu0 %v2237
        %2431 = vmatprep.subr.bf16.mxu0 %v2240
        %2432 = vmatpush1.bf16.msra.mxu0 %v2239
        %2433 = vmatprep.subr.bf16.mxu0 %v2242
        %2434 = vmatpush1.bf16.msra.mxu0 %v2241
        %2435 = vmatprep.subr.bf16.mxu0 %v2244
        %2436 = vmatpush1.bf16.msra.mxu0 %v2243
        %2437 = vmatprep.subr.bf16.mxu0 %v2246
        %2438 = vmatpush1.bf16.msra.mxu0 %v2245
        %2439 = vmatprep.subr.bf16.mxu0 %v2248
        %2440 = vmatpush1.bf16.msra.mxu0 %v2247
        %2441 = vmatprep.subr.bf16.mxu0 %v2250
        %2442 = vmatpush1.bf16.msra.mxu0 %v2249
        %2443 = vmatprep.subr.bf16.mxu0 %v2252
        %2444 = vmatpush1.bf16.msra.mxu0 %v2251
        %2445 = vmatprep.subr.bf16.mxu0 %v2254
        %2446 = vmatpush1.bf16.msra.mxu0 %v2253
        %2447 = vmatprep.subr.bf16.mxu0 %v2256
        %2448 = vmatpush1.bf16.msra.mxu0 %v2255
        %2449 = vmatprep.subr.bf16.mxu0 %v2258
        %2450 = vmatpush1.bf16.msra.mxu0 %v2257
        %2451 = vmatprep.subr.bf16.mxu0 %v2260
        %2452 = vmatpush1.bf16.msra.mxu0 %v2259
        %2453 = vmatprep.subr.bf16.mxu0 %v2262
        %2454 = vmatpush1.bf16.msra.mxu0 %v2261
        %2455 = vmatprep.subr.bf16.mxu0 %v2264
        %2456 = vmatpush1.bf16.msra.mxu0 %v2263
        %2457 = vmatprep.subr.bf16.mxu0 %v2266
        %2458 = vmatpush1.bf16.msra.mxu0 %v2265
        %2459 = vmatprep.subr.bf16.mxu0 %v2268
        %2460 = vmatpush1.bf16.msra.mxu0 %v2267
        %2461 = vmatprep.mubr.bf16.mxu0 %v1787
        %2462 = vmatmul.mubr.bf16.gmra.mrb[0].mxu0 %v1786
        %v2463 = vpop.f32.mrb[0].mxu0
        %v2464 = vadd.f32 %v1942, %v2463
        %v2465 = vpop.f32.mrb[0].mxu0
        %v2466 = vadd.f32 %v1946, %v2465
        %v2467 = vpop.f32.mrb[0].mxu0
        %v2468 = vpop.f32.mrb[0].mxu0
        %2469 = vdwg.mxu0
        %2470 = vmatprep.subr.bf16.mxu0 %v2270
        %2471 = vmatpush1.bf16.msra.mxu0 %v2269
        %2472 = vmatprep.subr.bf16.mxu0 %v2272
        %2473 = vmatpush1.bf16.msra.mxu0 %v2271
        %2474 = vmatprep.subr.bf16.mxu0 %v2274
        %2475 = vmatpush1.bf16.msra.mxu0 %v2273
        %2476 = vmatprep.subr.bf16.mxu0 %v2276
        %2477 = vmatpush1.bf16.msra.mxu0 %v2275
        %2478 = vmatprep.subr.bf16.mxu0 %v2278
        %2479 = vmatpush1.bf16.msra.mxu0 %v2277
        %2480 = vmatprep.subr.bf16.mxu0 %v2280
        %2481 = vmatpush1.bf16.msra.mxu0 %v2279
        %2482 = vmatprep.subr.bf16.mxu0 %v2282
        %2483 = vmatpush1.bf16.msra.mxu0 %v2281
        %2484 = vmatprep.subr.bf16.mxu0 %v2284
        %2485 = vmatpush1.bf16.msra.mxu0 %v2283
        %2486 = vmatprep.subr.bf16.mxu0 %v2286
        %2487 = vmatpush1.bf16.msra.mxu0 %v2285
        %2488 = vmatprep.subr.bf16.mxu0 %v2288
        %2489 = vmatpush1.bf16.msra.mxu0 %v2287
        %2490 = vmatprep.subr.bf16.mxu0 %v2290
        %2491 = vmatpush1.bf16.msra.mxu0 %v2289
        %2492 = vmatprep.subr.bf16.mxu0 %v2292
        %2493 = vmatpush1.bf16.msra.mxu0 %v2291
        %2494 = vmatprep.subr.bf16.mxu0 %v2294
        %2495 = vmatpush1.bf16.msra.mxu0 %v2293
        %2496 = vmatprep.subr.bf16.mxu0 %v2296
        %2497 = vmatpush1.bf16.msra.mxu0 %v2295
        %2498 = vmatprep.subr.bf16.mxu0 %v2298
        %2499 = vmatpush1.bf16.msra.mxu0 %v2297
        %2500 = vmatprep.subr.bf16.mxu0 %v2300
        %2501 = vmatpush1.bf16.msra.mxu0 %v2299
        %2502 = vmatprep.mubr.bf16.mxu0 %v1821
        %2503 = vmatmul.mubr.bf16.gmra.mrb[0].mxu0 %v1820
        %v2504 = vpop.f32.mrb[0].mxu0
        %v2505 = vadd.f32 %v2464, %v2504
        %v2506 = vpop.f32.mrb[0].mxu0
        %v2507 = vadd.f32 %v2466, %v2506
        %v2508 = vpop.f32.mrb[0].mxu0
        %v2509 = vpop.f32.mrb[0].mxu0
        %2510 = vdwg.mxu0
        %2511 = vmatprep.subr.bf16.mxu0 %v2302
        %2512 = vmatpush1.bf16.msra.mxu0 %v2301
        %2513 = vmatprep.subr.bf16.mxu0 %v2304
        %2514 = vmatpush1.bf16.msra.mxu0 %v2303
        %2515 = vmatprep.subr.bf16.mxu0 %v2306
        %2516 = vmatpush1.bf16.msra.mxu0 %v2305
        %2517 = vmatprep.subr.bf16.mxu0 %v2308
        %2518 = vmatpush1.bf16.msra.mxu0 %v2307
        %2519 = vmatprep.subr.bf16.mxu0 %v2310
        %2520 = vmatpush1.bf16.msra.mxu0 %v2309
        %2521 = vmatprep.subr.bf16.mxu0 %v2312
        %2522 = vmatpush1.bf16.msra.mxu0 %v2311
        %2523 = vmatprep.subr.bf16.mxu0 %v2314
        %2524 = vmatpush1.bf16.msra.mxu0 %v2313
        %2525 = vmatprep.subr.bf16.mxu0 %v2316
        %2526 = vmatpush1.bf16.msra.mxu0 %v2315
        %2527 = vmatprep.subr.bf16.mxu0 %v2318
        %2528 = vmatpush1.bf16.msra.mxu0 %v2317
        %2529 = vmatprep.subr.bf16.mxu0 %v2320
        %2530 = vmatpush1.bf16.msra.mxu0 %v2319
        %2531 = vmatprep.subr.bf16.mxu0 %v2322
        %2532 = vmatpush1.bf16.msra.mxu0 %v2321
        %2533 = vmatprep.subr.bf16.mxu0 %v2324
        %2534 = vmatpush1.bf16.msra.mxu0 %v2323
        %2535 = vmatprep.subr.bf16.mxu0 %v2326
        %2536 = vmatpush1.bf16.msra.mxu0 %v2325
        %2537 = vmatprep.subr.bf16.mxu0 %v2328
        %2538 = vmatpush1.bf16.msra.mxu0 %v2327
        %2539 = vmatprep.subr.bf16.mxu0 %v2330
        %2540 = vmatpush1.bf16.msra.mxu0 %v2329
        %2541 = vmatprep.subr.bf16.mxu0 %v2332
        %2542 = vmatpush1.bf16.msra.mxu0 %v2331
        %2543 = vmatprep.mubr.bf16.mxu0 %v1837
        %2544 = vmatmul.mubr.bf16.gmra.mrb[0].mxu0 %v1836
        %v2545 = vpop.f32.mrb[0].mxu0
        %v2546 = vadd.f32 %v2505, %v2545
        %v2547 = vpop.f32.mrb[0].mxu0
        %v2548 = vadd.f32 %v2507, %v2547
        %v2549 = vpop.f32.mrb[0].mxu0
        %v2550 = vpop.f32.mrb[0].mxu0
        %2551 = vdwg.mxu0
        %vm2552 = vcmp.ge.f32.partialorder %v2546, 0.0
        %vm2553 = vcmp.ge.f32.partialorder %v2548, 0.0
        %v2554 = vmul.f32 %v2546, 0.01
        %v2555 = vmul.f32 %v2548, 0.01
        %v2556 = vsel %vm2552, %v2546, %v2554
        %v2557 = vsel %vm2553, %v2548, %v2555
        %v2558 = vpack.c.bf16 %v2556, %v2556
        %v2559 = vpack.c.bf16 %v2557, %v2557
        %v2562 = vcombine.low %v2558, %v2559
        %v2564 = vunpack.c.l.s4 1966171168
        %v2565 = vunpack.c.0.s8 %v2564
        %v2566 = vlaneseq
        %v2567 = vshrl.u32 %v2566, 7
        %v2568 = vsub.s32 %v2565, %v2567
        %v2569 = vrot.slane %v2562, %v2568
        %v2570 = vcombine.high %v2569, %v2569
        %v2572 = vunpack.c.l.s4 1966171168
        %v2573 = vunpack.c.0.s8 %v2572
        %v2574 = vlaneseq
        %v2575 = vshrl.u32 %v2574, 7
        %v2576 = vsub.s32 %v2573, %v2575
        %v2577 = vrot.slane %v2569, %v2576
        %v2579 = vunpack.c.l.s4 1966171168
        %v2580 = vunpack.c.0.s8 %v2579
        %v2581 = vlaneseq
        %v2582 = vshrl.u32 %v2581, 7
        %v2583 = vsub.s32 %v2580, %v2582
        %v2584 = vrot.slane %v2570, %v2583
        %v2586 = vunpack.c.l.s4 1966171168
        %v2587 = vunpack.c.0.s8 %v2586
        %v2588 = vlaneseq
        %v2589 = vshrl.u32 %v2588, 7
        %v2590 = vsub.s32 %v2587, %v2589
        %v2591 = vrot.slane %v2577, %v2590
        %v2592 = vcombine.high %v2591, %v2591
        %v2594 = vunpack.c.l.s4 1966171168
        %v2595 = vunpack.c.0.s8 %v2594
        %v2596 = vlaneseq
        %v2597 = vshrl.u32 %v2596, 7
        %v2598 = vsub.s32 %v2595, %v2597
        %v2599 = vrot.slane %v2591, %v2598
        %v2601 = vunpack.c.l.s4 1966171168
        %v2602 = vunpack.c.0.s8 %v2601
        %v2603 = vlaneseq
        %v2604 = vshrl.u32 %v2603, 7
        %v2605 = vsub.s32 %v2602, %v2604
        %v2606 = vrot.slane %v2592, %v2605
        %v2608 = vunpack.c.l.s4 1966171168
        %v2609 = vunpack.c.0.s8 %v2608
        %v2610 = vlaneseq
        %v2611 = vshrl.u32 %v2610, 7
        %v2612 = vsub.s32 %v2609, %v2611
        %v2613 = vrot.slane %v2584, %v2612
        %v2614 = vcombine.high %v2613, %v2613
        %v2616 = vunpack.c.l.s4 1966171168
        %v2617 = vunpack.c.0.s8 %v2616
        %v2618 = vlaneseq
        %v2619 = vshrl.u32 %v2618, 7
        %v2620 = vsub.s32 %v2617, %v2619
        %v2621 = vrot.slane %v2613, %v2620
        %v2623 = vunpack.c.l.s4 1966171168
        %v2624 = vunpack.c.0.s8 %v2623
        %v2625 = vlaneseq
        %v2626 = vshrl.u32 %v2625, 7
        %v2627 = vsub.s32 %v2624, %v2626
        %v2628 = vrot.slane %v2614, %v2627
        %v2629 = vunpack.c.l.b16 %v2599
        %v2630 = vunpack.c.l.b16 %v2606
        %v2631 = vunpack.c.l.b16 %v2621
        %v2632 = vunpack.c.l.b16 %v2628
        %v2633 = vrot.slane %v2631, 7
        %v2634 = vsel %vm902, %v2633, %v2629
        %v2635 = vrot.slane %v2632, 7
        %v2636 = vsel %vm902, %v2635, %v2630
        %v2637 = vpack.c.b16 %v2634, %v2634
        %v2638 = vpack.c.b16 %v2636, %v2636
        %v2641 = vrot.slane %v2629, 1
        %v2642 = vsel %vm902, %v2631, %v2641
        %v2643 = vrot.slane %v2630, 1
        %v2644 = vsel %vm902, %v2632, %v2643
        %v2645 = vpack.c.b16 %v2642, %v2642
        %v2646 = vpack.c.b16 %v2644, %v2644
        %v2649 = vld [vmem:[#allocation2 + $0x780] sm:$0xff]
        %v2650 = vld [vmem:[#allocation2 + $0x788] sm:$0xff]
        %v2651 = vld [vmem:[#allocation2 + $0x790] sm:$0xff]
        %v2652 = vld [vmem:[#allocation2 + $0x798] sm:$0xff]
        %v2653 = vld [vmem:[#allocation2 + $0x7a0] sm:$0xff]
        %v2654 = vld [vmem:[#allocation2 + $0x7a8] sm:$0xff]
        %v2655 = vld [vmem:[#allocation2 + $0x7b0] sm:$0xff]
        %v2656 = vld [vmem:[#allocation2 + $0x7b8] sm:$0xff]
        %v2657 = vld [vmem:[#allocation2 + $0x7c0] sm:$0xff]
        %v2658 = vld [vmem:[#allocation2 + $0x7c8] sm:$0xff]
        %v2659 = vld [vmem:[#allocation2 + $0x7d0] sm:$0xff]
        %v2660 = vld [vmem:[#allocation2 + $0x7d8] sm:$0xff]
        %v2661 = vld [vmem:[#allocation2 + $0x7e0] sm:$0xff]
        %v2662 = vld [vmem:[#allocation2 + $0x7e8] sm:$0xff]
        %v2663 = vld [vmem:[#allocation2 + $0x7f0] sm:$0xff]
        %v2664 = vld [vmem:[#allocation2 + $0x7f8] sm:$0xff]
        %v2665 = vld [vmem:[#allocation2 + $0x800] sm:$0xff]
        %v2666 = vld [vmem:[#allocation2 + $0x808] sm:$0xff]
        %v2667 = vld [vmem:[#allocation2 + $0x810] sm:$0xff]
        %v2668 = vld [vmem:[#allocation2 + $0x818] sm:$0xff]
        %v2669 = vld [vmem:[#allocation2 + $0x820] sm:$0xff]
        %v2670 = vld [vmem:[#allocation2 + $0x828] sm:$0xff]
        %v2671 = vld [vmem:[#allocation2 + $0x830] sm:$0xff]
        %v2672 = vld [vmem:[#allocation2 + $0x838] sm:$0xff]
        %v2673 = vld [vmem:[#allocation2 + $0x840] sm:$0xff]
        %v2674 = vld [vmem:[#allocation2 + $0x848] sm:$0xff]
        %v2675 = vld [vmem:[#allocation2 + $0x850] sm:$0xff]
        %v2676 = vld [vmem:[#allocation2 + $0x858] sm:$0xff]
        %v2677 = vld [vmem:[#allocation2 + $0x860] sm:$0xff]
        %v2678 = vld [vmem:[#allocation2 + $0x868] sm:$0xff]
        %v2679 = vld [vmem:[#allocation2 + $0x870] sm:$0xff]
        %v2680 = vld [vmem:[#allocation2 + $0x878] sm:$0xff]
        %v2681 = vld [vmem:[#allocation2 + $0x880] sm:$0xff]
        %v2682 = vld [vmem:[#allocation2 + $0x888] sm:$0xff]
        %v2683 = vld [vmem:[#allocation2 + $0x890] sm:$0xff]
        %v2684 = vld [vmem:[#allocation2 + $0x898] sm:$0xff]
        %v2685 = vld [vmem:[#allocation2 + $0x8a0] sm:$0xff]
        %v2686 = vld [vmem:[#allocation2 + $0x8a8] sm:$0xff]
        %v2687 = vld [vmem:[#allocation2 + $0x8b0] sm:$0xff]
        %v2688 = vld [vmem:[#allocation2 + $0x8b8] sm:$0xff]
        %v2689 = vld [vmem:[#allocation2 + $0x8c0] sm:$0xff]
        %v2690 = vld [vmem:[#allocation2 + $0x8c8] sm:$0xff]
        %v2691 = vld [vmem:[#allocation2 + $0x8d0] sm:$0xff]
        %v2692 = vld [vmem:[#allocation2 + $0x8d8] sm:$0xff]
        %v2693 = vld [vmem:[#allocation2 + $0x8e0] sm:$0xff]
        %v2694 = vld [vmem:[#allocation2 + $0x8e8] sm:$0xff]
        %v2695 = vld [vmem:[#allocation2 + $0x8f0] sm:$0xff]
        %v2696 = vld [vmem:[#allocation2 + $0x8f8] sm:$0xff]
        %v2697 = vld [vmem:[#allocation2 + $0x900] sm:$0xff]
        %v2698 = vld [vmem:[#allocation2 + $0x908] sm:$0xff]
        %v2699 = vld [vmem:[#allocation2 + $0x910] sm:$0xff]
        %v2700 = vld [vmem:[#allocation2 + $0x918] sm:$0xff]
        %v2701 = vld [vmem:[#allocation2 + $0x920] sm:$0xff]
        %v2702 = vld [vmem:[#allocation2 + $0x928] sm:$0xff]
        %v2703 = vld [vmem:[#allocation2 + $0x930] sm:$0xff]
        %v2704 = vld [vmem:[#allocation2 + $0x938] sm:$0xff]
        %v2705 = vld [vmem:[#allocation2 + $0x940] sm:$0xff]
        %v2706 = vld [vmem:[#allocation2 + $0x948] sm:$0xff]
        %v2707 = vld [vmem:[#allocation2 + $0x950] sm:$0xff]
        %v2708 = vld [vmem:[#allocation2 + $0x958] sm:$0xff]
        %v2709 = vld [vmem:[#allocation2 + $0x960] sm:$0xff]
        %v2710 = vld [vmem:[#allocation2 + $0x968] sm:$0xff]
        %v2711 = vld [vmem:[#allocation2 + $0x970] sm:$0xff]
        %v2712 = vld [vmem:[#allocation2 + $0x978] sm:$0xff]
        %v2713 = vld [vmem:[#allocation2 + $0x980] sm:$0xff]
        %v2714 = vld [vmem:[#allocation2 + $0x988] sm:$0xff]
        %v2715 = vld [vmem:[#allocation2 + $0x990] sm:$0xff]
        %v2716 = vld [vmem:[#allocation2 + $0x998] sm:$0xff]
        %v2717 = vld [vmem:[#allocation2 + $0x9a0] sm:$0xff]
        %v2718 = vld [vmem:[#allocation2 + $0x9a8] sm:$0xff]
        %v2719 = vld [vmem:[#allocation2 + $0x9b0] sm:$0xff]
        %v2720 = vld [vmem:[#allocation2 + $0x9b8] sm:$0xff]
        %v2721 = vld [vmem:[#allocation2 + $0x9c0] sm:$0xff]
        %v2722 = vld [vmem:[#allocation2 + $0x9c8] sm:$0xff]
        %v2723 = vld [vmem:[#allocation2 + $0x9d0] sm:$0xff]
        %v2724 = vld [vmem:[#allocation2 + $0x9d8] sm:$0xff]
        %v2725 = vld [vmem:[#allocation2 + $0x9e0] sm:$0xff]
        %v2726 = vld [vmem:[#allocation2 + $0x9e8] sm:$0xff]
        %v2727 = vld [vmem:[#allocation2 + $0x9f0] sm:$0xff]
        %v2728 = vld [vmem:[#allocation2 + $0x9f8] sm:$0xff]
        %v2729 = vld [vmem:[#allocation2 + $0xa00] sm:$0xff]
        %v2730 = vld [vmem:[#allocation2 + $0xa08] sm:$0xff]
        %v2731 = vld [vmem:[#allocation2 + $0xa10] sm:$0xff]
        %v2732 = vld [vmem:[#allocation2 + $0xa18] sm:$0xff]
        %v2733 = vld [vmem:[#allocation2 + $0xa20] sm:$0xff]
        %v2734 = vld [vmem:[#allocation2 + $0xa28] sm:$0xff]
        %v2735 = vld [vmem:[#allocation2 + $0xa30] sm:$0xff]
        %v2736 = vld [vmem:[#allocation2 + $0xa38] sm:$0xff]
        %v2737 = vld [vmem:[#allocation2 + $0xa40] sm:$0xff]
        %v2738 = vld [vmem:[#allocation2 + $0xa48] sm:$0xff]
        %v2739 = vld [vmem:[#allocation2 + $0xa50] sm:$0xff]
        %v2740 = vld [vmem:[#allocation2 + $0xa58] sm:$0xff]
        %v2741 = vld [vmem:[#allocation2 + $0xa60] sm:$0xff]
        %v2742 = vld [vmem:[#allocation2 + $0xa68] sm:$0xff]
        %v2743 = vld [vmem:[#allocation2 + $0xa70] sm:$0xff]
        %v2744 = vld [vmem:[#allocation2 + $0xa78] sm:$0xff]
        %s2745 = scalar_lea.vmem [#allocation4], 3
        %v2746 = vld [vmem:[%s2745] ss:$8 sm:$0x3]
        %v2748 = vlaneseq
        %v2749 = vshrl.u32 %v2748, 7
        %v2750 = vsub.s32 0, %v2749
        %v2751 = vrot.slane %v2746, %v2750
        %v2752 = vlaneseq
        %v2753 = vshrl.u32 %v2752, 7
        %v2754 = vsub.s32 1, %v2753
        %v2755 = vrot.slane %v2746, %v2754
        %v2854 = vunpack.c.l.b16 %v2649
        %v2855 = vunpack.c.h.b16 %v2649
        %v2856 = vunpack.c.l.b16 %v2650
        %v2857 = vunpack.c.h.b16 %v2650
        %v2858 = vunpack.c.l.b16 %v2651
        %v2859 = vunpack.c.h.b16 %v2651
        %v2860 = vunpack.c.l.b16 %v2652
        %v2861 = vunpack.c.h.b16 %v2652
        %v2862 = vunpack.c.l.b16 %v2653
        %v2863 = vunpack.c.h.b16 %v2653
        %v2864 = vunpack.c.l.b16 %v2654
        %v2865 = vunpack.c.h.b16 %v2654
        %v2866 = vunpack.c.l.b16 %v2655
        %v2867 = vunpack.c.h.b16 %v2655
        %v2868 = vunpack.c.l.b16 %v2656
        %v2869 = vunpack.c.h.b16 %v2656
        %v2870 = vunpack.c.l.b16 %v2657
        %v2871 = vunpack.c.h.b16 %v2657
        %v2872 = vunpack.c.l.b16 %v2658
        %v2873 = vunpack.c.h.b16 %v2658
        %v2874 = vunpack.c.l.b16 %v2659
        %v2875 = vunpack.c.h.b16 %v2659
        %v2876 = vunpack.c.l.b16 %v2660
        %v2877 = vunpack.c.h.b16 %v2660
        %v2878 = vunpack.c.l.b16 %v2661
        %v2879 = vunpack.c.h.b16 %v2661
        %v2880 = vunpack.c.l.b16 %v2662
        %v2881 = vunpack.c.h.b16 %v2662
        %v2882 = vunpack.c.l.b16 %v2663
        %v2883 = vunpack.c.h.b16 %v2663
        %v2884 = vunpack.c.l.b16 %v2664
        %v2885 = vunpack.c.h.b16 %v2664
        %v2886 = vunpack.c.l.b16 %v2665
        %v2887 = vunpack.c.h.b16 %v2665
        %v2888 = vunpack.c.l.b16 %v2666
        %v2889 = vunpack.c.h.b16 %v2666
        %v2890 = vunpack.c.l.b16 %v2667
        %v2891 = vunpack.c.h.b16 %v2667
        %v2892 = vunpack.c.l.b16 %v2668
        %v2893 = vunpack.c.h.b16 %v2668
        %v2894 = vunpack.c.l.b16 %v2669
        %v2895 = vunpack.c.h.b16 %v2669
        %v2896 = vunpack.c.l.b16 %v2670
        %v2897 = vunpack.c.h.b16 %v2670
        %v2898 = vunpack.c.l.b16 %v2671
        %v2899 = vunpack.c.h.b16 %v2671
        %v2900 = vunpack.c.l.b16 %v2672
        %v2901 = vunpack.c.h.b16 %v2672
        %v2902 = vunpack.c.l.b16 %v2673
        %v2903 = vunpack.c.h.b16 %v2673
        %v2904 = vunpack.c.l.b16 %v2674
        %v2905 = vunpack.c.h.b16 %v2674
        %v2906 = vunpack.c.l.b16 %v2675
        %v2907 = vunpack.c.h.b16 %v2675
        %v2908 = vunpack.c.l.b16 %v2676
        %v2909 = vunpack.c.h.b16 %v2676
        %v2910 = vunpack.c.l.b16 %v2677
        %v2911 = vunpack.c.h.b16 %v2677
        %v2912 = vunpack.c.l.b16 %v2678
        %v2913 = vunpack.c.h.b16 %v2678
        %v2914 = vunpack.c.l.b16 %v2679
        %v2915 = vunpack.c.h.b16 %v2679
        %v2916 = vunpack.c.l.b16 %v2680
        %v2917 = vunpack.c.h.b16 %v2680
        %v2918 = vunpack.c.l.b16 %v2681
        %v2919 = vunpack.c.h.b16 %v2681
        %v2920 = vunpack.c.l.b16 %v2682
        %v2921 = vunpack.c.h.b16 %v2682
        %v2922 = vunpack.c.l.b16 %v2683
        %v2923 = vunpack.c.h.b16 %v2683
        %v2924 = vunpack.c.l.b16 %v2684
        %v2925 = vunpack.c.h.b16 %v2684
        %v2926 = vunpack.c.l.b16 %v2685
        %v2927 = vunpack.c.h.b16 %v2685
        %v2928 = vunpack.c.l.b16 %v2686
        %v2929 = vunpack.c.h.b16 %v2686
        %v2930 = vunpack.c.l.b16 %v2687
        %v2931 = vunpack.c.h.b16 %v2687
        %v2932 = vunpack.c.l.b16 %v2688
        %v2933 = vunpack.c.h.b16 %v2688
        %v2934 = vunpack.c.l.b16 %v2689
        %v2935 = vunpack.c.h.b16 %v2689
        %v2936 = vunpack.c.l.b16 %v2690
        %v2937 = vunpack.c.h.b16 %v2690
        %v2938 = vunpack.c.l.b16 %v2691
        %v2939 = vunpack.c.h.b16 %v2691
        %v2940 = vunpack.c.l.b16 %v2692
        %v2941 = vunpack.c.h.b16 %v2692
        %v2942 = vunpack.c.l.b16 %v2693
        %v2943 = vunpack.c.h.b16 %v2693
        %v2944 = vunpack.c.l.b16 %v2694
        %v2945 = vunpack.c.h.b16 %v2694
        %v2946 = vunpack.c.l.b16 %v2695
        %v2947 = vunpack.c.h.b16 %v2695
        %v2948 = vunpack.c.l.b16 %v2696
        %v2949 = vunpack.c.h.b16 %v2696
        %v2950 = vunpack.c.l.b16 %v2697
        %v2951 = vunpack.c.h.b16 %v2697
        %v2952 = vunpack.c.l.b16 %v2698
        %v2953 = vunpack.c.h.b16 %v2698
        %v2954 = vunpack.c.l.b16 %v2699
        %v2955 = vunpack.c.h.b16 %v2699
        %v2956 = vunpack.c.l.b16 %v2700
        %v2957 = vunpack.c.h.b16 %v2700
        %v2958 = vunpack.c.l.b16 %v2701
        %v2959 = vunpack.c.h.b16 %v2701
        %v2960 = vunpack.c.l.b16 %v2702
        %v2961 = vunpack.c.h.b16 %v2702
        %v2962 = vunpack.c.l.b16 %v2703
        %v2963 = vunpack.c.h.b16 %v2703
        %v2964 = vunpack.c.l.b16 %v2704
        %v2965 = vunpack.c.h.b16 %v2704
        %v2966 = vunpack.c.l.b16 %v2705
        %v2967 = vunpack.c.h.b16 %v2705
        %v2968 = vunpack.c.l.b16 %v2706
        %v2969 = vunpack.c.h.b16 %v2706
        %v2970 = vunpack.c.l.b16 %v2707
        %v2971 = vunpack.c.h.b16 %v2707
        %v2972 = vunpack.c.l.b16 %v2708
        %v2973 = vunpack.c.h.b16 %v2708
        %v2974 = vunpack.c.l.b16 %v2709
        %v2975 = vunpack.c.h.b16 %v2709
        %v2976 = vunpack.c.l.b16 %v2710
        %v2977 = vunpack.c.h.b16 %v2710
        %v2978 = vunpack.c.l.b16 %v2711
        %v2979 = vunpack.c.h.b16 %v2711
        %v2980 = vunpack.c.l.b16 %v2712
        %v2981 = vunpack.c.h.b16 %v2712
        %v2982 = vunpack.c.l.b16 %v2713
        %v2983 = vunpack.c.h.b16 %v2713
        %v2984 = vunpack.c.l.b16 %v2714
        %v2985 = vunpack.c.h.b16 %v2714
        %v2986 = vunpack.c.l.b16 %v2715
        %v2987 = vunpack.c.h.b16 %v2715
        %v2988 = vunpack.c.l.b16 %v2716
        %v2989 = vunpack.c.h.b16 %v2716
        %v2990 = vunpack.c.l.b16 %v2717
        %v2991 = vunpack.c.h.b16 %v2717
        %v2992 = vunpack.c.l.b16 %v2718
        %v2993 = vunpack.c.h.b16 %v2718
        %v2994 = vunpack.c.l.b16 %v2719
        %v2995 = vunpack.c.h.b16 %v2719
        %v2996 = vunpack.c.l.b16 %v2720
        %v2997 = vunpack.c.h.b16 %v2720
        %v2998 = vunpack.c.l.b16 %v2721
        %v2999 = vunpack.c.h.b16 %v2721
        %v3000 = vunpack.c.l.b16 %v2722
        %v3001 = vunpack.c.h.b16 %v2722
        %v3002 = vunpack.c.l.b16 %v2723
        %v3003 = vunpack.c.h.b16 %v2723
        %v3004 = vunpack.c.l.b16 %v2724
        %v3005 = vunpack.c.h.b16 %v2724
        %v3006 = vunpack.c.l.b16 %v2725
        %v3007 = vunpack.c.h.b16 %v2725
        %v3008 = vunpack.c.l.b16 %v2726
        %v3009 = vunpack.c.h.b16 %v2726
        %v3010 = vunpack.c.l.b16 %v2727
        %v3011 = vunpack.c.h.b16 %v2727
        %v3012 = vunpack.c.l.b16 %v2728
        %v3013 = vunpack.c.h.b16 %v2728
        %v3014 = vunpack.c.l.b16 %v2729
        %v3015 = vunpack.c.h.b16 %v2729
        %v3016 = vunpack.c.l.b16 %v2730
        %v3017 = vunpack.c.h.b16 %v2730
        %v3018 = vunpack.c.l.b16 %v2731
        %v3019 = vunpack.c.h.b16 %v2731
        %v3020 = vunpack.c.l.b16 %v2732
        %v3021 = vunpack.c.h.b16 %v2732
        %v3022 = vunpack.c.l.b16 %v2733
        %v3023 = vunpack.c.h.b16 %v2733
        %v3024 = vunpack.c.l.b16 %v2734
        %v3025 = vunpack.c.h.b16 %v2734
        %v3026 = vunpack.c.l.b16 %v2735
        %v3027 = vunpack.c.h.b16 %v2735
        %v3028 = vunpack.c.l.b16 %v2736
        %v3029 = vunpack.c.h.b16 %v2736
        %v3030 = vunpack.c.l.b16 %v2737
        %v3031 = vunpack.c.h.b16 %v2737
        %v3032 = vunpack.c.l.b16 %v2738
        %v3033 = vunpack.c.h.b16 %v2738
        %v3034 = vunpack.c.l.b16 %v2739
        %v3035 = vunpack.c.h.b16 %v2739
        %v3036 = vunpack.c.l.b16 %v2740
        %v3037 = vunpack.c.h.b16 %v2740
        %v3038 = vunpack.c.l.b16 %v2741
        %v3039 = vunpack.c.h.b16 %v2741
        %v3040 = vunpack.c.l.b16 %v2742
        %v3041 = vunpack.c.h.b16 %v2742
        %v3042 = vunpack.c.l.b16 %v2743
        %v3043 = vunpack.c.h.b16 %v2743
        %v3044 = vunpack.c.l.b16 %v2744
        %v3045 = vunpack.c.h.b16 %v2744
        %v3046 = vpack.c.b16 %v2856, %v2854
        %v3047 = vpack.c.b16 %v2857, %v2855
        %v3048 = vpack.c.b16 %v2860, %v2858
        %v3049 = vpack.c.b16 %v2861, %v2859
        %v3050 = vpack.c.b16 %v2864, %v2862
        %v3051 = vpack.c.b16 %v2865, %v2863
        %v3052 = vpack.c.b16 %v2868, %v2866
        %v3053 = vpack.c.b16 %v2869, %v2867
        %v3054 = vpack.c.b16 %v2872, %v2870
        %v3055 = vpack.c.b16 %v2873, %v2871
        %v3056 = vpack.c.b16 %v2876, %v2874
        %v3057 = vpack.c.b16 %v2877, %v2875
        %v3058 = vpack.c.b16 %v2880, %v2878
        %v3059 = vpack.c.b16 %v2881, %v2879
        %v3060 = vpack.c.b16 %v2884, %v2882
        %v3061 = vpack.c.b16 %v2885, %v2883
        %v3062 = vpack.c.b16 %v2888, %v2886
        %v3063 = vpack.c.b16 %v2889, %v2887
        %v3064 = vpack.c.b16 %v2892, %v2890
        %v3065 = vpack.c.b16 %v2893, %v2891
        %v3066 = vpack.c.b16 %v2896, %v2894
        %v3067 = vpack.c.b16 %v2897, %v2895
        %v3068 = vpack.c.b16 %v2900, %v2898
        %v3069 = vpack.c.b16 %v2901, %v2899
        %v3070 = vpack.c.b16 %v2904, %v2902
        %v3071 = vpack.c.b16 %v2905, %v2903
        %v3072 = vpack.c.b16 %v2908, %v2906
        %v3073 = vpack.c.b16 %v2909, %v2907
        %v3074 = vpack.c.b16 %v2912, %v2910
        %v3075 = vpack.c.b16 %v2913, %v2911
        %v3076 = vpack.c.b16 %v2916, %v2914
        %v3077 = vpack.c.b16 %v2917, %v2915
        %v3078 = vpack.c.b16 %v2920, %v2918
        %v3079 = vpack.c.b16 %v2921, %v2919
        %v3080 = vpack.c.b16 %v2924, %v2922
        %v3081 = vpack.c.b16 %v2925, %v2923
        %v3082 = vpack.c.b16 %v2928, %v2926
        %v3083 = vpack.c.b16 %v2929, %v2927
        %v3084 = vpack.c.b16 %v2932, %v2930
        %v3085 = vpack.c.b16 %v2933, %v2931
        %v3086 = vpack.c.b16 %v2936, %v2934
        %v3087 = vpack.c.b16 %v2937, %v2935
        %v3088 = vpack.c.b16 %v2940, %v2938
        %v3089 = vpack.c.b16 %v2941, %v2939
        %v3090 = vpack.c.b16 %v2944, %v2942
        %v3091 = vpack.c.b16 %v2945, %v2943
        %v3092 = vpack.c.b16 %v2948, %v2946
        %v3093 = vpack.c.b16 %v2949, %v2947
        %v3094 = vpack.c.b16 %v2952, %v2950
        %v3095 = vpack.c.b16 %v2953, %v2951
        %v3096 = vpack.c.b16 %v2956, %v2954
        %v3097 = vpack.c.b16 %v2957, %v2955
        %v3098 = vpack.c.b16 %v2960, %v2958
        %v3099 = vpack.c.b16 %v2961, %v2959
        %v3100 = vpack.c.b16 %v2964, %v2962
        %v3101 = vpack.c.b16 %v2965, %v2963
        %v3102 = vpack.c.b16 %v2968, %v2966
        %v3103 = vpack.c.b16 %v2969, %v2967
        %v3104 = vpack.c.b16 %v2972, %v2970
        %v3105 = vpack.c.b16 %v2973, %v2971
        %v3106 = vpack.c.b16 %v2976, %v2974
        %v3107 = vpack.c.b16 %v2977, %v2975
        %v3108 = vpack.c.b16 %v2980, %v2978
        %v3109 = vpack.c.b16 %v2981, %v2979
        %v3110 = vpack.c.b16 %v2984, %v2982
        %v3111 = vpack.c.b16 %v2985, %v2983
        %v3112 = vpack.c.b16 %v2988, %v2986
        %v3113 = vpack.c.b16 %v2989, %v2987
        %v3114 = vpack.c.b16 %v2992, %v2990
        %v3115 = vpack.c.b16 %v2993, %v2991
        %v3116 = vpack.c.b16 %v2996, %v2994
        %v3117 = vpack.c.b16 %v2997, %v2995
        %v3118 = vpack.c.b16 %v3000, %v2998
        %v3119 = vpack.c.b16 %v3001, %v2999
        %v3120 = vpack.c.b16 %v3004, %v3002
        %v3121 = vpack.c.b16 %v3005, %v3003
        %v3122 = vpack.c.b16 %v3008, %v3006
        %v3123 = vpack.c.b16 %v3009, %v3007
        %v3124 = vpack.c.b16 %v3012, %v3010
        %v3125 = vpack.c.b16 %v3013, %v3011
        %v3126 = vpack.c.b16 %v3016, %v3014
        %v3127 = vpack.c.b16 %v3017, %v3015
        %v3128 = vpack.c.b16 %v3020, %v3018
        %v3129 = vpack.c.b16 %v3021, %v3019
        %v3130 = vpack.c.b16 %v3024, %v3022
        %v3131 = vpack.c.b16 %v3025, %v3023
        %v3132 = vpack.c.b16 %v3028, %v3026
        %v3133 = vpack.c.b16 %v3029, %v3027
        %v3134 = vpack.c.b16 %v3032, %v3030
        %v3135 = vpack.c.b16 %v3033, %v3031
        %v3136 = vpack.c.b16 %v3036, %v3034
        %v3137 = vpack.c.b16 %v3037, %v3035
        %v3138 = vpack.c.b16 %v3040, %v3038
        %v3139 = vpack.c.b16 %v3041, %v3039
        %v3140 = vpack.c.b16 %v3044, %v3042
        %v3141 = vpack.c.b16 %v3045, %v3043
        %3238 = vmatprep.subr.bf16.mxu0 %v3047
        %3239 = vmatpush1.bf16.msra.mxu0 %v3046
        %3240 = vmatprep.subr.bf16.mxu0 %v3049
        %3241 = vmatpush1.bf16.msra.mxu0 %v3048
        %3242 = vmatprep.subr.bf16.mxu0 %v3051
        %3243 = vmatpush1.bf16.msra.mxu0 %v3050
        %3244 = vmatprep.subr.bf16.mxu0 %v3053
        %3245 = vmatpush1.bf16.msra.mxu0 %v3052
        %3246 = vmatprep.subr.bf16.mxu0 %v3055
        %3247 = vmatpush1.bf16.msra.mxu0 %v3054
        %3248 = vmatprep.subr.bf16.mxu0 %v3057
        %3249 = vmatpush1.bf16.msra.mxu0 %v3056
        %3250 = vmatprep.subr.bf16.mxu0 %v3059
        %3251 = vmatpush1.bf16.msra.mxu0 %v3058
        %3252 = vmatprep.subr.bf16.mxu0 %v3061
        %3253 = vmatpush1.bf16.msra.mxu0 %v3060
        %3254 = vmatprep.subr.bf16.mxu0 %v3063
        %3255 = vmatpush1.bf16.msra.mxu0 %v3062
        %3256 = vmatprep.subr.bf16.mxu0 %v3065
        %3257 = vmatpush1.bf16.msra.mxu0 %v3064
        %3258 = vmatprep.subr.bf16.mxu0 %v3067
        %3259 = vmatpush1.bf16.msra.mxu0 %v3066
        %3260 = vmatprep.subr.bf16.mxu0 %v3069
        %3261 = vmatpush1.bf16.msra.mxu0 %v3068
        %3262 = vmatprep.subr.bf16.mxu0 %v3071
        %3263 = vmatpush1.bf16.msra.mxu0 %v3070
        %3264 = vmatprep.subr.bf16.mxu0 %v3073
        %3265 = vmatpush1.bf16.msra.mxu0 %v3072
        %3266 = vmatprep.subr.bf16.mxu0 %v3075
        %3267 = vmatpush1.bf16.msra.mxu0 %v3074
        %3268 = vmatprep.subr.bf16.mxu0 %v3077
        %3269 = vmatpush1.bf16.msra.mxu0 %v3076
        %3270 = vmatprep.mubr.bf16.mxu0 %v2559
        %3271 = vmatmul.mubr.bf16.gmra.mrb[0].mxu0 %v2558
        %v3272 = vpop.f32.mrb[0].mxu0
        %v3273 = vadd.f32 %v2751, %v3272
        %v3274 = vpop.f32.mrb[0].mxu0
        %v3275 = vadd.f32 %v2755, %v3274
        %v3276 = vpop.f32.mrb[0].mxu0
        %v3277 = vpop.f32.mrb[0].mxu0
        %3278 = vdwg.mxu0
        %3279 = vmatprep.subr.bf16.mxu0 %v3079
        %3280 = vmatpush1.bf16.msra.mxu0 %v3078
        %3281 = vmatprep.subr.bf16.mxu0 %v3081
        %3282 = vmatpush1.bf16.msra.mxu0 %v3080
        %3283 = vmatprep.subr.bf16.mxu0 %v3083
        %3284 = vmatpush1.bf16.msra.mxu0 %v3082
        %3285 = vmatprep.subr.bf16.mxu0 %v3085
        %3286 = vmatpush1.bf16.msra.mxu0 %v3084
        %3287 = vmatprep.subr.bf16.mxu0 %v3087
        %3288 = vmatpush1.bf16.msra.mxu0 %v3086
        %3289 = vmatprep.subr.bf16.mxu0 %v3089
        %3290 = vmatpush1.bf16.msra.mxu0 %v3088
        %3291 = vmatprep.subr.bf16.mxu0 %v3091
        %3292 = vmatpush1.bf16.msra.mxu0 %v3090
        %3293 = vmatprep.subr.bf16.mxu0 %v3093
        %3294 = vmatpush1.bf16.msra.mxu0 %v3092
        %3295 = vmatprep.subr.bf16.mxu0 %v3095
        %3296 = vmatpush1.bf16.msra.mxu0 %v3094
        %3297 = vmatprep.subr.bf16.mxu0 %v3097
        %3298 = vmatpush1.bf16.msra.mxu0 %v3096
        %3299 = vmatprep.subr.bf16.mxu0 %v3099
        %3300 = vmatpush1.bf16.msra.mxu0 %v3098
        %3301 = vmatprep.subr.bf16.mxu0 %v3101
        %3302 = vmatpush1.bf16.msra.mxu0 %v3100
        %3303 = vmatprep.subr.bf16.mxu0 %v3103
        %3304 = vmatpush1.bf16.msra.mxu0 %v3102
        %3305 = vmatprep.subr.bf16.mxu0 %v3105
        %3306 = vmatpush1.bf16.msra.mxu0 %v3104
        %3307 = vmatprep.subr.bf16.mxu0 %v3107
        %3308 = vmatpush1.bf16.msra.mxu0 %v3106
        %3309 = vmatprep.subr.bf16.mxu0 %v3109
        %3310 = vmatpush1.bf16.msra.mxu0 %v3108
        %3311 = vmatprep.mubr.bf16.mxu0 %v2638
        %3312 = vmatmul.mubr.bf16.gmra.mrb[0].mxu0 %v2637
        %v3313 = vpop.f32.mrb[0].mxu0
        %v3314 = vadd.f32 %v3273, %v3313
        %v3315 = vpop.f32.mrb[0].mxu0
        %v3316 = vadd.f32 %v3275, %v3315
        %v3317 = vpop.f32.mrb[0].mxu0
        %v3318 = vpop.f32.mrb[0].mxu0
        %3319 = vdwg.mxu0
        %3320 = vmatprep.subr.bf16.mxu0 %v3111
        %3321 = vmatpush1.bf16.msra.mxu0 %v3110
        %3322 = vmatprep.subr.bf16.mxu0 %v3113
        %3323 = vmatpush1.bf16.msra.mxu0 %v3112
        %3324 = vmatprep.subr.bf16.mxu0 %v3115
        %3325 = vmatpush1.bf16.msra.mxu0 %v3114
        %3326 = vmatprep.subr.bf16.mxu0 %v3117
        %3327 = vmatpush1.bf16.msra.mxu0 %v3116
        %3328 = vmatprep.subr.bf16.mxu0 %v3119
        %3329 = vmatpush1.bf16.msra.mxu0 %v3118
        %3330 = vmatprep.subr.bf16.mxu0 %v3121
        %3331 = vmatpush1.bf16.msra.mxu0 %v3120
        %3332 = vmatprep.subr.bf16.mxu0 %v3123
        %3333 = vmatpush1.bf16.msra.mxu0 %v3122
        %3334 = vmatprep.subr.bf16.mxu0 %v3125
        %3335 = vmatpush1.bf16.msra.mxu0 %v3124
        %3336 = vmatprep.subr.bf16.mxu0 %v3127
        %3337 = vmatpush1.bf16.msra.mxu0 %v3126
        %3338 = vmatprep.subr.bf16.mxu0 %v3129
        %3339 = vmatpush1.bf16.msra.mxu0 %v3128
        %3340 = vmatprep.subr.bf16.mxu0 %v3131
        %3341 = vmatpush1.bf16.msra.mxu0 %v3130
        %3342 = vmatprep.subr.bf16.mxu0 %v3133
        %3343 = vmatpush1.bf16.msra.mxu0 %v3132
        %3344 = vmatprep.subr.bf16.mxu0 %v3135
        %3345 = vmatpush1.bf16.msra.mxu0 %v3134
        %3346 = vmatprep.subr.bf16.mxu0 %v3137
        %3347 = vmatpush1.bf16.msra.mxu0 %v3136
        %3348 = vmatprep.subr.bf16.mxu0 %v3139
        %3349 = vmatpush1.bf16.msra.mxu0 %v3138
        %3350 = vmatprep.subr.bf16.mxu0 %v3141
        %3351 = vmatpush1.bf16.msra.mxu0 %v3140
        %3352 = vmatprep.mubr.bf16.mxu0 %v2646
        %3353 = vmatmul.mubr.bf16.gmra.mrb[0].mxu0 %v2645
        %v3354 = vpop.f32.mrb[0].mxu0
        %v3355 = vadd.f32 %v3314, %v3354
        %v3356 = vpop.f32.mrb[0].mxu0
        %v3357 = vadd.f32 %v3316, %v3356
        %v3358 = vpop.f32.mrb[0].mxu0
        %v3359 = vpop.f32.mrb[0].mxu0
        %3360 = vdwg.mxu0
        %vm3361 = vcmp.ge.f32.partialorder %v3355, 0.0
        %vm3362 = vcmp.ge.f32.partialorder %v3357, 0.0
        %v3363 = vmul.f32 %v3355, 0.01
        %v3364 = vmul.f32 %v3357, 0.01
        %v3365 = vsel %vm3361, %v3355, %v3363
        %v3366 = vsel %vm3362, %v3357, %v3364
        %v3367 = vpack.c.bf16 %v3365, %v3365
        %v3368 = vpack.c.bf16 %v3366, %v3366
        %v3371 = vcombine.low %v3367, %v3368
        %v3373 = vunpack.c.l.s4 1966171168
        %v3374 = vunpack.c.0.s8 %v3373
        %v3375 = vlaneseq
        %v3376 = vshrl.u32 %v3375, 7
        %v3377 = vsub.s32 %v3374, %v3376
        %v3378 = vrot.slane %v3371, %v3377
        %v3380 = vunpack.c.l.s4 1966171168
        %v3381 = vunpack.c.0.s8 %v3380
        %v3382 = vlaneseq
        %v3383 = vshrl.u32 %v3382, 7
        %v3384 = vsub.s32 %v3381, %v3383
        %v3385 = vrot.slane %v3378, %v3384
        %v3386 = vunpack.i.l.s16 %v3385
        %v3387 = vunpack.i.h.s16 %v3385
        %v3388 = vpack.i.b16 %v3386, %v3386
        %v3389 = vpack.i.b16 %v3387, %v3387
        %v3390 = vlaneseq
        %v3391 = vshrl.u32 %v3390, 7
        %v3392 = vsub.s32 0, %v3391
        %v3393 = vrot.slane %v3388, %v3392
        %v3394 = vlaneseq
        %v3395 = vshrl.u32 %v3394, 7
        %v3396 = vsub.s32 1, %v3395
        %v3397 = vrot.slane %v3388, %v3396
        %v3398 = vlaneseq
        %v3399 = vshrl.u32 %v3398, 7
        %v3400 = vsub.s32 0, %v3399
        %v3401 = vrot.slane %v3389, %v3400
        %v3402 = vlaneseq
        %v3403 = vshrl.u32 %v3402, 7
        %v3404 = vsub.s32 1, %v3403
        %v3405 = vrot.slane %v3389, %v3404
        %v3407 = vpack.i.b16 %v3393, %v3393
        %v3409 = vlaneseq
        %v3410 = vshrl.u32 %v3409, 7
        %v3411 = vsub.s32 0, %v3410
        %v3412 = vrot.slane %v3407, %v3411
        %v3414 = vpack.i.b16 %v3397, %v3397
        %v3416 = vlaneseq
        %v3417 = vshrl.u32 %v3416, 7
        %v3418 = vsub.s32 0, %v3417
        %v3419 = vrot.slane %v3414, %v3418
        %v3421 = vpack.i.b16 %v3401, %v3401
        %v3423 = vlaneseq
        %v3424 = vshrl.u32 %v3423, 7
        %v3425 = vsub.s32 0, %v3424
        %v3426 = vrot.slane %v3421, %v3425
        %v3428 = vpack.i.b16 %v3405, %v3405
        %v3430 = vlaneseq
        %v3431 = vshrl.u32 %v3430, 7
        %v3432 = vsub.s32 0, %v3431
        %v3433 = vrot.slane %v3428, %v3432
        %v3438 = vcombine.low %v3412, %v3419
        %v3440 = vunpack.c.l.s4 1966171168
        %v3441 = vunpack.c.0.s8 %v3440
        %v3442 = vlaneseq
        %v3443 = vshrl.u32 %v3442, 7
        %v3444 = vsub.s32 %v3441, %v3443
        %v3445 = vrot.slane %v3438, %v3444
        %v3447 = vunpack.c.l.s4 1966171168
        %v3448 = vunpack.c.0.s8 %v3447
        %v3449 = vlaneseq
        %v3450 = vshrl.u32 %v3449, 7
        %v3451 = vsub.s32 %v3448, %v3450
        %v3452 = vrot.slane %v3445, %v3451
        %v3453 = vcombine.low %v3426, %v3433
        %v3455 = vunpack.c.l.s4 1966171168
        %v3456 = vunpack.c.0.s8 %v3455
        %v3457 = vlaneseq
        %v3458 = vshrl.u32 %v3457, 7
        %v3459 = vsub.s32 %v3456, %v3458
        %v3460 = vrot.slane %v3453, %v3459
        %v3462 = vunpack.c.l.s4 1966171168
        %v3463 = vunpack.c.0.s8 %v3462
        %v3464 = vlaneseq
        %v3465 = vshrl.u32 %v3464, 7
        %v3466 = vsub.s32 %v3463, %v3465
        %v3467 = vrot.slane %v3460, %v3466
        %v3468 = vcombine.low %v3452, %v3467
        %v3470 = vunpack.c.l.s4 1966171168
        %v3471 = vunpack.c.0.s8 %v3470
        %v3472 = vlaneseq
        %v3473 = vshrl.u32 %v3472, 7
        %v3474 = vsub.s32 %v3471, %v3473
        %v3475 = vrot.slane %v3468, %v3474
        %v3476 = vcombine.high %v3475, %v3475
        %v3478 = vunpack.c.l.s4 1966171168
        %v3479 = vunpack.c.0.s8 %v3478
        %v3480 = vlaneseq
        %v3481 = vshrl.u32 %v3480, 7
        %v3482 = vsub.s32 %v3479, %v3481
        %v3483 = vrot.slane %v3475, %v3482
        %v3485 = vunpack.c.l.s4 1966171168
        %v3486 = vunpack.c.0.s8 %v3485
        %v3487 = vlaneseq
        %v3488 = vshrl.u32 %v3487, 7
        %v3489 = vsub.s32 %v3486, %v3488
        %v3490 = vrot.slane %v3476, %v3489
        %v3492 = vshrl.u32 %v3483, 16
        %v3494 = vrot.slane %v3492, 7
        %v3495 = vshll.u32 %v3483, 16
        %v3497 = vor.u32 %v3494, %v3495
        %v3499 = vshrl.u32 %v3490, 16
        %v3501 = vrot.slane %v3499, 7
        %v3502 = vshll.u32 %v3490, 16
        %v3504 = vor.u32 %v3501, %v3502
        %v3507 = vsel %vm213, %v3367, %v3497
        %v3508 = vsel %vm213, %v3368, %v3504
        %v3509 = vrot.slane %v3495, 1
        %v3510 = vor.u32 %v3492, %v3509
        %v3511 = vrot.slane %v3502, 1
        %v3512 = vor.u32 %v3499, %v3511
        %v3515 = vrot.slane %v3367, 7
        %v3516 = vrot.slane %v3368, 7
        %vm3519 = vcmask 1041408
        %vm3520 = vsmask.f32 1280
        %vm3521 = vmand %vm3519, %vm3520
        %v3522 = vsel %vm3521, %v3510, %v3515
        %v3523 = vsel %vm3521, %v3512, %v3516
        %v3526 = vld [vmem:[#allocation2 + $0xa80] sm:$0xff]
        %v3527 = vld [vmem:[#allocation2 + $0xa88] sm:$0xff]
        %v3528 = vld [vmem:[#allocation2 + $0xa90] sm:$0xff]
        %v3529 = vld [vmem:[#allocation2 + $0xa98] sm:$0xff]
        %v3530 = vld [vmem:[#allocation2 + $0xaa0] sm:$0xff]
        %v3531 = vld [vmem:[#allocation2 + $0xaa8] sm:$0xff]
        %v3532 = vld [vmem:[#allocation2 + $0xab0] sm:$0xff]
        %v3533 = vld [vmem:[#allocation2 + $0xab8] sm:$0xff]
        %v3534 = vld [vmem:[#allocation2 + $0xac0] sm:$0xff]
        %v3535 = vld [vmem:[#allocation2 + $0xac8] sm:$0xff]
        %v3536 = vld [vmem:[#allocation2 + $0xad0] sm:$0xff]
        %v3537 = vld [vmem:[#allocation2 + $0xad8] sm:$0xff]
        %v3538 = vld [vmem:[#allocation2 + $0xae0] sm:$0xff]
        %v3539 = vld [vmem:[#allocation2 + $0xae8] sm:$0xff]
        %v3540 = vld [vmem:[#allocation2 + $0xaf0] sm:$0xff]
        %v3541 = vld [vmem:[#allocation2 + $0xaf8] sm:$0xff]
        %v3542 = vld [vmem:[#allocation2 + $0xb00] sm:$0xff]
        %v3543 = vld [vmem:[#allocation2 + $0xb08] sm:$0xff]
        %v3544 = vld [vmem:[#allocation2 + $0xb10] sm:$0xff]
        %v3545 = vld [vmem:[#allocation2 + $0xb18] sm:$0xff]
        %v3546 = vld [vmem:[#allocation2 + $0xb20] sm:$0xff]
        %v3547 = vld [vmem:[#allocation2 + $0xb28] sm:$0xff]
        %v3548 = vld [vmem:[#allocation2 + $0xb30] sm:$0xff]
        %v3549 = vld [vmem:[#allocation2 + $0xb38] sm:$0xff]
        %v3550 = vld [vmem:[#allocation2 + $0xb40] sm:$0xff]
        %v3551 = vld [vmem:[#allocation2 + $0xb48] sm:$0xff]
        %v3552 = vld [vmem:[#allocation2 + $0xb50] sm:$0xff]
        %v3553 = vld [vmem:[#allocation2 + $0xb58] sm:$0xff]
        %v3554 = vld [vmem:[#allocation2 + $0xb60] sm:$0xff]
        %v3555 = vld [vmem:[#allocation2 + $0xb68] sm:$0xff]
        %v3556 = vld [vmem:[#allocation2 + $0xb70] sm:$0xff]
        %v3557 = vld [vmem:[#allocation2 + $0xb78] sm:$0xff]
        %v3558 = vld [vmem:[#allocation2 + $0xb80] sm:$0xff]
        %v3559 = vld [vmem:[#allocation2 + $0xb88] sm:$0xff]
        %v3560 = vld [vmem:[#allocation2 + $0xb90] sm:$0xff]
        %v3561 = vld [vmem:[#allocation2 + $0xb98] sm:$0xff]
        %v3562 = vld [vmem:[#allocation2 + $0xba0] sm:$0xff]
        %v3563 = vld [vmem:[#allocation2 + $0xba8] sm:$0xff]
        %v3564 = vld [vmem:[#allocation2 + $0xbb0] sm:$0xff]
        %v3565 = vld [vmem:[#allocation2 + $0xbb8] sm:$0xff]
        %v3566 = vld [vmem:[#allocation2 + $0xbc0] sm:$0xff]
        %v3567 = vld [vmem:[#allocation2 + $0xbc8] sm:$0xff]
        %v3568 = vld [vmem:[#allocation2 + $0xbd0] sm:$0xff]
        %v3569 = vld [vmem:[#allocation2 + $0xbd8] sm:$0xff]
        %v3570 = vld [vmem:[#allocation2 + $0xbe0] sm:$0xff]
        %v3571 = vld [vmem:[#allocation2 + $0xbe8] sm:$0xff]
        %v3572 = vld [vmem:[#allocation2 + $0xbf0] sm:$0xff]
        %v3573 = vld [vmem:[#allocation2 + $0xbf8] sm:$0xff]
        %v3574 = vld [vmem:[#allocation2 + $0xc00] sm:$0xff]
        %v3575 = vld [vmem:[#allocation2 + $0xc08] sm:$0xff]
        %v3576 = vld [vmem:[#allocation2 + $0xc10] sm:$0xff]
        %v3577 = vld [vmem:[#allocation2 + $0xc18] sm:$0xff]
        %v3578 = vld [vmem:[#allocation2 + $0xc20] sm:$0xff]
        %v3579 = vld [vmem:[#allocation2 + $0xc28] sm:$0xff]
        %v3580 = vld [vmem:[#allocation2 + $0xc30] sm:$0xff]
        %v3581 = vld [vmem:[#allocation2 + $0xc38] sm:$0xff]
        %v3582 = vld [vmem:[#allocation2 + $0xc40] sm:$0xff]
        %v3583 = vld [vmem:[#allocation2 + $0xc48] sm:$0xff]
        %v3584 = vld [vmem:[#allocation2 + $0xc50] sm:$0xff]
        %v3585 = vld [vmem:[#allocation2 + $0xc58] sm:$0xff]
        %v3586 = vld [vmem:[#allocation2 + $0xc60] sm:$0xff]
        %v3587 = vld [vmem:[#allocation2 + $0xc68] sm:$0xff]
        %v3588 = vld [vmem:[#allocation2 + $0xc70] sm:$0xff]
        %v3589 = vld [vmem:[#allocation2 + $0xc78] sm:$0xff]
        %v3590 = vld [vmem:[#allocation2 + $0xc80] sm:$0xff]
        %v3591 = vld [vmem:[#allocation2 + $0xc88] sm:$0xff]
        %v3592 = vld [vmem:[#allocation2 + $0xc90] sm:$0xff]
        %v3593 = vld [vmem:[#allocation2 + $0xc98] sm:$0xff]
        %v3594 = vld [vmem:[#allocation2 + $0xca0] sm:$0xff]
        %v3595 = vld [vmem:[#allocation2 + $0xca8] sm:$0xff]
        %v3596 = vld [vmem:[#allocation2 + $0xcb0] sm:$0xff]
        %v3597 = vld [vmem:[#allocation2 + $0xcb8] sm:$0xff]
        %v3598 = vld [vmem:[#allocation2 + $0xcc0] sm:$0xff]
        %v3599 = vld [vmem:[#allocation2 + $0xcc8] sm:$0xff]
        %v3600 = vld [vmem:[#allocation2 + $0xcd0] sm:$0xff]
        %v3601 = vld [vmem:[#allocation2 + $0xcd8] sm:$0xff]
        %v3602 = vld [vmem:[#allocation2 + $0xce0] sm:$0xff]
        %v3603 = vld [vmem:[#allocation2 + $0xce8] sm:$0xff]
        %v3604 = vld [vmem:[#allocation2 + $0xcf0] sm:$0xff]
        %v3605 = vld [vmem:[#allocation2 + $0xcf8] sm:$0xff]
        %v3606 = vld [vmem:[#allocation2 + $0xd00] sm:$0xff]
        %v3607 = vld [vmem:[#allocation2 + $0xd08] sm:$0xff]
        %v3608 = vld [vmem:[#allocation2 + $0xd10] sm:$0xff]
        %v3609 = vld [vmem:[#allocation2 + $0xd18] sm:$0xff]
        %v3610 = vld [vmem:[#allocation2 + $0xd20] sm:$0xff]
        %v3611 = vld [vmem:[#allocation2 + $0xd28] sm:$0xff]
        %v3612 = vld [vmem:[#allocation2 + $0xd30] sm:$0xff]
        %v3613 = vld [vmem:[#allocation2 + $0xd38] sm:$0xff]
        %v3614 = vld [vmem:[#allocation2 + $0xd40] sm:$0xff]
        %v3615 = vld [vmem:[#allocation2 + $0xd48] sm:$0xff]
        %v3616 = vld [vmem:[#allocation2 + $0xd50] sm:$0xff]
        %v3617 = vld [vmem:[#allocation2 + $0xd58] sm:$0xff]
        %v3618 = vld [vmem:[#allocation2 + $0xd60] sm:$0xff]
        %v3619 = vld [vmem:[#allocation2 + $0xd68] sm:$0xff]
        %v3620 = vld [vmem:[#allocation2 + $0xd70] sm:$0xff]
        %v3621 = vld [vmem:[#allocation2 + $0xd78] sm:$0xff]
        %s3622 = scalar_lea.vmem [#allocation4], 4
        %v3623 = vld [vmem:[%s3622] ss:$8 sm:$0x3]
        %v3625 = vlaneseq
        %v3626 = vshrl.u32 %v3625, 7
        %v3627 = vsub.s32 0, %v3626
        %v3628 = vrot.slane %v3623, %v3627
        %v3629 = vlaneseq
        %v3630 = vshrl.u32 %v3629, 7
        %v3631 = vsub.s32 1, %v3630
        %v3632 = vrot.slane %v3623, %v3631
        %v3731 = vunpack.c.l.b16 %v3526
        %v3732 = vunpack.c.h.b16 %v3526
        %v3733 = vunpack.c.l.b16 %v3527
        %v3734 = vunpack.c.h.b16 %v3527
        %v3735 = vunpack.c.l.b16 %v3528
        %v3736 = vunpack.c.h.b16 %v3528
        %v3737 = vunpack.c.l.b16 %v3529
        %v3738 = vunpack.c.h.b16 %v3529
        %v3739 = vunpack.c.l.b16 %v3530
        %v3740 = vunpack.c.h.b16 %v3530
        %v3741 = vunpack.c.l.b16 %v3531
        %v3742 = vunpack.c.h.b16 %v3531
        %v3743 = vunpack.c.l.b16 %v3532
        %v3744 = vunpack.c.h.b16 %v3532
        %v3745 = vunpack.c.l.b16 %v3533
        %v3746 = vunpack.c.h.b16 %v3533
        %v3747 = vunpack.c.l.b16 %v3534
        %v3748 = vunpack.c.h.b16 %v3534
        %v3749 = vunpack.c.l.b16 %v3535
        %v3750 = vunpack.c.h.b16 %v3535
        %v3751 = vunpack.c.l.b16 %v3536
        %v3752 = vunpack.c.h.b16 %v3536
        %v3753 = vunpack.c.l.b16 %v3537
        %v3754 = vunpack.c.h.b16 %v3537
        %v3755 = vunpack.c.l.b16 %v3538
        %v3756 = vunpack.c.h.b16 %v3538
        %v3757 = vunpack.c.l.b16 %v3539
        %v3758 = vunpack.c.h.b16 %v3539
        %v3759 = vunpack.c.l.b16 %v3540
        %v3760 = vunpack.c.h.b16 %v3540
        %v3761 = vunpack.c.l.b16 %v3541
        %v3762 = vunpack.c.h.b16 %v3541
        %v3763 = vunpack.c.l.b16 %v3542
        %v3764 = vunpack.c.h.b16 %v3542
        %v3765 = vunpack.c.l.b16 %v3543
        %v3766 = vunpack.c.h.b16 %v3543
        %v3767 = vunpack.c.l.b16 %v3544
        %v3768 = vunpack.c.h.b16 %v3544
        %v3769 = vunpack.c.l.b16 %v3545
        %v3770 = vunpack.c.h.b16 %v3545
        %v3771 = vunpack.c.l.b16 %v3546
        %v3772 = vunpack.c.h.b16 %v3546
        %v3773 = vunpack.c.l.b16 %v3547
        %v3774 = vunpack.c.h.b16 %v3547
        %v3775 = vunpack.c.l.b16 %v3548
        %v3776 = vunpack.c.h.b16 %v3548
        %v3777 = vunpack.c.l.b16 %v3549
        %v3778 = vunpack.c.h.b16 %v3549
        %v3779 = vunpack.c.l.b16 %v3550
        %v3780 = vunpack.c.h.b16 %v3550
        %v3781 = vunpack.c.l.b16 %v3551
        %v3782 = vunpack.c.h.b16 %v3551
        %v3783 = vunpack.c.l.b16 %v3552
        %v3784 = vunpack.c.h.b16 %v3552
        %v3785 = vunpack.c.l.b16 %v3553
        %v3786 = vunpack.c.h.b16 %v3553
        %v3787 = vunpack.c.l.b16 %v3554
        %v3788 = vunpack.c.h.b16 %v3554
        %v3789 = vunpack.c.l.b16 %v3555
        %v3790 = vunpack.c.h.b16 %v3555
        %v3791 = vunpack.c.l.b16 %v3556
        %v3792 = vunpack.c.h.b16 %v3556
        %v3793 = vunpack.c.l.b16 %v3557
        %v3794 = vunpack.c.h.b16 %v3557
        %v3795 = vunpack.c.l.b16 %v3558
        %v3796 = vunpack.c.h.b16 %v3558
        %v3797 = vunpack.c.l.b16 %v3559
        %v3798 = vunpack.c.h.b16 %v3559
        %v3799 = vunpack.c.l.b16 %v3560
        %v3800 = vunpack.c.h.b16 %v3560
        %v3801 = vunpack.c.l.b16 %v3561
        %v3802 = vunpack.c.h.b16 %v3561
        %v3803 = vunpack.c.l.b16 %v3562
        %v3804 = vunpack.c.h.b16 %v3562
        %v3805 = vunpack.c.l.b16 %v3563
        %v3806 = vunpack.c.h.b16 %v3563
        %v3807 = vunpack.c.l.b16 %v3564
        %v3808 = vunpack.c.h.b16 %v3564
        %v3809 = vunpack.c.l.b16 %v3565
        %v3810 = vunpack.c.h.b16 %v3565
        %v3811 = vunpack.c.l.b16 %v3566
        %v3812 = vunpack.c.h.b16 %v3566
        %v3813 = vunpack.c.l.b16 %v3567
        %v3814 = vunpack.c.h.b16 %v3567
        %v3815 = vunpack.c.l.b16 %v3568
        %v3816 = vunpack.c.h.b16 %v3568
        %v3817 = vunpack.c.l.b16 %v3569
        %v3818 = vunpack.c.h.b16 %v3569
        %v3819 = vunpack.c.l.b16 %v3570
        %v3820 = vunpack.c.h.b16 %v3570
        %v3821 = vunpack.c.l.b16 %v3571
        %v3822 = vunpack.c.h.b16 %v3571
        %v3823 = vunpack.c.l.b16 %v3572
        %v3824 = vunpack.c.h.b16 %v3572
        %v3825 = vunpack.c.l.b16 %v3573
        %v3826 = vunpack.c.h.b16 %v3573
        %v3827 = vunpack.c.l.b16 %v3574
        %v3828 = vunpack.c.h.b16 %v3574
        %v3829 = vunpack.c.l.b16 %v3575
        %v3830 = vunpack.c.h.b16 %v3575
        %v3831 = vunpack.c.l.b16 %v3576
        %v3832 = vunpack.c.h.b16 %v3576
        %v3833 = vunpack.c.l.b16 %v3577
        %v3834 = vunpack.c.h.b16 %v3577
        %v3835 = vunpack.c.l.b16 %v3578
        %v3836 = vunpack.c.h.b16 %v3578
        %v3837 = vunpack.c.l.b16 %v3579
        %v3838 = vunpack.c.h.b16 %v3579
        %v3839 = vunpack.c.l.b16 %v3580
        %v3840 = vunpack.c.h.b16 %v3580
        %v3841 = vunpack.c.l.b16 %v3581
        %v3842 = vunpack.c.h.b16 %v3581
        %v3843 = vunpack.c.l.b16 %v3582
        %v3844 = vunpack.c.h.b16 %v3582
        %v3845 = vunpack.c.l.b16 %v3583
        %v3846 = vunpack.c.h.b16 %v3583
        %v3847 = vunpack.c.l.b16 %v3584
        %v3848 = vunpack.c.h.b16 %v3584
        %v3849 = vunpack.c.l.b16 %v3585
        %v3850 = vunpack.c.h.b16 %v3585
        %v3851 = vunpack.c.l.b16 %v3586
        %v3852 = vunpack.c.h.b16 %v3586
        %v3853 = vunpack.c.l.b16 %v3587
        %v3854 = vunpack.c.h.b16 %v3587
        %v3855 = vunpack.c.l.b16 %v3588
        %v3856 = vunpack.c.h.b16 %v3588
        %v3857 = vunpack.c.l.b16 %v3589
        %v3858 = vunpack.c.h.b16 %v3589
        %v3859 = vunpack.c.l.b16 %v3590
        %v3860 = vunpack.c.h.b16 %v3590
        %v3861 = vunpack.c.l.b16 %v3591
        %v3862 = vunpack.c.h.b16 %v3591
        %v3863 = vunpack.c.l.b16 %v3592
        %v3864 = vunpack.c.h.b16 %v3592
        %v3865 = vunpack.c.l.b16 %v3593
        %v3866 = vunpack.c.h.b16 %v3593
        %v3867 = vunpack.c.l.b16 %v3594
        %v3868 = vunpack.c.h.b16 %v3594
        %v3869 = vunpack.c.l.b16 %v3595
        %v3870 = vunpack.c.h.b16 %v3595
        %v3871 = vunpack.c.l.b16 %v3596
        %v3872 = vunpack.c.h.b16 %v3596
        %v3873 = vunpack.c.l.b16 %v3597
        %v3874 = vunpack.c.h.b16 %v3597
        %v3875 = vunpack.c.l.b16 %v3598
        %v3876 = vunpack.c.h.b16 %v3598
        %v3877 = vunpack.c.l.b16 %v3599
        %v3878 = vunpack.c.h.b16 %v3599
        %v3879 = vunpack.c.l.b16 %v3600
        %v3880 = vunpack.c.h.b16 %v3600
        %v3881 = vunpack.c.l.b16 %v3601
        %v3882 = vunpack.c.h.b16 %v3601
        %v3883 = vunpack.c.l.b16 %v3602
        %v3884 = vunpack.c.h.b16 %v3602
        %v3885 = vunpack.c.l.b16 %v3603
        %v3886 = vunpack.c.h.b16 %v3603
        %v3887 = vunpack.c.l.b16 %v3604
        %v3888 = vunpack.c.h.b16 %v3604
        %v3889 = vunpack.c.l.b16 %v3605
        %v3890 = vunpack.c.h.b16 %v3605
        %v3891 = vunpack.c.l.b16 %v3606
        %v3892 = vunpack.c.h.b16 %v3606
        %v3893 = vunpack.c.l.b16 %v3607
        %v3894 = vunpack.c.h.b16 %v3607
        %v3895 = vunpack.c.l.b16 %v3608
        %v3896 = vunpack.c.h.b16 %v3608
        %v3897 = vunpack.c.l.b16 %v3609
        %v3898 = vunpack.c.h.b16 %v3609
        %v3899 = vunpack.c.l.b16 %v3610
        %v3900 = vunpack.c.h.b16 %v3610
        %v3901 = vunpack.c.l.b16 %v3611
        %v3902 = vunpack.c.h.b16 %v3611
        %v3903 = vunpack.c.l.b16 %v3612
        %v3904 = vunpack.c.h.b16 %v3612
        %v3905 = vunpack.c.l.b16 %v3613
        %v3906 = vunpack.c.h.b16 %v3613
        %v3907 = vunpack.c.l.b16 %v3614
        %v3908 = vunpack.c.h.b16 %v3614
        %v3909 = vunpack.c.l.b16 %v3615
        %v3910 = vunpack.c.h.b16 %v3615
        %v3911 = vunpack.c.l.b16 %v3616
        %v3912 = vunpack.c.h.b16 %v3616
        %v3913 = vunpack.c.l.b16 %v3617
        %v3914 = vunpack.c.h.b16 %v3617
        %v3915 = vunpack.c.l.b16 %v3618
        %v3916 = vunpack.c.h.b16 %v3618
        %v3917 = vunpack.c.l.b16 %v3619
        %v3918 = vunpack.c.h.b16 %v3619
        %v3919 = vunpack.c.l.b16 %v3620
        %v3920 = vunpack.c.h.b16 %v3620
        %v3921 = vunpack.c.l.b16 %v3621
        %v3922 = vunpack.c.h.b16 %v3621
        %v3923 = vpack.c.b16 %v3733, %v3731
        %v3924 = vpack.c.b16 %v3734, %v3732
        %v3925 = vpack.c.b16 %v3737, %v3735
        %v3926 = vpack.c.b16 %v3738, %v3736
        %v3927 = vpack.c.b16 %v3741, %v3739
        %v3928 = vpack.c.b16 %v3742, %v3740
        %v3929 = vpack.c.b16 %v3745, %v3743
        %v3930 = vpack.c.b16 %v3746, %v3744
        %v3931 = vpack.c.b16 %v3749, %v3747
        %v3932 = vpack.c.b16 %v3750, %v3748
        %v3933 = vpack.c.b16 %v3753, %v3751
        %v3934 = vpack.c.b16 %v3754, %v3752
        %v3935 = vpack.c.b16 %v3757, %v3755
        %v3936 = vpack.c.b16 %v3758, %v3756
        %v3937 = vpack.c.b16 %v3761, %v3759
        %v3938 = vpack.c.b16 %v3762, %v3760
        %v3939 = vpack.c.b16 %v3765, %v3763
        %v3940 = vpack.c.b16 %v3766, %v3764
        %v3941 = vpack.c.b16 %v3769, %v3767
        %v3942 = vpack.c.b16 %v3770, %v3768
        %v3943 = vpack.c.b16 %v3773, %v3771
        %v3944 = vpack.c.b16 %v3774, %v3772
        %v3945 = vpack.c.b16 %v3777, %v3775
        %v3946 = vpack.c.b16 %v3778, %v3776
        %v3947 = vpack.c.b16 %v3781, %v3779
        %v3948 = vpack.c.b16 %v3782, %v3780
        %v3949 = vpack.c.b16 %v3785, %v3783
        %v3950 = vpack.c.b16 %v3786, %v3784
        %v3951 = vpack.c.b16 %v3789, %v3787
        %v3952 = vpack.c.b16 %v3790, %v3788
        %v3953 = vpack.c.b16 %v3793, %v3791
        %v3954 = vpack.c.b16 %v3794, %v3792
        %v3955 = vpack.c.b16 %v3797, %v3795
        %v3956 = vpack.c.b16 %v3798, %v3796
        %v3957 = vpack.c.b16 %v3801, %v3799
        %v3958 = vpack.c.b16 %v3802, %v3800
        %v3959 = vpack.c.b16 %v3805, %v3803
        %v3960 = vpack.c.b16 %v3806, %v3804
        %v3961 = vpack.c.b16 %v3809, %v3807
        %v3962 = vpack.c.b16 %v3810, %v3808
        %v3963 = vpack.c.b16 %v3813, %v3811
        %v3964 = vpack.c.b16 %v3814, %v3812
        %v3965 = vpack.c.b16 %v3817, %v3815
        %v3966 = vpack.c.b16 %v3818, %v3816
        %v3967 = vpack.c.b16 %v3821, %v3819
        %v3968 = vpack.c.b16 %v3822, %v3820
        %v3969 = vpack.c.b16 %v3825, %v3823
        %v3970 = vpack.c.b16 %v3826, %v3824
        %v3971 = vpack.c.b16 %v3829, %v3827
        %v3972 = vpack.c.b16 %v3830, %v3828
        %v3973 = vpack.c.b16 %v3833, %v3831
        %v3974 = vpack.c.b16 %v3834, %v3832
        %v3975 = vpack.c.b16 %v3837, %v3835
        %v3976 = vpack.c.b16 %v3838, %v3836
        %v3977 = vpack.c.b16 %v3841, %v3839
        %v3978 = vpack.c.b16 %v3842, %v3840
        %v3979 = vpack.c.b16 %v3845, %v3843
        %v3980 = vpack.c.b16 %v3846, %v3844
        %v3981 = vpack.c.b16 %v3849, %v3847
        %v3982 = vpack.c.b16 %v3850, %v3848
        %v3983 = vpack.c.b16 %v3853, %v3851
        %v3984 = vpack.c.b16 %v3854, %v3852
        %v3985 = vpack.c.b16 %v3857, %v3855
        %v3986 = vpack.c.b16 %v3858, %v3856
        %v3987 = vpack.c.b16 %v3861, %v3859
        %v3988 = vpack.c.b16 %v3862, %v3860
        %v3989 = vpack.c.b16 %v3865, %v3863
        %v3990 = vpack.c.b16 %v3866, %v3864
        %v3991 = vpack.c.b16 %v3869, %v3867
        %v3992 = vpack.c.b16 %v3870, %v3868
        %v3993 = vpack.c.b16 %v3873, %v3871
        %v3994 = vpack.c.b16 %v3874, %v3872
        %v3995 = vpack.c.b16 %v3877, %v3875
        %v3996 = vpack.c.b16 %v3878, %v3876
        %v3997 = vpack.c.b16 %v3881, %v3879
        %v3998 = vpack.c.b16 %v3882, %v3880
        %v3999 = vpack.c.b16 %v3885, %v3883
        %v4000 = vpack.c.b16 %v3886, %v3884
        %v4001 = vpack.c.b16 %v3889, %v3887
        %v4002 = vpack.c.b16 %v3890, %v3888
        %v4003 = vpack.c.b16 %v3893, %v3891
        %v4004 = vpack.c.b16 %v3894, %v3892
        %v4005 = vpack.c.b16 %v3897, %v3895
        %v4006 = vpack.c.b16 %v3898, %v3896
        %v4007 = vpack.c.b16 %v3901, %v3899
        %v4008 = vpack.c.b16 %v3902, %v3900
        %v4009 = vpack.c.b16 %v3905, %v3903
        %v4010 = vpack.c.b16 %v3906, %v3904
        %v4011 = vpack.c.b16 %v3909, %v3907
        %v4012 = vpack.c.b16 %v3910, %v3908
        %v4013 = vpack.c.b16 %v3913, %v3911
        %v4014 = vpack.c.b16 %v3914, %v3912
        %v4015 = vpack.c.b16 %v3917, %v3915
        %v4016 = vpack.c.b16 %v3918, %v3916
        %v4017 = vpack.c.b16 %v3921, %v3919
        %v4018 = vpack.c.b16 %v3922, %v3920
        %4115 = vmatprep.subr.bf16.mxu0 %v3924
        %4116 = vmatpush1.bf16.msra.mxu0 %v3923
        %4117 = vmatprep.subr.bf16.mxu0 %v3926
        %4118 = vmatpush1.bf16.msra.mxu0 %v3925
        %4119 = vmatprep.subr.bf16.mxu0 %v3928
        %4120 = vmatpush1.bf16.msra.mxu0 %v3927
        %4121 = vmatprep.subr.bf16.mxu0 %v3930
        %4122 = vmatpush1.bf16.msra.mxu0 %v3929
        %4123 = vmatprep.subr.bf16.mxu0 %v3932
        %4124 = vmatpush1.bf16.msra.mxu0 %v3931
        %4125 = vmatprep.subr.bf16.mxu0 %v3934
        %4126 = vmatpush1.bf16.msra.mxu0 %v3933
        %4127 = vmatprep.subr.bf16.mxu0 %v3936
        %4128 = vmatpush1.bf16.msra.mxu0 %v3935
        %4129 = vmatprep.subr.bf16.mxu0 %v3938
        %4130 = vmatpush1.bf16.msra.mxu0 %v3937
        %4131 = vmatprep.subr.bf16.mxu0 %v3940
        %4132 = vmatpush1.bf16.msra.mxu0 %v3939
        %4133 = vmatprep.subr.bf16.mxu0 %v3942
        %4134 = vmatpush1.bf16.msra.mxu0 %v3941
        %4135 = vmatprep.subr.bf16.mxu0 %v3944
        %4136 = vmatpush1.bf16.msra.mxu0 %v3943
        %4137 = vmatprep.subr.bf16.mxu0 %v3946
        %4138 = vmatpush1.bf16.msra.mxu0 %v3945
        %4139 = vmatprep.subr.bf16.mxu0 %v3948
        %4140 = vmatpush1.bf16.msra.mxu0 %v3947
        %4141 = vmatprep.subr.bf16.mxu0 %v3950
        %4142 = vmatpush1.bf16.msra.mxu0 %v3949
        %4143 = vmatprep.subr.bf16.mxu0 %v3952
        %4144 = vmatpush1.bf16.msra.mxu0 %v3951
        %4145 = vmatprep.subr.bf16.mxu0 %v3954
        %4146 = vmatpush1.bf16.msra.mxu0 %v3953
        %4147 = vmatprep.mubr.bf16.mxu0 %v3508
        %4148 = vmatmul.mubr.bf16.gmra.mrb[0].mxu0 %v3507
        %v4149 = vpop.f32.mrb[0].mxu0
        %v4150 = vadd.f32 %v3628, %v4149
        %v4151 = vpop.f32.mrb[0].mxu0
        %v4152 = vadd.f32 %v3632, %v4151
        %v4153 = vpop.f32.mrb[0].mxu0
        %v4154 = vpop.f32.mrb[0].mxu0
        %4155 = vdwg.mxu0
        %4156 = vmatprep.subr.bf16.mxu0 %v3956
        %4157 = vmatpush1.bf16.msra.mxu0 %v3955
        %4158 = vmatprep.subr.bf16.mxu0 %v3958
        %4159 = vmatpush1.bf16.msra.mxu0 %v3957
        %4160 = vmatprep.subr.bf16.mxu0 %v3960
        %4161 = vmatpush1.bf16.msra.mxu0 %v3959
        %4162 = vmatprep.subr.bf16.mxu0 %v3962
        %4163 = vmatpush1.bf16.msra.mxu0 %v3961
        %4164 = vmatprep.subr.bf16.mxu0 %v3964
        %4165 = vmatpush1.bf16.msra.mxu0 %v3963
        %4166 = vmatprep.subr.bf16.mxu0 %v3966
        %4167 = vmatpush1.bf16.msra.mxu0 %v3965
        %4168 = vmatprep.subr.bf16.mxu0 %v3968
        %4169 = vmatpush1.bf16.msra.mxu0 %v3967
        %4170 = vmatprep.subr.bf16.mxu0 %v3970
        %4171 = vmatpush1.bf16.msra.mxu0 %v3969
        %4172 = vmatprep.subr.bf16.mxu0 %v3972
        %4173 = vmatpush1.bf16.msra.mxu0 %v3971
        %4174 = vmatprep.subr.bf16.mxu0 %v3974
        %4175 = vmatpush1.bf16.msra.mxu0 %v3973
        %4176 = vmatprep.subr.bf16.mxu0 %v3976
        %4177 = vmatpush1.bf16.msra.mxu0 %v3975
        %4178 = vmatprep.subr.bf16.mxu0 %v3978
        %4179 = vmatpush1.bf16.msra.mxu0 %v3977
        %4180 = vmatprep.subr.bf16.mxu0 %v3980
        %4181 = vmatpush1.bf16.msra.mxu0 %v3979
        %4182 = vmatprep.subr.bf16.mxu0 %v3982
        %4183 = vmatpush1.bf16.msra.mxu0 %v3981
        %4184 = vmatprep.subr.bf16.mxu0 %v3984
        %4185 = vmatpush1.bf16.msra.mxu0 %v3983
        %4186 = vmatprep.subr.bf16.mxu0 %v3986
        %4187 = vmatpush1.bf16.msra.mxu0 %v3985
        %4188 = vmatprep.mubr.bf16.mxu0 %v3490
        %4189 = vmatmul.mubr.bf16.gmra.mrb[0].mxu0 %v3483
        %v4190 = vpop.f32.mrb[0].mxu0
        %v4191 = vadd.f32 %v4150, %v4190
        %v4192 = vpop.f32.mrb[0].mxu0
        %v4193 = vadd.f32 %v4152, %v4192
        %v4194 = vpop.f32.mrb[0].mxu0
        %v4195 = vpop.f32.mrb[0].mxu0
        %4196 = vdwg.mxu0
        %4197 = vmatprep.subr.bf16.mxu0 %v3988
        %4198 = vmatpush1.bf16.msra.mxu0 %v3987
        %4199 = vmatprep.subr.bf16.mxu0 %v3990
        %4200 = vmatpush1.bf16.msra.mxu0 %v3989
        %4201 = vmatprep.subr.bf16.mxu0 %v3992
        %4202 = vmatpush1.bf16.msra.mxu0 %v3991
        %4203 = vmatprep.subr.bf16.mxu0 %v3994
        %4204 = vmatpush1.bf16.msra.mxu0 %v3993
        %4205 = vmatprep.subr.bf16.mxu0 %v3996
        %4206 = vmatpush1.bf16.msra.mxu0 %v3995
        %4207 = vmatprep.subr.bf16.mxu0 %v3998
        %4208 = vmatpush1.bf16.msra.mxu0 %v3997
        %4209 = vmatprep.subr.bf16.mxu0 %v4000
        %4210 = vmatpush1.bf16.msra.mxu0 %v3999
        %4211 = vmatprep.subr.bf16.mxu0 %v4002
        %4212 = vmatpush1.bf16.msra.mxu0 %v4001
        %4213 = vmatprep.subr.bf16.mxu0 %v4004
        %4214 = vmatpush1.bf16.msra.mxu0 %v4003
        %4215 = vmatprep.subr.bf16.mxu0 %v4006
        %4216 = vmatpush1.bf16.msra.mxu0 %v4005
        %4217 = vmatprep.subr.bf16.mxu0 %v4008
        %4218 = vmatpush1.bf16.msra.mxu0 %v4007
        %4219 = vmatprep.subr.bf16.mxu0 %v4010
        %4220 = vmatpush1.bf16.msra.mxu0 %v4009
        %4221 = vmatprep.subr.bf16.mxu0 %v4012
        %4222 = vmatpush1.bf16.msra.mxu0 %v4011
        %4223 = vmatprep.subr.bf16.mxu0 %v4014
        %4224 = vmatpush1.bf16.msra.mxu0 %v4013
        %4225 = vmatprep.subr.bf16.mxu0 %v4016
        %4226 = vmatpush1.bf16.msra.mxu0 %v4015
        %4227 = vmatprep.subr.bf16.mxu0 %v4018
        %4228 = vmatpush1.bf16.msra.mxu0 %v4017
        %4229 = vmatprep.mubr.bf16.mxu0 %v3523
        %4230 = vmatmul.mubr.bf16.gmra.mrb[0].mxu0 %v3522
        %v4231 = vpop.f32.mrb[0].mxu0
        %v4232 = vadd.f32 %v4191, %v4231
        %v4233 = vpop.f32.mrb[0].mxu0
        %v4234 = vadd.f32 %v4193, %v4233
        %v4235 = vpop.f32.mrb[0].mxu0
        %v4236 = vpop.f32.mrb[0].mxu0
        %4237 = vdwg.mxu0
        %vm4238 = vcmp.ge.f32.partialorder %v4232, 0.0
        %vm4239 = vcmp.ge.f32.partialorder %v4234, 0.0
        %v4240 = vmul.f32 %v4232, 0.01
        %v4241 = vmul.f32 %v4234, 0.01
        %v4242 = vsel %vm4238, %v4232, %v4240
        %v4243 = vsel %vm4239, %v4234, %v4241
        %v4244 = vpack.c.bf16 %v4242, %v4242
        %v4245 = vpack.c.bf16 %v4243, %v4243
        %v4246 = vunpack.i.l.s16 %v2577
        %v4247 = vunpack.i.h.s16 %v2577
        %v4248 = vunpack.i.l.s16 %v2584
        %v4249 = vunpack.i.h.s16 %v2584
        %v4250 = vpack.i.b16 %v4246, %v4246
        %v4251 = vpack.i.b16 %v4247, %v4247
        %v4252 = vpack.i.b16 %v4248, %v4248
        %v4253 = vpack.i.b16 %v4249, %v4249
        %v4254 = vlaneseq
        %v4255 = vshrl.u32 %v4254, 7
        %v4256 = vsub.s32 0, %v4255
        %v4257 = vrot.slane %v4250, %v4256
        %v4258 = vlaneseq
        %v4259 = vshrl.u32 %v4258, 7
        %v4260 = vsub.s32 1, %v4259
        %v4261 = vrot.slane %v4250, %v4260
        %v4262 = vlaneseq
        %v4263 = vshrl.u32 %v4262, 7
        %v4264 = vsub.s32 0, %v4263
        %v4265 = vrot.slane %v4251, %v4264
        %v4266 = vlaneseq
        %v4267 = vshrl.u32 %v4266, 7
        %v4268 = vsub.s32 1, %v4267
        %v4269 = vrot.slane %v4251, %v4268
        %v4270 = vlaneseq
        %v4271 = vshrl.u32 %v4270, 7
        %v4272 = vsub.s32 0, %v4271
        %v4273 = vrot.slane %v4252, %v4272
        %v4274 = vlaneseq
        %v4275 = vshrl.u32 %v4274, 7
        %v4276 = vsub.s32 1, %v4275
        %v4277 = vrot.slane %v4252, %v4276
        %v4278 = vlaneseq
        %v4279 = vshrl.u32 %v4278, 7
        %v4280 = vsub.s32 0, %v4279
        %v4281 = vrot.slane %v4253, %v4280
        %v4282 = vlaneseq
        %v4283 = vshrl.u32 %v4282, 7
        %v4284 = vsub.s32 1, %v4283
        %v4285 = vrot.slane %v4253, %v4284
        %v4287 = vpack.i.b16 %v4257, %v4257
        %v4289 = vlaneseq
        %v4290 = vshrl.u32 %v4289, 7
        %v4291 = vsub.s32 0, %v4290
        %v4292 = vrot.slane %v4287, %v4291
        %v4294 = vpack.i.b16 %v4261, %v4261
        %v4296 = vlaneseq
        %v4297 = vshrl.u32 %v4296, 7
        %v4298 = vsub.s32 0, %v4297
        %v4299 = vrot.slane %v4294, %v4298
        %v4301 = vpack.i.b16 %v4265, %v4265
        %v4303 = vlaneseq
        %v4304 = vshrl.u32 %v4303, 7
        %v4305 = vsub.s32 0, %v4304
        %v4306 = vrot.slane %v4301, %v4305
        %v4308 = vpack.i.b16 %v4269, %v4269
        %v4310 = vlaneseq
        %v4311 = vshrl.u32 %v4310, 7
        %v4312 = vsub.s32 0, %v4311
        %v4313 = vrot.slane %v4308, %v4312
        %v4315 = vpack.i.b16 %v4273, %v4273
        %v4317 = vlaneseq
        %v4318 = vshrl.u32 %v4317, 7
        %v4319 = vsub.s32 0, %v4318
        %v4320 = vrot.slane %v4315, %v4319
        %v4322 = vpack.i.b16 %v4277, %v4277
        %v4324 = vlaneseq
        %v4325 = vshrl.u32 %v4324, 7
        %v4326 = vsub.s32 0, %v4325
        %v4327 = vrot.slane %v4322, %v4326
        %v4329 = vpack.i.b16 %v4281, %v4281
        %v4331 = vlaneseq
        %v4332 = vshrl.u32 %v4331, 7
        %v4333 = vsub.s32 0, %v4332
        %v4334 = vrot.slane %v4329, %v4333
        %v4336 = vpack.i.b16 %v4285, %v4285
        %v4338 = vlaneseq
        %v4339 = vshrl.u32 %v4338, 7
        %v4340 = vsub.s32 0, %v4339
        %v4341 = vrot.slane %v4336, %v4340
        %v4350 = vcombine.low %v4292, %v4299
        %v4352 = vunpack.c.l.s4 1966171168
        %v4353 = vunpack.c.0.s8 %v4352
        %v4354 = vlaneseq
        %v4355 = vshrl.u32 %v4354, 7
        %v4356 = vsub.s32 %v4353, %v4355
        %v4357 = vrot.slane %v4350, %v4356
        %v4359 = vunpack.c.l.s4 1966171168
        %v4360 = vunpack.c.0.s8 %v4359
        %v4361 = vlaneseq
        %v4362 = vshrl.u32 %v4361, 7
        %v4363 = vsub.s32 %v4360, %v4362
        %v4364 = vrot.slane %v4357, %v4363
        %v4365 = vcombine.low %v4306, %v4313
        %v4367 = vunpack.c.l.s4 1966171168
        %v4368 = vunpack.c.0.s8 %v4367
        %v4369 = vlaneseq
        %v4370 = vshrl.u32 %v4369, 7
        %v4371 = vsub.s32 %v4368, %v4370
        %v4372 = vrot.slane %v4365, %v4371
        %v4374 = vunpack.c.l.s4 1966171168
        %v4375 = vunpack.c.0.s8 %v4374
        %v4376 = vlaneseq
        %v4377 = vshrl.u32 %v4376, 7
        %v4378 = vsub.s32 %v4375, %v4377
        %v4379 = vrot.slane %v4372, %v4378
        %v4380 = vcombine.low %v4320, %v4327
        %v4382 = vunpack.c.l.s4 1966171168
        %v4383 = vunpack.c.0.s8 %v4382
        %v4384 = vlaneseq
        %v4385 = vshrl.u32 %v4384, 7
        %v4386 = vsub.s32 %v4383, %v4385
        %v4387 = vrot.slane %v4380, %v4386
        %v4389 = vunpack.c.l.s4 1966171168
        %v4390 = vunpack.c.0.s8 %v4389
        %v4391 = vlaneseq
        %v4392 = vshrl.u32 %v4391, 7
        %v4393 = vsub.s32 %v4390, %v4392
        %v4394 = vrot.slane %v4387, %v4393
        %v4395 = vcombine.low %v4334, %v4341
        %v4397 = vunpack.c.l.s4 1966171168
        %v4398 = vunpack.c.0.s8 %v4397
        %v4399 = vlaneseq
        %v4400 = vshrl.u32 %v4399, 7
        %v4401 = vsub.s32 %v4398, %v4400
        %v4402 = vrot.slane %v4395, %v4401
        %v4404 = vunpack.c.l.s4 1966171168
        %v4405 = vunpack.c.0.s8 %v4404
        %v4406 = vlaneseq
        %v4407 = vshrl.u32 %v4406, 7
        %v4408 = vsub.s32 %v4405, %v4407
        %v4409 = vrot.slane %v4402, %v4408
        %v4410 = vcombine.low %v4364, %v4379
        %v4411 = vcombine.low %v4394, %v4409
        %v4413 = vunpack.c.l.s4 1966171168
        %v4414 = vunpack.c.0.s8 %v4413
        %v4415 = vlaneseq
        %v4416 = vshrl.u32 %v4415, 7
        %v4417 = vsub.s32 %v4414, %v4416
        %v4418 = vrot.slane %v4410, %v4417
        %v4420 = vunpack.c.l.s4 1966171168
        %v4421 = vunpack.c.0.s8 %v4420
        %v4422 = vlaneseq
        %v4423 = vshrl.u32 %v4422, 7
        %v4424 = vsub.s32 %v4421, %v4423
        %v4425 = vrot.slane %v4411, %v4424
        %v4426 = vcombine.low %v4418, %v4425
        %v4427 = vcombine.high %v4418, %v4425
        %v4429 = vunpack.c.l.s4 1966171168
        %v4430 = vunpack.c.0.s8 %v4429
        %v4431 = vlaneseq
        %v4432 = vshrl.u32 %v4431, 7
        %v4433 = vsub.s32 %v4430, %v4432
        %v4434 = vrot.slane %v4426, %v4433
        %v4436 = vunpack.c.l.s4 1966171168
        %v4437 = vunpack.c.0.s8 %v4436
        %v4438 = vlaneseq
        %v4439 = vshrl.u32 %v4438, 7
        %v4440 = vsub.s32 %v4437, %v4439
        %v4441 = vrot.slane %v4427, %v4440
        %v4443 = vshrl.u32 %v4434, 16
        %v4445 = vrot.slane %v4443, 7
        %v4446 = vshll.u32 %v4434, 16
        %v4448 = vor.u32 %v4445, %v4446
        %v4450 = vshrl.u32 %v4441, 16
        %v4452 = vrot.slane %v4450, 7
        %v4453 = vshll.u32 %v4441, 16
        %v4455 = vor.u32 %v4452, %v4453
        %v4458 = vsel %vm213, %v2558, %v4448
        %v4459 = vsel %vm213, %v2559, %v4455
        %v4460 = vrot.slane %v4446, 1
        %v4461 = vor.u32 %v4443, %v4460
        %v4462 = vrot.slane %v4453, 1
        %v4463 = vor.u32 %v4450, %v4462
        %v4466 = vrot.slane %v2558, 6
        %v4467 = vrot.slane %v2559, 6
        %vm4470 = vcmask 1043456
        %vm4471 = vsmask.f32 3328
        %vm4472 = vmand %vm4470, %vm4471
        %v4473 = vsel %vm4472, %v4461, %v4466
        %v4474 = vsel %vm4472, %v4463, %v4467
        %v4479 = vcombine.low %v4244, %v4245
        %v4481 = vunpack.c.l.s4 1966171168
        %v4482 = vunpack.c.0.s8 %v4481
        %v4483 = vlaneseq
        %v4484 = vshrl.u32 %v4483, 7
        %v4485 = vsub.s32 %v4482, %v4484
        %v4486 = vrot.slane %v4479, %v4485
        %v4487 = vcombine.high %v4486, %v4486
        %v4489 = vunpack.c.l.s4 1966171168
        %v4490 = vunpack.c.0.s8 %v4489
        %v4491 = vlaneseq
        %v4492 = vshrl.u32 %v4491, 7
        %v4493 = vsub.s32 %v4490, %v4492
        %v4494 = vrot.slane %v4486, %v4493
        %v4496 = vunpack.c.l.s4 1966171168
        %v4497 = vunpack.c.0.s8 %v4496
        %v4498 = vlaneseq
        %v4499 = vshrl.u32 %v4498, 7
        %v4500 = vsub.s32 %v4497, %v4499
        %v4501 = vrot.slane %v4487, %v4500
        %v4502 = vunpack.i.l.s16 %v4494
        %v4503 = vunpack.i.h.s16 %v4494
        %v4504 = vunpack.i.l.s16 %v4501
        %v4505 = vunpack.i.h.s16 %v4501
        %v4506 = vpack.i.b16 %v4502, %v4502
        %v4507 = vpack.i.b16 %v4503, %v4503
        %v4508 = vpack.i.b16 %v4504, %v4504
        %v4509 = vpack.i.b16 %v4505, %v4505
        %v4510 = vlaneseq
        %v4511 = vshrl.u32 %v4510, 7
        %v4512 = vsub.s32 0, %v4511
        %v4513 = vrot.slane %v4506, %v4512
        %v4514 = vlaneseq
        %v4515 = vshrl.u32 %v4514, 7
        %v4516 = vsub.s32 1, %v4515
        %v4517 = vrot.slane %v4506, %v4516
        %v4518 = vlaneseq
        %v4519 = vshrl.u32 %v4518, 7
        %v4520 = vsub.s32 0, %v4519
        %v4521 = vrot.slane %v4507, %v4520
        %v4522 = vlaneseq
        %v4523 = vshrl.u32 %v4522, 7
        %v4524 = vsub.s32 1, %v4523
        %v4525 = vrot.slane %v4507, %v4524
        %v4526 = vlaneseq
        %v4527 = vshrl.u32 %v4526, 7
        %v4528 = vsub.s32 0, %v4527
        %v4529 = vrot.slane %v4508, %v4528
        %v4530 = vlaneseq
        %v4531 = vshrl.u32 %v4530, 7
        %v4532 = vsub.s32 1, %v4531
        %v4533 = vrot.slane %v4508, %v4532
        %v4534 = vlaneseq
        %v4535 = vshrl.u32 %v4534, 7
        %v4536 = vsub.s32 0, %v4535
        %v4537 = vrot.slane %v4509, %v4536
        %v4538 = vlaneseq
        %v4539 = vshrl.u32 %v4538, 7
        %v4540 = vsub.s32 1, %v4539
        %v4541 = vrot.slane %v4509, %v4540
        %v4543 = vpack.i.b16 %v4513, %v4513
        %v4545 = vlaneseq
        %v4546 = vshrl.u32 %v4545, 7
        %v4547 = vsub.s32 0, %v4546
        %v4548 = vrot.slane %v4543, %v4547
        %v4550 = vpack.i.b16 %v4517, %v4517
        %v4552 = vlaneseq
        %v4553 = vshrl.u32 %v4552, 7
        %v4554 = vsub.s32 0, %v4553
        %v4555 = vrot.slane %v4550, %v4554
        %v4557 = vpack.i.b16 %v4521, %v4521
        %v4559 = vlaneseq
        %v4560 = vshrl.u32 %v4559, 7
        %v4561 = vsub.s32 0, %v4560
        %v4562 = vrot.slane %v4557, %v4561
        %v4564 = vpack.i.b16 %v4525, %v4525
        %v4566 = vlaneseq
        %v4567 = vshrl.u32 %v4566, 7
        %v4568 = vsub.s32 0, %v4567
        %v4569 = vrot.slane %v4564, %v4568
        %v4571 = vpack.i.b16 %v4529, %v4529
        %v4573 = vlaneseq
        %v4574 = vshrl.u32 %v4573, 7
        %v4575 = vsub.s32 0, %v4574
        %v4576 = vrot.slane %v4571, %v4575
        %v4578 = vpack.i.b16 %v4533, %v4533
        %v4580 = vlaneseq
        %v4581 = vshrl.u32 %v4580, 7
        %v4582 = vsub.s32 0, %v4581
        %v4583 = vrot.slane %v4578, %v4582
        %v4585 = vpack.i.b16 %v4537, %v4537
        %v4587 = vlaneseq
        %v4588 = vshrl.u32 %v4587, 7
        %v4589 = vsub.s32 0, %v4588
        %v4590 = vrot.slane %v4585, %v4589
        %v4592 = vpack.i.b16 %v4541, %v4541
        %v4594 = vlaneseq
        %v4595 = vshrl.u32 %v4594, 7
        %v4596 = vsub.s32 0, %v4595
        %v4597 = vrot.slane %v4592, %v4596
        %v4606 = vcombine.low %v4548, %v4555
        %v4608 = vunpack.c.l.s4 1966171168
        %v4609 = vunpack.c.0.s8 %v4608
        %v4610 = vlaneseq
        %v4611 = vshrl.u32 %v4610, 7
        %v4612 = vsub.s32 %v4609, %v4611
        %v4613 = vrot.slane %v4606, %v4612
        %v4615 = vunpack.c.l.s4 1966171168
        %v4616 = vunpack.c.0.s8 %v4615
        %v4617 = vlaneseq
        %v4618 = vshrl.u32 %v4617, 7
        %v4619 = vsub.s32 %v4616, %v4618
        %v4620 = vrot.slane %v4613, %v4619
        %v4621 = vcombine.low %v4562, %v4569
        %v4623 = vunpack.c.l.s4 1966171168
        %v4624 = vunpack.c.0.s8 %v4623
        %v4625 = vlaneseq
        %v4626 = vshrl.u32 %v4625, 7
        %v4627 = vsub.s32 %v4624, %v4626
        %v4628 = vrot.slane %v4621, %v4627
        %v4630 = vunpack.c.l.s4 1966171168
        %v4631 = vunpack.c.0.s8 %v4630
        %v4632 = vlaneseq
        %v4633 = vshrl.u32 %v4632, 7
        %v4634 = vsub.s32 %v4631, %v4633
        %v4635 = vrot.slane %v4628, %v4634
        %v4636 = vcombine.low %v4576, %v4583
        %v4638 = vunpack.c.l.s4 1966171168
        %v4639 = vunpack.c.0.s8 %v4638
        %v4640 = vlaneseq
        %v4641 = vshrl.u32 %v4640, 7
        %v4642 = vsub.s32 %v4639, %v4641
        %v4643 = vrot.slane %v4636, %v4642
        %v4645 = vunpack.c.l.s4 1966171168
        %v4646 = vunpack.c.0.s8 %v4645
        %v4647 = vlaneseq
        %v4648 = vshrl.u32 %v4647, 7
        %v4649 = vsub.s32 %v4646, %v4648
        %v4650 = vrot.slane %v4643, %v4649
        %v4651 = vcombine.low %v4590, %v4597
        %v4653 = vunpack.c.l.s4 1966171168
        %v4654 = vunpack.c.0.s8 %v4653
        %v4655 = vlaneseq
        %v4656 = vshrl.u32 %v4655, 7
        %v4657 = vsub.s32 %v4654, %v4656
        %v4658 = vrot.slane %v4651, %v4657
        %v4660 = vunpack.c.l.s4 1966171168
        %v4661 = vunpack.c.0.s8 %v4660
        %v4662 = vlaneseq
        %v4663 = vshrl.u32 %v4662, 7
        %v4664 = vsub.s32 %v4661, %v4663
        %v4665 = vrot.slane %v4658, %v4664
        %v4666 = vcombine.low %v4620, %v4635
        %v4667 = vcombine.low %v4650, %v4665
        %v4669 = vunpack.c.l.s4 1966171168
        %v4670 = vunpack.c.0.s8 %v4669
        %v4671 = vlaneseq
        %v4672 = vshrl.u32 %v4671, 7
        %v4673 = vsub.s32 %v4670, %v4672
        %v4674 = vrot.slane %v4666, %v4673
        %v4676 = vunpack.c.l.s4 1966171168
        %v4677 = vunpack.c.0.s8 %v4676
        %v4678 = vlaneseq
        %v4679 = vshrl.u32 %v4678, 7
        %v4680 = vsub.s32 %v4677, %v4679
        %v4681 = vrot.slane %v4667, %v4680
        %v4682 = vcombine.low %v4674, %v4681
        %v4683 = vcombine.high %v4674, %v4681
        %v4685 = vunpack.c.l.s4 1966171168
        %v4686 = vunpack.c.0.s8 %v4685
        %v4687 = vlaneseq
        %v4688 = vshrl.u32 %v4687, 7
        %v4689 = vsub.s32 %v4686, %v4688
        %v4690 = vrot.slane %v4682, %v4689
        %v4692 = vunpack.c.l.s4 1966171168
        %v4693 = vunpack.c.0.s8 %v4692
        %v4694 = vlaneseq
        %v4695 = vshrl.u32 %v4694, 7
        %v4696 = vsub.s32 %v4693, %v4695
        %v4697 = vrot.slane %v4683, %v4696
        %v4699 = vshrl.u32 %v4690, 16
        %v4701 = vrot.slane %v4699, 7
        %v4702 = vshll.u32 %v4690, 16
        %v4704 = vor.u32 %v4701, %v4702
        %v4706 = vshrl.u32 %v4697, 16
        %v4708 = vrot.slane %v4706, 7
        %v4709 = vshll.u32 %v4697, 16
        %v4711 = vor.u32 %v4708, %v4709
        %v4714 = vsel %vm213, %v4244, %v4704
        %v4715 = vsel %vm213, %v4245, %v4711
        %v4716 = vrot.slane %v4702, 1
        %v4717 = vor.u32 %v4699, %v4716
        %v4718 = vrot.slane %v4709, 1
        %v4719 = vor.u32 %v4706, %v4718
        %v4722 = vrot.slane %v4244, 6
        %v4723 = vrot.slane %v4245, 6
        %v4726 = vsel %vm4472, %v4717, %v4722
        %v4727 = vsel %vm4472, %v4719, %v4723
        %v4730 = vld [vmem:[#allocation2 + $0xd80] sm:$0xff]
        %v4731 = vld [vmem:[#allocation2 + $0xd88] sm:$0xff]
        %v4732 = vld [vmem:[#allocation2 + $0xd90] sm:$0xff]
        %v4733 = vld [vmem:[#allocation2 + $0xd98] sm:$0xff]
        %v4734 = vld [vmem:[#allocation2 + $0xda0] sm:$0xff]
        %v4735 = vld [vmem:[#allocation2 + $0xda8] sm:$0xff]
        %v4736 = vld [vmem:[#allocation2 + $0xdb0] sm:$0xff]
        %v4737 = vld [vmem:[#allocation2 + $0xdb8] sm:$0xff]
        %v4738 = vld [vmem:[#allocation2 + $0xdc0] sm:$0xff]
        %v4739 = vld [vmem:[#allocation2 + $0xdc8] sm:$0xff]
        %v4740 = vld [vmem:[#allocation2 + $0xdd0] sm:$0xff]
        %v4741 = vld [vmem:[#allocation2 + $0xdd8] sm:$0xff]
        %v4742 = vld [vmem:[#allocation2 + $0xde0] sm:$0xff]
        %v4743 = vld [vmem:[#allocation2 + $0xde8] sm:$0xff]
        %v4744 = vld [vmem:[#allocation2 + $0xdf0] sm:$0xff]
        %v4745 = vld [vmem:[#allocation2 + $0xdf8] sm:$0xff]
        %v4746 = vld [vmem:[#allocation2 + $0xe00] sm:$0xff]
        %v4747 = vld [vmem:[#allocation2 + $0xe08] sm:$0xff]
        %v4748 = vld [vmem:[#allocation2 + $0xe10] sm:$0xff]
        %v4749 = vld [vmem:[#allocation2 + $0xe18] sm:$0xff]
        %v4750 = vld [vmem:[#allocation2 + $0xe20] sm:$0xff]
        %v4751 = vld [vmem:[#allocation2 + $0xe28] sm:$0xff]
        %v4752 = vld [vmem:[#allocation2 + $0xe30] sm:$0xff]
        %v4753 = vld [vmem:[#allocation2 + $0xe38] sm:$0xff]
        %v4754 = vld [vmem:[#allocation2 + $0xe40] sm:$0xff]
        %v4755 = vld [vmem:[#allocation2 + $0xe48] sm:$0xff]
        %v4756 = vld [vmem:[#allocation2 + $0xe50] sm:$0xff]
        %v4757 = vld [vmem:[#allocation2 + $0xe58] sm:$0xff]
        %v4758 = vld [vmem:[#allocation2 + $0xe60] sm:$0xff]
        %v4759 = vld [vmem:[#allocation2 + $0xe68] sm:$0xff]
        %v4760 = vld [vmem:[#allocation2 + $0xe70] sm:$0xff]
        %v4761 = vld [vmem:[#allocation2 + $0xe78] sm:$0xff]
        %v4762 = vld [vmem:[#allocation2 + $0xe80] sm:$0xff]
        %v4763 = vld [vmem:[#allocation2 + $0xe88] sm:$0xff]
        %v4764 = vld [vmem:[#allocation2 + $0xe90] sm:$0xff]
        %v4765 = vld [vmem:[#allocation2 + $0xe98] sm:$0xff]
        %v4766 = vld [vmem:[#allocation2 + $0xea0] sm:$0xff]
        %v4767 = vld [vmem:[#allocation2 + $0xea8] sm:$0xff]
        %v4768 = vld [vmem:[#allocation2 + $0xeb0] sm:$0xff]
        %v4769 = vld [vmem:[#allocation2 + $0xeb8] sm:$0xff]
        %v4770 = vld [vmem:[#allocation2 + $0xec0] sm:$0xff]
        %v4771 = vld [vmem:[#allocation2 + $0xec8] sm:$0xff]
        %v4772 = vld [vmem:[#allocation2 + $0xed0] sm:$0xff]
        %v4773 = vld [vmem:[#allocation2 + $0xed8] sm:$0xff]
        %v4774 = vld [vmem:[#allocation2 + $0xee0] sm:$0xff]
        %v4775 = vld [vmem:[#allocation2 + $0xee8] sm:$0xff]
        %v4776 = vld [vmem:[#allocation2 + $0xef0] sm:$0xff]
        %v4777 = vld [vmem:[#allocation2 + $0xef8] sm:$0xff]
        %v4778 = vld [vmem:[#allocation2 + $0xf00] sm:$0xff]
        %v4779 = vld [vmem:[#allocation2 + $0xf08] sm:$0xff]
        %v4780 = vld [vmem:[#allocation2 + $0xf10] sm:$0xff]
        %v4781 = vld [vmem:[#allocation2 + $0xf18] sm:$0xff]
        %v4782 = vld [vmem:[#allocation2 + $0xf20] sm:$0xff]
        %v4783 = vld [vmem:[#allocation2 + $0xf28] sm:$0xff]
        %v4784 = vld [vmem:[#allocation2 + $0xf30] sm:$0xff]
        %v4785 = vld [vmem:[#allocation2 + $0xf38] sm:$0xff]
        %v4786 = vld [vmem:[#allocation2 + $0xf40] sm:$0xff]
        %v4787 = vld [vmem:[#allocation2 + $0xf48] sm:$0xff]
        %v4788 = vld [vmem:[#allocation2 + $0xf50] sm:$0xff]
        %v4789 = vld [vmem:[#allocation2 + $0xf58] sm:$0xff]
        %v4790 = vld [vmem:[#allocation2 + $0xf60] sm:$0xff]
        %v4791 = vld [vmem:[#allocation2 + $0xf68] sm:$0xff]
        %v4792 = vld [vmem:[#allocation2 + $0xf70] sm:$0xff]
        %v4793 = vld [vmem:[#allocation2 + $0xf78] sm:$0xff]
        %v4794 = vld [vmem:[#allocation2 + $0xf80] sm:$0xff]
        %v4795 = vld [vmem:[#allocation2 + $0xf88] sm:$0xff]
        %v4796 = vld [vmem:[#allocation2 + $0xf90] sm:$0xff]
        %v4797 = vld [vmem:[#allocation2 + $0xf98] sm:$0xff]
        %v4798 = vld [vmem:[#allocation2 + $0xfa0] sm:$0xff]
        %v4799 = vld [vmem:[#allocation2 + $0xfa8] sm:$0xff]
        %v4800 = vld [vmem:[#allocation2 + $0xfb0] sm:$0xff]
        %v4801 = vld [vmem:[#allocation2 + $0xfb8] sm:$0xff]
        %v4802 = vld [vmem:[#allocation2 + $0xfc0] sm:$0xff]
        %v4803 = vld [vmem:[#allocation2 + $0xfc8] sm:$0xff]
        %v4804 = vld [vmem:[#allocation2 + $0xfd0] sm:$0xff]
        %v4805 = vld [vmem:[#allocation2 + $0xfd8] sm:$0xff]
        %v4806 = vld [vmem:[#allocation2 + $0xfe0] sm:$0xff]
        %v4807 = vld [vmem:[#allocation2 + $0xfe8] sm:$0xff]
        %v4808 = vld [vmem:[#allocation2 + $0xff0] sm:$0xff]
        %v4809 = vld [vmem:[#allocation2 + $0xff8] sm:$0xff]
        %v4810 = vld [vmem:[#allocation2 + $0x1000] sm:$0xff]
        %v4811 = vld [vmem:[#allocation2 + $0x1008] sm:$0xff]
        %v4812 = vld [vmem:[#allocation2 + $0x1010] sm:$0xff]
        %v4813 = vld [vmem:[#allocation2 + $0x1018] sm:$0xff]
        %v4814 = vld [vmem:[#allocation2 + $0x1020] sm:$0xff]
        %v4815 = vld [vmem:[#allocation2 + $0x1028] sm:$0xff]
        %v4816 = vld [vmem:[#allocation2 + $0x1030] sm:$0xff]
        %v4817 = vld [vmem:[#allocation2 + $0x1038] sm:$0xff]
        %v4818 = vld [vmem:[#allocation2 + $0x1040] sm:$0xff]
        %v4819 = vld [vmem:[#allocation2 + $0x1048] sm:$0xff]
        %v4820 = vld [vmem:[#allocation2 + $0x1050] sm:$0xff]
        %v4821 = vld [vmem:[#allocation2 + $0x1058] sm:$0xff]
        %v4822 = vld [vmem:[#allocation2 + $0x1060] sm:$0xff]
        %v4823 = vld [vmem:[#allocation2 + $0x1068] sm:$0xff]
        %v4824 = vld [vmem:[#allocation2 + $0x1070] sm:$0xff]
        %v4825 = vld [vmem:[#allocation2 + $0x1078] sm:$0xff]
        %v4826 = vld [vmem:[#allocation2 + $0x1080] sm:$0xff]
        %v4827 = vld [vmem:[#allocation2 + $0x1088] sm:$0xff]
        %v4828 = vld [vmem:[#allocation2 + $0x1090] sm:$0xff]
        %v4829 = vld [vmem:[#allocation2 + $0x1098] sm:$0xff]
        %v4830 = vld [vmem:[#allocation2 + $0x10a0] sm:$0xff]
        %v4831 = vld [vmem:[#allocation2 + $0x10a8] sm:$0xff]
        %v4832 = vld [vmem:[#allocation2 + $0x10b0] sm:$0xff]
        %v4833 = vld [vmem:[#allocation2 + $0x10b8] sm:$0xff]
        %v4834 = vld [vmem:[#allocation2 + $0x10c0] sm:$0xff]
        %v4835 = vld [vmem:[#allocation2 + $0x10c8] sm:$0xff]
        %v4836 = vld [vmem:[#allocation2 + $0x10d0] sm:$0xff]
        %v4837 = vld [vmem:[#allocation2 + $0x10d8] sm:$0xff]
        %v4838 = vld [vmem:[#allocation2 + $0x10e0] sm:$0xff]
        %v4839 = vld [vmem:[#allocation2 + $0x10e8] sm:$0xff]
        %v4840 = vld [vmem:[#allocation2 + $0x10f0] sm:$0xff]
        %v4841 = vld [vmem:[#allocation2 + $0x10f8] sm:$0xff]
        %v4842 = vld [vmem:[#allocation2 + $0x1100] sm:$0xff]
        %v4843 = vld [vmem:[#allocation2 + $0x1108] sm:$0xff]
        %v4844 = vld [vmem:[#allocation2 + $0x1110] sm:$0xff]
        %v4845 = vld [vmem:[#allocation2 + $0x1118] sm:$0xff]
        %v4846 = vld [vmem:[#allocation2 + $0x1120] sm:$0xff]
        %v4847 = vld [vmem:[#allocation2 + $0x1128] sm:$0xff]
        %v4848 = vld [vmem:[#allocation2 + $0x1130] sm:$0xff]
        %v4849 = vld [vmem:[#allocation2 + $0x1138] sm:$0xff]
        %v4850 = vld [vmem:[#allocation2 + $0x1140] sm:$0xff]
        %v4851 = vld [vmem:[#allocation2 + $0x1148] sm:$0xff]
        %v4852 = vld [vmem:[#allocation2 + $0x1150] sm:$0xff]
        %v4853 = vld [vmem:[#allocation2 + $0x1158] sm:$0xff]
        %v4854 = vld [vmem:[#allocation2 + $0x1160] sm:$0xff]
        %v4855 = vld [vmem:[#allocation2 + $0x1168] sm:$0xff]
        %v4856 = vld [vmem:[#allocation2 + $0x1170] sm:$0xff]
        %v4857 = vld [vmem:[#allocation2 + $0x1178] sm:$0xff]
        %v4858 = vld [vmem:[#allocation2 + $0x1180] sm:$0xff]
        %v4859 = vld [vmem:[#allocation2 + $0x1188] sm:$0xff]
        %v4860 = vld [vmem:[#allocation2 + $0x1190] sm:$0xff]
        %v4861 = vld [vmem:[#allocation2 + $0x1198] sm:$0xff]
        %v4862 = vld [vmem:[#allocation2 + $0x11a0] sm:$0xff]
        %v4863 = vld [vmem:[#allocation2 + $0x11a8] sm:$0xff]
        %v4864 = vld [vmem:[#allocation2 + $0x11b0] sm:$0xff]
        %v4865 = vld [vmem:[#allocation2 + $0x11b8] sm:$0xff]
        %v4866 = vld [vmem:[#allocation2 + $0x11c0] sm:$0xff]
        %v4867 = vld [vmem:[#allocation2 + $0x11c8] sm:$0xff]
        %v4868 = vld [vmem:[#allocation2 + $0x11d0] sm:$0xff]
        %v4869 = vld [vmem:[#allocation2 + $0x11d8] sm:$0xff]
        %v4870 = vld [vmem:[#allocation2 + $0x11e0] sm:$0xff]
        %v4871 = vld [vmem:[#allocation2 + $0x11e8] sm:$0xff]
        %v4872 = vld [vmem:[#allocation2 + $0x11f0] sm:$0xff]
        %v4873 = vld [vmem:[#allocation2 + $0x11f8] sm:$0xff]
        %v4874 = vld [vmem:[#allocation2 + $0x1200] sm:$0xff]
        %v4875 = vld [vmem:[#allocation2 + $0x1208] sm:$0xff]
        %v4876 = vld [vmem:[#allocation2 + $0x1210] sm:$0xff]
        %v4877 = vld [vmem:[#allocation2 + $0x1218] sm:$0xff]
        %v4878 = vld [vmem:[#allocation2 + $0x1220] sm:$0xff]
        %v4879 = vld [vmem:[#allocation2 + $0x1228] sm:$0xff]
        %v4880 = vld [vmem:[#allocation2 + $0x1230] sm:$0xff]
        %v4881 = vld [vmem:[#allocation2 + $0x1238] sm:$0xff]
        %v4882 = vld [vmem:[#allocation2 + $0x1240] sm:$0xff]
        %v4883 = vld [vmem:[#allocation2 + $0x1248] sm:$0xff]
        %v4884 = vld [vmem:[#allocation2 + $0x1250] sm:$0xff]
        %v4885 = vld [vmem:[#allocation2 + $0x1258] sm:$0xff]
        %v4886 = vld [vmem:[#allocation2 + $0x1260] sm:$0xff]
        %v4887 = vld [vmem:[#allocation2 + $0x1268] sm:$0xff]
        %v4888 = vld [vmem:[#allocation2 + $0x1270] sm:$0xff]
        %v4889 = vld [vmem:[#allocation2 + $0x1278] sm:$0xff]
        %v4890 = vld [vmem:[#allocation2 + $0x1280] sm:$0xff]
        %v4891 = vld [vmem:[#allocation2 + $0x1288] sm:$0xff]
        %v4892 = vld [vmem:[#allocation2 + $0x1290] sm:$0xff]
        %v4893 = vld [vmem:[#allocation2 + $0x1298] sm:$0xff]
        %v4894 = vld [vmem:[#allocation2 + $0x12a0] sm:$0xff]
        %v4895 = vld [vmem:[#allocation2 + $0x12a8] sm:$0xff]
        %v4896 = vld [vmem:[#allocation2 + $0x12b0] sm:$0xff]
        %v4897 = vld [vmem:[#allocation2 + $0x12b8] sm:$0xff]
        %v4898 = vld [vmem:[#allocation2 + $0x12c0] sm:$0xff]
        %v4899 = vld [vmem:[#allocation2 + $0x12c8] sm:$0xff]
        %v4900 = vld [vmem:[#allocation2 + $0x12d0] sm:$0xff]
        %v4901 = vld [vmem:[#allocation2 + $0x12d8] sm:$0xff]
        %v4902 = vld [vmem:[#allocation2 + $0x12e0] sm:$0xff]
        %v4903 = vld [vmem:[#allocation2 + $0x12e8] sm:$0xff]
        %v4904 = vld [vmem:[#allocation2 + $0x12f0] sm:$0xff]
        %v4905 = vld [vmem:[#allocation2 + $0x12f8] sm:$0xff]
        %v4906 = vld [vmem:[#allocation2 + $0x1300] sm:$0xff]
        %v4907 = vld [vmem:[#allocation2 + $0x1308] sm:$0xff]
        %v4908 = vld [vmem:[#allocation2 + $0x1310] sm:$0xff]
        %v4909 = vld [vmem:[#allocation2 + $0x1318] sm:$0xff]
        %v4910 = vld [vmem:[#allocation2 + $0x1320] sm:$0xff]
        %v4911 = vld [vmem:[#allocation2 + $0x1328] sm:$0xff]
        %v4912 = vld [vmem:[#allocation2 + $0x1330] sm:$0xff]
        %v4913 = vld [vmem:[#allocation2 + $0x1338] sm:$0xff]
        %v4914 = vld [vmem:[#allocation2 + $0x1340] sm:$0xff]
        %v4915 = vld [vmem:[#allocation2 + $0x1348] sm:$0xff]
        %v4916 = vld [vmem:[#allocation2 + $0x1350] sm:$0xff]
        %v4917 = vld [vmem:[#allocation2 + $0x1358] sm:$0xff]
        %v4918 = vld [vmem:[#allocation2 + $0x1360] sm:$0xff]
        %v4919 = vld [vmem:[#allocation2 + $0x1368] sm:$0xff]
        %v4920 = vld [vmem:[#allocation2 + $0x1370] sm:$0xff]
        %v4921 = vld [vmem:[#allocation2 + $0x1378] sm:$0xff]
        %s4922 = scalar_lea.vmem [#allocation4], 5
        %v4923 = vld [vmem:[%s4922] ss:$8 sm:$0x3]
        %v4925 = vlaneseq
        %v4926 = vshrl.u32 %v4925, 7
        %v4927 = vsub.s32 0, %v4926
        %v4928 = vrot.slane %v4923, %v4927
        %v4929 = vlaneseq
        %v4930 = vshrl.u32 %v4929, 7
        %v4931 = vsub.s32 1, %v4930
        %v4932 = vrot.slane %v4923, %v4931
        %v5127 = vunpack.c.l.b16 %v4730
        %v5128 = vunpack.c.h.b16 %v4730
        %v5129 = vunpack.c.l.b16 %v4731
        %v5130 = vunpack.c.h.b16 %v4731
        %v5131 = vunpack.c.l.b16 %v4732
        %v5132 = vunpack.c.h.b16 %v4732
        %v5133 = vunpack.c.l.b16 %v4733
        %v5134 = vunpack.c.h.b16 %v4733
        %v5135 = vunpack.c.l.b16 %v4734
        %v5136 = vunpack.c.h.b16 %v4734
        %v5137 = vunpack.c.l.b16 %v4735
        %v5138 = vunpack.c.h.b16 %v4735
        %v5139 = vunpack.c.l.b16 %v4736
        %v5140 = vunpack.c.h.b16 %v4736
        %v5141 = vunpack.c.l.b16 %v4737
        %v5142 = vunpack.c.h.b16 %v4737
        %v5143 = vunpack.c.l.b16 %v4738
        %v5144 = vunpack.c.h.b16 %v4738
        %v5145 = vunpack.c.l.b16 %v4739
        %v5146 = vunpack.c.h.b16 %v4739
        %v5147 = vunpack.c.l.b16 %v4740
        %v5148 = vunpack.c.h.b16 %v4740
        %v5149 = vunpack.c.l.b16 %v4741
        %v5150 = vunpack.c.h.b16 %v4741
        %v5151 = vunpack.c.l.b16 %v4742
        %v5152 = vunpack.c.h.b16 %v4742
        %v5153 = vunpack.c.l.b16 %v4743
        %v5154 = vunpack.c.h.b16 %v4743
        %v5155 = vunpack.c.l.b16 %v4744
        %v5156 = vunpack.c.h.b16 %v4744
        %v5157 = vunpack.c.l.b16 %v4745
        %v5158 = vunpack.c.h.b16 %v4745
        %v5159 = vunpack.c.l.b16 %v4746
        %v5160 = vunpack.c.h.b16 %v4746
        %v5161 = vunpack.c.l.b16 %v4747
        %v5162 = vunpack.c.h.b16 %v4747
        %v5163 = vunpack.c.l.b16 %v4748
        %v5164 = vunpack.c.h.b16 %v4748
        %v5165 = vunpack.c.l.b16 %v4749
        %v5166 = vunpack.c.h.b16 %v4749
        %v5167 = vunpack.c.l.b16 %v4750
        %v5168 = vunpack.c.h.b16 %v4750
        %v5169 = vunpack.c.l.b16 %v4751
        %v5170 = vunpack.c.h.b16 %v4751
        %v5171 = vunpack.c.l.b16 %v4752
        %v5172 = vunpack.c.h.b16 %v4752
        %v5173 = vunpack.c.l.b16 %v4753
        %v5174 = vunpack.c.h.b16 %v4753
        %v5175 = vunpack.c.l.b16 %v4754
        %v5176 = vunpack.c.h.b16 %v4754
        %v5177 = vunpack.c.l.b16 %v4755
        %v5178 = vunpack.c.h.b16 %v4755
        %v5179 = vunpack.c.l.b16 %v4756
        %v5180 = vunpack.c.h.b16 %v4756
        %v5181 = vunpack.c.l.b16 %v4757
        %v5182 = vunpack.c.h.b16 %v4757
        %v5183 = vunpack.c.l.b16 %v4758
        %v5184 = vunpack.c.h.b16 %v4758
        %v5185 = vunpack.c.l.b16 %v4759
        %v5186 = vunpack.c.h.b16 %v4759
        %v5187 = vunpack.c.l.b16 %v4760
        %v5188 = vunpack.c.h.b16 %v4760
        %v5189 = vunpack.c.l.b16 %v4761
        %v5190 = vunpack.c.h.b16 %v4761
        %v5191 = vunpack.c.l.b16 %v4762
        %v5192 = vunpack.c.h.b16 %v4762
        %v5193 = vunpack.c.l.b16 %v4763
        %v5194 = vunpack.c.h.b16 %v4763
        %v5195 = vunpack.c.l.b16 %v4764
        %v5196 = vunpack.c.h.b16 %v4764
        %v5197 = vunpack.c.l.b16 %v4765
        %v5198 = vunpack.c.h.b16 %v4765
        %v5199 = vunpack.c.l.b16 %v4766
        %v5200 = vunpack.c.h.b16 %v4766
        %v5201 = vunpack.c.l.b16 %v4767
        %v5202 = vunpack.c.h.b16 %v4767
        %v5203 = vunpack.c.l.b16 %v4768
        %v5204 = vunpack.c.h.b16 %v4768
        %v5205 = vunpack.c.l.b16 %v4769
        %v5206 = vunpack.c.h.b16 %v4769
        %v5207 = vunpack.c.l.b16 %v4770
        %v5208 = vunpack.c.h.b16 %v4770
        %v5209 = vunpack.c.l.b16 %v4771
        %v5210 = vunpack.c.h.b16 %v4771
        %v5211 = vunpack.c.l.b16 %v4772
        %v5212 = vunpack.c.h.b16 %v4772
        %v5213 = vunpack.c.l.b16 %v4773
        %v5214 = vunpack.c.h.b16 %v4773
        %v5215 = vunpack.c.l.b16 %v4774
        %v5216 = vunpack.c.h.b16 %v4774
        %v5217 = vunpack.c.l.b16 %v4775
        %v5218 = vunpack.c.h.b16 %v4775
        %v5219 = vunpack.c.l.b16 %v4776
        %v5220 = vunpack.c.h.b16 %v4776
        %v5221 = vunpack.c.l.b16 %v4777
        %v5222 = vunpack.c.h.b16 %v4777
        %v5223 = vunpack.c.l.b16 %v4778
        %v5224 = vunpack.c.h.b16 %v4778
        %v5225 = vunpack.c.l.b16 %v4779
        %v5226 = vunpack.c.h.b16 %v4779
        %v5227 = vunpack.c.l.b16 %v4780
        %v5228 = vunpack.c.h.b16 %v4780
        %v5229 = vunpack.c.l.b16 %v4781
        %v5230 = vunpack.c.h.b16 %v4781
        %v5231 = vunpack.c.l.b16 %v4782
        %v5232 = vunpack.c.h.b16 %v4782
        %v5233 = vunpack.c.l.b16 %v4783
        %v5234 = vunpack.c.h.b16 %v4783
        %v5235 = vunpack.c.l.b16 %v4784
        %v5236 = vunpack.c.h.b16 %v4784
        %v5237 = vunpack.c.l.b16 %v4785
        %v5238 = vunpack.c.h.b16 %v4785
        %v5239 = vunpack.c.l.b16 %v4786
        %v5240 = vunpack.c.h.b16 %v4786
        %v5241 = vunpack.c.l.b16 %v4787
        %v5242 = vunpack.c.h.b16 %v4787
        %v5243 = vunpack.c.l.b16 %v4788
        %v5244 = vunpack.c.h.b16 %v4788
        %v5245 = vunpack.c.l.b16 %v4789
        %v5246 = vunpack.c.h.b16 %v4789
        %v5247 = vunpack.c.l.b16 %v4790
        %v5248 = vunpack.c.h.b16 %v4790
        %v5249 = vunpack.c.l.b16 %v4791
        %v5250 = vunpack.c.h.b16 %v4791
        %v5251 = vunpack.c.l.b16 %v4792
        %v5252 = vunpack.c.h.b16 %v4792
        %v5253 = vunpack.c.l.b16 %v4793
        %v5254 = vunpack.c.h.b16 %v4793
        %v5255 = vunpack.c.l.b16 %v4794
        %v5256 = vunpack.c.h.b16 %v4794
        %v5257 = vunpack.c.l.b16 %v4795
        %v5258 = vunpack.c.h.b16 %v4795
        %v5259 = vunpack.c.l.b16 %v4796
        %v5260 = vunpack.c.h.b16 %v4796
        %v5261 = vunpack.c.l.b16 %v4797
        %v5262 = vunpack.c.h.b16 %v4797
        %v5263 = vunpack.c.l.b16 %v4798
        %v5264 = vunpack.c.h.b16 %v4798
        %v5265 = vunpack.c.l.b16 %v4799
        %v5266 = vunpack.c.h.b16 %v4799
        %v5267 = vunpack.c.l.b16 %v4800
        %v5268 = vunpack.c.h.b16 %v4800
        %v5269 = vunpack.c.l.b16 %v4801
        %v5270 = vunpack.c.h.b16 %v4801
        %v5271 = vunpack.c.l.b16 %v4802
        %v5272 = vunpack.c.h.b16 %v4802
        %v5273 = vunpack.c.l.b16 %v4803
        %v5274 = vunpack.c.h.b16 %v4803
        %v5275 = vunpack.c.l.b16 %v4804
        %v5276 = vunpack.c.h.b16 %v4804
        %v5277 = vunpack.c.l.b16 %v4805
        %v5278 = vunpack.c.h.b16 %v4805
        %v5279 = vunpack.c.l.b16 %v4806
        %v5280 = vunpack.c.h.b16 %v4806
        %v5281 = vunpack.c.l.b16 %v4807
        %v5282 = vunpack.c.h.b16 %v4807
        %v5283 = vunpack.c.l.b16 %v4808
        %v5284 = vunpack.c.h.b16 %v4808
        %v5285 = vunpack.c.l.b16 %v4809
        %v5286 = vunpack.c.h.b16 %v4809
        %v5287 = vunpack.c.l.b16 %v4810
        %v5288 = vunpack.c.h.b16 %v4810
        %v5289 = vunpack.c.l.b16 %v4811
        %v5290 = vunpack.c.h.b16 %v4811
        %v5291 = vunpack.c.l.b16 %v4812
        %v5292 = vunpack.c.h.b16 %v4812
        %v5293 = vunpack.c.l.b16 %v4813
        %v5294 = vunpack.c.h.b16 %v4813
        %v5295 = vunpack.c.l.b16 %v4814
        %v5296 = vunpack.c.h.b16 %v4814
        %v5297 = vunpack.c.l.b16 %v4815
        %v5298 = vunpack.c.h.b16 %v4815
        %v5299 = vunpack.c.l.b16 %v4816
        %v5300 = vunpack.c.h.b16 %v4816
        %v5301 = vunpack.c.l.b16 %v4817
        %v5302 = vunpack.c.h.b16 %v4817
        %v5303 = vunpack.c.l.b16 %v4818
        %v5304 = vunpack.c.h.b16 %v4818
        %v5305 = vunpack.c.l.b16 %v4819
        %v5306 = vunpack.c.h.b16 %v4819
        %v5307 = vunpack.c.l.b16 %v4820
        %v5308 = vunpack.c.h.b16 %v4820
        %v5309 = vunpack.c.l.b16 %v4821
        %v5310 = vunpack.c.h.b16 %v4821
        %v5311 = vunpack.c.l.b16 %v4822
        %v5312 = vunpack.c.h.b16 %v4822
        %v5313 = vunpack.c.l.b16 %v4823
        %v5314 = vunpack.c.h.b16 %v4823
        %v5315 = vunpack.c.l.b16 %v4824
        %v5316 = vunpack.c.h.b16 %v4824
        %v5317 = vunpack.c.l.b16 %v4825
        %v5318 = vunpack.c.h.b16 %v4825
        %v5319 = vunpack.c.l.b16 %v4826
        %v5320 = vunpack.c.h.b16 %v4826
        %v5321 = vunpack.c.l.b16 %v4827
        %v5322 = vunpack.c.h.b16 %v4827
        %v5323 = vunpack.c.l.b16 %v4828
        %v5324 = vunpack.c.h.b16 %v4828
        %v5325 = vunpack.c.l.b16 %v4829
        %v5326 = vunpack.c.h.b16 %v4829
        %v5327 = vunpack.c.l.b16 %v4830
        %v5328 = vunpack.c.h.b16 %v4830
        %v5329 = vunpack.c.l.b16 %v4831
        %v5330 = vunpack.c.h.b16 %v4831
        %v5331 = vunpack.c.l.b16 %v4832
        %v5332 = vunpack.c.h.b16 %v4832
        %v5333 = vunpack.c.l.b16 %v4833
        %v5334 = vunpack.c.h.b16 %v4833
        %v5335 = vunpack.c.l.b16 %v4834
        %v5336 = vunpack.c.h.b16 %v4834
        %v5337 = vunpack.c.l.b16 %v4835
        %v5338 = vunpack.c.h.b16 %v4835
        %v5339 = vunpack.c.l.b16 %v4836
        %v5340 = vunpack.c.h.b16 %v4836
        %v5341 = vunpack.c.l.b16 %v4837
        %v5342 = vunpack.c.h.b16 %v4837
        %v5343 = vunpack.c.l.b16 %v4838
        %v5344 = vunpack.c.h.b16 %v4838
        %v5345 = vunpack.c.l.b16 %v4839
        %v5346 = vunpack.c.h.b16 %v4839
        %v5347 = vunpack.c.l.b16 %v4840
        %v5348 = vunpack.c.h.b16 %v4840
        %v5349 = vunpack.c.l.b16 %v4841
        %v5350 = vunpack.c.h.b16 %v4841
        %v5351 = vunpack.c.l.b16 %v4842
        %v5352 = vunpack.c.h.b16 %v4842
        %v5353 = vunpack.c.l.b16 %v4843
        %v5354 = vunpack.c.h.b16 %v4843
        %v5355 = vunpack.c.l.b16 %v4844
        %v5356 = vunpack.c.h.b16 %v4844
        %v5357 = vunpack.c.l.b16 %v4845
        %v5358 = vunpack.c.h.b16 %v4845
        %v5359 = vunpack.c.l.b16 %v4846
        %v5360 = vunpack.c.h.b16 %v4846
        %v5361 = vunpack.c.l.b16 %v4847
        %v5362 = vunpack.c.h.b16 %v4847
        %v5363 = vunpack.c.l.b16 %v4848
        %v5364 = vunpack.c.h.b16 %v4848
        %v5365 = vunpack.c.l.b16 %v4849
        %v5366 = vunpack.c.h.b16 %v4849
        %v5367 = vunpack.c.l.b16 %v4850
        %v5368 = vunpack.c.h.b16 %v4850
        %v5369 = vunpack.c.l.b16 %v4851
        %v5370 = vunpack.c.h.b16 %v4851
        %v5371 = vunpack.c.l.b16 %v4852
        %v5372 = vunpack.c.h.b16 %v4852
        %v5373 = vunpack.c.l.b16 %v4853
        %v5374 = vunpack.c.h.b16 %v4853
        %v5375 = vunpack.c.l.b16 %v4854
        %v5376 = vunpack.c.h.b16 %v4854
        %v5377 = vunpack.c.l.b16 %v4855
        %v5378 = vunpack.c.h.b16 %v4855
        %v5379 = vunpack.c.l.b16 %v4856
        %v5380 = vunpack.c.h.b16 %v4856
        %v5381 = vunpack.c.l.b16 %v4857
        %v5382 = vunpack.c.h.b16 %v4857
        %v5383 = vunpack.c.l.b16 %v4858
        %v5384 = vunpack.c.h.b16 %v4858
        %v5385 = vunpack.c.l.b16 %v4859
        %v5386 = vunpack.c.h.b16 %v4859
        %v5387 = vunpack.c.l.b16 %v4860
        %v5388 = vunpack.c.h.b16 %v4860
        %v5389 = vunpack.c.l.b16 %v4861
        %v5390 = vunpack.c.h.b16 %v4861
        %v5391 = vunpack.c.l.b16 %v4862
        %v5392 = vunpack.c.h.b16 %v4862
        %v5393 = vunpack.c.l.b16 %v4863
        %v5394 = vunpack.c.h.b16 %v4863
        %v5395 = vunpack.c.l.b16 %v4864
        %v5396 = vunpack.c.h.b16 %v4864
        %v5397 = vunpack.c.l.b16 %v4865
        %v5398 = vunpack.c.h.b16 %v4865
        %v5399 = vunpack.c.l.b16 %v4866
        %v5400 = vunpack.c.h.b16 %v4866
        %v5401 = vunpack.c.l.b16 %v4867
        %v5402 = vunpack.c.h.b16 %v4867
        %v5403 = vunpack.c.l.b16 %v4868
        %v5404 = vunpack.c.h.b16 %v4868
        %v5405 = vunpack.c.l.b16 %v4869
        %v5406 = vunpack.c.h.b16 %v4869
        %v5407 = vunpack.c.l.b16 %v4870
        %v5408 = vunpack.c.h.b16 %v4870
        %v5409 = vunpack.c.l.b16 %v4871
        %v5410 = vunpack.c.h.b16 %v4871
        %v5411 = vunpack.c.l.b16 %v4872
        %v5412 = vunpack.c.h.b16 %v4872
        %v5413 = vunpack.c.l.b16 %v4873
        %v5414 = vunpack.c.h.b16 %v4873
        %v5415 = vunpack.c.l.b16 %v4874
        %v5416 = vunpack.c.h.b16 %v4874
        %v5417 = vunpack.c.l.b16 %v4875
        %v5418 = vunpack.c.h.b16 %v4875
        %v5419 = vunpack.c.l.b16 %v4876
        %v5420 = vunpack.c.h.b16 %v4876
        %v5421 = vunpack.c.l.b16 %v4877
        %v5422 = vunpack.c.h.b16 %v4877
        %v5423 = vunpack.c.l.b16 %v4878
        %v5424 = vunpack.c.h.b16 %v4878
        %v5425 = vunpack.c.l.b16 %v4879
        %v5426 = vunpack.c.h.b16 %v4879
        %v5427 = vunpack.c.l.b16 %v4880
        %v5428 = vunpack.c.h.b16 %v4880
        %v5429 = vunpack.c.l.b16 %v4881
        %v5430 = vunpack.c.h.b16 %v4881
        %v5431 = vunpack.c.l.b16 %v4882
        %v5432 = vunpack.c.h.b16 %v4882
        %v5433 = vunpack.c.l.b16 %v4883
        %v5434 = vunpack.c.h.b16 %v4883
        %v5435 = vunpack.c.l.b16 %v4884
        %v5436 = vunpack.c.h.b16 %v4884
        %v5437 = vunpack.c.l.b16 %v4885
        %v5438 = vunpack.c.h.b16 %v4885
        %v5439 = vunpack.c.l.b16 %v4886
        %v5440 = vunpack.c.h.b16 %v4886
        %v5441 = vunpack.c.l.b16 %v4887
        %v5442 = vunpack.c.h.b16 %v4887
        %v5443 = vunpack.c.l.b16 %v4888
        %v5444 = vunpack.c.h.b16 %v4888
        %v5445 = vunpack.c.l.b16 %v4889
        %v5446 = vunpack.c.h.b16 %v4889
        %v5447 = vunpack.c.l.b16 %v4890
        %v5448 = vunpack.c.h.b16 %v4890
        %v5449 = vunpack.c.l.b16 %v4891
        %v5450 = vunpack.c.h.b16 %v4891
        %v5451 = vunpack.c.l.b16 %v4892
        %v5452 = vunpack.c.h.b16 %v4892
        %v5453 = vunpack.c.l.b16 %v4893
        %v5454 = vunpack.c.h.b16 %v4893
        %v5455 = vunpack.c.l.b16 %v4894
        %v5456 = vunpack.c.h.b16 %v4894
        %v5457 = vunpack.c.l.b16 %v4895
        %v5458 = vunpack.c.h.b16 %v4895
        %v5459 = vunpack.c.l.b16 %v4896
        %v5460 = vunpack.c.h.b16 %v4896
        %v5461 = vunpack.c.l.b16 %v4897
        %v5462 = vunpack.c.h.b16 %v4897
        %v5463 = vunpack.c.l.b16 %v4898
        %v5464 = vunpack.c.h.b16 %v4898
        %v5465 = vunpack.c.l.b16 %v4899
        %v5466 = vunpack.c.h.b16 %v4899
        %v5467 = vunpack.c.l.b16 %v4900
        %v5468 = vunpack.c.h.b16 %v4900
        %v5469 = vunpack.c.l.b16 %v4901
        %v5470 = vunpack.c.h.b16 %v4901
        %v5471 = vunpack.c.l.b16 %v4902
        %v5472 = vunpack.c.h.b16 %v4902
        %v5473 = vunpack.c.l.b16 %v4903
        %v5474 = vunpack.c.h.b16 %v4903
        %v5475 = vunpack.c.l.b16 %v4904
        %v5476 = vunpack.c.h.b16 %v4904
        %v5477 = vunpack.c.l.b16 %v4905
        %v5478 = vunpack.c.h.b16 %v4905
        %v5479 = vunpack.c.l.b16 %v4906
        %v5480 = vunpack.c.h.b16 %v4906
        %v5481 = vunpack.c.l.b16 %v4907
        %v5482 = vunpack.c.h.b16 %v4907
        %v5483 = vunpack.c.l.b16 %v4908
        %v5484 = vunpack.c.h.b16 %v4908
        %v5485 = vunpack.c.l.b16 %v4909
        %v5486 = vunpack.c.h.b16 %v4909
        %v5487 = vunpack.c.l.b16 %v4910
        %v5488 = vunpack.c.h.b16 %v4910
        %v5489 = vunpack.c.l.b16 %v4911
        %v5490 = vunpack.c.h.b16 %v4911
        %v5491 = vunpack.c.l.b16 %v4912
        %v5492 = vunpack.c.h.b16 %v4912
        %v5493 = vunpack.c.l.b16 %v4913
        %v5494 = vunpack.c.h.b16 %v4913
        %v5495 = vunpack.c.l.b16 %v4914
        %v5496 = vunpack.c.h.b16 %v4914
        %v5497 = vunpack.c.l.b16 %v4915
        %v5498 = vunpack.c.h.b16 %v4915
        %v5499 = vunpack.c.l.b16 %v4916
        %v5500 = vunpack.c.h.b16 %v4916
        %v5501 = vunpack.c.l.b16 %v4917
        %v5502 = vunpack.c.h.b16 %v4917
        %v5503 = vunpack.c.l.b16 %v4918
        %v5504 = vunpack.c.h.b16 %v4918
        %v5505 = vunpack.c.l.b16 %v4919
        %v5506 = vunpack.c.h.b16 %v4919
        %v5507 = vunpack.c.l.b16 %v4920
        %v5508 = vunpack.c.h.b16 %v4920
        %v5509 = vunpack.c.l.b16 %v4921
        %v5510 = vunpack.c.h.b16 %v4921
        %v5511 = vpack.c.b16 %v5129, %v5127
        %v5512 = vpack.c.b16 %v5130, %v5128
        %v5513 = vpack.c.b16 %v5133, %v5131
        %v5514 = vpack.c.b16 %v5134, %v5132
        %v5515 = vpack.c.b16 %v5137, %v5135
        %v5516 = vpack.c.b16 %v5138, %v5136
        %v5517 = vpack.c.b16 %v5141, %v5139
        %v5518 = vpack.c.b16 %v5142, %v5140
        %v5519 = vpack.c.b16 %v5145, %v5143
        %v5520 = vpack.c.b16 %v5146, %v5144
        %v5521 = vpack.c.b16 %v5149, %v5147
        %v5522 = vpack.c.b16 %v5150, %v5148
        %v5523 = vpack.c.b16 %v5153, %v5151
        %v5524 = vpack.c.b16 %v5154, %v5152
        %v5525 = vpack.c.b16 %v5157, %v5155
        %v5526 = vpack.c.b16 %v5158, %v5156
        %v5527 = vpack.c.b16 %v5161, %v5159
        %v5528 = vpack.c.b16 %v5162, %v5160
        %v5529 = vpack.c.b16 %v5165, %v5163
        %v5530 = vpack.c.b16 %v5166, %v5164
        %v5531 = vpack.c.b16 %v5169, %v5167
        %v5532 = vpack.c.b16 %v5170, %v5168
        %v5533 = vpack.c.b16 %v5173, %v5171
        %v5534 = vpack.c.b16 %v5174, %v5172
        %v5535 = vpack.c.b16 %v5177, %v5175
        %v5536 = vpack.c.b16 %v5178, %v5176
        %v5537 = vpack.c.b16 %v5181, %v5179
        %v5538 = vpack.c.b16 %v5182, %v5180
        %v5539 = vpack.c.b16 %v5185, %v5183
        %v5540 = vpack.c.b16 %v5186, %v5184
        %v5541 = vpack.c.b16 %v5189, %v5187
        %v5542 = vpack.c.b16 %v5190, %v5188
        %v5543 = vpack.c.b16 %v5193, %v5191
        %v5544 = vpack.c.b16 %v5194, %v5192
        %v5545 = vpack.c.b16 %v5197, %v5195
        %v5546 = vpack.c.b16 %v5198, %v5196
        %v5547 = vpack.c.b16 %v5201, %v5199
        %v5548 = vpack.c.b16 %v5202, %v5200
        %v5549 = vpack.c.b16 %v5205, %v5203
        %v5550 = vpack.c.b16 %v5206, %v5204
        %v5551 = vpack.c.b16 %v5209, %v5207
        %v5552 = vpack.c.b16 %v5210, %v5208
        %v5553 = vpack.c.b16 %v5213, %v5211
        %v5554 = vpack.c.b16 %v5214, %v5212
        %v5555 = vpack.c.b16 %v5217, %v5215
        %v5556 = vpack.c.b16 %v5218, %v5216
        %v5557 = vpack.c.b16 %v5221, %v5219
        %v5558 = vpack.c.b16 %v5222, %v5220
        %v5559 = vpack.c.b16 %v5225, %v5223
        %v5560 = vpack.c.b16 %v5226, %v5224
        %v5561 = vpack.c.b16 %v5229, %v5227
        %v5562 = vpack.c.b16 %v5230, %v5228
        %v5563 = vpack.c.b16 %v5233, %v5231
        %v5564 = vpack.c.b16 %v5234, %v5232
        %v5565 = vpack.c.b16 %v5237, %v5235
        %v5566 = vpack.c.b16 %v5238, %v5236
        %v5567 = vpack.c.b16 %v5241, %v5239
        %v5568 = vpack.c.b16 %v5242, %v5240
        %v5569 = vpack.c.b16 %v5245, %v5243
        %v5570 = vpack.c.b16 %v5246, %v5244
        %v5571 = vpack.c.b16 %v5249, %v5247
        %v5572 = vpack.c.b16 %v5250, %v5248
        %v5573 = vpack.c.b16 %v5253, %v5251
        %v5574 = vpack.c.b16 %v5254, %v5252
        %v5575 = vpack.c.b16 %v5257, %v5255
        %v5576 = vpack.c.b16 %v5258, %v5256
        %v5577 = vpack.c.b16 %v5261, %v5259
        %v5578 = vpack.c.b16 %v5262, %v5260
        %v5579 = vpack.c.b16 %v5265, %v5263
        %v5580 = vpack.c.b16 %v5266, %v5264
        %v5581 = vpack.c.b16 %v5269, %v5267
        %v5582 = vpack.c.b16 %v5270, %v5268
        %v5583 = vpack.c.b16 %v5273, %v5271
        %v5584 = vpack.c.b16 %v5274, %v5272
        %v5585 = vpack.c.b16 %v5277, %v5275
        %v5586 = vpack.c.b16 %v5278, %v5276
        %v5587 = vpack.c.b16 %v5281, %v5279
        %v5588 = vpack.c.b16 %v5282, %v5280
        %v5589 = vpack.c.b16 %v5285, %v5283
        %v5590 = vpack.c.b16 %v5286, %v5284
        %v5591 = vpack.c.b16 %v5289, %v5287
        %v5592 = vpack.c.b16 %v5290, %v5288
        %v5593 = vpack.c.b16 %v5293, %v5291
        %v5594 = vpack.c.b16 %v5294, %v5292
        %v5595 = vpack.c.b16 %v5297, %v5295
        %v5596 = vpack.c.b16 %v5298, %v5296
        %v5597 = vpack.c.b16 %v5301, %v5299
        %v5598 = vpack.c.b16 %v5302, %v5300
        %v5599 = vpack.c.b16 %v5305, %v5303
        %v5600 = vpack.c.b16 %v5306, %v5304
        %v5601 = vpack.c.b16 %v5309, %v5307
        %v5602 = vpack.c.b16 %v5310, %v5308
        %v5603 = vpack.c.b16 %v5313, %v5311
        %v5604 = vpack.c.b16 %v5314, %v5312
        %v5605 = vpack.c.b16 %v5317, %v5315
        %v5606 = vpack.c.b16 %v5318, %v5316
        %v5607 = vpack.c.b16 %v5321, %v5319
        %v5608 = vpack.c.b16 %v5322, %v5320
        %v5609 = vpack.c.b16 %v5325, %v5323
        %v5610 = vpack.c.b16 %v5326, %v5324
        %v5611 = vpack.c.b16 %v5329, %v5327
        %v5612 = vpack.c.b16 %v5330, %v5328
        %v5613 = vpack.c.b16 %v5333, %v5331
        %v5614 = vpack.c.b16 %v5334, %v5332
        %v5615 = vpack.c.b16 %v5337, %v5335
        %v5616 = vpack.c.b16 %v5338, %v5336
        %v5617 = vpack.c.b16 %v5341, %v5339
        %v5618 = vpack.c.b16 %v5342, %v5340
        %v5619 = vpack.c.b16 %v5345, %v5343
        %v5620 = vpack.c.b16 %v5346, %v5344
        %v5621 = vpack.c.b16 %v5349, %v5347
        %v5622 = vpack.c.b16 %v5350, %v5348
        %v5623 = vpack.c.b16 %v5353, %v5351
        %v5624 = vpack.c.b16 %v5354, %v5352
        %v5625 = vpack.c.b16 %v5357, %v5355
        %v5626 = vpack.c.b16 %v5358, %v5356
        %v5627 = vpack.c.b16 %v5361, %v5359
        %v5628 = vpack.c.b16 %v5362, %v5360
        %v5629 = vpack.c.b16 %v5365, %v5363
        %v5630 = vpack.c.b16 %v5366, %v5364
        %v5631 = vpack.c.b16 %v5369, %v5367
        %v5632 = vpack.c.b16 %v5370, %v5368
        %v5633 = vpack.c.b16 %v5373, %v5371
        %v5634 = vpack.c.b16 %v5374, %v5372
        %v5635 = vpack.c.b16 %v5377, %v5375
        %v5636 = vpack.c.b16 %v5378, %v5376
        %v5637 = vpack.c.b16 %v5381, %v5379
        %v5638 = vpack.c.b16 %v5382, %v5380
        %v5639 = vpack.c.b16 %v5385, %v5383
        %v5640 = vpack.c.b16 %v5386, %v5384
        %v5641 = vpack.c.b16 %v5389, %v5387
        %v5642 = vpack.c.b16 %v5390, %v5388
        %v5643 = vpack.c.b16 %v5393, %v5391
        %v5644 = vpack.c.b16 %v5394, %v5392
        %v5645 = vpack.c.b16 %v5397, %v5395
        %v5646 = vpack.c.b16 %v5398, %v5396
        %v5647 = vpack.c.b16 %v5401, %v5399
        %v5648 = vpack.c.b16 %v5402, %v5400
        %v5649 = vpack.c.b16 %v5405, %v5403
        %v5650 = vpack.c.b16 %v5406, %v5404
        %v5651 = vpack.c.b16 %v5409, %v5407
        %v5652 = vpack.c.b16 %v5410, %v5408
        %v5653 = vpack.c.b16 %v5413, %v5411
        %v5654 = vpack.c.b16 %v5414, %v5412
        %v5655 = vpack.c.b16 %v5417, %v5415
        %v5656 = vpack.c.b16 %v5418, %v5416
        %v5657 = vpack.c.b16 %v5421, %v5419
        %v5658 = vpack.c.b16 %v5422, %v5420
        %v5659 = vpack.c.b16 %v5425, %v5423
        %v5660 = vpack.c.b16 %v5426, %v5424
        %v5661 = vpack.c.b16 %v5429, %v5427
        %v5662 = vpack.c.b16 %v5430, %v5428
        %v5663 = vpack.c.b16 %v5433, %v5431
        %v5664 = vpack.c.b16 %v5434, %v5432
        %v5665 = vpack.c.b16 %v5437, %v5435
        %v5666 = vpack.c.b16 %v5438, %v5436
        %v5667 = vpack.c.b16 %v5441, %v5439
        %v5668 = vpack.c.b16 %v5442, %v5440
        %v5669 = vpack.c.b16 %v5445, %v5443
        %v5670 = vpack.c.b16 %v5446, %v5444
        %v5671 = vpack.c.b16 %v5449, %v5447
        %v5672 = vpack.c.b16 %v5450, %v5448
        %v5673 = vpack.c.b16 %v5453, %v5451
        %v5674 = vpack.c.b16 %v5454, %v5452
        %v5675 = vpack.c.b16 %v5457, %v5455
        %v5676 = vpack.c.b16 %v5458, %v5456
        %v5677 = vpack.c.b16 %v5461, %v5459
        %v5678 = vpack.c.b16 %v5462, %v5460
        %v5679 = vpack.c.b16 %v5465, %v5463
        %v5680 = vpack.c.b16 %v5466, %v5464
        %v5681 = vpack.c.b16 %v5469, %v5467
        %v5682 = vpack.c.b16 %v5470, %v5468
        %v5683 = vpack.c.b16 %v5473, %v5471
        %v5684 = vpack.c.b16 %v5474, %v5472
        %v5685 = vpack.c.b16 %v5477, %v5475
        %v5686 = vpack.c.b16 %v5478, %v5476
        %v5687 = vpack.c.b16 %v5481, %v5479
        %v5688 = vpack.c.b16 %v5482, %v5480
        %v5689 = vpack.c.b16 %v5485, %v5483
        %v5690 = vpack.c.b16 %v5486, %v5484
        %v5691 = vpack.c.b16 %v5489, %v5487
        %v5692 = vpack.c.b16 %v5490, %v5488
        %v5693 = vpack.c.b16 %v5493, %v5491
        %v5694 = vpack.c.b16 %v5494, %v5492
        %v5695 = vpack.c.b16 %v5497, %v5495
        %v5696 = vpack.c.b16 %v5498, %v5496
        %v5697 = vpack.c.b16 %v5501, %v5499
        %v5698 = vpack.c.b16 %v5502, %v5500
        %v5699 = vpack.c.b16 %v5505, %v5503
        %v5700 = vpack.c.b16 %v5506, %v5504
        %v5701 = vpack.c.b16 %v5509, %v5507
        %v5702 = vpack.c.b16 %v5510, %v5508
        %5895 = vmatprep.subr.bf16.mxu0 %v5512
        %5896 = vmatpush1.bf16.msra.mxu0 %v5511
        %5897 = vmatprep.subr.bf16.mxu0 %v5514
        %5898 = vmatpush1.bf16.msra.mxu0 %v5513
        %5899 = vmatprep.subr.bf16.mxu0 %v5516
        %5900 = vmatpush1.bf16.msra.mxu0 %v5515
        %5901 = vmatprep.subr.bf16.mxu0 %v5518
        %5902 = vmatpush1.bf16.msra.mxu0 %v5517
        %5903 = vmatprep.subr.bf16.mxu0 %v5520
        %5904 = vmatpush1.bf16.msra.mxu0 %v5519
        %5905 = vmatprep.subr.bf16.mxu0 %v5522
        %5906 = vmatpush1.bf16.msra.mxu0 %v5521
        %5907 = vmatprep.subr.bf16.mxu0 %v5524
        %5908 = vmatpush1.bf16.msra.mxu0 %v5523
        %5909 = vmatprep.subr.bf16.mxu0 %v5526
        %5910 = vmatpush1.bf16.msra.mxu0 %v5525
        %5911 = vmatprep.subr.bf16.mxu0 %v5528
        %5912 = vmatpush1.bf16.msra.mxu0 %v5527
        %5913 = vmatprep.subr.bf16.mxu0 %v5530
        %5914 = vmatpush1.bf16.msra.mxu0 %v5529
        %5915 = vmatprep.subr.bf16.mxu0 %v5532
        %5916 = vmatpush1.bf16.msra.mxu0 %v5531
        %5917 = vmatprep.subr.bf16.mxu0 %v5534
        %5918 = vmatpush1.bf16.msra.mxu0 %v5533
        %5919 = vmatprep.subr.bf16.mxu0 %v5536
        %5920 = vmatpush1.bf16.msra.mxu0 %v5535
        %5921 = vmatprep.subr.bf16.mxu0 %v5538
        %5922 = vmatpush1.bf16.msra.mxu0 %v5537
        %5923 = vmatprep.subr.bf16.mxu0 %v5540
        %5924 = vmatpush1.bf16.msra.mxu0 %v5539
        %5925 = vmatprep.subr.bf16.mxu0 %v5542
        %5926 = vmatpush1.bf16.msra.mxu0 %v5541
        %5927 = vmatprep.mubr.bf16.mxu0 %v4459
        %5928 = vmatmul.mubr.bf16.gmra.mrb[0].mxu0 %v4458
        %v5929 = vpop.f32.mrb[0].mxu0
        %v5930 = vadd.f32 %v4928, %v5929
        %v5931 = vpop.f32.mrb[0].mxu0
        %v5932 = vadd.f32 %v4932, %v5931
        %v5933 = vpop.f32.mrb[0].mxu0
        %v5934 = vpop.f32.mrb[0].mxu0
        %5935 = vdwg.mxu0
        %5936 = vmatprep.subr.bf16.mxu0 %v5544
        %5937 = vmatpush1.bf16.msra.mxu0 %v5543
        %5938 = vmatprep.subr.bf16.mxu0 %v5546
        %5939 = vmatpush1.bf16.msra.mxu0 %v5545
        %5940 = vmatprep.subr.bf16.mxu0 %v5548
        %5941 = vmatpush1.bf16.msra.mxu0 %v5547
        %5942 = vmatprep.subr.bf16.mxu0 %v5550
        %5943 = vmatpush1.bf16.msra.mxu0 %v5549
        %5944 = vmatprep.subr.bf16.mxu0 %v5552
        %5945 = vmatpush1.bf16.msra.mxu0 %v5551
        %5946 = vmatprep.subr.bf16.mxu0 %v5554
        %5947 = vmatpush1.bf16.msra.mxu0 %v5553
        %5948 = vmatprep.subr.bf16.mxu0 %v5556
        %5949 = vmatpush1.bf16.msra.mxu0 %v5555
        %5950 = vmatprep.subr.bf16.mxu0 %v5558
        %5951 = vmatpush1.bf16.msra.mxu0 %v5557
        %5952 = vmatprep.subr.bf16.mxu0 %v5560
        %5953 = vmatpush1.bf16.msra.mxu0 %v5559
        %5954 = vmatprep.subr.bf16.mxu0 %v5562
        %5955 = vmatpush1.bf16.msra.mxu0 %v5561
        %5956 = vmatprep.subr.bf16.mxu0 %v5564
        %5957 = vmatpush1.bf16.msra.mxu0 %v5563
        %5958 = vmatprep.subr.bf16.mxu0 %v5566
        %5959 = vmatpush1.bf16.msra.mxu0 %v5565
        %5960 = vmatprep.subr.bf16.mxu0 %v5568
        %5961 = vmatpush1.bf16.msra.mxu0 %v5567
        %5962 = vmatprep.subr.bf16.mxu0 %v5570
        %5963 = vmatpush1.bf16.msra.mxu0 %v5569
        %5964 = vmatprep.subr.bf16.mxu0 %v5572
        %5965 = vmatpush1.bf16.msra.mxu0 %v5571
        %5966 = vmatprep.subr.bf16.mxu0 %v5574
        %5967 = vmatpush1.bf16.msra.mxu0 %v5573
        %5968 = vmatprep.mubr.bf16.mxu0 %v4441
        %5969 = vmatmul.mubr.bf16.gmra.mrb[0].mxu0 %v4434
        %v5970 = vpop.f32.mrb[0].mxu0
        %v5971 = vadd.f32 %v5930, %v5970
        %v5972 = vpop.f32.mrb[0].mxu0
        %v5973 = vadd.f32 %v5932, %v5972
        %v5974 = vpop.f32.mrb[0].mxu0
        %v5975 = vpop.f32.mrb[0].mxu0
        %5976 = vdwg.mxu0
        %5977 = vmatprep.subr.bf16.mxu0 %v5576
        %5978 = vmatpush1.bf16.msra.mxu0 %v5575
        %5979 = vmatprep.subr.bf16.mxu0 %v5578
        %5980 = vmatpush1.bf16.msra.mxu0 %v5577
        %5981 = vmatprep.subr.bf16.mxu0 %v5580
        %5982 = vmatpush1.bf16.msra.mxu0 %v5579
        %5983 = vmatprep.subr.bf16.mxu0 %v5582
        %5984 = vmatpush1.bf16.msra.mxu0 %v5581
        %5985 = vmatprep.subr.bf16.mxu0 %v5584
        %5986 = vmatpush1.bf16.msra.mxu0 %v5583
        %5987 = vmatprep.subr.bf16.mxu0 %v5586
        %5988 = vmatpush1.bf16.msra.mxu0 %v5585
        %5989 = vmatprep.subr.bf16.mxu0 %v5588
        %5990 = vmatpush1.bf16.msra.mxu0 %v5587
        %5991 = vmatprep.subr.bf16.mxu0 %v5590
        %5992 = vmatpush1.bf16.msra.mxu0 %v5589
        %5993 = vmatprep.subr.bf16.mxu0 %v5592
        %5994 = vmatpush1.bf16.msra.mxu0 %v5591
        %5995 = vmatprep.subr.bf16.mxu0 %v5594
        %5996 = vmatpush1.bf16.msra.mxu0 %v5593
        %5997 = vmatprep.subr.bf16.mxu0 %v5596
        %5998 = vmatpush1.bf16.msra.mxu0 %v5595
        %5999 = vmatprep.subr.bf16.mxu0 %v5598
        %6000 = vmatpush1.bf16.msra.mxu0 %v5597
        %6001 = vmatprep.subr.bf16.mxu0 %v5600
        %6002 = vmatpush1.bf16.msra.mxu0 %v5599
        %6003 = vmatprep.subr.bf16.mxu0 %v5602
        %6004 = vmatpush1.bf16.msra.mxu0 %v5601
        %6005 = vmatprep.subr.bf16.mxu0 %v5604
        %6006 = vmatpush1.bf16.msra.mxu0 %v5603
        %6007 = vmatprep.subr.bf16.mxu0 %v5606
        %6008 = vmatpush1.bf16.msra.mxu0 %v5605
        %6009 = vmatprep.mubr.bf16.mxu0 %v4474
        %6010 = vmatmul.mubr.bf16.gmra.mrb[0].mxu0 %v4473
        %v6011 = vpop.f32.mrb[0].mxu0
        %v6012 = vadd.f32 %v5971, %v6011
        %v6013 = vpop.f32.mrb[0].mxu0
        %v6014 = vadd.f32 %v5973, %v6013
        %v6015 = vpop.f32.mrb[0].mxu0
        %v6016 = vpop.f32.mrb[0].mxu0
        %6017 = vdwg.mxu0
        %6018 = vmatprep.subr.bf16.mxu0 %v5608
        %6019 = vmatpush1.bf16.msra.mxu0 %v5607
        %6020 = vmatprep.subr.bf16.mxu0 %v5610
        %6021 = vmatpush1.bf16.msra.mxu0 %v5609
        %6022 = vmatprep.subr.bf16.mxu0 %v5612
        %6023 = vmatpush1.bf16.msra.mxu0 %v5611
        %6024 = vmatprep.subr.bf16.mxu0 %v5614
        %6025 = vmatpush1.bf16.msra.mxu0 %v5613
        %6026 = vmatprep.subr.bf16.mxu0 %v5616
        %6027 = vmatpush1.bf16.msra.mxu0 %v5615
        %6028 = vmatprep.subr.bf16.mxu0 %v5618
        %6029 = vmatpush1.bf16.msra.mxu0 %v5617
        %6030 = vmatprep.subr.bf16.mxu0 %v5620
        %6031 = vmatpush1.bf16.msra.mxu0 %v5619
        %6032 = vmatprep.subr.bf16.mxu0 %v5622
        %6033 = vmatpush1.bf16.msra.mxu0 %v5621
        %6034 = vmatprep.subr.bf16.mxu0 %v5624
        %6035 = vmatpush1.bf16.msra.mxu0 %v5623
        %6036 = vmatprep.subr.bf16.mxu0 %v5626
        %6037 = vmatpush1.bf16.msra.mxu0 %v5625
        %6038 = vmatprep.subr.bf16.mxu0 %v5628
        %6039 = vmatpush1.bf16.msra.mxu0 %v5627
        %6040 = vmatprep.subr.bf16.mxu0 %v5630
        %6041 = vmatpush1.bf16.msra.mxu0 %v5629
        %6042 = vmatprep.subr.bf16.mxu0 %v5632
        %6043 = vmatpush1.bf16.msra.mxu0 %v5631
        %6044 = vmatprep.subr.bf16.mxu0 %v5634
        %6045 = vmatpush1.bf16.msra.mxu0 %v5633
        %6046 = vmatprep.subr.bf16.mxu0 %v5636
        %6047 = vmatpush1.bf16.msra.mxu0 %v5635
        %6048 = vmatprep.subr.bf16.mxu0 %v5638
        %6049 = vmatpush1.bf16.msra.mxu0 %v5637
        %6050 = vmatprep.mubr.bf16.mxu0 %v4715
        %6051 = vmatmul.mubr.bf16.gmra.mrb[0].mxu0 %v4714
        %v6052 = vpop.f32.mrb[0].mxu0
        %v6053 = vadd.f32 %v6012, %v6052
        %v6054 = vpop.f32.mrb[0].mxu0
        %v6055 = vadd.f32 %v6014, %v6054
        %v6056 = vpop.f32.mrb[0].mxu0
        %v6057 = vpop.f32.mrb[0].mxu0
        %6058 = vdwg.mxu0
        %6059 = vmatprep.subr.bf16.mxu0 %v5640
        %6060 = vmatpush1.bf16.msra.mxu0 %v5639
        %6061 = vmatprep.subr.bf16.mxu0 %v5642
        %6062 = vmatpush1.bf16.msra.mxu0 %v5641
        %6063 = vmatprep.subr.bf16.mxu0 %v5644
        %6064 = vmatpush1.bf16.msra.mxu0 %v5643
        %6065 = vmatprep.subr.bf16.mxu0 %v5646
        %6066 = vmatpush1.bf16.msra.mxu0 %v5645
        %6067 = vmatprep.subr.bf16.mxu0 %v5648
        %6068 = vmatpush1.bf16.msra.mxu0 %v5647
        %6069 = vmatprep.subr.bf16.mxu0 %v5650
        %6070 = vmatpush1.bf16.msra.mxu0 %v5649
        %6071 = vmatprep.subr.bf16.mxu0 %v5652
        %6072 = vmatpush1.bf16.msra.mxu0 %v5651
        %6073 = vmatprep.subr.bf16.mxu0 %v5654
        %6074 = vmatpush1.bf16.msra.mxu0 %v5653
        %6075 = vmatprep.subr.bf16.mxu0 %v5656
        %6076 = vmatpush1.bf16.msra.mxu0 %v5655
        %6077 = vmatprep.subr.bf16.mxu0 %v5658
        %6078 = vmatpush1.bf16.msra.mxu0 %v5657
        %6079 = vmatprep.subr.bf16.mxu0 %v5660
        %6080 = vmatpush1.bf16.msra.mxu0 %v5659
        %6081 = vmatprep.subr.bf16.mxu0 %v5662
        %6082 = vmatpush1.bf16.msra.mxu0 %v5661
        %6083 = vmatprep.subr.bf16.mxu0 %v5664
        %6084 = vmatpush1.bf16.msra.mxu0 %v5663
        %6085 = vmatprep.subr.bf16.mxu0 %v5666
        %6086 = vmatpush1.bf16.msra.mxu0 %v5665
        %6087 = vmatprep.subr.bf16.mxu0 %v5668
        %6088 = vmatpush1.bf16.msra.mxu0 %v5667
        %6089 = vmatprep.subr.bf16.mxu0 %v5670
        %6090 = vmatpush1.bf16.msra.mxu0 %v5669
        %6091 = vmatprep.mubr.bf16.mxu0 %v4697
        %6092 = vmatmul.mubr.bf16.gmra.mrb[0].mxu0 %v4690
        %v6093 = vpop.f32.mrb[0].mxu0
        %v6094 = vadd.f32 %v6053, %v6093
        %v6095 = vpop.f32.mrb[0].mxu0
        %v6096 = vadd.f32 %v6055, %v6095
        %v6097 = vpop.f32.mrb[0].mxu0
        %v6098 = vpop.f32.mrb[0].mxu0
        %6099 = vdwg.mxu0
        %6100 = vmatprep.subr.bf16.mxu0 %v5672
        %6101 = vmatpush1.bf16.msra.mxu0 %v5671
        %6102 = vmatprep.subr.bf16.mxu0 %v5674
        %6103 = vmatpush1.bf16.msra.mxu0 %v5673
        %6104 = vmatprep.subr.bf16.mxu0 %v5676
        %6105 = vmatpush1.bf16.msra.mxu0 %v5675
        %6106 = vmatprep.subr.bf16.mxu0 %v5678
        %6107 = vmatpush1.bf16.msra.mxu0 %v5677
        %6108 = vmatprep.subr.bf16.mxu0 %v5680
        %6109 = vmatpush1.bf16.msra.mxu0 %v5679
        %6110 = vmatprep.subr.bf16.mxu0 %v5682
        %6111 = vmatpush1.bf16.msra.mxu0 %v5681
        %6112 = vmatprep.subr.bf16.mxu0 %v5684
        %6113 = vmatpush1.bf16.msra.mxu0 %v5683
        %6114 = vmatprep.subr.bf16.mxu0 %v5686
        %6115 = vmatpush1.bf16.msra.mxu0 %v5685
        %6116 = vmatprep.subr.bf16.mxu0 %v5688
        %6117 = vmatpush1.bf16.msra.mxu0 %v5687
        %6118 = vmatprep.subr.bf16.mxu0 %v5690
        %6119 = vmatpush1.bf16.msra.mxu0 %v5689
        %6120 = vmatprep.subr.bf16.mxu0 %v5692
        %6121 = vmatpush1.bf16.msra.mxu0 %v5691
        %6122 = vmatprep.subr.bf16.mxu0 %v5694
        %6123 = vmatpush1.bf16.msra.mxu0 %v5693
        %6124 = vmatprep.subr.bf16.mxu0 %v5696
        %6125 = vmatpush1.bf16.msra.mxu0 %v5695
        %6126 = vmatprep.subr.bf16.mxu0 %v5698
        %6127 = vmatpush1.bf16.msra.mxu0 %v5697
        %6128 = vmatprep.subr.bf16.mxu0 %v5700
        %6129 = vmatpush1.bf16.msra.mxu0 %v5699
        %6130 = vmatprep.subr.bf16.mxu0 %v5702
        %6131 = vmatpush1.bf16.msra.mxu0 %v5701
        %6132 = vmatprep.mubr.bf16.mxu0 %v4727
        %6133 = vmatmul.mubr.bf16.gmra.mrb[0].mxu0 %v4726
        %v6134 = vpop.f32.mrb[0].mxu0
        %v6135 = vadd.f32 %v6094, %v6134
        %v6136 = vpop.f32.mrb[0].mxu0
        %v6137 = vadd.f32 %v6096, %v6136
        %v6138 = vpop.f32.mrb[0].mxu0
        %v6139 = vpop.f32.mrb[0].mxu0
        %6140 = vdwg.mxu0
        %vm6141 = vcmp.ge.f32.partialorder %v6135, 0.0
        %vm6142 = vcmp.ge.f32.partialorder %v6137, 0.0
        %v6143 = vmul.f32 %v6135, 0.01
        %v6144 = vmul.f32 %v6137, 0.01
        %v6145 = vsel %vm6141, %v6135, %v6143
        %v6146 = vsel %vm6142, %v6137, %v6144
        %v6147 = vpack.c.bf16 %v6145, %v6145
        %v6148 = vpack.c.bf16 %v6146, %v6146
        %v6149 = vunpack.i.l.s16 %v1692
        %v6150 = vunpack.i.h.s16 %v1692
        %v6151 = vunpack.i.l.s16 %v1699
        %v6152 = vunpack.i.h.s16 %v1699
        %v6153 = vunpack.i.l.s16 %v1700
        %v6154 = vunpack.i.h.s16 %v1700
        %v6155 = vunpack.i.l.s16 %v1701
        %v6156 = vunpack.i.h.s16 %v1701
        %v6157 = vpack.i.b16 %v6149, %v6149
        %v6158 = vpack.i.b16 %v6150, %v6150
        %v6159 = vpack.i.b16 %v6151, %v6151
        %v6160 = vpack.i.b16 %v6152, %v6152
        %v6161 = vpack.i.b16 %v6153, %v6153
        %v6162 = vpack.i.b16 %v6154, %v6154
        %v6163 = vpack.i.b16 %v6155, %v6155
        %v6164 = vpack.i.b16 %v6156, %v6156
        %v6165 = vlaneseq
        %v6166 = vshrl.u32 %v6165, 7
        %v6167 = vsub.s32 0, %v6166
        %v6168 = vrot.slane %v6157, %v6167
        %v6169 = vlaneseq
        %v6170 = vshrl.u32 %v6169, 7
        %v6171 = vsub.s32 1, %v6170
        %v6172 = vrot.slane %v6157, %v6171
        %v6173 = vlaneseq
        %v6174 = vshrl.u32 %v6173, 7
        %v6175 = vsub.s32 0, %v6174
        %v6176 = vrot.slane %v6158, %v6175
        %v6177 = vlaneseq
        %v6178 = vshrl.u32 %v6177, 7
        %v6179 = vsub.s32 1, %v6178
        %v6180 = vrot.slane %v6158, %v6179
        %v6181 = vlaneseq
        %v6182 = vshrl.u32 %v6181, 7
        %v6183 = vsub.s32 0, %v6182
        %v6184 = vrot.slane %v6159, %v6183
        %v6185 = vlaneseq
        %v6186 = vshrl.u32 %v6185, 7
        %v6187 = vsub.s32 1, %v6186
        %v6188 = vrot.slane %v6159, %v6187
        %v6189 = vlaneseq
        %v6190 = vshrl.u32 %v6189, 7
        %v6191 = vsub.s32 0, %v6190
        %v6192 = vrot.slane %v6160, %v6191
        %v6193 = vlaneseq
        %v6194 = vshrl.u32 %v6193, 7
        %v6195 = vsub.s32 1, %v6194
        %v6196 = vrot.slane %v6160, %v6195
        %v6197 = vlaneseq
        %v6198 = vshrl.u32 %v6197, 7
        %v6199 = vsub.s32 0, %v6198
        %v6200 = vrot.slane %v6161, %v6199
        %v6201 = vlaneseq
        %v6202 = vshrl.u32 %v6201, 7
        %v6203 = vsub.s32 1, %v6202
        %v6204 = vrot.slane %v6161, %v6203
        %v6205 = vlaneseq
        %v6206 = vshrl.u32 %v6205, 7
        %v6207 = vsub.s32 0, %v6206
        %v6208 = vrot.slane %v6162, %v6207
        %v6209 = vlaneseq
        %v6210 = vshrl.u32 %v6209, 7
        %v6211 = vsub.s32 1, %v6210
        %v6212 = vrot.slane %v6162, %v6211
        %v6213 = vlaneseq
        %v6214 = vshrl.u32 %v6213, 7
        %v6215 = vsub.s32 0, %v6214
        %v6216 = vrot.slane %v6163, %v6215
        %v6217 = vlaneseq
        %v6218 = vshrl.u32 %v6217, 7
        %v6219 = vsub.s32 1, %v6218
        %v6220 = vrot.slane %v6163, %v6219
        %v6221 = vlaneseq
        %v6222 = vshrl.u32 %v6221, 7
        %v6223 = vsub.s32 0, %v6222
        %v6224 = vrot.slane %v6164, %v6223
        %v6225 = vlaneseq
        %v6226 = vshrl.u32 %v6225, 7
        %v6227 = vsub.s32 1, %v6226
        %v6228 = vrot.slane %v6164, %v6227
        %v6230 = vpack.i.b16 %v6168, %v6168
        %v6232 = vlaneseq
        %v6233 = vshrl.u32 %v6232, 7
        %v6234 = vsub.s32 0, %v6233
        %v6235 = vrot.slane %v6230, %v6234
        %v6237 = vpack.i.b16 %v6172, %v6172
        %v6239 = vlaneseq
        %v6240 = vshrl.u32 %v6239, 7
        %v6241 = vsub.s32 0, %v6240
        %v6242 = vrot.slane %v6237, %v6241
        %v6244 = vpack.i.b16 %v6176, %v6176
        %v6246 = vlaneseq
        %v6247 = vshrl.u32 %v6246, 7
        %v6248 = vsub.s32 0, %v6247
        %v6249 = vrot.slane %v6244, %v6248
        %v6251 = vpack.i.b16 %v6180, %v6180
        %v6253 = vlaneseq
        %v6254 = vshrl.u32 %v6253, 7
        %v6255 = vsub.s32 0, %v6254
        %v6256 = vrot.slane %v6251, %v6255
        %v6258 = vpack.i.b16 %v6184, %v6184
        %v6260 = vlaneseq
        %v6261 = vshrl.u32 %v6260, 7
        %v6262 = vsub.s32 0, %v6261
        %v6263 = vrot.slane %v6258, %v6262
        %v6265 = vpack.i.b16 %v6188, %v6188
        %v6267 = vlaneseq
        %v6268 = vshrl.u32 %v6267, 7
        %v6269 = vsub.s32 0, %v6268
        %v6270 = vrot.slane %v6265, %v6269
        %v6272 = vpack.i.b16 %v6192, %v6192
        %v6274 = vlaneseq
        %v6275 = vshrl.u32 %v6274, 7
        %v6276 = vsub.s32 0, %v6275
        %v6277 = vrot.slane %v6272, %v6276
        %v6279 = vpack.i.b16 %v6196, %v6196
        %v6281 = vlaneseq
        %v6282 = vshrl.u32 %v6281, 7
        %v6283 = vsub.s32 0, %v6282
        %v6284 = vrot.slane %v6279, %v6283
        %v6286 = vpack.i.b16 %v6200, %v6200
        %v6288 = vlaneseq
        %v6289 = vshrl.u32 %v6288, 7
        %v6290 = vsub.s32 0, %v6289
        %v6291 = vrot.slane %v6286, %v6290
        %v6293 = vpack.i.b16 %v6204, %v6204
        %v6295 = vlaneseq
        %v6296 = vshrl.u32 %v6295, 7
        %v6297 = vsub.s32 0, %v6296
        %v6298 = vrot.slane %v6293, %v6297
        %v6300 = vpack.i.b16 %v6208, %v6208
        %v6302 = vlaneseq
        %v6303 = vshrl.u32 %v6302, 7
        %v6304 = vsub.s32 0, %v6303
        %v6305 = vrot.slane %v6300, %v6304
        %v6307 = vpack.i.b16 %v6212, %v6212
        %v6309 = vlaneseq
        %v6310 = vshrl.u32 %v6309, 7
        %v6311 = vsub.s32 0, %v6310
        %v6312 = vrot.slane %v6307, %v6311
        %v6314 = vpack.i.b16 %v6216, %v6216
        %v6316 = vlaneseq
        %v6317 = vshrl.u32 %v6316, 7
        %v6318 = vsub.s32 0, %v6317
        %v6319 = vrot.slane %v6314, %v6318
        %v6321 = vpack.i.b16 %v6220, %v6220
        %v6323 = vlaneseq
        %v6324 = vshrl.u32 %v6323, 7
        %v6325 = vsub.s32 0, %v6324
        %v6326 = vrot.slane %v6321, %v6325
        %v6328 = vpack.i.b16 %v6224, %v6224
        %v6330 = vlaneseq
        %v6331 = vshrl.u32 %v6330, 7
        %v6332 = vsub.s32 0, %v6331
        %v6333 = vrot.slane %v6328, %v6332
        %v6335 = vpack.i.b16 %v6228, %v6228
        %v6337 = vlaneseq
        %v6338 = vshrl.u32 %v6337, 7
        %v6339 = vsub.s32 0, %v6338
        %v6340 = vrot.slane %v6335, %v6339
        %v6357 = vcombine.low %v6235, %v6242
        %v6359 = vunpack.c.l.s4 1966171168
        %v6360 = vunpack.c.0.s8 %v6359
        %v6361 = vlaneseq
        %v6362 = vshrl.u32 %v6361, 7
        %v6363 = vsub.s32 %v6360, %v6362
        %v6364 = vrot.slane %v6357, %v6363
        %v6366 = vunpack.c.l.s4 1966171168
        %v6367 = vunpack.c.0.s8 %v6366
        %v6368 = vlaneseq
        %v6369 = vshrl.u32 %v6368, 7
        %v6370 = vsub.s32 %v6367, %v6369
        %v6371 = vrot.slane %v6364, %v6370
        %v6372 = vcombine.low %v6249, %v6256
        %v6374 = vunpack.c.l.s4 1966171168
        %v6375 = vunpack.c.0.s8 %v6374
        %v6376 = vlaneseq
        %v6377 = vshrl.u32 %v6376, 7
        %v6378 = vsub.s32 %v6375, %v6377
        %v6379 = vrot.slane %v6372, %v6378
        %v6381 = vunpack.c.l.s4 1966171168
        %v6382 = vunpack.c.0.s8 %v6381
        %v6383 = vlaneseq
        %v6384 = vshrl.u32 %v6383, 7
        %v6385 = vsub.s32 %v6382, %v6384
        %v6386 = vrot.slane %v6379, %v6385
        %v6387 = vcombine.low %v6263, %v6270
        %v6389 = vunpack.c.l.s4 1966171168
        %v6390 = vunpack.c.0.s8 %v6389
        %v6391 = vlaneseq
        %v6392 = vshrl.u32 %v6391, 7
        %v6393 = vsub.s32 %v6390, %v6392
        %v6394 = vrot.slane %v6387, %v6393
        %v6396 = vunpack.c.l.s4 1966171168
        %v6397 = vunpack.c.0.s8 %v6396
        %v6398 = vlaneseq
        %v6399 = vshrl.u32 %v6398, 7
        %v6400 = vsub.s32 %v6397, %v6399
        %v6401 = vrot.slane %v6394, %v6400
        %v6402 = vcombine.low %v6277, %v6284
        %v6404 = vunpack.c.l.s4 1966171168
        %v6405 = vunpack.c.0.s8 %v6404
        %v6406 = vlaneseq
        %v6407 = vshrl.u32 %v6406, 7
        %v6408 = vsub.s32 %v6405, %v6407
        %v6409 = vrot.slane %v6402, %v6408
        %v6411 = vunpack.c.l.s4 1966171168
        %v6412 = vunpack.c.0.s8 %v6411
        %v6413 = vlaneseq
        %v6414 = vshrl.u32 %v6413, 7
        %v6415 = vsub.s32 %v6412, %v6414
        %v6416 = vrot.slane %v6409, %v6415
        %v6417 = vcombine.low %v6291, %v6298
        %v6419 = vunpack.c.l.s4 1966171168
        %v6420 = vunpack.c.0.s8 %v6419
        %v6421 = vlaneseq
        %v6422 = vshrl.u32 %v6421, 7
        %v6423 = vsub.s32 %v6420, %v6422
        %v6424 = vrot.slane %v6417, %v6423
        %v6426 = vunpack.c.l.s4 1966171168
        %v6427 = vunpack.c.0.s8 %v6426
        %v6428 = vlaneseq
        %v6429 = vshrl.u32 %v6428, 7
        %v6430 = vsub.s32 %v6427, %v6429
        %v6431 = vrot.slane %v6424, %v6430
        %v6432 = vcombine.low %v6305, %v6312
        %v6434 = vunpack.c.l.s4 1966171168
        %v6435 = vunpack.c.0.s8 %v6434
        %v6436 = vlaneseq
        %v6437 = vshrl.u32 %v6436, 7
        %v6438 = vsub.s32 %v6435, %v6437
        %v6439 = vrot.slane %v6432, %v6438
        %v6441 = vunpack.c.l.s4 1966171168
        %v6442 = vunpack.c.0.s8 %v6441
        %v6443 = vlaneseq
        %v6444 = vshrl.u32 %v6443, 7
        %v6445 = vsub.s32 %v6442, %v6444
        %v6446 = vrot.slane %v6439, %v6445
        %v6447 = vcombine.low %v6319, %v6326
        %v6449 = vunpack.c.l.s4 1966171168
        %v6450 = vunpack.c.0.s8 %v6449
        %v6451 = vlaneseq
        %v6452 = vshrl.u32 %v6451, 7
        %v6453 = vsub.s32 %v6450, %v6452
        %v6454 = vrot.slane %v6447, %v6453
        %v6456 = vunpack.c.l.s4 1966171168
        %v6457 = vunpack.c.0.s8 %v6456
        %v6458 = vlaneseq
        %v6459 = vshrl.u32 %v6458, 7
        %v6460 = vsub.s32 %v6457, %v6459
        %v6461 = vrot.slane %v6454, %v6460
        %v6462 = vcombine.low %v6333, %v6340
        %v6464 = vunpack.c.l.s4 1966171168
        %v6465 = vunpack.c.0.s8 %v6464
        %v6466 = vlaneseq
        %v6467 = vshrl.u32 %v6466, 7
        %v6468 = vsub.s32 %v6465, %v6467
        %v6469 = vrot.slane %v6462, %v6468
        %v6471 = vunpack.c.l.s4 1966171168
        %v6472 = vunpack.c.0.s8 %v6471
        %v6473 = vlaneseq
        %v6474 = vshrl.u32 %v6473, 7
        %v6475 = vsub.s32 %v6472, %v6474
        %v6476 = vrot.slane %v6469, %v6475
        %v6477 = vcombine.low %v6371, %v6386
        %v6478 = vcombine.low %v6401, %v6416
        %v6479 = vcombine.low %v6431, %v6446
        %v6480 = vcombine.low %v6461, %v6476
        %v6482 = vunpack.c.l.s4 1966171168
        %v6483 = vunpack.c.0.s8 %v6482
        %v6484 = vlaneseq
        %v6485 = vshrl.u32 %v6484, 7
        %v6486 = vsub.s32 %v6483, %v6485
        %v6487 = vrot.slane %v6477, %v6486
        %v6489 = vunpack.c.l.s4 1966171168
        %v6490 = vunpack.c.0.s8 %v6489
        %v6491 = vlaneseq
        %v6492 = vshrl.u32 %v6491, 7
        %v6493 = vsub.s32 %v6490, %v6492
        %v6494 = vrot.slane %v6478, %v6493
        %v6496 = vunpack.c.l.s4 1966171168
        %v6497 = vunpack.c.0.s8 %v6496
        %v6498 = vlaneseq
        %v6499 = vshrl.u32 %v6498, 7
        %v6500 = vsub.s32 %v6497, %v6499
        %v6501 = vrot.slane %v6479, %v6500
        %v6503 = vunpack.c.l.s4 1966171168
        %v6504 = vunpack.c.0.s8 %v6503
        %v6505 = vlaneseq
        %v6506 = vshrl.u32 %v6505, 7
        %v6507 = vsub.s32 %v6504, %v6506
        %v6508 = vrot.slane %v6480, %v6507
        %v6509 = vcombine.low %v6487, %v6494
        %v6510 = vcombine.high %v6487, %v6494
        %v6511 = vcombine.low %v6501, %v6508
        %v6512 = vcombine.high %v6501, %v6508
        %v6514 = vunpack.c.l.s4 1966171168
        %v6515 = vunpack.c.0.s8 %v6514
        %v6516 = vlaneseq
        %v6517 = vshrl.u32 %v6516, 7
        %v6518 = vsub.s32 %v6515, %v6517
        %v6519 = vrot.slane %v6509, %v6518
        %v6521 = vunpack.c.l.s4 1966171168
        %v6522 = vunpack.c.0.s8 %v6521
        %v6523 = vlaneseq
        %v6524 = vshrl.u32 %v6523, 7
        %v6525 = vsub.s32 %v6522, %v6524
        %v6526 = vrot.slane %v6510, %v6525
        %v6528 = vunpack.c.l.s4 1966171168
        %v6529 = vunpack.c.0.s8 %v6528
        %v6530 = vlaneseq
        %v6531 = vshrl.u32 %v6530, 7
        %v6532 = vsub.s32 %v6529, %v6531
        %v6533 = vrot.slane %v6511, %v6532
        %v6535 = vunpack.c.l.s4 1966171168
        %v6536 = vunpack.c.0.s8 %v6535
        %v6537 = vlaneseq
        %v6538 = vshrl.u32 %v6537, 7
        %v6539 = vsub.s32 %v6536, %v6538
        %v6540 = vrot.slane %v6512, %v6539
        %v6541 = vcombine.low %v6519, %v6533
        %v6542 = vcombine.low %v6526, %v6540
        %v6544 = vshrl.u32 %v6541, 16
        %v6546 = vrot.slane %v6544, 7
        %v6547 = vshll.u32 %v6541, 16
        %v6549 = vor.u32 %v6546, %v6547
        %v6551 = vshrl.u32 %v6542, 16
        %v6553 = vrot.slane %v6551, 7
        %v6554 = vshll.u32 %v6542, 16
        %v6556 = vor.u32 %v6553, %v6554
        %v6559 = vsel %vm213, %v1673, %v6549
        %v6560 = vsel %vm213, %v1674, %v6556
        %v6561 = vrot.slane %v6547, 1
        %v6562 = vor.u32 %v6544, %v6561
        %v6563 = vrot.slane %v6554, 1
        %v6564 = vor.u32 %v6551, %v6563
        %v6567 = vrot.slane %v1673, 4
        %v6568 = vrot.slane %v1674, 4
        %v6571 = vsel %vm220, %v6562, %v6567
        %v6572 = vsel %vm220, %v6564, %v6568
        %v6577 = vcombine.low %v6147, %v6148
        %v6579 = vunpack.c.l.s4 1966171168
        %v6580 = vunpack.c.0.s8 %v6579
        %v6581 = vlaneseq
        %v6582 = vshrl.u32 %v6581, 7
        %v6583 = vsub.s32 %v6580, %v6582
        %v6584 = vrot.slane %v6577, %v6583
        %v6585 = vcombine.high %v6584, %v6584
        %v6587 = vunpack.c.l.s4 1966171168
        %v6588 = vunpack.c.0.s8 %v6587
        %v6589 = vlaneseq
        %v6590 = vshrl.u32 %v6589, 7
        %v6591 = vsub.s32 %v6588, %v6590
        %v6592 = vrot.slane %v6584, %v6591
        %v6594 = vunpack.c.l.s4 1966171168
        %v6595 = vunpack.c.0.s8 %v6594
        %v6596 = vlaneseq
        %v6597 = vshrl.u32 %v6596, 7
        %v6598 = vsub.s32 %v6595, %v6597
        %v6599 = vrot.slane %v6585, %v6598
        %v6600 = vcombine.high %v6592, %v6592
        %v6601 = vcombine.high %v6599, %v6599
        %v6602 = vunpack.i.l.s16 %v6592
        %v6603 = vunpack.i.h.s16 %v6592
        %v6604 = vunpack.i.l.s16 %v6599
        %v6605 = vunpack.i.h.s16 %v6599
        %v6606 = vunpack.i.l.s16 %v6600
        %v6607 = vunpack.i.h.s16 %v6600
        %v6608 = vunpack.i.l.s16 %v6601
        %v6609 = vunpack.i.h.s16 %v6601
        %v6610 = vpack.i.b16 %v6602, %v6602
        %v6611 = vpack.i.b16 %v6603, %v6603
        %v6612 = vpack.i.b16 %v6604, %v6604
        %v6613 = vpack.i.b16 %v6605, %v6605
        %v6614 = vpack.i.b16 %v6606, %v6606
        %v6615 = vpack.i.b16 %v6607, %v6607
        %v6616 = vpack.i.b16 %v6608, %v6608
        %v6617 = vpack.i.b16 %v6609, %v6609
        %v6618 = vlaneseq
        %v6619 = vshrl.u32 %v6618, 7
        %v6620 = vsub.s32 0, %v6619
        %v6621 = vrot.slane %v6610, %v6620
        %v6622 = vlaneseq
        %v6623 = vshrl.u32 %v6622, 7
        %v6624 = vsub.s32 1, %v6623
        %v6625 = vrot.slane %v6610, %v6624
        %v6626 = vlaneseq
        %v6627 = vshrl.u32 %v6626, 7
        %v6628 = vsub.s32 0, %v6627
        %v6629 = vrot.slane %v6611, %v6628
        %v6630 = vlaneseq
        %v6631 = vshrl.u32 %v6630, 7
        %v6632 = vsub.s32 1, %v6631
        %v6633 = vrot.slane %v6611, %v6632
        %v6634 = vlaneseq
        %v6635 = vshrl.u32 %v6634, 7
        %v6636 = vsub.s32 0, %v6635
        %v6637 = vrot.slane %v6612, %v6636
        %v6638 = vlaneseq
        %v6639 = vshrl.u32 %v6638, 7
        %v6640 = vsub.s32 1, %v6639
        %v6641 = vrot.slane %v6612, %v6640
        %v6642 = vlaneseq
        %v6643 = vshrl.u32 %v6642, 7
        %v6644 = vsub.s32 0, %v6643
        %v6645 = vrot.slane %v6613, %v6644
        %v6646 = vlaneseq
        %v6647 = vshrl.u32 %v6646, 7
        %v6648 = vsub.s32 1, %v6647
        %v6649 = vrot.slane %v6613, %v6648
        %v6650 = vlaneseq
        %v6651 = vshrl.u32 %v6650, 7
        %v6652 = vsub.s32 0, %v6651
        %v6653 = vrot.slane %v6614, %v6652
        %v6654 = vlaneseq
        %v6655 = vshrl.u32 %v6654, 7
        %v6656 = vsub.s32 1, %v6655
        %v6657 = vrot.slane %v6614, %v6656
        %v6658 = vlaneseq
        %v6659 = vshrl.u32 %v6658, 7
        %v6660 = vsub.s32 0, %v6659
        %v6661 = vrot.slane %v6615, %v6660
        %v6662 = vlaneseq
        %v6663 = vshrl.u32 %v6662, 7
        %v6664 = vsub.s32 1, %v6663
        %v6665 = vrot.slane %v6615, %v6664
        %v6666 = vlaneseq
        %v6667 = vshrl.u32 %v6666, 7
        %v6668 = vsub.s32 0, %v6667
        %v6669 = vrot.slane %v6616, %v6668
        %v6670 = vlaneseq
        %v6671 = vshrl.u32 %v6670, 7
        %v6672 = vsub.s32 1, %v6671
        %v6673 = vrot.slane %v6616, %v6672
        %v6674 = vlaneseq
        %v6675 = vshrl.u32 %v6674, 7
        %v6676 = vsub.s32 0, %v6675
        %v6677 = vrot.slane %v6617, %v6676
        %v6678 = vlaneseq
        %v6679 = vshrl.u32 %v6678, 7
        %v6680 = vsub.s32 1, %v6679
        %v6681 = vrot.slane %v6617, %v6680
        %v6683 = vpack.i.b16 %v6621, %v6621
        %v6685 = vlaneseq
        %v6686 = vshrl.u32 %v6685, 7
        %v6687 = vsub.s32 0, %v6686
        %v6688 = vrot.slane %v6683, %v6687
        %v6690 = vpack.i.b16 %v6625, %v6625
        %v6692 = vlaneseq
        %v6693 = vshrl.u32 %v6692, 7
        %v6694 = vsub.s32 0, %v6693
        %v6695 = vrot.slane %v6690, %v6694
        %v6697 = vpack.i.b16 %v6629, %v6629
        %v6699 = vlaneseq
        %v6700 = vshrl.u32 %v6699, 7
        %v6701 = vsub.s32 0, %v6700
        %v6702 = vrot.slane %v6697, %v6701
        %v6704 = vpack.i.b16 %v6633, %v6633
        %v6706 = vlaneseq
        %v6707 = vshrl.u32 %v6706, 7
        %v6708 = vsub.s32 0, %v6707
        %v6709 = vrot.slane %v6704, %v6708
        %v6711 = vpack.i.b16 %v6637, %v6637
        %v6713 = vlaneseq
        %v6714 = vshrl.u32 %v6713, 7
        %v6715 = vsub.s32 0, %v6714
        %v6716 = vrot.slane %v6711, %v6715
        %v6718 = vpack.i.b16 %v6641, %v6641
        %v6720 = vlaneseq
        %v6721 = vshrl.u32 %v6720, 7
        %v6722 = vsub.s32 0, %v6721
        %v6723 = vrot.slane %v6718, %v6722
        %v6725 = vpack.i.b16 %v6645, %v6645
        %v6727 = vlaneseq
        %v6728 = vshrl.u32 %v6727, 7
        %v6729 = vsub.s32 0, %v6728
        %v6730 = vrot.slane %v6725, %v6729
        %v6732 = vpack.i.b16 %v6649, %v6649
        %v6734 = vlaneseq
        %v6735 = vshrl.u32 %v6734, 7
        %v6736 = vsub.s32 0, %v6735
        %v6737 = vrot.slane %v6732, %v6736
        %v6739 = vpack.i.b16 %v6653, %v6653
        %v6741 = vlaneseq
        %v6742 = vshrl.u32 %v6741, 7
        %v6743 = vsub.s32 0, %v6742
        %v6744 = vrot.slane %v6739, %v6743
        %v6746 = vpack.i.b16 %v6657, %v6657
        %v6748 = vlaneseq
        %v6749 = vshrl.u32 %v6748, 7
        %v6750 = vsub.s32 0, %v6749
        %v6751 = vrot.slane %v6746, %v6750
        %v6753 = vpack.i.b16 %v6661, %v6661
        %v6755 = vlaneseq
        %v6756 = vshrl.u32 %v6755, 7
        %v6757 = vsub.s32 0, %v6756
        %v6758 = vrot.slane %v6753, %v6757
        %v6760 = vpack.i.b16 %v6665, %v6665
        %v6762 = vlaneseq
        %v6763 = vshrl.u32 %v6762, 7
        %v6764 = vsub.s32 0, %v6763
        %v6765 = vrot.slane %v6760, %v6764
        %v6767 = vpack.i.b16 %v6669, %v6669
        %v6769 = vlaneseq
        %v6770 = vshrl.u32 %v6769, 7
        %v6771 = vsub.s32 0, %v6770
        %v6772 = vrot.slane %v6767, %v6771
        %v6774 = vpack.i.b16 %v6673, %v6673
        %v6776 = vlaneseq
        %v6777 = vshrl.u32 %v6776, 7
        %v6778 = vsub.s32 0, %v6777
        %v6779 = vrot.slane %v6774, %v6778
        %v6781 = vpack.i.b16 %v6677, %v6677
        %v6783 = vlaneseq
        %v6784 = vshrl.u32 %v6783, 7
        %v6785 = vsub.s32 0, %v6784
        %v6786 = vrot.slane %v6781, %v6785
        %v6788 = vpack.i.b16 %v6681, %v6681
        %v6790 = vlaneseq
        %v6791 = vshrl.u32 %v6790, 7
        %v6792 = vsub.s32 0, %v6791
        %v6793 = vrot.slane %v6788, %v6792
        %v6810 = vcombine.low %v6688, %v6695
        %v6812 = vunpack.c.l.s4 1966171168
        %v6813 = vunpack.c.0.s8 %v6812
        %v6814 = vlaneseq
        %v6815 = vshrl.u32 %v6814, 7
        %v6816 = vsub.s32 %v6813, %v6815
        %v6817 = vrot.slane %v6810, %v6816
        %v6819 = vunpack.c.l.s4 1966171168
        %v6820 = vunpack.c.0.s8 %v6819
        %v6821 = vlaneseq
        %v6822 = vshrl.u32 %v6821, 7
        %v6823 = vsub.s32 %v6820, %v6822
        %v6824 = vrot.slane %v6817, %v6823
        %v6825 = vcombine.low %v6702, %v6709
        %v6827 = vunpack.c.l.s4 1966171168
        %v6828 = vunpack.c.0.s8 %v6827
        %v6829 = vlaneseq
        %v6830 = vshrl.u32 %v6829, 7
        %v6831 = vsub.s32 %v6828, %v6830
        %v6832 = vrot.slane %v6825, %v6831
        %v6834 = vunpack.c.l.s4 1966171168
        %v6835 = vunpack.c.0.s8 %v6834
        %v6836 = vlaneseq
        %v6837 = vshrl.u32 %v6836, 7
        %v6838 = vsub.s32 %v6835, %v6837
        %v6839 = vrot.slane %v6832, %v6838
        %v6840 = vcombine.low %v6716, %v6723
        %v6842 = vunpack.c.l.s4 1966171168
        %v6843 = vunpack.c.0.s8 %v6842
        %v6844 = vlaneseq
        %v6845 = vshrl.u32 %v6844, 7
        %v6846 = vsub.s32 %v6843, %v6845
        %v6847 = vrot.slane %v6840, %v6846
        %v6849 = vunpack.c.l.s4 1966171168
        %v6850 = vunpack.c.0.s8 %v6849
        %v6851 = vlaneseq
        %v6852 = vshrl.u32 %v6851, 7
        %v6853 = vsub.s32 %v6850, %v6852
        %v6854 = vrot.slane %v6847, %v6853
        %v6855 = vcombine.low %v6730, %v6737
        %v6857 = vunpack.c.l.s4 1966171168
        %v6858 = vunpack.c.0.s8 %v6857
        %v6859 = vlaneseq
        %v6860 = vshrl.u32 %v6859, 7
        %v6861 = vsub.s32 %v6858, %v6860
        %v6862 = vrot.slane %v6855, %v6861
        %v6864 = vunpack.c.l.s4 1966171168
        %v6865 = vunpack.c.0.s8 %v6864
        %v6866 = vlaneseq
        %v6867 = vshrl.u32 %v6866, 7
        %v6868 = vsub.s32 %v6865, %v6867
        %v6869 = vrot.slane %v6862, %v6868
        %v6870 = vcombine.low %v6744, %v6751
        %v6872 = vunpack.c.l.s4 1966171168
        %v6873 = vunpack.c.0.s8 %v6872
        %v6874 = vlaneseq
        %v6875 = vshrl.u32 %v6874, 7
        %v6876 = vsub.s32 %v6873, %v6875
        %v6877 = vrot.slane %v6870, %v6876
        %v6879 = vunpack.c.l.s4 1966171168
        %v6880 = vunpack.c.0.s8 %v6879
        %v6881 = vlaneseq
        %v6882 = vshrl.u32 %v6881, 7
        %v6883 = vsub.s32 %v6880, %v6882
        %v6884 = vrot.slane %v6877, %v6883
        %v6885 = vcombine.low %v6758, %v6765
        %v6887 = vunpack.c.l.s4 1966171168
        %v6888 = vunpack.c.0.s8 %v6887
        %v6889 = vlaneseq
        %v6890 = vshrl.u32 %v6889, 7
        %v6891 = vsub.s32 %v6888, %v6890
        %v6892 = vrot.slane %v6885, %v6891
        %v6894 = vunpack.c.l.s4 1966171168
        %v6895 = vunpack.c.0.s8 %v6894
        %v6896 = vlaneseq
        %v6897 = vshrl.u32 %v6896, 7
        %v6898 = vsub.s32 %v6895, %v6897
        %v6899 = vrot.slane %v6892, %v6898
        %v6900 = vcombine.low %v6772, %v6779
        %v6902 = vunpack.c.l.s4 1966171168
        %v6903 = vunpack.c.0.s8 %v6902
        %v6904 = vlaneseq
        %v6905 = vshrl.u32 %v6904, 7
        %v6906 = vsub.s32 %v6903, %v6905
        %v6907 = vrot.slane %v6900, %v6906
        %v6909 = vunpack.c.l.s4 1966171168
        %v6910 = vunpack.c.0.s8 %v6909
        %v6911 = vlaneseq
        %v6912 = vshrl.u32 %v6911, 7
        %v6913 = vsub.s32 %v6910, %v6912
        %v6914 = vrot.slane %v6907, %v6913
        %v6915 = vcombine.low %v6786, %v6793
        %v6917 = vunpack.c.l.s4 1966171168
        %v6918 = vunpack.c.0.s8 %v6917
        %v6919 = vlaneseq
        %v6920 = vshrl.u32 %v6919, 7
        %v6921 = vsub.s32 %v6918, %v6920
        %v6922 = vrot.slane %v6915, %v6921
        %v6924 = vunpack.c.l.s4 1966171168
        %v6925 = vunpack.c.0.s8 %v6924
        %v6926 = vlaneseq
        %v6927 = vshrl.u32 %v6926, 7
        %v6928 = vsub.s32 %v6925, %v6927
        %v6929 = vrot.slane %v6922, %v6928
        %v6930 = vcombine.low %v6824, %v6839
        %v6931 = vcombine.low %v6854, %v6869
        %v6932 = vcombine.low %v6884, %v6899
        %v6933 = vcombine.low %v6914, %v6929
        %v6935 = vunpack.c.l.s4 1966171168
        %v6936 = vunpack.c.0.s8 %v6935
        %v6937 = vlaneseq
        %v6938 = vshrl.u32 %v6937, 7
        %v6939 = vsub.s32 %v6936, %v6938
        %v6940 = vrot.slane %v6930, %v6939
        %v6942 = vunpack.c.l.s4 1966171168
        %v6943 = vunpack.c.0.s8 %v6942
        %v6944 = vlaneseq
        %v6945 = vshrl.u32 %v6944, 7
        %v6946 = vsub.s32 %v6943, %v6945
        %v6947 = vrot.slane %v6931, %v6946
        %v6949 = vunpack.c.l.s4 1966171168
        %v6950 = vunpack.c.0.s8 %v6949
        %v6951 = vlaneseq
        %v6952 = vshrl.u32 %v6951, 7
        %v6953 = vsub.s32 %v6950, %v6952
        %v6954 = vrot.slane %v6932, %v6953
        %v6956 = vunpack.c.l.s4 1966171168
        %v6957 = vunpack.c.0.s8 %v6956
        %v6958 = vlaneseq
        %v6959 = vshrl.u32 %v6958, 7
        %v6960 = vsub.s32 %v6957, %v6959
        %v6961 = vrot.slane %v6933, %v6960
        %v6962 = vcombine.low %v6940, %v6947
        %v6963 = vcombine.high %v6940, %v6947
        %v6964 = vcombine.low %v6954, %v6961
        %v6965 = vcombine.high %v6954, %v6961
        %v6967 = vunpack.c.l.s4 1966171168
        %v6968 = vunpack.c.0.s8 %v6967
        %v6969 = vlaneseq
        %v6970 = vshrl.u32 %v6969, 7
        %v6971 = vsub.s32 %v6968, %v6970
        %v6972 = vrot.slane %v6962, %v6971
        %v6974 = vunpack.c.l.s4 1966171168
        %v6975 = vunpack.c.0.s8 %v6974
        %v6976 = vlaneseq
        %v6977 = vshrl.u32 %v6976, 7
        %v6978 = vsub.s32 %v6975, %v6977
        %v6979 = vrot.slane %v6963, %v6978
        %v6981 = vunpack.c.l.s4 1966171168
        %v6982 = vunpack.c.0.s8 %v6981
        %v6983 = vlaneseq
        %v6984 = vshrl.u32 %v6983, 7
        %v6985 = vsub.s32 %v6982, %v6984
        %v6986 = vrot.slane %v6964, %v6985
        %v6988 = vunpack.c.l.s4 1966171168
        %v6989 = vunpack.c.0.s8 %v6988
        %v6990 = vlaneseq
        %v6991 = vshrl.u32 %v6990, 7
        %v6992 = vsub.s32 %v6989, %v6991
        %v6993 = vrot.slane %v6965, %v6992
        %v6994 = vcombine.low %v6972, %v6986
        %v6995 = vcombine.low %v6979, %v6993
        %v6997 = vshrl.u32 %v6994, 16
        %v6999 = vrot.slane %v6997, 7
        %v7000 = vshll.u32 %v6994, 16
        %v7002 = vor.u32 %v6999, %v7000
        %v7004 = vshrl.u32 %v6995, 16
        %v7006 = vrot.slane %v7004, 7
        %v7007 = vshll.u32 %v6995, 16
        %v7009 = vor.u32 %v7006, %v7007
        %v7012 = vsel %vm213, %v6147, %v7002
        %v7013 = vsel %vm213, %v6148, %v7009
        %v7014 = vrot.slane %v7000, 1
        %v7015 = vor.u32 %v6997, %v7014
        %v7016 = vrot.slane %v7007, 1
        %v7017 = vor.u32 %v7004, %v7016
        %v7020 = vrot.slane %v6147, 4
        %v7021 = vrot.slane %v6148, 4
        %v7024 = vsel %vm220, %v7015, %v7020
        %v7025 = vsel %vm220, %v7017, %v7021
        %v7028 = vld [vmem:[#allocation2 + $0x1380] sm:$0xff]
        %v7029 = vld [vmem:[#allocation2 + $0x1388] sm:$0xff]
        %v7030 = vld [vmem:[#allocation2 + $0x1390] sm:$0xff]
        %v7031 = vld [vmem:[#allocation2 + $0x1398] sm:$0xff]
        %v7032 = vld [vmem:[#allocation2 + $0x13a0] sm:$0xff]
        %v7033 = vld [vmem:[#allocation2 + $0x13a8] sm:$0xff]
        %v7034 = vld [vmem:[#allocation2 + $0x13b0] sm:$0xff]
        %v7035 = vld [vmem:[#allocation2 + $0x13b8] sm:$0xff]
        %v7036 = vld [vmem:[#allocation2 + $0x13c0] sm:$0xff]
        %v7037 = vld [vmem:[#allocation2 + $0x13c8] sm:$0xff]
        %v7038 = vld [vmem:[#allocation2 + $0x13d0] sm:$0xff]
        %v7039 = vld [vmem:[#allocation2 + $0x13d8] sm:$0xff]
        %v7040 = vld [vmem:[#allocation2 + $0x13e0] sm:$0xff]
        %v7041 = vld [vmem:[#allocation2 + $0x13e8] sm:$0xff]
        %v7042 = vld [vmem:[#allocation2 + $0x13f0] sm:$0xff]
        %v7043 = vld [vmem:[#allocation2 + $0x13f8] sm:$0xff]
        %v7044 = vld [vmem:[#allocation2 + $0x1400] sm:$0xff]
        %v7045 = vld [vmem:[#allocation2 + $0x1408] sm:$0xff]
        %v7046 = vld [vmem:[#allocation2 + $0x1410] sm:$0xff]
        %v7047 = vld [vmem:[#allocation2 + $0x1418] sm:$0xff]
        %v7048 = vld [vmem:[#allocation2 + $0x1420] sm:$0xff]
        %v7049 = vld [vmem:[#allocation2 + $0x1428] sm:$0xff]
        %v7050 = vld [vmem:[#allocation2 + $0x1430] sm:$0xff]
        %v7051 = vld [vmem:[#allocation2 + $0x1438] sm:$0xff]
        %v7052 = vld [vmem:[#allocation2 + $0x1440] sm:$0xff]
        %v7053 = vld [vmem:[#allocation2 + $0x1448] sm:$0xff]
        %v7054 = vld [vmem:[#allocation2 + $0x1450] sm:$0xff]
        %v7055 = vld [vmem:[#allocation2 + $0x1458] sm:$0xff]
        %v7056 = vld [vmem:[#allocation2 + $0x1460] sm:$0xff]
        %v7057 = vld [vmem:[#allocation2 + $0x1468] sm:$0xff]
        %v7058 = vld [vmem:[#allocation2 + $0x1470] sm:$0xff]
        %v7059 = vld [vmem:[#allocation2 + $0x1478] sm:$0xff]
        %v7060 = vld [vmem:[#allocation2 + $0x1480] sm:$0xff]
        %v7061 = vld [vmem:[#allocation2 + $0x1488] sm:$0xff]
        %v7062 = vld [vmem:[#allocation2 + $0x1490] sm:$0xff]
        %v7063 = vld [vmem:[#allocation2 + $0x1498] sm:$0xff]
        %v7064 = vld [vmem:[#allocation2 + $0x14a0] sm:$0xff]
        %v7065 = vld [vmem:[#allocation2 + $0x14a8] sm:$0xff]
        %v7066 = vld [vmem:[#allocation2 + $0x14b0] sm:$0xff]
        %v7067 = vld [vmem:[#allocation2 + $0x14b8] sm:$0xff]
        %v7068 = vld [vmem:[#allocation2 + $0x14c0] sm:$0xff]
        %v7069 = vld [vmem:[#allocation2 + $0x14c8] sm:$0xff]
        %v7070 = vld [vmem:[#allocation2 + $0x14d0] sm:$0xff]
        %v7071 = vld [vmem:[#allocation2 + $0x14d8] sm:$0xff]
        %v7072 = vld [vmem:[#allocation2 + $0x14e0] sm:$0xff]
        %v7073 = vld [vmem:[#allocation2 + $0x14e8] sm:$0xff]
        %v7074 = vld [vmem:[#allocation2 + $0x14f0] sm:$0xff]
        %v7075 = vld [vmem:[#allocation2 + $0x14f8] sm:$0xff]
        %v7076 = vld [vmem:[#allocation2 + $0x1500] sm:$0xff]
        %v7077 = vld [vmem:[#allocation2 + $0x1508] sm:$0xff]
        %v7078 = vld [vmem:[#allocation2 + $0x1510] sm:$0xff]
        %v7079 = vld [vmem:[#allocation2 + $0x1518] sm:$0xff]
        %v7080 = vld [vmem:[#allocation2 + $0x1520] sm:$0xff]
        %v7081 = vld [vmem:[#allocation2 + $0x1528] sm:$0xff]
        %v7082 = vld [vmem:[#allocation2 + $0x1530] sm:$0xff]
        %v7083 = vld [vmem:[#allocation2 + $0x1538] sm:$0xff]
        %v7084 = vld [vmem:[#allocation2 + $0x1540] sm:$0xff]
        %v7085 = vld [vmem:[#allocation2 + $0x1548] sm:$0xff]
        %v7086 = vld [vmem:[#allocation2 + $0x1550] sm:$0xff]
        %v7087 = vld [vmem:[#allocation2 + $0x1558] sm:$0xff]
        %v7088 = vld [vmem:[#allocation2 + $0x1560] sm:$0xff]
        %v7089 = vld [vmem:[#allocation2 + $0x1568] sm:$0xff]
        %v7090 = vld [vmem:[#allocation2 + $0x1570] sm:$0xff]
        %v7091 = vld [vmem:[#allocation2 + $0x1578] sm:$0xff]
        %v7092 = vld [vmem:[#allocation2 + $0x1580] sm:$0xff]
        %v7093 = vld [vmem:[#allocation2 + $0x1588] sm:$0xff]
        %v7094 = vld [vmem:[#allocation2 + $0x1590] sm:$0xff]
        %v7095 = vld [vmem:[#allocation2 + $0x1598] sm:$0xff]
        %v7096 = vld [vmem:[#allocation2 + $0x15a0] sm:$0xff]
        %v7097 = vld [vmem:[#allocation2 + $0x15a8] sm:$0xff]
        %v7098 = vld [vmem:[#allocation2 + $0x15b0] sm:$0xff]
        %v7099 = vld [vmem:[#allocation2 + $0x15b8] sm:$0xff]
        %v7100 = vld [vmem:[#allocation2 + $0x15c0] sm:$0xff]
        %v7101 = vld [vmem:[#allocation2 + $0x15c8] sm:$0xff]
        %v7102 = vld [vmem:[#allocation2 + $0x15d0] sm:$0xff]
        %v7103 = vld [vmem:[#allocation2 + $0x15d8] sm:$0xff]
        %v7104 = vld [vmem:[#allocation2 + $0x15e0] sm:$0xff]
        %v7105 = vld [vmem:[#allocation2 + $0x15e8] sm:$0xff]
        %v7106 = vld [vmem:[#allocation2 + $0x15f0] sm:$0xff]
        %v7107 = vld [vmem:[#allocation2 + $0x15f8] sm:$0xff]
        %v7108 = vld [vmem:[#allocation2 + $0x1600] sm:$0xff]
        %v7109 = vld [vmem:[#allocation2 + $0x1608] sm:$0xff]
        %v7110 = vld [vmem:[#allocation2 + $0x1610] sm:$0xff]
        %v7111 = vld [vmem:[#allocation2 + $0x1618] sm:$0xff]
        %v7112 = vld [vmem:[#allocation2 + $0x1620] sm:$0xff]
        %v7113 = vld [vmem:[#allocation2 + $0x1628] sm:$0xff]
        %v7114 = vld [vmem:[#allocation2 + $0x1630] sm:$0xff]
        %v7115 = vld [vmem:[#allocation2 + $0x1638] sm:$0xff]
        %v7116 = vld [vmem:[#allocation2 + $0x1640] sm:$0xff]
        %v7117 = vld [vmem:[#allocation2 + $0x1648] sm:$0xff]
        %v7118 = vld [vmem:[#allocation2 + $0x1650] sm:$0xff]
        %v7119 = vld [vmem:[#allocation2 + $0x1658] sm:$0xff]
        %v7120 = vld [vmem:[#allocation2 + $0x1660] sm:$0xff]
        %v7121 = vld [vmem:[#allocation2 + $0x1668] sm:$0xff]
        %v7122 = vld [vmem:[#allocation2 + $0x1670] sm:$0xff]
        %v7123 = vld [vmem:[#allocation2 + $0x1678] sm:$0xff]
        %v7124 = vld [vmem:[#allocation2 + $0x1680] sm:$0xff]
        %v7125 = vld [vmem:[#allocation2 + $0x1688] sm:$0xff]
        %v7126 = vld [vmem:[#allocation2 + $0x1690] sm:$0xff]
        %v7127 = vld [vmem:[#allocation2 + $0x1698] sm:$0xff]
        %v7128 = vld [vmem:[#allocation2 + $0x16a0] sm:$0xff]
        %v7129 = vld [vmem:[#allocation2 + $0x16a8] sm:$0xff]
        %v7130 = vld [vmem:[#allocation2 + $0x16b0] sm:$0xff]
        %v7131 = vld [vmem:[#allocation2 + $0x16b8] sm:$0xff]
        %v7132 = vld [vmem:[#allocation2 + $0x16c0] sm:$0xff]
        %v7133 = vld [vmem:[#allocation2 + $0x16c8] sm:$0xff]
        %v7134 = vld [vmem:[#allocation2 + $0x16d0] sm:$0xff]
        %v7135 = vld [vmem:[#allocation2 + $0x16d8] sm:$0xff]
        %v7136 = vld [vmem:[#allocation2 + $0x16e0] sm:$0xff]
        %v7137 = vld [vmem:[#allocation2 + $0x16e8] sm:$0xff]
        %v7138 = vld [vmem:[#allocation2 + $0x16f0] sm:$0xff]
        %v7139 = vld [vmem:[#allocation2 + $0x16f8] sm:$0xff]
        %v7140 = vld [vmem:[#allocation2 + $0x1700] sm:$0xff]
        %v7141 = vld [vmem:[#allocation2 + $0x1708] sm:$0xff]
        %v7142 = vld [vmem:[#allocation2 + $0x1710] sm:$0xff]
        %v7143 = vld [vmem:[#allocation2 + $0x1718] sm:$0xff]
        %v7144 = vld [vmem:[#allocation2 + $0x1720] sm:$0xff]
        %v7145 = vld [vmem:[#allocation2 + $0x1728] sm:$0xff]
        %v7146 = vld [vmem:[#allocation2 + $0x1730] sm:$0xff]
        %v7147 = vld [vmem:[#allocation2 + $0x1738] sm:$0xff]
        %v7148 = vld [vmem:[#allocation2 + $0x1740] sm:$0xff]
        %v7149 = vld [vmem:[#allocation2 + $0x1748] sm:$0xff]
        %v7150 = vld [vmem:[#allocation2 + $0x1750] sm:$0xff]
        %v7151 = vld [vmem:[#allocation2 + $0x1758] sm:$0xff]
        %v7152 = vld [vmem:[#allocation2 + $0x1760] sm:$0xff]
        %v7153 = vld [vmem:[#allocation2 + $0x1768] sm:$0xff]
        %v7154 = vld [vmem:[#allocation2 + $0x1770] sm:$0xff]
        %v7155 = vld [vmem:[#allocation2 + $0x1778] sm:$0xff]
        %v7156 = vld [vmem:[#allocation2 + $0x1780] sm:$0xff]
        %v7157 = vld [vmem:[#allocation2 + $0x1788] sm:$0xff]
        %v7158 = vld [vmem:[#allocation2 + $0x1790] sm:$0xff]
        %v7159 = vld [vmem:[#allocation2 + $0x1798] sm:$0xff]
        %v7160 = vld [vmem:[#allocation2 + $0x17a0] sm:$0xff]
        %v7161 = vld [vmem:[#allocation2 + $0x17a8] sm:$0xff]
        %v7162 = vld [vmem:[#allocation2 + $0x17b0] sm:$0xff]
        %v7163 = vld [vmem:[#allocation2 + $0x17b8] sm:$0xff]
        %v7164 = vld [vmem:[#allocation2 + $0x17c0] sm:$0xff]
        %v7165 = vld [vmem:[#allocation2 + $0x17c8] sm:$0xff]
        %v7166 = vld [vmem:[#allocation2 + $0x17d0] sm:$0xff]
        %v7167 = vld [vmem:[#allocation2 + $0x17d8] sm:$0xff]
        %v7168 = vld [vmem:[#allocation2 + $0x17e0] sm:$0xff]
        %v7169 = vld [vmem:[#allocation2 + $0x17e8] sm:$0xff]
        %v7170 = vld [vmem:[#allocation2 + $0x17f0] sm:$0xff]
        %v7171 = vld [vmem:[#allocation2 + $0x17f8] sm:$0xff]
        %v7172 = vld [vmem:[#allocation2 + $0x1800] sm:$0xff]
        %v7173 = vld [vmem:[#allocation2 + $0x1808] sm:$0xff]
        %v7174 = vld [vmem:[#allocation2 + $0x1810] sm:$0xff]
        %v7175 = vld [vmem:[#allocation2 + $0x1818] sm:$0xff]
        %v7176 = vld [vmem:[#allocation2 + $0x1820] sm:$0xff]
        %v7177 = vld [vmem:[#allocation2 + $0x1828] sm:$0xff]
        %v7178 = vld [vmem:[#allocation2 + $0x1830] sm:$0xff]
        %v7179 = vld [vmem:[#allocation2 + $0x1838] sm:$0xff]
        %v7180 = vld [vmem:[#allocation2 + $0x1840] sm:$0xff]
        %v7181 = vld [vmem:[#allocation2 + $0x1848] sm:$0xff]
        %v7182 = vld [vmem:[#allocation2 + $0x1850] sm:$0xff]
        %v7183 = vld [vmem:[#allocation2 + $0x1858] sm:$0xff]
        %v7184 = vld [vmem:[#allocation2 + $0x1860] sm:$0xff]
        %v7185 = vld [vmem:[#allocation2 + $0x1868] sm:$0xff]
        %v7186 = vld [vmem:[#allocation2 + $0x1870] sm:$0xff]
        %v7187 = vld [vmem:[#allocation2 + $0x1878] sm:$0xff]
        %v7188 = vld [vmem:[#allocation2 + $0x1880] sm:$0xff]
        %v7189 = vld [vmem:[#allocation2 + $0x1888] sm:$0xff]
        %v7190 = vld [vmem:[#allocation2 + $0x1890] sm:$0xff]
        %v7191 = vld [vmem:[#allocation2 + $0x1898] sm:$0xff]
        %v7192 = vld [vmem:[#allocation2 + $0x18a0] sm:$0xff]
        %v7193 = vld [vmem:[#allocation2 + $0x18a8] sm:$0xff]
        %v7194 = vld [vmem:[#allocation2 + $0x18b0] sm:$0xff]
        %v7195 = vld [vmem:[#allocation2 + $0x18b8] sm:$0xff]
        %v7196 = vld [vmem:[#allocation2 + $0x18c0] sm:$0xff]
        %v7197 = vld [vmem:[#allocation2 + $0x18c8] sm:$0xff]
        %v7198 = vld [vmem:[#allocation2 + $0x18d0] sm:$0xff]
        %v7199 = vld [vmem:[#allocation2 + $0x18d8] sm:$0xff]
        %v7200 = vld [vmem:[#allocation2 + $0x18e0] sm:$0xff]
        %v7201 = vld [vmem:[#allocation2 + $0x18e8] sm:$0xff]
        %v7202 = vld [vmem:[#allocation2 + $0x18f0] sm:$0xff]
        %v7203 = vld [vmem:[#allocation2 + $0x18f8] sm:$0xff]
        %v7204 = vld [vmem:[#allocation2 + $0x1900] sm:$0xff]
        %v7205 = vld [vmem:[#allocation2 + $0x1908] sm:$0xff]
        %v7206 = vld [vmem:[#allocation2 + $0x1910] sm:$0xff]
        %v7207 = vld [vmem:[#allocation2 + $0x1918] sm:$0xff]
        %v7208 = vld [vmem:[#allocation2 + $0x1920] sm:$0xff]
        %v7209 = vld [vmem:[#allocation2 + $0x1928] sm:$0xff]
        %v7210 = vld [vmem:[#allocation2 + $0x1930] sm:$0xff]
        %v7211 = vld [vmem:[#allocation2 + $0x1938] sm:$0xff]
        %v7212 = vld [vmem:[#allocation2 + $0x1940] sm:$0xff]
        %v7213 = vld [vmem:[#allocation2 + $0x1948] sm:$0xff]
        %v7214 = vld [vmem:[#allocation2 + $0x1950] sm:$0xff]
        %v7215 = vld [vmem:[#allocation2 + $0x1958] sm:$0xff]
        %v7216 = vld [vmem:[#allocation2 + $0x1960] sm:$0xff]
        %v7217 = vld [vmem:[#allocation2 + $0x1968] sm:$0xff]
        %v7218 = vld [vmem:[#allocation2 + $0x1970] sm:$0xff]
        %v7219 = vld [vmem:[#allocation2 + $0x1978] sm:$0xff]
        %s7220 = scalar_lea.vmem [#allocation4], 6
        %v7221 = vld [vmem:[%s7220] ss:$8 sm:$0x3]
        %v7223 = vlaneseq
        %v7224 = vshrl.u32 %v7223, 7
        %v7225 = vsub.s32 0, %v7224
        %v7226 = vrot.slane %v7221, %v7225
        %v7227 = vlaneseq
        %v7228 = vshrl.u32 %v7227, 7
        %v7229 = vsub.s32 1, %v7228
        %v7230 = vrot.slane %v7221, %v7229
        %v7425 = vunpack.c.l.b16 %v7028
        %v7426 = vunpack.c.h.b16 %v7028
        %v7427 = vunpack.c.l.b16 %v7029
        %v7428 = vunpack.c.h.b16 %v7029
        %v7429 = vunpack.c.l.b16 %v7030
        %v7430 = vunpack.c.h.b16 %v7030
        %v7431 = vunpack.c.l.b16 %v7031
        %v7432 = vunpack.c.h.b16 %v7031
        %v7433 = vunpack.c.l.b16 %v7032
        %v7434 = vunpack.c.h.b16 %v7032
        %v7435 = vunpack.c.l.b16 %v7033
        %v7436 = vunpack.c.h.b16 %v7033
        %v7437 = vunpack.c.l.b16 %v7034
        %v7438 = vunpack.c.h.b16 %v7034
        %v7439 = vunpack.c.l.b16 %v7035
        %v7440 = vunpack.c.h.b16 %v7035
        %v7441 = vunpack.c.l.b16 %v7036
        %v7442 = vunpack.c.h.b16 %v7036
        %v7443 = vunpack.c.l.b16 %v7037
        %v7444 = vunpack.c.h.b16 %v7037
        %v7445 = vunpack.c.l.b16 %v7038
        %v7446 = vunpack.c.h.b16 %v7038
        %v7447 = vunpack.c.l.b16 %v7039
        %v7448 = vunpack.c.h.b16 %v7039
        %v7449 = vunpack.c.l.b16 %v7040
        %v7450 = vunpack.c.h.b16 %v7040
        %v7451 = vunpack.c.l.b16 %v7041
        %v7452 = vunpack.c.h.b16 %v7041
        %v7453 = vunpack.c.l.b16 %v7042
        %v7454 = vunpack.c.h.b16 %v7042
        %v7455 = vunpack.c.l.b16 %v7043
        %v7456 = vunpack.c.h.b16 %v7043
        %v7457 = vunpack.c.l.b16 %v7044
        %v7458 = vunpack.c.h.b16 %v7044
        %v7459 = vunpack.c.l.b16 %v7045
        %v7460 = vunpack.c.h.b16 %v7045
        %v7461 = vunpack.c.l.b16 %v7046
        %v7462 = vunpack.c.h.b16 %v7046
        %v7463 = vunpack.c.l.b16 %v7047
        %v7464 = vunpack.c.h.b16 %v7047
        %v7465 = vunpack.c.l.b16 %v7048
        %v7466 = vunpack.c.h.b16 %v7048
        %v7467 = vunpack.c.l.b16 %v7049
        %v7468 = vunpack.c.h.b16 %v7049
        %v7469 = vunpack.c.l.b16 %v7050
        %v7470 = vunpack.c.h.b16 %v7050
        %v7471 = vunpack.c.l.b16 %v7051
        %v7472 = vunpack.c.h.b16 %v7051
        %v7473 = vunpack.c.l.b16 %v7052
        %v7474 = vunpack.c.h.b16 %v7052
        %v7475 = vunpack.c.l.b16 %v7053
        %v7476 = vunpack.c.h.b16 %v7053
        %v7477 = vunpack.c.l.b16 %v7054
        %v7478 = vunpack.c.h.b16 %v7054
        %v7479 = vunpack.c.l.b16 %v7055
        %v7480 = vunpack.c.h.b16 %v7055
        %v7481 = vunpack.c.l.b16 %v7056
        %v7482 = vunpack.c.h.b16 %v7056
        %v7483 = vunpack.c.l.b16 %v7057
        %v7484 = vunpack.c.h.b16 %v7057
        %v7485 = vunpack.c.l.b16 %v7058
        %v7486 = vunpack.c.h.b16 %v7058
        %v7487 = vunpack.c.l.b16 %v7059
        %v7488 = vunpack.c.h.b16 %v7059
        %v7489 = vunpack.c.l.b16 %v7060
        %v7490 = vunpack.c.h.b16 %v7060
        %v7491 = vunpack.c.l.b16 %v7061
        %v7492 = vunpack.c.h.b16 %v7061
        %v7493 = vunpack.c.l.b16 %v7062
        %v7494 = vunpack.c.h.b16 %v7062
        %v7495 = vunpack.c.l.b16 %v7063
        %v7496 = vunpack.c.h.b16 %v7063
        %v7497 = vunpack.c.l.b16 %v7064
        %v7498 = vunpack.c.h.b16 %v7064
        %v7499 = vunpack.c.l.b16 %v7065
        %v7500 = vunpack.c.h.b16 %v7065
        %v7501 = vunpack.c.l.b16 %v7066
        %v7502 = vunpack.c.h.b16 %v7066
        %v7503 = vunpack.c.l.b16 %v7067
        %v7504 = vunpack.c.h.b16 %v7067
        %v7505 = vunpack.c.l.b16 %v7068
        %v7506 = vunpack.c.h.b16 %v7068
        %v7507 = vunpack.c.l.b16 %v7069
        %v7508 = vunpack.c.h.b16 %v7069
        %v7509 = vunpack.c.l.b16 %v7070
        %v7510 = vunpack.c.h.b16 %v7070
        %v7511 = vunpack.c.l.b16 %v7071
        %v7512 = vunpack.c.h.b16 %v7071
        %v7513 = vunpack.c.l.b16 %v7072
        %v7514 = vunpack.c.h.b16 %v7072
        %v7515 = vunpack.c.l.b16 %v7073
        %v7516 = vunpack.c.h.b16 %v7073
        %v7517 = vunpack.c.l.b16 %v7074
        %v7518 = vunpack.c.h.b16 %v7074
        %v7519 = vunpack.c.l.b16 %v7075
        %v7520 = vunpack.c.h.b16 %v7075
        %v7521 = vunpack.c.l.b16 %v7076
        %v7522 = vunpack.c.h.b16 %v7076
        %v7523 = vunpack.c.l.b16 %v7077
        %v7524 = vunpack.c.h.b16 %v7077
        %v7525 = vunpack.c.l.b16 %v7078
        %v7526 = vunpack.c.h.b16 %v7078
        %v7527 = vunpack.c.l.b16 %v7079
        %v7528 = vunpack.c.h.b16 %v7079
        %v7529 = vunpack.c.l.b16 %v7080
        %v7530 = vunpack.c.h.b16 %v7080
        %v7531 = vunpack.c.l.b16 %v7081
        %v7532 = vunpack.c.h.b16 %v7081
        %v7533 = vunpack.c.l.b16 %v7082
        %v7534 = vunpack.c.h.b16 %v7082
        %v7535 = vunpack.c.l.b16 %v7083
        %v7536 = vunpack.c.h.b16 %v7083
        %v7537 = vunpack.c.l.b16 %v7084
        %v7538 = vunpack.c.h.b16 %v7084
        %v7539 = vunpack.c.l.b16 %v7085
        %v7540 = vunpack.c.h.b16 %v7085
        %v7541 = vunpack.c.l.b16 %v7086
        %v7542 = vunpack.c.h.b16 %v7086
        %v7543 = vunpack.c.l.b16 %v7087
        %v7544 = vunpack.c.h.b16 %v7087
        %v7545 = vunpack.c.l.b16 %v7088
        %v7546 = vunpack.c.h.b16 %v7088
        %v7547 = vunpack.c.l.b16 %v7089
        %v7548 = vunpack.c.h.b16 %v7089
        %v7549 = vunpack.c.l.b16 %v7090
        %v7550 = vunpack.c.h.b16 %v7090
        %v7551 = vunpack.c.l.b16 %v7091
        %v7552 = vunpack.c.h.b16 %v7091
        %v7553 = vunpack.c.l.b16 %v7092
        %v7554 = vunpack.c.h.b16 %v7092
        %v7555 = vunpack.c.l.b16 %v7093
        %v7556 = vunpack.c.h.b16 %v7093
        %v7557 = vunpack.c.l.b16 %v7094
        %v7558 = vunpack.c.h.b16 %v7094
        %v7559 = vunpack.c.l.b16 %v7095
        %v7560 = vunpack.c.h.b16 %v7095
        %v7561 = vunpack.c.l.b16 %v7096
        %v7562 = vunpack.c.h.b16 %v7096
        %v7563 = vunpack.c.l.b16 %v7097
        %v7564 = vunpack.c.h.b16 %v7097
        %v7565 = vunpack.c.l.b16 %v7098
        %v7566 = vunpack.c.h.b16 %v7098
        %v7567 = vunpack.c.l.b16 %v7099
        %v7568 = vunpack.c.h.b16 %v7099
        %v7569 = vunpack.c.l.b16 %v7100
        %v7570 = vunpack.c.h.b16 %v7100
        %v7571 = vunpack.c.l.b16 %v7101
        %v7572 = vunpack.c.h.b16 %v7101
        %v7573 = vunpack.c.l.b16 %v7102
        %v7574 = vunpack.c.h.b16 %v7102
        %v7575 = vunpack.c.l.b16 %v7103
        %v7576 = vunpack.c.h.b16 %v7103
        %v7577 = vunpack.c.l.b16 %v7104
        %v7578 = vunpack.c.h.b16 %v7104
        %v7579 = vunpack.c.l.b16 %v7105
        %v7580 = vunpack.c.h.b16 %v7105
        %v7581 = vunpack.c.l.b16 %v7106
        %v7582 = vunpack.c.h.b16 %v7106
        %v7583 = vunpack.c.l.b16 %v7107
        %v7584 = vunpack.c.h.b16 %v7107
        %v7585 = vunpack.c.l.b16 %v7108
        %v7586 = vunpack.c.h.b16 %v7108
        %v7587 = vunpack.c.l.b16 %v7109
        %v7588 = vunpack.c.h.b16 %v7109
        %v7589 = vunpack.c.l.b16 %v7110
        %v7590 = vunpack.c.h.b16 %v7110
        %v7591 = vunpack.c.l.b16 %v7111
        %v7592 = vunpack.c.h.b16 %v7111
        %v7593 = vunpack.c.l.b16 %v7112
        %v7594 = vunpack.c.h.b16 %v7112
        %v7595 = vunpack.c.l.b16 %v7113
        %v7596 = vunpack.c.h.b16 %v7113
        %v7597 = vunpack.c.l.b16 %v7114
        %v7598 = vunpack.c.h.b16 %v7114
        %v7599 = vunpack.c.l.b16 %v7115
        %v7600 = vunpack.c.h.b16 %v7115
        %v7601 = vunpack.c.l.b16 %v7116
        %v7602 = vunpack.c.h.b16 %v7116
        %v7603 = vunpack.c.l.b16 %v7117
        %v7604 = vunpack.c.h.b16 %v7117
        %v7605 = vunpack.c.l.b16 %v7118
        %v7606 = vunpack.c.h.b16 %v7118
        %v7607 = vunpack.c.l.b16 %v7119
        %v7608 = vunpack.c.h.b16 %v7119
        %v7609 = vunpack.c.l.b16 %v7120
        %v7610 = vunpack.c.h.b16 %v7120
        %v7611 = vunpack.c.l.b16 %v7121
        %v7612 = vunpack.c.h.b16 %v7121
        %v7613 = vunpack.c.l.b16 %v7122
        %v7614 = vunpack.c.h.b16 %v7122
        %v7615 = vunpack.c.l.b16 %v7123
        %v7616 = vunpack.c.h.b16 %v7123
        %v7617 = vunpack.c.l.b16 %v7124
        %v7618 = vunpack.c.h.b16 %v7124
        %v7619 = vunpack.c.l.b16 %v7125
        %v7620 = vunpack.c.h.b16 %v7125
        %v7621 = vunpack.c.l.b16 %v7126
        %v7622 = vunpack.c.h.b16 %v7126
        %v7623 = vunpack.c.l.b16 %v7127
        %v7624 = vunpack.c.h.b16 %v7127
        %v7625 = vunpack.c.l.b16 %v7128
        %v7626 = vunpack.c.h.b16 %v7128
        %v7627 = vunpack.c.l.b16 %v7129
        %v7628 = vunpack.c.h.b16 %v7129
        %v7629 = vunpack.c.l.b16 %v7130
        %v7630 = vunpack.c.h.b16 %v7130
        %v7631 = vunpack.c.l.b16 %v7131
        %v7632 = vunpack.c.h.b16 %v7131
        %v7633 = vunpack.c.l.b16 %v7132
        %v7634 = vunpack.c.h.b16 %v7132
        %v7635 = vunpack.c.l.b16 %v7133
        %v7636 = vunpack.c.h.b16 %v7133
        %v7637 = vunpack.c.l.b16 %v7134
        %v7638 = vunpack.c.h.b16 %v7134
        %v7639 = vunpack.c.l.b16 %v7135
        %v7640 = vunpack.c.h.b16 %v7135
        %v7641 = vunpack.c.l.b16 %v7136
        %v7642 = vunpack.c.h.b16 %v7136
        %v7643 = vunpack.c.l.b16 %v7137
        %v7644 = vunpack.c.h.b16 %v7137
        %v7645 = vunpack.c.l.b16 %v7138
        %v7646 = vunpack.c.h.b16 %v7138
        %v7647 = vunpack.c.l.b16 %v7139
        %v7648 = vunpack.c.h.b16 %v7139
        %v7649 = vunpack.c.l.b16 %v7140
        %v7650 = vunpack.c.h.b16 %v7140
        %v7651 = vunpack.c.l.b16 %v7141
        %v7652 = vunpack.c.h.b16 %v7141
        %v7653 = vunpack.c.l.b16 %v7142
        %v7654 = vunpack.c.h.b16 %v7142
        %v7655 = vunpack.c.l.b16 %v7143
        %v7656 = vunpack.c.h.b16 %v7143
        %v7657 = vunpack.c.l.b16 %v7144
        %v7658 = vunpack.c.h.b16 %v7144
        %v7659 = vunpack.c.l.b16 %v7145
        %v7660 = vunpack.c.h.b16 %v7145
        %v7661 = vunpack.c.l.b16 %v7146
        %v7662 = vunpack.c.h.b16 %v7146
        %v7663 = vunpack.c.l.b16 %v7147
        %v7664 = vunpack.c.h.b16 %v7147
        %v7665 = vunpack.c.l.b16 %v7148
        %v7666 = vunpack.c.h.b16 %v7148
        %v7667 = vunpack.c.l.b16 %v7149
        %v7668 = vunpack.c.h.b16 %v7149
        %v7669 = vunpack.c.l.b16 %v7150
        %v7670 = vunpack.c.h.b16 %v7150
        %v7671 = vunpack.c.l.b16 %v7151
        %v7672 = vunpack.c.h.b16 %v7151
        %v7673 = vunpack.c.l.b16 %v7152
        %v7674 = vunpack.c.h.b16 %v7152
        %v7675 = vunpack.c.l.b16 %v7153
        %v7676 = vunpack.c.h.b16 %v7153
        %v7677 = vunpack.c.l.b16 %v7154
        %v7678 = vunpack.c.h.b16 %v7154
        %v7679 = vunpack.c.l.b16 %v7155
        %v7680 = vunpack.c.h.b16 %v7155
        %v7681 = vunpack.c.l.b16 %v7156
        %v7682 = vunpack.c.h.b16 %v7156
        %v7683 = vunpack.c.l.b16 %v7157
        %v7684 = vunpack.c.h.b16 %v7157
        %v7685 = vunpack.c.l.b16 %v7158
        %v7686 = vunpack.c.h.b16 %v7158
        %v7687 = vunpack.c.l.b16 %v7159
        %v7688 = vunpack.c.h.b16 %v7159
        %v7689 = vunpack.c.l.b16 %v7160
        %v7690 = vunpack.c.h.b16 %v7160
        %v7691 = vunpack.c.l.b16 %v7161
        %v7692 = vunpack.c.h.b16 %v7161
        %v7693 = vunpack.c.l.b16 %v7162
        %v7694 = vunpack.c.h.b16 %v7162
        %v7695 = vunpack.c.l.b16 %v7163
        %v7696 = vunpack.c.h.b16 %v7163
        %v7697 = vunpack.c.l.b16 %v7164
        %v7698 = vunpack.c.h.b16 %v7164
        %v7699 = vunpack.c.l.b16 %v7165
        %v7700 = vunpack.c.h.b16 %v7165
        %v7701 = vunpack.c.l.b16 %v7166
        %v7702 = vunpack.c.h.b16 %v7166
        %v7703 = vunpack.c.l.b16 %v7167
        %v7704 = vunpack.c.h.b16 %v7167
        %v7705 = vunpack.c.l.b16 %v7168
        %v7706 = vunpack.c.h.b16 %v7168
        %v7707 = vunpack.c.l.b16 %v7169
        %v7708 = vunpack.c.h.b16 %v7169
        %v7709 = vunpack.c.l.b16 %v7170
        %v7710 = vunpack.c.h.b16 %v7170
        %v7711 = vunpack.c.l.b16 %v7171
        %v7712 = vunpack.c.h.b16 %v7171
        %v7713 = vunpack.c.l.b16 %v7172
        %v7714 = vunpack.c.h.b16 %v7172
        %v7715 = vunpack.c.l.b16 %v7173
        %v7716 = vunpack.c.h.b16 %v7173
        %v7717 = vunpack.c.l.b16 %v7174
        %v7718 = vunpack.c.h.b16 %v7174
        %v7719 = vunpack.c.l.b16 %v7175
        %v7720 = vunpack.c.h.b16 %v7175
        %v7721 = vunpack.c.l.b16 %v7176
        %v7722 = vunpack.c.h.b16 %v7176
        %v7723 = vunpack.c.l.b16 %v7177
        %v7724 = vunpack.c.h.b16 %v7177
        %v7725 = vunpack.c.l.b16 %v7178
        %v7726 = vunpack.c.h.b16 %v7178
        %v7727 = vunpack.c.l.b16 %v7179
        %v7728 = vunpack.c.h.b16 %v7179
        %v7729 = vunpack.c.l.b16 %v7180
        %v7730 = vunpack.c.h.b16 %v7180
        %v7731 = vunpack.c.l.b16 %v7181
        %v7732 = vunpack.c.h.b16 %v7181
        %v7733 = vunpack.c.l.b16 %v7182
        %v7734 = vunpack.c.h.b16 %v7182
        %v7735 = vunpack.c.l.b16 %v7183
        %v7736 = vunpack.c.h.b16 %v7183
        %v7737 = vunpack.c.l.b16 %v7184
        %v7738 = vunpack.c.h.b16 %v7184
        %v7739 = vunpack.c.l.b16 %v7185
        %v7740 = vunpack.c.h.b16 %v7185
        %v7741 = vunpack.c.l.b16 %v7186
        %v7742 = vunpack.c.h.b16 %v7186
        %v7743 = vunpack.c.l.b16 %v7187
        %v7744 = vunpack.c.h.b16 %v7187
        %v7745 = vunpack.c.l.b16 %v7188
        %v7746 = vunpack.c.h.b16 %v7188
        %v7747 = vunpack.c.l.b16 %v7189
        %v7748 = vunpack.c.h.b16 %v7189
        %v7749 = vunpack.c.l.b16 %v7190
        %v7750 = vunpack.c.h.b16 %v7190
        %v7751 = vunpack.c.l.b16 %v7191
        %v7752 = vunpack.c.h.b16 %v7191
        %v7753 = vunpack.c.l.b16 %v7192
        %v7754 = vunpack.c.h.b16 %v7192
        %v7755 = vunpack.c.l.b16 %v7193
        %v7756 = vunpack.c.h.b16 %v7193
        %v7757 = vunpack.c.l.b16 %v7194
        %v7758 = vunpack.c.h.b16 %v7194
        %v7759 = vunpack.c.l.b16 %v7195
        %v7760 = vunpack.c.h.b16 %v7195
        %v7761 = vunpack.c.l.b16 %v7196
        %v7762 = vunpack.c.h.b16 %v7196
        %v7763 = vunpack.c.l.b16 %v7197
        %v7764 = vunpack.c.h.b16 %v7197
        %v7765 = vunpack.c.l.b16 %v7198
        %v7766 = vunpack.c.h.b16 %v7198
        %v7767 = vunpack.c.l.b16 %v7199
        %v7768 = vunpack.c.h.b16 %v7199
        %v7769 = vunpack.c.l.b16 %v7200
        %v7770 = vunpack.c.h.b16 %v7200
        %v7771 = vunpack.c.l.b16 %v7201
        %v7772 = vunpack.c.h.b16 %v7201
        %v7773 = vunpack.c.l.b16 %v7202
        %v7774 = vunpack.c.h.b16 %v7202
        %v7775 = vunpack.c.l.b16 %v7203
        %v7776 = vunpack.c.h.b16 %v7203
        %v7777 = vunpack.c.l.b16 %v7204
        %v7778 = vunpack.c.h.b16 %v7204
        %v7779 = vunpack.c.l.b16 %v7205
        %v7780 = vunpack.c.h.b16 %v7205
        %v7781 = vunpack.c.l.b16 %v7206
        %v7782 = vunpack.c.h.b16 %v7206
        %v7783 = vunpack.c.l.b16 %v7207
        %v7784 = vunpack.c.h.b16 %v7207
        %v7785 = vunpack.c.l.b16 %v7208
        %v7786 = vunpack.c.h.b16 %v7208
        %v7787 = vunpack.c.l.b16 %v7209
        %v7788 = vunpack.c.h.b16 %v7209
        %v7789 = vunpack.c.l.b16 %v7210
        %v7790 = vunpack.c.h.b16 %v7210
        %v7791 = vunpack.c.l.b16 %v7211
        %v7792 = vunpack.c.h.b16 %v7211
        %v7793 = vunpack.c.l.b16 %v7212
        %v7794 = vunpack.c.h.b16 %v7212
        %v7795 = vunpack.c.l.b16 %v7213
        %v7796 = vunpack.c.h.b16 %v7213
        %v7797 = vunpack.c.l.b16 %v7214
        %v7798 = vunpack.c.h.b16 %v7214
        %v7799 = vunpack.c.l.b16 %v7215
        %v7800 = vunpack.c.h.b16 %v7215
        %v7801 = vunpack.c.l.b16 %v7216
        %v7802 = vunpack.c.h.b16 %v7216
        %v7803 = vunpack.c.l.b16 %v7217
        %v7804 = vunpack.c.h.b16 %v7217
        %v7805 = vunpack.c.l.b16 %v7218
        %v7806 = vunpack.c.h.b16 %v7218
        %v7807 = vunpack.c.l.b16 %v7219
        %v7808 = vunpack.c.h.b16 %v7219
        %v7809 = vpack.c.b16 %v7427, %v7425
        %v7810 = vpack.c.b16 %v7428, %v7426
        %v7811 = vpack.c.b16 %v7431, %v7429
        %v7812 = vpack.c.b16 %v7432, %v7430
        %v7813 = vpack.c.b16 %v7435, %v7433
        %v7814 = vpack.c.b16 %v7436, %v7434
        %v7815 = vpack.c.b16 %v7439, %v7437
        %v7816 = vpack.c.b16 %v7440, %v7438
        %v7817 = vpack.c.b16 %v7443, %v7441
        %v7818 = vpack.c.b16 %v7444, %v7442
        %v7819 = vpack.c.b16 %v7447, %v7445
        %v7820 = vpack.c.b16 %v7448, %v7446
        %v7821 = vpack.c.b16 %v7451, %v7449
        %v7822 = vpack.c.b16 %v7452, %v7450
        %v7823 = vpack.c.b16 %v7455, %v7453
        %v7824 = vpack.c.b16 %v7456, %v7454
        %v7825 = vpack.c.b16 %v7459, %v7457
        %v7826 = vpack.c.b16 %v7460, %v7458
        %v7827 = vpack.c.b16 %v7463, %v7461
        %v7828 = vpack.c.b16 %v7464, %v7462
        %v7829 = vpack.c.b16 %v7467, %v7465
        %v7830 = vpack.c.b16 %v7468, %v7466
        %v7831 = vpack.c.b16 %v7471, %v7469
        %v7832 = vpack.c.b16 %v7472, %v7470
        %v7833 = vpack.c.b16 %v7475, %v7473
        %v7834 = vpack.c.b16 %v7476, %v7474
        %v7835 = vpack.c.b16 %v7479, %v7477
        %v7836 = vpack.c.b16 %v7480, %v7478
        %v7837 = vpack.c.b16 %v7483, %v7481
        %v7838 = vpack.c.b16 %v7484, %v7482
        %v7839 = vpack.c.b16 %v7487, %v7485
        %v7840 = vpack.c.b16 %v7488, %v7486
        %v7841 = vpack.c.b16 %v7491, %v7489
        %v7842 = vpack.c.b16 %v7492, %v7490
        %v7843 = vpack.c.b16 %v7495, %v7493
        %v7844 = vpack.c.b16 %v7496, %v7494
        %v7845 = vpack.c.b16 %v7499, %v7497
        %v7846 = vpack.c.b16 %v7500, %v7498
        %v7847 = vpack.c.b16 %v7503, %v7501
        %v7848 = vpack.c.b16 %v7504, %v7502
        %v7849 = vpack.c.b16 %v7507, %v7505
        %v7850 = vpack.c.b16 %v7508, %v7506
        %v7851 = vpack.c.b16 %v7511, %v7509
        %v7852 = vpack.c.b16 %v7512, %v7510
        %v7853 = vpack.c.b16 %v7515, %v7513
        %v7854 = vpack.c.b16 %v7516, %v7514
        %v7855 = vpack.c.b16 %v7519, %v7517
        %v7856 = vpack.c.b16 %v7520, %v7518
        %v7857 = vpack.c.b16 %v7523, %v7521
        %v7858 = vpack.c.b16 %v7524, %v7522
        %v7859 = vpack.c.b16 %v7527, %v7525
        %v7860 = vpack.c.b16 %v7528, %v7526
        %v7861 = vpack.c.b16 %v7531, %v7529
        %v7862 = vpack.c.b16 %v7532, %v7530
        %v7863 = vpack.c.b16 %v7535, %v7533
        %v7864 = vpack.c.b16 %v7536, %v7534
        %v7865 = vpack.c.b16 %v7539, %v7537
        %v7866 = vpack.c.b16 %v7540, %v7538
        %v7867 = vpack.c.b16 %v7543, %v7541
        %v7868 = vpack.c.b16 %v7544, %v7542
        %v7869 = vpack.c.b16 %v7547, %v7545
        %v7870 = vpack.c.b16 %v7548, %v7546
        %v7871 = vpack.c.b16 %v7551, %v7549
        %v7872 = vpack.c.b16 %v7552, %v7550
        %v7873 = vpack.c.b16 %v7555, %v7553
        %v7874 = vpack.c.b16 %v7556, %v7554
        %v7875 = vpack.c.b16 %v7559, %v7557
        %v7876 = vpack.c.b16 %v7560, %v7558
        %v7877 = vpack.c.b16 %v7563, %v7561
        %v7878 = vpack.c.b16 %v7564, %v7562
        %v7879 = vpack.c.b16 %v7567, %v7565
        %v7880 = vpack.c.b16 %v7568, %v7566
        %v7881 = vpack.c.b16 %v7571, %v7569
        %v7882 = vpack.c.b16 %v7572, %v7570
        %v7883 = vpack.c.b16 %v7575, %v7573
        %v7884 = vpack.c.b16 %v7576, %v7574
        %v7885 = vpack.c.b16 %v7579, %v7577
        %v7886 = vpack.c.b16 %v7580, %v7578
        %v7887 = vpack.c.b16 %v7583, %v7581
        %v7888 = vpack.c.b16 %v7584, %v7582
        %v7889 = vpack.c.b16 %v7587, %v7585
        %v7890 = vpack.c.b16 %v7588, %v7586
        %v7891 = vpack.c.b16 %v7591, %v7589
        %v7892 = vpack.c.b16 %v7592, %v7590
        %v7893 = vpack.c.b16 %v7595, %v7593
        %v7894 = vpack.c.b16 %v7596, %v7594
        %v7895 = vpack.c.b16 %v7599, %v7597
        %v7896 = vpack.c.b16 %v7600, %v7598
        %v7897 = vpack.c.b16 %v7603, %v7601
        %v7898 = vpack.c.b16 %v7604, %v7602
        %v7899 = vpack.c.b16 %v7607, %v7605
        %v7900 = vpack.c.b16 %v7608, %v7606
        %v7901 = vpack.c.b16 %v7611, %v7609
        %v7902 = vpack.c.b16 %v7612, %v7610
        %v7903 = vpack.c.b16 %v7615, %v7613
        %v7904 = vpack.c.b16 %v7616, %v7614
        %v7905 = vpack.c.b16 %v7619, %v7617
        %v7906 = vpack.c.b16 %v7620, %v7618
        %v7907 = vpack.c.b16 %v7623, %v7621
        %v7908 = vpack.c.b16 %v7624, %v7622
        %v7909 = vpack.c.b16 %v7627, %v7625
        %v7910 = vpack.c.b16 %v7628, %v7626
        %v7911 = vpack.c.b16 %v7631, %v7629
        %v7912 = vpack.c.b16 %v7632, %v7630
        %v7913 = vpack.c.b16 %v7635, %v7633
        %v7914 = vpack.c.b16 %v7636, %v7634
        %v7915 = vpack.c.b16 %v7639, %v7637
        %v7916 = vpack.c.b16 %v7640, %v7638
        %v7917 = vpack.c.b16 %v7643, %v7641
        %v7918 = vpack.c.b16 %v7644, %v7642
        %v7919 = vpack.c.b16 %v7647, %v7645
        %v7920 = vpack.c.b16 %v7648, %v7646
        %v7921 = vpack.c.b16 %v7651, %v7649
        %v7922 = vpack.c.b16 %v7652, %v7650
        %v7923 = vpack.c.b16 %v7655, %v7653
        %v7924 = vpack.c.b16 %v7656, %v7654
        %v7925 = vpack.c.b16 %v7659, %v7657
        %v7926 = vpack.c.b16 %v7660, %v7658
        %v7927 = vpack.c.b16 %v7663, %v7661
        %v7928 = vpack.c.b16 %v7664, %v7662
        %v7929 = vpack.c.b16 %v7667, %v7665
        %v7930 = vpack.c.b16 %v7668, %v7666
        %v7931 = vpack.c.b16 %v7671, %v7669
        %v7932 = vpack.c.b16 %v7672, %v7670
        %v7933 = vpack.c.b16 %v7675, %v7673
        %v7934 = vpack.c.b16 %v7676, %v7674
        %v7935 = vpack.c.b16 %v7679, %v7677
        %v7936 = vpack.c.b16 %v7680, %v7678
        %v7937 = vpack.c.b16 %v7683, %v7681
        %v7938 = vpack.c.b16 %v7684, %v7682
        %v7939 = vpack.c.b16 %v7687, %v7685
        %v7940 = vpack.c.b16 %v7688, %v7686
        %v7941 = vpack.c.b16 %v7691, %v7689
        %v7942 = vpack.c.b16 %v7692, %v7690
        %v7943 = vpack.c.b16 %v7695, %v7693
        %v7944 = vpack.c.b16 %v7696, %v7694
        %v7945 = vpack.c.b16 %v7699, %v7697
        %v7946 = vpack.c.b16 %v7700, %v7698
        %v7947 = vpack.c.b16 %v7703, %v7701
        %v7948 = vpack.c.b16 %v7704, %v7702
        %v7949 = vpack.c.b16 %v7707, %v7705
        %v7950 = vpack.c.b16 %v7708, %v7706
        %v7951 = vpack.c.b16 %v7711, %v7709
        %v7952 = vpack.c.b16 %v7712, %v7710
        %v7953 = vpack.c.b16 %v7715, %v7713
        %v7954 = vpack.c.b16 %v7716, %v7714
        %v7955 = vpack.c.b16 %v7719, %v7717
        %v7956 = vpack.c.b16 %v7720, %v7718
        %v7957 = vpack.c.b16 %v7723, %v7721
        %v7958 = vpack.c.b16 %v7724, %v7722
        %v7959 = vpack.c.b16 %v7727, %v7725
        %v7960 = vpack.c.b16 %v7728, %v7726
        %v7961 = vpack.c.b16 %v7731, %v7729
        %v7962 = vpack.c.b16 %v7732, %v7730
        %v7963 = vpack.c.b16 %v7735, %v7733
        %v7964 = vpack.c.b16 %v7736, %v7734
        %v7965 = vpack.c.b16 %v7739, %v7737
        %v7966 = vpack.c.b16 %v7740, %v7738
        %v7967 = vpack.c.b16 %v7743, %v7741
        %v7968 = vpack.c.b16 %v7744, %v7742
        %v7969 = vpack.c.b16 %v7747, %v7745
        %v7970 = vpack.c.b16 %v7748, %v7746
        %v7971 = vpack.c.b16 %v7751, %v7749
        %v7972 = vpack.c.b16 %v7752, %v7750
        %v7973 = vpack.c.b16 %v7755, %v7753
        %v7974 = vpack.c.b16 %v7756, %v7754
        %v7975 = vpack.c.b16 %v7759, %v7757
        %v7976 = vpack.c.b16 %v7760, %v7758
        %v7977 = vpack.c.b16 %v7763, %v7761
        %v7978 = vpack.c.b16 %v7764, %v7762
        %v7979 = vpack.c.b16 %v7767, %v7765
        %v7980 = vpack.c.b16 %v7768, %v7766
        %v7981 = vpack.c.b16 %v7771, %v7769
        %v7982 = vpack.c.b16 %v7772, %v7770
        %v7983 = vpack.c.b16 %v7775, %v7773
        %v7984 = vpack.c.b16 %v7776, %v7774
        %v7985 = vpack.c.b16 %v7779, %v7777
        %v7986 = vpack.c.b16 %v7780, %v7778
        %v7987 = vpack.c.b16 %v7783, %v7781
        %v7988 = vpack.c.b16 %v7784, %v7782
        %v7989 = vpack.c.b16 %v7787, %v7785
        %v7990 = vpack.c.b16 %v7788, %v7786
        %v7991 = vpack.c.b16 %v7791, %v7789
        %v7992 = vpack.c.b16 %v7792, %v7790
        %v7993 = vpack.c.b16 %v7795, %v7793
        %v7994 = vpack.c.b16 %v7796, %v7794
        %v7995 = vpack.c.b16 %v7799, %v7797
        %v7996 = vpack.c.b16 %v7800, %v7798
        %v7997 = vpack.c.b16 %v7803, %v7801
        %v7998 = vpack.c.b16 %v7804, %v7802
        %v7999 = vpack.c.b16 %v7807, %v7805
        %v8000 = vpack.c.b16 %v7808, %v7806
        %8193 = vmatprep.subr.bf16.mxu0 %v7810
        %8194 = vmatpush1.bf16.msra.mxu0 %v7809
        %8195 = vmatprep.subr.bf16.mxu0 %v7812
        %8196 = vmatpush1.bf16.msra.mxu0 %v7811
        %8197 = vmatprep.subr.bf16.mxu0 %v7814
        %8198 = vmatpush1.bf16.msra.mxu0 %v7813
        %8199 = vmatprep.subr.bf16.mxu0 %v7816
        %8200 = vmatpush1.bf16.msra.mxu0 %v7815
        %8201 = vmatprep.subr.bf16.mxu0 %v7818
        %8202 = vmatpush1.bf16.msra.mxu0 %v7817
        %8203 = vmatprep.subr.bf16.mxu0 %v7820
        %8204 = vmatpush1.bf16.msra.mxu0 %v7819
        %8205 = vmatprep.subr.bf16.mxu0 %v7822
        %8206 = vmatpush1.bf16.msra.mxu0 %v7821
        %8207 = vmatprep.subr.bf16.mxu0 %v7824
        %8208 = vmatpush1.bf16.msra.mxu0 %v7823
        %8209 = vmatprep.subr.bf16.mxu0 %v7826
        %8210 = vmatpush1.bf16.msra.mxu0 %v7825
        %8211 = vmatprep.subr.bf16.mxu0 %v7828
        %8212 = vmatpush1.bf16.msra.mxu0 %v7827
        %8213 = vmatprep.subr.bf16.mxu0 %v7830
        %8214 = vmatpush1.bf16.msra.mxu0 %v7829
        %8215 = vmatprep.subr.bf16.mxu0 %v7832
        %8216 = vmatpush1.bf16.msra.mxu0 %v7831
        %8217 = vmatprep.subr.bf16.mxu0 %v7834
        %8218 = vmatpush1.bf16.msra.mxu0 %v7833
        %8219 = vmatprep.subr.bf16.mxu0 %v7836
        %8220 = vmatpush1.bf16.msra.mxu0 %v7835
        %8221 = vmatprep.subr.bf16.mxu0 %v7838
        %8222 = vmatpush1.bf16.msra.mxu0 %v7837
        %8223 = vmatprep.subr.bf16.mxu0 %v7840
        %8224 = vmatpush1.bf16.msra.mxu0 %v7839
        %8225 = vmatprep.mubr.bf16.mxu0 %v6560
        %8226 = vmatmul.mubr.bf16.gmra.mrb[0].mxu0 %v6559
        %v8227 = vpop.f32.mrb[0].mxu0
        %v8228 = vadd.f32 %v7226, %v8227
        %v8229 = vpop.f32.mrb[0].mxu0
        %v8230 = vadd.f32 %v7230, %v8229
        %v8231 = vpop.f32.mrb[0].mxu0
        %v8232 = vadd.f32 %v7226, %v8231
        %v8233 = vpop.f32.mrb[0].mxu0
        %v8234 = vadd.f32 %v7230, %v8233
        %8235 = vdwg.mxu0
        %8236 = vmatprep.subr.bf16.mxu0 %v7842
        %8237 = vmatpush1.bf16.msra.mxu0 %v7841
        %8238 = vmatprep.subr.bf16.mxu0 %v7844
        %8239 = vmatpush1.bf16.msra.mxu0 %v7843
        %8240 = vmatprep.subr.bf16.mxu0 %v7846
        %8241 = vmatpush1.bf16.msra.mxu0 %v7845
        %8242 = vmatprep.subr.bf16.mxu0 %v7848
        %8243 = vmatpush1.bf16.msra.mxu0 %v7847
        %8244 = vmatprep.subr.bf16.mxu0 %v7850
        %8245 = vmatpush1.bf16.msra.mxu0 %v7849
        %8246 = vmatprep.subr.bf16.mxu0 %v7852
        %8247 = vmatpush1.bf16.msra.mxu0 %v7851
        %8248 = vmatprep.subr.bf16.mxu0 %v7854
        %8249 = vmatpush1.bf16.msra.mxu0 %v7853
        %8250 = vmatprep.subr.bf16.mxu0 %v7856
        %8251 = vmatpush1.bf16.msra.mxu0 %v7855
        %8252 = vmatprep.subr.bf16.mxu0 %v7858
        %8253 = vmatpush1.bf16.msra.mxu0 %v7857
        %8254 = vmatprep.subr.bf16.mxu0 %v7860
        %8255 = vmatpush1.bf16.msra.mxu0 %v7859
        %8256 = vmatprep.subr.bf16.mxu0 %v7862
        %8257 = vmatpush1.bf16.msra.mxu0 %v7861
        %8258 = vmatprep.subr.bf16.mxu0 %v7864
        %8259 = vmatpush1.bf16.msra.mxu0 %v7863
        %8260 = vmatprep.subr.bf16.mxu0 %v7866
        %8261 = vmatpush1.bf16.msra.mxu0 %v7865
        %8262 = vmatprep.subr.bf16.mxu0 %v7868
        %8263 = vmatpush1.bf16.msra.mxu0 %v7867
        %8264 = vmatprep.subr.bf16.mxu0 %v7870
        %8265 = vmatpush1.bf16.msra.mxu0 %v7869
        %8266 = vmatprep.subr.bf16.mxu0 %v7872
        %8267 = vmatpush1.bf16.msra.mxu0 %v7871
        %8268 = vmatprep.mubr.bf16.mxu0 %v6542
        %8269 = vmatmul.mubr.bf16.gmra.mrb[0].mxu0 %v6541
        %v8270 = vpop.f32.mrb[0].mxu0
        %v8271 = vadd.f32 %v8228, %v8270
        %v8272 = vpop.f32.mrb[0].mxu0
        %v8273 = vadd.f32 %v8230, %v8272
        %v8274 = vpop.f32.mrb[0].mxu0
        %v8275 = vadd.f32 %v8232, %v8274
        %v8276 = vpop.f32.mrb[0].mxu0
        %v8277 = vadd.f32 %v8234, %v8276
        %8278 = vdwg.mxu0
        %8279 = vmatprep.subr.bf16.mxu0 %v7874
        %8280 = vmatpush1.bf16.msra.mxu0 %v7873
        %8281 = vmatprep.subr.bf16.mxu0 %v7876
        %8282 = vmatpush1.bf16.msra.mxu0 %v7875
        %8283 = vmatprep.subr.bf16.mxu0 %v7878
        %8284 = vmatpush1.bf16.msra.mxu0 %v7877
        %8285 = vmatprep.subr.bf16.mxu0 %v7880
        %8286 = vmatpush1.bf16.msra.mxu0 %v7879
        %8287 = vmatprep.subr.bf16.mxu0 %v7882
        %8288 = vmatpush1.bf16.msra.mxu0 %v7881
        %8289 = vmatprep.subr.bf16.mxu0 %v7884
        %8290 = vmatpush1.bf16.msra.mxu0 %v7883
        %8291 = vmatprep.subr.bf16.mxu0 %v7886
        %8292 = vmatpush1.bf16.msra.mxu0 %v7885
        %8293 = vmatprep.subr.bf16.mxu0 %v7888
        %8294 = vmatpush1.bf16.msra.mxu0 %v7887
        %8295 = vmatprep.subr.bf16.mxu0 %v7890
        %8296 = vmatpush1.bf16.msra.mxu0 %v7889
        %8297 = vmatprep.subr.bf16.mxu0 %v7892
        %8298 = vmatpush1.bf16.msra.mxu0 %v7891
        %8299 = vmatprep.subr.bf16.mxu0 %v7894
        %8300 = vmatpush1.bf16.msra.mxu0 %v7893
        %8301 = vmatprep.subr.bf16.mxu0 %v7896
        %8302 = vmatpush1.bf16.msra.mxu0 %v7895
        %8303 = vmatprep.subr.bf16.mxu0 %v7898
        %8304 = vmatpush1.bf16.msra.mxu0 %v7897
        %8305 = vmatprep.subr.bf16.mxu0 %v7900
        %8306 = vmatpush1.bf16.msra.mxu0 %v7899
        %8307 = vmatprep.subr.bf16.mxu0 %v7902
        %8308 = vmatpush1.bf16.msra.mxu0 %v7901
        %8309 = vmatprep.subr.bf16.mxu0 %v7904
        %8310 = vmatpush1.bf16.msra.mxu0 %v7903
        %8311 = vmatprep.mubr.bf16.mxu0 %v6572
        %8312 = vmatmul.mubr.bf16.gmra.mrb[0].mxu0 %v6571
        %v8313 = vpop.f32.mrb[0].mxu0
        %v8314 = vadd.f32 %v8271, %v8313
        %v8315 = vpop.f32.mrb[0].mxu0
        %v8316 = vadd.f32 %v8273, %v8315
        %v8317 = vpop.f32.mrb[0].mxu0
        %v8318 = vadd.f32 %v8275, %v8317
        %v8319 = vpop.f32.mrb[0].mxu0
        %v8320 = vadd.f32 %v8277, %v8319
        %8321 = vdwg.mxu0
        %8322 = vmatprep.subr.bf16.mxu0 %v7906
        %8323 = vmatpush1.bf16.msra.mxu0 %v7905
        %8324 = vmatprep.subr.bf16.mxu0 %v7908
        %8325 = vmatpush1.bf16.msra.mxu0 %v7907
        %8326 = vmatprep.subr.bf16.mxu0 %v7910
        %8327 = vmatpush1.bf16.msra.mxu0 %v7909
        %8328 = vmatprep.subr.bf16.mxu0 %v7912
        %8329 = vmatpush1.bf16.msra.mxu0 %v7911
        %8330 = vmatprep.subr.bf16.mxu0 %v7914
        %8331 = vmatpush1.bf16.msra.mxu0 %v7913
        %8332 = vmatprep.subr.bf16.mxu0 %v7916
        %8333 = vmatpush1.bf16.msra.mxu0 %v7915
        %8334 = vmatprep.subr.bf16.mxu0 %v7918
        %8335 = vmatpush1.bf16.msra.mxu0 %v7917
        %8336 = vmatprep.subr.bf16.mxu0 %v7920
        %8337 = vmatpush1.bf16.msra.mxu0 %v7919
        %8338 = vmatprep.subr.bf16.mxu0 %v7922
        %8339 = vmatpush1.bf16.msra.mxu0 %v7921
        %8340 = vmatprep.subr.bf16.mxu0 %v7924
        %8341 = vmatpush1.bf16.msra.mxu0 %v7923
        %8342 = vmatprep.subr.bf16.mxu0 %v7926
        %8343 = vmatpush1.bf16.msra.mxu0 %v7925
        %8344 = vmatprep.subr.bf16.mxu0 %v7928
        %8345 = vmatpush1.bf16.msra.mxu0 %v7927
        %8346 = vmatprep.subr.bf16.mxu0 %v7930
        %8347 = vmatpush1.bf16.msra.mxu0 %v7929
        %8348 = vmatprep.subr.bf16.mxu0 %v7932
        %8349 = vmatpush1.bf16.msra.mxu0 %v7931
        %8350 = vmatprep.subr.bf16.mxu0 %v7934
        %8351 = vmatpush1.bf16.msra.mxu0 %v7933
        %8352 = vmatprep.subr.bf16.mxu0 %v7936
        %8353 = vmatpush1.bf16.msra.mxu0 %v7935
        %8354 = vmatprep.mubr.bf16.mxu0 %v7013
        %8355 = vmatmul.mubr.bf16.gmra.mrb[0].mxu0 %v7012
        %v8356 = vpop.f32.mrb[0].mxu0
        %v8357 = vadd.f32 %v8314, %v8356
        %v8358 = vpop.f32.mrb[0].mxu0
        %v8359 = vadd.f32 %v8316, %v8358
        %v8360 = vpop.f32.mrb[0].mxu0
        %v8361 = vadd.f32 %v8318, %v8360
        %v8362 = vpop.f32.mrb[0].mxu0
        %v8363 = vadd.f32 %v8320, %v8362
        %8364 = vdwg.mxu0
        %8365 = vmatprep.subr.bf16.mxu0 %v7938
        %8366 = vmatpush1.bf16.msra.mxu0 %v7937
        %8367 = vmatprep.subr.bf16.mxu0 %v7940
        %8368 = vmatpush1.bf16.msra.mxu0 %v7939
        %8369 = vmatprep.subr.bf16.mxu0 %v7942
        %8370 = vmatpush1.bf16.msra.mxu0 %v7941
        %8371 = vmatprep.subr.bf16.mxu0 %v7944
        %8372 = vmatpush1.bf16.msra.mxu0 %v7943
        %8373 = vmatprep.subr.bf16.mxu0 %v7946
        %8374 = vmatpush1.bf16.msra.mxu0 %v7945
        %8375 = vmatprep.subr.bf16.mxu0 %v7948
        %8376 = vmatpush1.bf16.msra.mxu0 %v7947
        %8377 = vmatprep.subr.bf16.mxu0 %v7950
        %8378 = vmatpush1.bf16.msra.mxu0 %v7949
        %8379 = vmatprep.subr.bf16.mxu0 %v7952
        %8380 = vmatpush1.bf16.msra.mxu0 %v7951
        %8381 = vmatprep.subr.bf16.mxu0 %v7954
        %8382 = vmatpush1.bf16.msra.mxu0 %v7953
        %8383 = vmatprep.subr.bf16.mxu0 %v7956
        %8384 = vmatpush1.bf16.msra.mxu0 %v7955
        %8385 = vmatprep.subr.bf16.mxu0 %v7958
        %8386 = vmatpush1.bf16.msra.mxu0 %v7957
        %8387 = vmatprep.subr.bf16.mxu0 %v7960
        %8388 = vmatpush1.bf16.msra.mxu0 %v7959
        %8389 = vmatprep.subr.bf16.mxu0 %v7962
        %8390 = vmatpush1.bf16.msra.mxu0 %v7961
        %8391 = vmatprep.subr.bf16.mxu0 %v7964
        %8392 = vmatpush1.bf16.msra.mxu0 %v7963
        %8393 = vmatprep.subr.bf16.mxu0 %v7966
        %8394 = vmatpush1.bf16.msra.mxu0 %v7965
        %8395 = vmatprep.subr.bf16.mxu0 %v7968
        %8396 = vmatpush1.bf16.msra.mxu0 %v7967
        %8397 = vmatprep.mubr.bf16.mxu0 %v6995
        %8398 = vmatmul.mubr.bf16.gmra.mrb[0].mxu0 %v6994
        %v8399 = vpop.f32.mrb[0].mxu0
        %v8400 = vadd.f32 %v8357, %v8399
        %v8401 = vpop.f32.mrb[0].mxu0
        %v8402 = vadd.f32 %v8359, %v8401
        %v8403 = vpop.f32.mrb[0].mxu0
        %v8404 = vadd.f32 %v8361, %v8403
        %v8405 = vpop.f32.mrb[0].mxu0
        %v8406 = vadd.f32 %v8363, %v8405
        %8407 = vdwg.mxu0
        %8408 = vmatprep.subr.bf16.mxu0 %v7970
        %8409 = vmatpush1.bf16.msra.mxu0 %v7969
        %8410 = vmatprep.subr.bf16.mxu0 %v7972
        %8411 = vmatpush1.bf16.msra.mxu0 %v7971
        %8412 = vmatprep.subr.bf16.mxu0 %v7974
        %8413 = vmatpush1.bf16.msra.mxu0 %v7973
        %8414 = vmatprep.subr.bf16.mxu0 %v7976
        %8415 = vmatpush1.bf16.msra.mxu0 %v7975
        %8416 = vmatprep.subr.bf16.mxu0 %v7978
        %8417 = vmatpush1.bf16.msra.mxu0 %v7977
        %8418 = vmatprep.subr.bf16.mxu0 %v7980
        %8419 = vmatpush1.bf16.msra.mxu0 %v7979
        %8420 = vmatprep.subr.bf16.mxu0 %v7982
        %8421 = vmatpush1.bf16.msra.mxu0 %v7981
        %8422 = vmatprep.subr.bf16.mxu0 %v7984
        %8423 = vmatpush1.bf16.msra.mxu0 %v7983
        %8424 = vmatprep.subr.bf16.mxu0 %v7986
        %8425 = vmatpush1.bf16.msra.mxu0 %v7985
        %8426 = vmatprep.subr.bf16.mxu0 %v7988
        %8427 = vmatpush1.bf16.msra.mxu0 %v7987
        %8428 = vmatprep.subr.bf16.mxu0 %v7990
        %8429 = vmatpush1.bf16.msra.mxu0 %v7989
        %8430 = vmatprep.subr.bf16.mxu0 %v7992
        %8431 = vmatpush1.bf16.msra.mxu0 %v7991
        %8432 = vmatprep.subr.bf16.mxu0 %v7994
        %8433 = vmatpush1.bf16.msra.mxu0 %v7993
        %8434 = vmatprep.subr.bf16.mxu0 %v7996
        %8435 = vmatpush1.bf16.msra.mxu0 %v7995
        %8436 = vmatprep.subr.bf16.mxu0 %v7998
        %8437 = vmatpush1.bf16.msra.mxu0 %v7997
        %8438 = vmatprep.subr.bf16.mxu0 %v8000
        %8439 = vmatpush1.bf16.msra.mxu0 %v7999
        %8440 = vmatprep.mubr.bf16.mxu0 %v7025
        %8441 = vmatmul.mubr.bf16.gmra.mrb[0].mxu0 %v7024
        %v8442 = vpop.f32.mrb[0].mxu0
        %v8443 = vadd.f32 %v8400, %v8442
        %v8444 = vpop.f32.mrb[0].mxu0
        %v8445 = vadd.f32 %v8402, %v8444
        %v8446 = vpop.f32.mrb[0].mxu0
        %v8447 = vadd.f32 %v8404, %v8446
        %v8448 = vpop.f32.mrb[0].mxu0
        %v8449 = vadd.f32 %v8406, %v8448
        %8450 = vdwg.mxu0
        %vm8451 = vcmp.ge.f32.partialorder %v8443, 0.0
        %vm8452 = vcmp.ge.f32.partialorder %v8445, 0.0
        %vm8453 = vcmp.ge.f32.partialorder %v8447, 0.0
        %vm8454 = vcmp.ge.f32.partialorder %v8449, 0.0
        %v8455 = vmul.f32 %v8443, 0.01
        %v8456 = vmul.f32 %v8445, 0.01
        %v8457 = vmul.f32 %v8447, 0.01
        %v8458 = vmul.f32 %v8449, 0.01
        %v8459 = vsel %vm8451, %v8443, %v8455
        %v8460 = vsel %vm8452, %v8445, %v8456
        %v8461 = vsel %vm8453, %v8447, %v8457
        %v8462 = vsel %vm8454, %v8449, %v8458
        %v8463 = vpack.c.bf16 %v8461, %v8459
        %v8464 = vpack.c.bf16 %v8462, %v8460
        %v8465 = vld [vmem:[#allocation2 + $0x1980] sm:$0xff]
        %v8466 = vld [vmem:[#allocation2 + $0x1988] sm:$0xff]
        %v8467 = vld [vmem:[#allocation2 + $0x1990] sm:$0xff]
        %v8468 = vld [vmem:[#allocation2 + $0x1998] sm:$0xff]
        %v8469 = vld [vmem:[#allocation2 + $0x19a0] sm:$0xff]
        %v8470 = vld [vmem:[#allocation2 + $0x19a8] sm:$0xff]
        %v8471 = vld [vmem:[#allocation2 + $0x19b0] sm:$0xff]
        %v8472 = vld [vmem:[#allocation2 + $0x19b8] sm:$0xff]
        %v8473 = vld [vmem:[#allocation2 + $0x19c0] sm:$0xff]
        %v8474 = vld [vmem:[#allocation2 + $0x19c8] sm:$0xff]
        %v8475 = vld [vmem:[#allocation2 + $0x19d0] sm:$0xff]
        %v8476 = vld [vmem:[#allocation2 + $0x19d8] sm:$0xff]
        %v8477 = vld [vmem:[#allocation2 + $0x19e0] sm:$0xff]
        %v8478 = vld [vmem:[#allocation2 + $0x19e8] sm:$0xff]
        %v8479 = vld [vmem:[#allocation2 + $0x19f0] sm:$0xff]
        %v8480 = vld [vmem:[#allocation2 + $0x19f8] sm:$0xff]
        %v8481 = vld [vmem:[#allocation2 + $0x1a00] sm:$0xff]
        %v8482 = vld [vmem:[#allocation2 + $0x1a08] sm:$0xff]
        %v8483 = vld [vmem:[#allocation2 + $0x1a10] sm:$0xff]
        %v8484 = vld [vmem:[#allocation2 + $0x1a18] sm:$0xff]
        %v8485 = vld [vmem:[#allocation2 + $0x1a20] sm:$0xff]
        %v8486 = vld [vmem:[#allocation2 + $0x1a28] sm:$0xff]
        %v8487 = vld [vmem:[#allocation2 + $0x1a30] sm:$0xff]
        %v8488 = vld [vmem:[#allocation2 + $0x1a38] sm:$0xff]
        %v8489 = vld [vmem:[#allocation2 + $0x1a40] sm:$0xff]
        %v8490 = vld [vmem:[#allocation2 + $0x1a48] sm:$0xff]
        %v8491 = vld [vmem:[#allocation2 + $0x1a50] sm:$0xff]
        %v8492 = vld [vmem:[#allocation2 + $0x1a58] sm:$0xff]
        %v8493 = vld [vmem:[#allocation2 + $0x1a60] sm:$0xff]
        %v8494 = vld [vmem:[#allocation2 + $0x1a68] sm:$0xff]
        %v8495 = vld [vmem:[#allocation2 + $0x1a70] sm:$0xff]
        %v8496 = vld [vmem:[#allocation2 + $0x1a78] sm:$0xff]
        %v8497 = vld [vmem:[#allocation2 + $0x1a80] sm:$0xff]
        %v8498 = vld [vmem:[#allocation2 + $0x1a88] sm:$0xff]
        %v8499 = vld [vmem:[#allocation2 + $0x1a90] sm:$0xff]
        %v8500 = vld [vmem:[#allocation2 + $0x1a98] sm:$0xff]
        %v8501 = vld [vmem:[#allocation2 + $0x1aa0] sm:$0xff]
        %v8502 = vld [vmem:[#allocation2 + $0x1aa8] sm:$0xff]
        %v8503 = vld [vmem:[#allocation2 + $0x1ab0] sm:$0xff]
        %v8504 = vld [vmem:[#allocation2 + $0x1ab8] sm:$0xff]
        %v8505 = vld [vmem:[#allocation2 + $0x1ac0] sm:$0xff]
        %v8506 = vld [vmem:[#allocation2 + $0x1ac8] sm:$0xff]
        %v8507 = vld [vmem:[#allocation2 + $0x1ad0] sm:$0xff]
        %v8508 = vld [vmem:[#allocation2 + $0x1ad8] sm:$0xff]
        %v8509 = vld [vmem:[#allocation2 + $0x1ae0] sm:$0xff]
        %v8510 = vld [vmem:[#allocation2 + $0x1ae8] sm:$0xff]
        %v8511 = vld [vmem:[#allocation2 + $0x1af0] sm:$0xff]
        %v8512 = vld [vmem:[#allocation2 + $0x1af8] sm:$0xff]
        %v8513 = vld [vmem:[#allocation2 + $0x1b00] sm:$0xff]
        %v8514 = vld [vmem:[#allocation2 + $0x1b08] sm:$0xff]
        %v8515 = vld [vmem:[#allocation2 + $0x1b10] sm:$0xff]
        %v8516 = vld [vmem:[#allocation2 + $0x1b18] sm:$0xff]
        %v8517 = vld [vmem:[#allocation2 + $0x1b20] sm:$0xff]
        %v8518 = vld [vmem:[#allocation2 + $0x1b28] sm:$0xff]
        %v8519 = vld [vmem:[#allocation2 + $0x1b30] sm:$0xff]
        %v8520 = vld [vmem:[#allocation2 + $0x1b38] sm:$0xff]
        %v8521 = vld [vmem:[#allocation2 + $0x1b40] sm:$0xff]
        %v8522 = vld [vmem:[#allocation2 + $0x1b48] sm:$0xff]
        %v8523 = vld [vmem:[#allocation2 + $0x1b50] sm:$0xff]
        %v8524 = vld [vmem:[#allocation2 + $0x1b58] sm:$0xff]
        %v8525 = vld [vmem:[#allocation2 + $0x1b60] sm:$0xff]
        %v8526 = vld [vmem:[#allocation2 + $0x1b68] sm:$0xff]
        %v8527 = vld [vmem:[#allocation2 + $0x1b70] sm:$0xff]
        %v8528 = vld [vmem:[#allocation2 + $0x1b78] sm:$0xff]
        %v8593 = vunpack.c.l.b16 %v8465
        %v8594 = vunpack.c.h.b16 %v8465
        %v8595 = vunpack.c.l.b16 %v8466
        %v8596 = vunpack.c.h.b16 %v8466
        %v8597 = vunpack.c.l.b16 %v8467
        %v8598 = vunpack.c.h.b16 %v8467
        %v8599 = vunpack.c.l.b16 %v8468
        %v8600 = vunpack.c.h.b16 %v8468
        %v8601 = vunpack.c.l.b16 %v8469
        %v8602 = vunpack.c.h.b16 %v8469
        %v8603 = vunpack.c.l.b16 %v8470
        %v8604 = vunpack.c.h.b16 %v8470
        %v8605 = vunpack.c.l.b16 %v8471
        %v8606 = vunpack.c.h.b16 %v8471
        %v8607 = vunpack.c.l.b16 %v8472
        %v8608 = vunpack.c.h.b16 %v8472
        %v8609 = vunpack.c.l.b16 %v8473
        %v8610 = vunpack.c.h.b16 %v8473
        %v8611 = vunpack.c.l.b16 %v8474
        %v8612 = vunpack.c.h.b16 %v8474
        %v8613 = vunpack.c.l.b16 %v8475
        %v8614 = vunpack.c.h.b16 %v8475
        %v8615 = vunpack.c.l.b16 %v8476
        %v8616 = vunpack.c.h.b16 %v8476
        %v8617 = vunpack.c.l.b16 %v8477
        %v8618 = vunpack.c.h.b16 %v8477
        %v8619 = vunpack.c.l.b16 %v8478
        %v8620 = vunpack.c.h.b16 %v8478
        %v8621 = vunpack.c.l.b16 %v8479
        %v8622 = vunpack.c.h.b16 %v8479
        %v8623 = vunpack.c.l.b16 %v8480
        %v8624 = vunpack.c.h.b16 %v8480
        %v8625 = vunpack.c.l.b16 %v8481
        %v8626 = vunpack.c.h.b16 %v8481
        %v8627 = vunpack.c.l.b16 %v8482
        %v8628 = vunpack.c.h.b16 %v8482
        %v8629 = vunpack.c.l.b16 %v8483
        %v8630 = vunpack.c.h.b16 %v8483
        %v8631 = vunpack.c.l.b16 %v8484
        %v8632 = vunpack.c.h.b16 %v8484
        %v8633 = vunpack.c.l.b16 %v8485
        %v8634 = vunpack.c.h.b16 %v8485
        %v8635 = vunpack.c.l.b16 %v8486
        %v8636 = vunpack.c.h.b16 %v8486
        %v8637 = vunpack.c.l.b16 %v8487
        %v8638 = vunpack.c.h.b16 %v8487
        %v8639 = vunpack.c.l.b16 %v8488
        %v8640 = vunpack.c.h.b16 %v8488
        %v8641 = vunpack.c.l.b16 %v8489
        %v8642 = vunpack.c.h.b16 %v8489
        %v8643 = vunpack.c.l.b16 %v8490
        %v8644 = vunpack.c.h.b16 %v8490
        %v8645 = vunpack.c.l.b16 %v8491
        %v8646 = vunpack.c.h.b16 %v8491
        %v8647 = vunpack.c.l.b16 %v8492
        %v8648 = vunpack.c.h.b16 %v8492
        %v8649 = vunpack.c.l.b16 %v8493
        %v8650 = vunpack.c.h.b16 %v8493
        %v8651 = vunpack.c.l.b16 %v8494
        %v8652 = vunpack.c.h.b16 %v8494
        %v8653 = vunpack.c.l.b16 %v8495
        %v8654 = vunpack.c.h.b16 %v8495
        %v8655 = vunpack.c.l.b16 %v8496
        %v8656 = vunpack.c.h.b16 %v8496
        %v8657 = vunpack.c.l.b16 %v8497
        %v8658 = vunpack.c.h.b16 %v8497
        %v8659 = vunpack.c.l.b16 %v8498
        %v8660 = vunpack.c.h.b16 %v8498
        %v8661 = vunpack.c.l.b16 %v8499
        %v8662 = vunpack.c.h.b16 %v8499
        %v8663 = vunpack.c.l.b16 %v8500
        %v8664 = vunpack.c.h.b16 %v8500
        %v8665 = vunpack.c.l.b16 %v8501
        %v8666 = vunpack.c.h.b16 %v8501
        %v8667 = vunpack.c.l.b16 %v8502
        %v8668 = vunpack.c.h.b16 %v8502
        %v8669 = vunpack.c.l.b16 %v8503
        %v8670 = vunpack.c.h.b16 %v8503
        %v8671 = vunpack.c.l.b16 %v8504
        %v8672 = vunpack.c.h.b16 %v8504
        %v8673 = vunpack.c.l.b16 %v8505
        %v8674 = vunpack.c.h.b16 %v8505
        %v8675 = vunpack.c.l.b16 %v8506
        %v8676 = vunpack.c.h.b16 %v8506
        %v8677 = vunpack.c.l.b16 %v8507
        %v8678 = vunpack.c.h.b16 %v8507
        %v8679 = vunpack.c.l.b16 %v8508
        %v8680 = vunpack.c.h.b16 %v8508
        %v8681 = vunpack.c.l.b16 %v8509
        %v8682 = vunpack.c.h.b16 %v8509
        %v8683 = vunpack.c.l.b16 %v8510
        %v8684 = vunpack.c.h.b16 %v8510
        %v8685 = vunpack.c.l.b16 %v8511
        %v8686 = vunpack.c.h.b16 %v8511
        %v8687 = vunpack.c.l.b16 %v8512
        %v8688 = vunpack.c.h.b16 %v8512
        %v8689 = vunpack.c.l.b16 %v8513
        %v8690 = vunpack.c.h.b16 %v8513
        %v8691 = vunpack.c.l.b16 %v8514
        %v8692 = vunpack.c.h.b16 %v8514
        %v8693 = vunpack.c.l.b16 %v8515
        %v8694 = vunpack.c.h.b16 %v8515
        %v8695 = vunpack.c.l.b16 %v8516
        %v8696 = vunpack.c.h.b16 %v8516
        %v8697 = vunpack.c.l.b16 %v8517
        %v8698 = vunpack.c.h.b16 %v8517
        %v8699 = vunpack.c.l.b16 %v8518
        %v8700 = vunpack.c.h.b16 %v8518
        %v8701 = vunpack.c.l.b16 %v8519
        %v8702 = vunpack.c.h.b16 %v8519
        %v8703 = vunpack.c.l.b16 %v8520
        %v8704 = vunpack.c.h.b16 %v8520
        %v8705 = vunpack.c.l.b16 %v8521
        %v8706 = vunpack.c.h.b16 %v8521
        %v8707 = vunpack.c.l.b16 %v8522
        %v8708 = vunpack.c.h.b16 %v8522
        %v8709 = vunpack.c.l.b16 %v8523
        %v8710 = vunpack.c.h.b16 %v8523
        %v8711 = vunpack.c.l.b16 %v8524
        %v8712 = vunpack.c.h.b16 %v8524
        %v8713 = vunpack.c.l.b16 %v8525
        %v8714 = vunpack.c.h.b16 %v8525
        %v8715 = vunpack.c.l.b16 %v8526
        %v8716 = vunpack.c.h.b16 %v8526
        %v8717 = vunpack.c.l.b16 %v8527
        %v8718 = vunpack.c.h.b16 %v8527
        %v8719 = vunpack.c.l.b16 %v8528
        %v8720 = vunpack.c.h.b16 %v8528
        %v8721 = vpack.c.b16 %v8595, %v8593
        %v8722 = vpack.c.b16 %v8596, %v8594
        %v8723 = vpack.c.b16 %v8599, %v8597
        %v8724 = vpack.c.b16 %v8600, %v8598
        %v8725 = vpack.c.b16 %v8603, %v8601
        %v8726 = vpack.c.b16 %v8604, %v8602
        %v8727 = vpack.c.b16 %v8607, %v8605
        %v8728 = vpack.c.b16 %v8608, %v8606
        %v8729 = vpack.c.b16 %v8611, %v8609
        %v8730 = vpack.c.b16 %v8612, %v8610
        %v8731 = vpack.c.b16 %v8615, %v8613
        %v8732 = vpack.c.b16 %v8616, %v8614
        %v8733 = vpack.c.b16 %v8619, %v8617
        %v8734 = vpack.c.b16 %v8620, %v8618
        %v8735 = vpack.c.b16 %v8623, %v8621
        %v8736 = vpack.c.b16 %v8624, %v8622
        %v8737 = vpack.c.b16 %v8627, %v8625
        %v8738 = vpack.c.b16 %v8628, %v8626
        %v8739 = vpack.c.b16 %v8631, %v8629
        %v8740 = vpack.c.b16 %v8632, %v8630
        %v8741 = vpack.c.b16 %v8635, %v8633
        %v8742 = vpack.c.b16 %v8636, %v8634
        %v8743 = vpack.c.b16 %v8639, %v8637
        %v8744 = vpack.c.b16 %v8640, %v8638
        %v8745 = vpack.c.b16 %v8643, %v8641
        %v8746 = vpack.c.b16 %v8644, %v8642
        %v8747 = vpack.c.b16 %v8647, %v8645
        %v8748 = vpack.c.b16 %v8648, %v8646
        %v8749 = vpack.c.b16 %v8651, %v8649
        %v8750 = vpack.c.b16 %v8652, %v8650
        %v8751 = vpack.c.b16 %v8655, %v8653
        %v8752 = vpack.c.b16 %v8656, %v8654
        %v8753 = vpack.c.b16 %v8659, %v8657
        %v8754 = vpack.c.b16 %v8660, %v8658
        %v8755 = vpack.c.b16 %v8663, %v8661
        %v8756 = vpack.c.b16 %v8664, %v8662
        %v8757 = vpack.c.b16 %v8667, %v8665
        %v8758 = vpack.c.b16 %v8668, %v8666
        %v8759 = vpack.c.b16 %v8671, %v8669
        %v8760 = vpack.c.b16 %v8672, %v8670
        %v8761 = vpack.c.b16 %v8675, %v8673
        %v8762 = vpack.c.b16 %v8676, %v8674
        %v8763 = vpack.c.b16 %v8679, %v8677
        %v8764 = vpack.c.b16 %v8680, %v8678
        %v8765 = vpack.c.b16 %v8683, %v8681
        %v8766 = vpack.c.b16 %v8684, %v8682
        %v8767 = vpack.c.b16 %v8687, %v8685
        %v8768 = vpack.c.b16 %v8688, %v8686
        %v8769 = vpack.c.b16 %v8691, %v8689
        %v8770 = vpack.c.b16 %v8692, %v8690
        %v8771 = vpack.c.b16 %v8695, %v8693
        %v8772 = vpack.c.b16 %v8696, %v8694
        %v8773 = vpack.c.b16 %v8699, %v8697
        %v8774 = vpack.c.b16 %v8700, %v8698
        %v8775 = vpack.c.b16 %v8703, %v8701
        %v8776 = vpack.c.b16 %v8704, %v8702
        %v8777 = vpack.c.b16 %v8707, %v8705
        %v8778 = vpack.c.b16 %v8708, %v8706
        %v8779 = vpack.c.b16 %v8711, %v8709
        %v8780 = vpack.c.b16 %v8712, %v8710
        %v8781 = vpack.c.b16 %v8715, %v8713
        %v8782 = vpack.c.b16 %v8716, %v8714
        %v8783 = vpack.c.b16 %v8719, %v8717
        %v8784 = vpack.c.b16 %v8720, %v8718
        %8849 = vmatprep.subr.bf16.mxu0 %v8722
        %8850 = vmatpush1.bf16.msra.mxu0 %v8721
        %8851 = vmatprep.subr.bf16.mxu0 %v8724
        %8852 = vmatpush1.bf16.msra.mxu0 %v8723
        %8853 = vmatprep.subr.bf16.mxu0 %v8726
        %8854 = vmatpush1.bf16.msra.mxu0 %v8725
        %8855 = vmatprep.subr.bf16.mxu0 %v8728
        %8856 = vmatpush1.bf16.msra.mxu0 %v8727
        %8857 = vmatprep.subr.bf16.mxu0 %v8730
        %8858 = vmatpush1.bf16.msra.mxu0 %v8729
        %8859 = vmatprep.subr.bf16.mxu0 %v8732
        %8860 = vmatpush1.bf16.msra.mxu0 %v8731
        %8861 = vmatprep.subr.bf16.mxu0 %v8734
        %8862 = vmatpush1.bf16.msra.mxu0 %v8733
        %8863 = vmatprep.subr.bf16.mxu0 %v8736
        %8864 = vmatpush1.bf16.msra.mxu0 %v8735
        %8865 = vmatprep.subr.bf16.mxu0 %v8738
        %8866 = vmatpush1.bf16.msra.mxu0 %v8737
        %8867 = vmatprep.subr.bf16.mxu0 %v8740
        %8868 = vmatpush1.bf16.msra.mxu0 %v8739
        %8869 = vmatprep.subr.bf16.mxu0 %v8742
        %8870 = vmatpush1.bf16.msra.mxu0 %v8741
        %8871 = vmatprep.subr.bf16.mxu0 %v8744
        %8872 = vmatpush1.bf16.msra.mxu0 %v8743
        %8873 = vmatprep.subr.bf16.mxu0 %v8746
        %8874 = vmatpush1.bf16.msra.mxu0 %v8745
        %8875 = vmatprep.subr.bf16.mxu0 %v8748
        %8876 = vmatpush1.bf16.msra.mxu0 %v8747
        %8877 = vmatprep.subr.bf16.mxu0 %v8750
        %8878 = vmatpush1.bf16.msra.mxu0 %v8749
        %8879 = vmatprep.subr.bf16.mxu0 %v8752
        %8880 = vmatpush1.bf16.msra.mxu0 %v8751
        %8881 = vmatprep.mubr.bf16.mxu0 %v621
        %8882 = vmatmul.mubr.bf16.gmra.mrb[0].mxu0 %v620
        %v8883 = vpop.f32.mrb[0].mxu0
        %v8884 = vadd.f32 0.0, %v8883
        %v8885 = vpop.f32.mrb[0].mxu0
        %v8886 = vpop.f32.mrb[0].mxu0
        %v8887 = vadd.f32 0.0, %v8886
        %v8888 = vpop.f32.mrb[0].mxu0
        %8889 = vdwg.mxu0
        %8890 = vmatprep.subr.bf16.mxu0 %v8754
        %8891 = vmatpush1.bf16.msra.mxu0 %v8753
        %8892 = vmatprep.subr.bf16.mxu0 %v8756
        %8893 = vmatpush1.bf16.msra.mxu0 %v8755
        %8894 = vmatprep.subr.bf16.mxu0 %v8758
        %8895 = vmatpush1.bf16.msra.mxu0 %v8757
        %8896 = vmatprep.subr.bf16.mxu0 %v8760
        %8897 = vmatpush1.bf16.msra.mxu0 %v8759
        %8898 = vmatprep.subr.bf16.mxu0 %v8762
        %8899 = vmatpush1.bf16.msra.mxu0 %v8761
        %8900 = vmatprep.subr.bf16.mxu0 %v8764
        %8901 = vmatpush1.bf16.msra.mxu0 %v8763
        %8902 = vmatprep.subr.bf16.mxu0 %v8766
        %8903 = vmatpush1.bf16.msra.mxu0 %v8765
        %8904 = vmatprep.subr.bf16.mxu0 %v8768
        %8905 = vmatpush1.bf16.msra.mxu0 %v8767
        %8906 = vmatprep.subr.bf16.mxu0 %v8770
        %8907 = vmatpush1.bf16.msra.mxu0 %v8769
        %8908 = vmatprep.subr.bf16.mxu0 %v8772
        %8909 = vmatpush1.bf16.msra.mxu0 %v8771
        %8910 = vmatprep.subr.bf16.mxu0 %v8774
        %8911 = vmatpush1.bf16.msra.mxu0 %v8773
        %8912 = vmatprep.subr.bf16.mxu0 %v8776
        %8913 = vmatpush1.bf16.msra.mxu0 %v8775
        %8914 = vmatprep.subr.bf16.mxu0 %v8778
        %8915 = vmatpush1.bf16.msra.mxu0 %v8777
        %8916 = vmatprep.subr.bf16.mxu0 %v8780
        %8917 = vmatpush1.bf16.msra.mxu0 %v8779
        %8918 = vmatprep.subr.bf16.mxu0 %v8782
        %8919 = vmatpush1.bf16.msra.mxu0 %v8781
        %8920 = vmatprep.subr.bf16.mxu0 %v8784
        %8921 = vmatpush1.bf16.msra.mxu0 %v8783
        %8922 = vmatprep.mubr.bf16.mxu0 %v8464
        %8923 = vmatmul.mubr.bf16.gmra.mrb[0].mxu0 %v8463
        %v8924 = vpop.f32.mrb[0].mxu0
        %v8925 = vadd.f32 %v8884, %v8924
        %v8926 = vpop.f32.mrb[0].mxu0
        %v8927 = vpop.f32.mrb[0].mxu0
        %v8928 = vadd.f32 %v8887, %v8927
        %v8929 = vpop.f32.mrb[0].mxu0
        %8930 = vdwg.mxu0
        %v8931 = vld [vmem:[#allocation4 + $0x7] ss:$0 sm:$0xff]
        %v8932 = vadd.f32 %v8925, %v8931
        %v8933 = vadd.f32 %v8928, %v8931
        %8934 = vst [vmem:[%s198] sm:$0xff] %v8932
        %8935 = vst [vmem:[%s198 + $0x8] sm:$0xff] %v8933
        %p8936 = scmp.lt.s32.totalorder %s16, 1
        %s8937 = scalar_select %p8936, %s16, 1
        %s8938 = smul.addr %s8937, 2
        %s8939 = smul.addr %s8938, 8
        %s8940 = scalar_lea.vmem %s3, %s8939
        // Predicated region
        $region41: #{fused_forward.1} parent=31 // pred_check
          %p8941 = pneg %p102
        $region42: #{fused_forward.1} parent=31 // pred_check_branch
          %8943 = sbr.rel (%p8941) target = $region44
        $region43: #{fused_forward.1} parent=31 // pred_region
          _
        $region44: #{fused_forward.1} parent=31 // pred_fallthru
          _
      $region32: #{fused_forward.1} parent=5 // pred_fallthru
        _
      %p8944 = scmp.le.s32.totalorder 2, %s11
      // Predicated region
      $region45: #{fused_forward.1} parent=5 // pred_check
        %p8945 = pneg %p8944
      $region46: #{fused_forward.1} parent=5 // pred_check_branch
        %8947 = sbr.rel (%p8945) target = $region48
      $region47: #{fused_forward.1} parent=5 // pred_region
        %s8948 = ssub.s32 %s11, 2
        // Predicated region
        $region49: #{fused_forward.1} parent=47 // pred_check
          %p8949 = pneg %p108
        $region50: #{fused_forward.1} parent=47 // pred_check_branch
          %8951 = sbr.rel (%p8949) target = $region52
        $region51: #{fused_forward.1} parent=47 // pred_region
          %p8952 = scmp.lt.s32.totalorder %s17, 1
          %s8953 = scalar_select %p8952, %s17, 1
          %s8954 = smul.addr %s8953, 2
          %s8955 = smul.addr %s8954, 8
          %s8956 = scalar_lea.vmem %s3, %s8955
        $region52: #{fused_forward.1} parent=47 // pred_fallthru
          _
      $region48: #{fused_forward.1} parent=5 // pred_fallthru
        _
    $region6: #{fused_forward.1} parent=1 // loop_footer
      %s15 = sadd.s32 1, %s11
    $region7: #{fused_forward.1} parent=1 // loop_footer_branch
      %10 = sbr.rel target = $region3
    $region8: #{fused_forward.1} parent=1 // loop_exit
      _
    %8957 = vsyncpa [#allocation3], 1
    %s8958 = scalar_lea.sflag [#allocation3], 1
    %8959 = vsyncpa %s8958, 1
    %8960 = vsyncpa [#allocation5], 1

</llo_original>
